<compile_context>
chip_gen: v7x
topology: tpu7x:2x2x1
jax: 0.10.0
libtpu: 0.0.40
codegen_flags: <defaults>
</compile_context>

<pallas_src>
import numpy as np
import jax
import jax.numpy as jnp
from jax.experimental import pallas as pl
from jax.experimental.pallas import tpu as pltpu


# ----------------------------------------------------------------------------
# In-kernel helpers
# ----------------------------------------------------------------------------
def _zero_border(pad_ref, H, W):
    """Zero only the 1-pixel border of a (Bb, H+2, W+2, C) scratch."""
    Bb, C = pad_ref.shape[0], pad_ref.shape[3]
    zrow = jnp.zeros((Bb, 1, W + 2, C), pad_ref.dtype)
    zcol = jnp.zeros((Bb, H, 1, C), pad_ref.dtype)
    pad_ref[:, 0:1, :, :] = zrow
    pad_ref[:, H + 1:H + 2, :, :] = zrow
    pad_ref[:, 1:H + 1, 0:1, :] = zcol
    pad_ref[:, 1:H + 1, W + 1:W + 2, :] = zcol


def _conv3x3(pad_ref, w_ref, M, H, W):
    """3x3 / stride 1 conv as 9 tap-shifted MXU matmuls (bf16 in, f32 acc)."""
    Cout = w_ref.shape[3]
    acc = jnp.zeros((M, Cout), jnp.float32)
    for kh in range(3):                      # statically unrolled at trace time
        for kw in range(3):
            taps = pad_ref[:, kh:kh + H, kw:kw + W, :].reshape(M, -1)
            acc = acc + jnp.dot(taps.astype(jnp.bfloat16), w_ref[kh, kw],
                                preferred_element_type=jnp.float32)
    return acc


# ----------------------------------------------------------------------------
# Pallas kernel: one grid step == one block of Bb images, everything in VMEM.
# ----------------------------------------------------------------------------
def _block_kernel(x_ref, w1_ref, b1_ref, w2_ref, b2_ref, w3_ref, b3_ref,
                  o_ref, pad1_ref, pad2_ref, comb_ref):
    Bb, H, W, Cin = x_ref.shape
    Cout = w1_ref.shape[3]
    H2, W2 = H // 2, W // 2
    M = Bb * H * W                               # batch folded into matmul M dim

    x = x_ref[...]                               # (Bb, H, W, Cin) bf16 (unpadded)

    # ---- pad(ReLU(x)) into scratch: border-only zeroing, interior overwritten
    _zero_border(pad1_ref, H, W)
    pad1_ref[:, 1:H + 1, 1:W + 1, :] = jnp.maximum(x, 0).astype(pad1_ref.dtype)

    # ---- sn_conv1: 3x3, stride 1, pad 1, then bias + ReLU (f32) ----
    acc1 = _conv3x3(pad1_ref, w1_ref, M, H, W)
    h1 = jnp.maximum(acc1 + b1_ref[...], 0.0)

    # ---- pad(h1) into scratch for sn_conv2 ----
    _zero_border(pad2_ref, H, W)
    pad2_ref[:, 1:H + 1, 1:W + 1, :] = h1.reshape(Bb, H, W, Cout).astype(pad2_ref.dtype)

    # ---- sn_conv2: 3x3, stride 1, pad 1 (bias fused below) ----
    acc2 = _conv3x3(pad2_ref, w2_ref, M, H, W)

    # ---- residual branch: sn_conv3 (1x1) on the ORIGINAL x (already bf16) ----
    res = jnp.dot(x.reshape(M, Cin), w3_ref[...],
                  preferred_element_type=jnp.float32)

    # ---- fuse both branch biases into one broadcast add ----
    bias23 = b2_ref[...] + b3_ref[...]                          # (1, Cout)

    # ---- AvgPool2d(2,2) applied ONCE to the sum (pooling is linear) ----
    # Stage the flat (M, Cout) sum in VMEM, pool W with stride-2 sublane reads,
    # then pool H by splitting the row dim (pure VPU work, no pooling matmul).
    comb_ref[...] = acc2 + res + bias23                          # rows ordered (b, h, w)
    w_even = comb_ref[pl.ds(0, M // 2, stride=2), :]             # (b, h, 2j)
    w_odd = comb_ref[pl.ds(1, M // 2, stride=2), :]              # (b, h, 2j+1)
    sw = (w_even + w_odd).reshape(Bb * H2, 2, W2, Cout)          # rows (b*i, h-parity, j)
    pooled = (sw[:, 0] + sw[:, 1]) * 0.25                        # (Bb*H2, W2, Cout)

    o_ref[...] = pooled.reshape(Bb, H2, W2, Cout).astype(o_ref.dtype)


# ----------------------------------------------------------------------------
# Wrapper / glue
# ----------------------------------------------------------------------------
def _pick_block_batch(B, H, W, Cin, Cout, budget_bytes=16 * 1024 * 1024):
    """Largest Bb (images per grid step) that fits the VMEM budget, keeps
    Bb | B, and leaves >=2 grid steps so megacore (v7x) has work per core."""
    per_b = ((H + 2) * (W + 2) * (Cin + Cout) * 4        # f32 pad scratches
             + 2 * H * W * Cin * 2                       # double-buffered bf16 input block
             + H * W * Cout * 4                          # pooling staging scratch (f32)
             + 4 * H * W * Cout * 4                      # live f32 accumulators
             + 2 * (H // 2) * (W // 2) * Cout * 4)       # double-buffered f32 output block
    bb = int(max(1, min(B, budget_bytes // max(per_b, 1))))
    while bb > 1 and (B % bb != 0 or B // bb < 2):
        bb -= 1
    return bb


def block_forward(x_nchw, kernel_params, block_batch=None):
    """x_nchw: (B, Cin, H, W) float32 -> (B, Cout, H//2, W//2) float32."""
    w1, b1, w2, b2, w3, b3 = kernel_params       # HWIO bf16 weights, (1, Cout) f32 biases
    B, Cin, H, W = x_nchw.shape
    Cout = w1.shape[-1]
    assert H % 2 == 0 and W % 2 == 0, "AvgPool2d(2,2) requires even H, W"
    H2, W2 = H // 2, W // 2

    # NHWC + bf16 at the HBM boundary (halves input DMA; padding is in-kernel).
    x_nhwc = jnp.transpose(x_nchw, (0, 2, 3, 1)).astype(jnp.bfloat16)
    Bb = block_batch or _pick_block_batch(B, H, W, Cin, Cout)
    assert B % Bb == 0

    out_nhwc = pl.pallas_call(
        _block_kernel,
        out_shape=jax.ShapeDtypeStruct((B, H2, W2, Cout), jnp.float32),
        grid_spec=pltpu.PrefetchScalarGridSpec(
            num_scalar_prefetch=0,
            grid=(B // Bb,),
            in_specs=[
                pl.BlockSpec((Bb, H, W, Cin), lambda b: (b, 0, 0, 0)),
                pl.BlockSpec((3, 3, Cin, Cout), lambda b: (0, 0, 0, 0)),
                pl.BlockSpec((1, Cout), lambda b: (0, 0)),
                pl.BlockSpec((3, 3, Cout, Cout), lambda b: (0, 0, 0, 0)),
                pl.BlockSpec((1, Cout), lambda b: (0, 0)),
                pl.BlockSpec((Cin, Cout), lambda b: (0, 0)),
                pl.BlockSpec((1, Cout), lambda b: (0, 0)),
            ],
            out_specs=pl.BlockSpec((Bb, H2, W2, Cout), lambda b: (b, 0, 0, 0)),
            scratch_shapes=[
                pltpu.VMEM((Bb, H + 2, W + 2, Cin), jnp.float32),    # padded relu(x)
                pltpu.VMEM((Bb, H + 2, W + 2, Cout), jnp.float32),   # padded h1
                pltpu.VMEM((Bb * H * W, Cout), jnp.float32),         # pooling staging
            ],
        ),
        compiler_params=pltpu.CompilerParams(
            dimension_semantics=("parallel",),
            vmem_limit_bytes=32 * 1024 * 1024,      # explicit, safe on v5e/v6e/v7x
        ),
    )(x_nhwc, w1, b1, w2, b2, w3, b3)

    return jnp.transpose(out_nhwc, (0, 3, 1, 2))     # back to NCHW


# ----------------------------------------------------------------------------
# Parameters (deterministic, synthetic) + spectral normalization (plain JAX)
# ----------------------------------------------------------------------------
def _spectral_normalize(w, u, eps=1e-12):
    w_mat = w.reshape(w.shape[0], -1)
    v = w_mat.T @ u
    v = v / (jnp.linalg.norm(v) + eps)
    u = w_mat @ v
    u = u / (jnp.linalg.norm(u) + eps)
    sigma = jnp.dot(u, jnp.dot(w_mat, v))
    return w / sigma


def init_block_params(key, cin, cout):
    ks = jax.random.split(key, 9)
    w1 = jax.random.normal(ks[0], (cout, cin, 3, 3), jnp.float32) * 0.1
    b1 = jax.random.normal(ks[1], (cout,), jnp.float32) * 0.05
    w2 = jax.random.normal(ks[2], (cout, cout, 3, 3), jnp.float32) * 0.1
    b2 = jax.random.normal(ks[3], (cout,), jnp.float32) * 0.05
    w3 = jax.random.normal(ks[4], (cout, cin, 1, 1), jnp.float32) * 0.1
    b3 = jax.random.normal(ks[5], (cout,), jnp.float32) * 0.05
    w1 = _spectral_normalize(w1, jax.random.normal(ks[6], (cout,), jnp.float32))
    w2 = _spectral_normalize(w2, jax.random.normal(ks[7], (cout,), jnp.float32))
    w3 = _spectral_normalize(w3, jax.random.normal(ks[8], (cout,), jnp.float32))
    return w1, b1, w2, b2, w3, b3   # PyTorch OIHW layout


def to_kernel_params(torch_params):
    """OIHW f32 -> HWIO bf16 weights (MXU-native) + (1, Cout) f32 biases."""
    w1, b1, w2, b2, w3, b3 = torch_params
    w1k = jnp.transpose(w1, (2, 3, 1, 0)).astype(jnp.bfloat16)   # (3, 3, Cin, Cout)
    w2k = jnp.transpose(w2, (2, 3, 1, 0)).astype(jnp.bfloat16)   # (3, 3, Cout, Cout)
    w3k = jnp.transpose(w3[:, :, 0, 0], (1, 0)).astype(jnp.bfloat16)  # (Cin, Cout)
    return (w1k, b1.reshape(1, -1).astype(jnp.float32),
            w2k, b2.reshape(1, -1).astype(jnp.float32),
            w3k, b3.reshape(1, -1).astype(jnp.float32))


# ----------------------------------------------------------------------------
# Pure-JAX reference (NCHW, mirrors the PyTorch forward exactly, full f32)
# ----------------------------------------------------------------------------
def ref_block(x, torch_params):
    w1, b1, w2, b2, w3, b3 = torch_params

    def conv(h, w, b, pad):
        y = jax.lax.conv_general_dilated(
            h, w, window_strides=(1, 1), padding=[(pad, pad), (pad, pad)],
            dimension_numbers=("NCHW", "OIHW", "NCHW"))
        return y + b[None, :, None, None]

    def avgpool(h):
        s = jax.lax.reduce_window(h, 0.0, jax.lax.add,
                                  (1, 1, 2, 2), (1, 1, 2, 2), "VALID")
        return s / 4.0

    h = jnp.maximum(x, 0.0)
    h = conv(h, w1, b1, 1)
    h = jnp.maximum(h, 0.0)
    h = conv(h, w2, b2, 1)
    h = avgpool(h)
    r = conv(x, w3, b3, 0)
    r = avgpool(r)
    return r + h


if __name__ == "__main__":
    B, Cin, Cout, H, W = 2, 4, 8, 16, 16
    key = jax.random.PRNGKey(0)
    kx, kp = jax.random.split(key)

    x = jax.random.normal(kx, (B, Cin, H, W), jnp.float32)
    torch_params = init_block_params(kp, Cin, Cout)
    kernel_params = to_kernel_params(torch_params)

    out = block_forward(x, kernel_params)
    out = jax.block_until_ready(out)

    assert out.shape == (B, Cout, H // 2, W // 2), out.shape
    ref = ref_block(x, torch_params)
    # bf16 MXU operands with f32 accumulation -> loosened tolerance vs f32 ref.
    np.testing.assert_allclose(np.asarray(out), np.asarray(ref),
                               rtol=2e-2, atol=2e-2)
    print("KERNEL_OK")
</pallas_src>

<mosaic_0001>
module attributes {stable_mosaic.version = 11 : i64} {
  func.func @_block_kernel(%arg0: i32, %arg1: memref<1x16x16x4xbf16, #tpu.memory_space<vmem>>, %arg2: memref<3x3x4x8xbf16, #tpu.memory_space<vmem>>, %arg3: memref<1x8xf32, #tpu.memory_space<vmem>>, %arg4: memref<3x3x8x8xbf16, #tpu.memory_space<vmem>>, %arg5: memref<1x8xf32, #tpu.memory_space<vmem>>, %arg6: memref<4x8xbf16, #tpu.memory_space<vmem>>, %arg7: memref<1x8xf32, #tpu.memory_space<vmem>>, %arg8: memref<1x8x8x8xf32, #tpu.memory_space<vmem>>, %arg9: memref<1x18x18x4xf32, #tpu.memory_space<vmem>>, %arg10: memref<1x18x18x8xf32, #tpu.memory_space<vmem>>, %arg11: memref<256x8xf32, #tpu.memory_space<vmem>>) attributes {dimension_semantics = [#tpu.dimension_semantics<parallel>], iteration_bounds = array<i64: 2>, scalar_prefetch = 0 : i64, scratch_operands = 3 : i64, tpu.core_type = #tpu.core_type<tc>, window_params = [{transform_indices = @transform_0, window_bounds = array<i64: 1, 16, 16, 4>}, {pipeline_mode = #tpu.pipeline_mode<synchronous>, transform_indices = @transform_1, window_bounds = array<i64: 3, 3, 4, 8>}, {pipeline_mode = #tpu.pipeline_mode<synchronous>, transform_indices = @transform_2, window_bounds = array<i64: 1, 8>}, {pipeline_mode = #tpu.pipeline_mode<synchronous>, transform_indices = @transform_3, window_bounds = array<i64: 3, 3, 8, 8>}, {pipeline_mode = #tpu.pipeline_mode<synchronous>, transform_indices = @transform_4, window_bounds = array<i64: 1, 8>}, {pipeline_mode = #tpu.pipeline_mode<synchronous>, transform_indices = @transform_5, window_bounds = array<i64: 4, 8>}, {pipeline_mode = #tpu.pipeline_mode<synchronous>, transform_indices = @transform_6, window_bounds = array<i64: 1, 8>}, {transform_indices = @transform_7, window_bounds = array<i64: 1, 8, 8, 8>}]} {
    %c0 = arith.constant 0 : index
    %c0_0 = arith.constant 0 : index
    %c0_1 = arith.constant 0 : index
    %c0_2 = arith.constant 0 : index
    %0 = vector.load %arg1[%c0, %c0_0, %c0_1, %c0_2] : memref<1x16x16x4xbf16, #tpu.memory_space<vmem>>, vector<1x16x16x4xbf16>
    %cst = arith.constant 0.000000e+00 : f32
    %1 = vector.broadcast %cst : f32 to vector<1x1x18x4xf32>
    %cst_3 = arith.constant 0.000000e+00 : f32
    %2 = vector.broadcast %cst_3 : f32 to vector<1x16x1x4xf32>
    %c0_4 = arith.constant 0 : index
    %c0_5 = arith.constant 0 : index
    %c0_6 = arith.constant 0 : index
    %c0_7 = arith.constant 0 : index
    %3 = vector.load %arg9[%c0_4, %c0_5, %c0_6, %c0_7] : memref<1x18x18x4xf32, #tpu.memory_space<vmem>>, vector<1x1x18x4xf32>
    tpu.vector_store %arg9[%c0_4, %c0_5, %c0_6, %c0_7], %1 {strides = array<i32>} : memref<1x18x18x4xf32, #tpu.memory_space<vmem>>, vector<1x1x18x4xf32>,
    %c0_8 = arith.constant 0 : index
    %c17 = arith.constant 17 : index
    %c0_9 = arith.constant 0 : index
    %c0_10 = arith.constant 0 : index
    %4 = vector.load %arg9[%c0_8, %c17, %c0_9, %c0_10] : memref<1x18x18x4xf32, #tpu.memory_space<vmem>>, vector<1x1x18x4xf32>
    tpu.vector_store %arg9[%c0_8, %c17, %c0_9, %c0_10], %1 {strides = array<i32>} : memref<1x18x18x4xf32, #tpu.memory_space<vmem>>, vector<1x1x18x4xf32>,
    %c0_11 = arith.constant 0 : index
    %c1 = arith.constant 1 : index
    %c0_12 = arith.constant 0 : index
    %c0_13 = arith.constant 0 : index
    %5 = vector.load %arg9[%c0_11, %c1, %c0_12, %c0_13] : memref<1x18x18x4xf32, #tpu.memory_space<vmem>>, vector<1x16x1x4xf32>
    tpu.vector_store %arg9[%c0_11, %c1, %c0_12, %c0_13], %2 {strides = array<i32>} : memref<1x18x18x4xf32, #tpu.memory_space<vmem>>, vector<1x16x1x4xf32>,
    %c0_14 = arith.constant 0 : index
    %c1_15 = arith.constant 1 : index
    %c17_16 = arith.constant 17 : index
    %c0_17 = arith.constant 0 : index
    %6 = vector.load %arg9[%c0_14, %c1_15, %c17_16, %c0_17] : memref<1x18x18x4xf32, #tpu.memory_space<vmem>>, vector<1x16x1x4xf32>
    tpu.vector_store %arg9[%c0_14, %c1_15, %c17_16, %c0_17], %2 {strides = array<i32>} : memref<1x18x18x4xf32, #tpu.memory_space<vmem>>, vector<1x16x1x4xf32>,
    %cst_18 = arith.constant 0.000000e+00 : bf16
    %7 = vector.broadcast %cst_18 : bf16 to vector<1x16x16x4xbf16>
    %8 = arith.maximumf %0, %7 : vector<1x16x16x4xbf16>
    %9 = arith.extf %8 : vector<1x16x16x4xbf16> to vector<1x16x16x4xf32>
    %c0_19 = arith.constant 0 : index
    %c1_20 = arith.constant 1 : index
    %c1_21 = arith.constant 1 : index
    %c0_22 = arith.constant 0 : index
    %10 = vector.load %arg9[%c0_19, %c1_20, %c1_21, %c0_22] : memref<1x18x18x4xf32, #tpu.memory_space<vmem>>, vector<1x16x16x4xf32>
    tpu.vector_store %arg9[%c0_19, %c1_20, %c1_21, %c0_22], %9 {strides = array<i32>} : memref<1x18x18x4xf32, #tpu.memory_space<vmem>>, vector<1x16x16x4xf32>,
    %cst_23 = arith.constant 0.000000e+00 : f32
    %11 = vector.broadcast %cst_23 : f32 to vector<256x8xf32>
    %c0_24 = arith.constant 0 : index
    %c0_25 = arith.constant 0 : index
    %c0_26 = arith.constant 0 : index
    %c0_27 = arith.constant 0 : index
    %12 = vector.load %arg9[%c0_24, %c0_25, %c0_26, %c0_27] : memref<1x18x18x4xf32, #tpu.memory_space<vmem>>, vector<1x16x16x4xf32>
    %13 = vector.shape_cast %12 : vector<1x16x16x4xf32> to vector<256x4xf32>
    %14 = arith.truncf %13 : vector<256x4xf32> to vector<256x4xbf16>
    %c0_28 = arith.constant 0 : index
    %c0_29 = arith.constant 0 : index
    %c0_30 = arith.constant 0 : index
    %c0_31 = arith.constant 0 : index
    %15 = vector.load %arg2[%c0_28, %c0_29, %c0_30, %c0_31] : memref<3x3x4x8xbf16, #tpu.memory_space<vmem>>, vector<1x1x4x8xbf16>
    %16 = vector.shape_cast %15 : vector<1x1x4x8xbf16> to vector<4x8xbf16>
    %cst_32 = arith.constant dense<0.000000e+00> : vector<256x8xf32>
    %17 = tpu.matmul %14, %16, %cst_32 {dimension_numbers = #tpu.dot_dimension_numbers<[1], [0], [0], [1], [0, 0, 1, 1], [], []>} : vector<256x4xbf16>, vector<4x8xbf16>, vector<256x8xf32> -> vector<256x8xf32>
    %18 = arith.addf %11, %17 : vector<256x8xf32>
    %c0_33 = arith.constant 0 : index
    %c0_34 = arith.constant 0 : index
    %c1_35 = arith.constant 1 : index
    %c0_36 = arith.constant 0 : index
    %19 = vector.load %arg9[%c0_33, %c0_34, %c1_35, %c0_36] : memref<1x18x18x4xf32, #tpu.memory_space<vmem>>, vector<1x16x16x4xf32>
    %20 = vector.shape_cast %19 : vector<1x16x16x4xf32> to vector<256x4xf32>
    %21 = arith.truncf %20 : vector<256x4xf32> to vector<256x4xbf16>
    %c0_37 = arith.constant 0 : index
    %c1_38 = arith.constant 1 : index
    %c0_39 = arith.constant 0 : index
    %c0_40 = arith.constant 0 : index
    %22 = vector.load %arg2[%c0_37, %c1_38, %c0_39, %c0_40] : memref<3x3x4x8xbf16, #tpu.memory_space<vmem>>, vector<1x1x4x8xbf16>
    %23 = vector.shape_cast %22 : vector<1x1x4x8xbf16> to vector<4x8xbf16>
    %cst_41 = arith.constant dense<0.000000e+00> : vector<256x8xf32>
    %24 = tpu.matmul %21, %23, %cst_41 {dimension_numbers = #tpu.dot_dimension_numbers<[1], [0], [0], [1], [0, 0, 1, 1], [], []>} : vector<256x4xbf16>, vector<4x8xbf16>, vector<256x8xf32> -> vector<256x8xf32>
    %25 = arith.addf %18, %24 : vector<256x8xf32>
    %c0_42 = arith.constant 0 : index
    %c0_43 = arith.constant 0 : index
    %c2 = arith.constant 2 : index
    %c0_44 = arith.constant 0 : index
    %26 = vector.load %arg9[%c0_42, %c0_43, %c2, %c0_44] : memref<1x18x18x4xf32, #tpu.memory_space<vmem>>, vector<1x16x16x4xf32>
    %27 = vector.shape_cast %26 : vector<1x16x16x4xf32> to vector<256x4xf32>
    %28 = arith.truncf %27 : vector<256x4xf32> to vector<256x4xbf16>
    %c0_45 = arith.constant 0 : index
    %c2_46 = arith.constant 2 : index
    %c0_47 = arith.constant 0 : index
    %c0_48 = arith.constant 0 : index
    %29 = vector.load %arg2[%c0_45, %c2_46, %c0_47, %c0_48] : memref<3x3x4x8xbf16, #tpu.memory_space<vmem>>, vector<1x1x4x8xbf16>
    %30 = vector.shape_cast %29 : vector<1x1x4x8xbf16> to vector<4x8xbf16>
    %cst_49 = arith.constant dense<0.000000e+00> : vector<256x8xf32>
    %31 = tpu.matmul %28, %30, %cst_49 {dimension_numbers = #tpu.dot_dimension_numbers<[1], [0], [0], [1], [0, 0, 1, 1], [], []>} : vector<256x4xbf16>, vector<4x8xbf16>, vector<256x8xf32> -> vector<256x8xf32>
    %32 = arith.addf %25, %31 : vector<256x8xf32>
    %c0_50 = arith.constant 0 : index
    %c1_51 = arith.constant 1 : index
    %c0_52 = arith.constant 0 : index
    %c0_53 = arith.constant 0 : index
    %33 = vector.load %arg9[%c0_50, %c1_51, %c0_52, %c0_53] : memref<1x18x18x4xf32, #tpu.memory_space<vmem>>, vector<1x16x16x4xf32>
    %34 = vector.shape_cast %33 : vector<1x16x16x4xf32> to vector<256x4xf32>
    %35 = arith.truncf %34 : vector<256x4xf32> to vector<256x4xbf16>
    %c1_54 = arith.constant 1 : index
    %c0_55 = arith.constant 0 : index
    %c0_56 = arith.constant 0 : index
    %c0_57 = arith.constant 0 : index
    %36 = vector.load %arg2[%c1_54, %c0_55, %c0_56, %c0_57] : memref<3x3x4x8xbf16, #tpu.memory_space<vmem>>, vector<1x1x4x8xbf16>
    %37 = vector.shape_cast %36 : vector<1x1x4x8xbf16> to vector<4x8xbf16>
    %cst_58 = arith.constant dense<0.000000e+00> : vector<256x8xf32>
    %38 = tpu.matmul %35, %37, %cst_58 {dimension_numbers = #tpu.dot_dimension_numbers<[1], [0], [0], [1], [0, 0, 1, 1], [], []>} : vector<256x4xbf16>, vector<4x8xbf16>, vector<256x8xf32> -> vector<256x8xf32>
    %39 = arith.addf %32, %38 : vector<256x8xf32>
    %c0_59 = arith.constant 0 : index
    %c1_60 = arith.constant 1 : index
    %c1_61 = arith.constant 1 : index
    %c0_62 = arith.constant 0 : index
    %40 = vector.load %arg9[%c0_59, %c1_60, %c1_61, %c0_62] : memref<1x18x18x4xf32, #tpu.memory_space<vmem>>, vector<1x16x16x4xf32>
    %41 = vector.shape_cast %40 : vector<1x16x16x4xf32> to vector<256x4xf32>
    %42 = arith.truncf %41 : vector<256x4xf32> to vector<256x4xbf16>
    %c1_63 = arith.constant 1 : index
    %c1_64 = arith.constant 1 : index
    %c0_65 = arith.constant 0 : index
    %c0_66 = arith.constant 0 : index
    %43 = vector.load %arg2[%c1_63, %c1_64, %c0_65, %c0_66] : memref<3x3x4x8xbf16, #tpu.memory_space<vmem>>, vector<1x1x4x8xbf16>
    %44 = vector.shape_cast %43 : vector<1x1x4x8xbf16> to vector<4x8xbf16>
    %cst_67 = arith.constant dense<0.000000e+00> : vector<256x8xf32>
    %45 = tpu.matmul %42, %44, %cst_67 {dimension_numbers = #tpu.dot_dimension_numbers<[1], [0], [0], [1], [0, 0, 1, 1], [], []>} : vector<256x4xbf16>, vector<4x8xbf16>, vector<256x8xf32> -> vector<256x8xf32>
    %46 = arith.addf %39, %45 : vector<256x8xf32>
    %c0_68 = arith.constant 0 : index
    %c1_69 = arith.constant 1 : index
    %c2_70 = arith.constant 2 : index
    %c0_71 = arith.constant 0 : index
    %47 = vector.load %arg9[%c0_68, %c1_69, %c2_70, %c0_71] : memref<1x18x18x4xf32, #tpu.memory_space<vmem>>, vector<1x16x16x4xf32>
    %48 = vector.shape_cast %47 : vector<1x16x16x4xf32> to vector<256x4xf32>
    %49 = arith.truncf %48 : vector<256x4xf32> to vector<256x4xbf16>
    %c1_72 = arith.constant 1 : index
    %c2_73 = arith.constant 2 : index
    %c0_74 = arith.constant 0 : index
    %c0_75 = arith.constant 0 : index
    %50 = vector.load %arg2[%c1_72, %c2_73, %c0_74, %c0_75] : memref<3x3x4x8xbf16, #tpu.memory_space<vmem>>, vector<1x1x4x8xbf16>
    %51 = vector.shape_cast %50 : vector<1x1x4x8xbf16> to vector<4x8xbf16>
    %cst_76 = arith.constant dense<0.000000e+00> : vector<256x8xf32>
    %52 = tpu.matmul %49, %51, %cst_76 {dimension_numbers = #tpu.dot_dimension_numbers<[1], [0], [0], [1], [0, 0, 1, 1], [], []>} : vector<256x4xbf16>, vector<4x8xbf16>, vector<256x8xf32> -> vector<256x8xf32>
    %53 = arith.addf %46, %52 : vector<256x8xf32>
    %c0_77 = arith.constant 0 : index
    %c2_78 = arith.constant 2 : index
    %c0_79 = arith.constant 0 : index
    %c0_80 = arith.constant 0 : index
    %54 = vector.load %arg9[%c0_77, %c2_78, %c0_79, %c0_80] : memref<1x18x18x4xf32, #tpu.memory_space<vmem>>, vector<1x16x16x4xf32>
    %55 = vector.shape_cast %54 : vector<1x16x16x4xf32> to vector<256x4xf32>
    %56 = arith.truncf %55 : vector<256x4xf32> to vector<256x4xbf16>
    %c2_81 = arith.constant 2 : index
    %c0_82 = arith.constant 0 : index
    %c0_83 = arith.constant 0 : index
    %c0_84 = arith.constant 0 : index
    %57 = vector.load %arg2[%c2_81, %c0_82, %c0_83, %c0_84] : memref<3x3x4x8xbf16, #tpu.memory_space<vmem>>, vector<1x1x4x8xbf16>
    %58 = vector.shape_cast %57 : vector<1x1x4x8xbf16> to vector<4x8xbf16>
    %cst_85 = arith.constant dense<0.000000e+00> : vector<256x8xf32>
    %59 = tpu.matmul %56, %58, %cst_85 {dimension_numbers = #tpu.dot_dimension_numbers<[1], [0], [0], [1], [0, 0, 1, 1], [], []>} : vector<256x4xbf16>, vector<4x8xbf16>, vector<256x8xf32> -> vector<256x8xf32>
    %60 = arith.addf %53, %59 : vector<256x8xf32>
    %c0_86 = arith.constant 0 : index
    %c2_87 = arith.constant 2 : index
    %c1_88 = arith.constant 1 : index
    %c0_89 = arith.constant 0 : index
    %61 = vector.load %arg9[%c0_86, %c2_87, %c1_88, %c0_89] : memref<1x18x18x4xf32, #tpu.memory_space<vmem>>, vector<1x16x16x4xf32>
    %62 = vector.shape_cast %61 : vector<1x16x16x4xf32> to vector<256x4xf32>
    %63 = arith.truncf %62 : vector<256x4xf32> to vector<256x4xbf16>
    %c2_90 = arith.constant 2 : index
    %c1_91 = arith.constant 1 : index
    %c0_92 = arith.constant 0 : index
    %c0_93 = arith.constant 0 : index
    %64 = vector.load %arg2[%c2_90, %c1_91, %c0_92, %c0_93] : memref<3x3x4x8xbf16, #tpu.memory_space<vmem>>, vector<1x1x4x8xbf16>
    %65 = vector.shape_cast %64 : vector<1x1x4x8xbf16> to vector<4x8xbf16>
    %cst_94 = arith.constant dense<0.000000e+00> : vector<256x8xf32>
    %66 = tpu.matmul %63, %65, %cst_94 {dimension_numbers = #tpu.dot_dimension_numbers<[1], [0], [0], [1], [0, 0, 1, 1], [], []>} : vector<256x4xbf16>, vector<4x8xbf16>, vector<256x8xf32> -> vector<256x8xf32>
    %67 = arith.addf %60, %66 : vector<256x8xf32>
    %c0_95 = arith.constant 0 : index
    %c2_96 = arith.constant 2 : index
    %c2_97 = arith.constant 2 : index
    %c0_98 = arith.constant 0 : index
    %68 = vector.load %arg9[%c0_95, %c2_96, %c2_97, %c0_98] : memref<1x18x18x4xf32, #tpu.memory_space<vmem>>, vector<1x16x16x4xf32>
    %69 = vector.shape_cast %68 : vector<1x16x16x4xf32> to vector<256x4xf32>
    %70 = arith.truncf %69 : vector<256x4xf32> to vector<256x4xbf16>
    %c2_99 = arith.constant 2 : index
    %c2_100 = arith.constant 2 : index
    %c0_101 = arith.constant 0 : index
    %c0_102 = arith.constant 0 : index
    %71 = vector.load %arg2[%c2_99, %c2_100, %c0_101, %c0_102] : memref<3x3x4x8xbf16, #tpu.memory_space<vmem>>, vector<1x1x4x8xbf16>
    %72 = vector.shape_cast %71 : vector<1x1x4x8xbf16> to vector<4x8xbf16>
    %cst_103 = arith.constant dense<0.000000e+00> : vector<256x8xf32>
    %73 = tpu.matmul %70, %72, %cst_103 {dimension_numbers = #tpu.dot_dimension_numbers<[1], [0], [0], [1], [0, 0, 1, 1], [], []>} : vector<256x4xbf16>, vector<4x8xbf16>, vector<256x8xf32> -> vector<256x8xf32>
    %74 = arith.addf %67, %73 : vector<256x8xf32>
    %c0_104 = arith.constant 0 : index
    %c0_105 = arith.constant 0 : index
    %75 = vector.load %arg3[%c0_104, %c0_105] : memref<1x8xf32, #tpu.memory_space<vmem>>, vector<1x8xf32>
    %76 = vector.broadcast %75 : vector<1x8xf32> to vector<256x8xf32>
    %77 = arith.addf %74, %76 : vector<256x8xf32>
    %cst_106 = arith.constant 0.000000e+00 : f32
    %78 = vector.broadcast %cst_106 : f32 to vector<256x8xf32>
    %79 = arith.maximumf %77, %78 : vector<256x8xf32>
    %cst_107 = arith.constant 0.000000e+00 : f32
    %80 = vector.broadcast %cst_107 : f32 to vector<1x1x18x8xf32>
    %cst_108 = arith.constant 0.000000e+00 : f32
    %81 = vector.broadcast %cst_108 : f32 to vector<1x16x1x8xf32>
    %c0_109 = arith.constant 0 : index
    %c0_110 = arith.constant 0 : index
    %c0_111 = arith.constant 0 : index
    %c0_112 = arith.constant 0 : index
    %82 = vector.load %arg10[%c0_109, %c0_110, %c0_111, %c0_112] : memref<1x18x18x8xf32, #tpu.memory_space<vmem>>, vector<1x1x18x8xf32>
    tpu.vector_store %arg10[%c0_109, %c0_110, %c0_111, %c0_112], %80 {strides = array<i32>} : memref<1x18x18x8xf32, #tpu.memory_space<vmem>>, vector<1x1x18x8xf32>,
    %c0_113 = arith.constant 0 : index
    %c17_114 = arith.constant 17 : index
    %c0_115 = arith.constant 0 : index
    %c0_116 = arith.constant 0 : index
    %83 = vector.load %arg10[%c0_113, %c17_114, %c0_115, %c0_116] : memref<1x18x18x8xf32, #tpu.memory_space<vmem>>, vector<1x1x18x8xf32>
    tpu.vector_store %arg10[%c0_113, %c17_114, %c0_115, %c0_116], %80 {strides = array<i32>} : memref<1x18x18x8xf32, #tpu.memory_space<vmem>>, vector<1x1x18x8xf32>,
    %c0_117 = arith.constant 0 : index
    %c1_118 = arith.constant 1 : index
    %c0_119 = arith.constant 0 : index
    %c0_120 = arith.constant 0 : index
    %84 = vector.load %arg10[%c0_117, %c1_118, %c0_119, %c0_120] : memref<1x18x18x8xf32, #tpu.memory_space<vmem>>, vector<1x16x1x8xf32>
    tpu.vector_store %arg10[%c0_117, %c1_118, %c0_119, %c0_120], %81 {strides = array<i32>} : memref<1x18x18x8xf32, #tpu.memory_space<vmem>>, vector<1x16x1x8xf32>,
    %c0_121 = arith.constant 0 : index
    %c1_122 = arith.constant 1 : index
    %c17_123 = arith.constant 17 : index
    %c0_124 = arith.constant 0 : index
    %85 = vector.load %arg10[%c0_121, %c1_122, %c17_123, %c0_124] : memref<1x18x18x8xf32, #tpu.memory_space<vmem>>, vector<1x16x1x8xf32>
    tpu.vector_store %arg10[%c0_121, %c1_122, %c17_123, %c0_124], %81 {strides = array<i32>} : memref<1x18x18x8xf32, #tpu.memory_space<vmem>>, vector<1x16x1x8xf32>,
    %86 = vector.shape_cast %79 : vector<256x8xf32> to vector<1x16x16x8xf32>
    %c0_125 = arith.constant 0 : index
    %c1_126 = arith.constant 1 : index
    %c1_127 = arith.constant 1 : index
    %c0_128 = arith.constant 0 : index
    %87 = vector.load %arg10[%c0_125, %c1_126, %c1_127, %c0_128] : memref<1x18x18x8xf32, #tpu.memory_space<vmem>>, vector<1x16x16x8xf32>
    tpu.vector_store %arg10[%c0_125, %c1_126, %c1_127, %c0_128], %86 {strides = array<i32>} : memref<1x18x18x8xf32, #tpu.memory_space<vmem>>, vector<1x16x16x8xf32>,
    %cst_129 = arith.constant 0.000000e+00 : f32
    %88 = vector.broadcast %cst_129 : f32 to vector<256x8xf32>
    %c0_130 = arith.constant 0 : index
    %c0_131 = arith.constant 0 : index
    %c0_132 = arith.constant 0 : index
    %c0_133 = arith.constant 0 : index
    %89 = vector.load %arg10[%c0_130, %c0_131, %c0_132, %c0_133] : memref<1x18x18x8xf32, #tpu.memory_space<vmem>>, vector<1x16x16x8xf32>
    %90 = vector.shape_cast %89 : vector<1x16x16x8xf32> to vector<256x8xf32>
    %91 = arith.truncf %90 : vector<256x8xf32> to vector<256x8xbf16>
    %c0_134 = arith.constant 0 : index
    %c0_135 = arith.constant 0 : index
    %c0_136 = arith.constant 0 : index
    %c0_137 = arith.constant 0 : index
    %92 = vector.load %arg4[%c0_134, %c0_135, %c0_136, %c0_137] : memref<3x3x8x8xbf16, #tpu.memory_space<vmem>>, vector<1x1x8x8xbf16>
    %93 = vector.shape_cast %92 : vector<1x1x8x8xbf16> to vector<8x8xbf16>
    %cst_138 = arith.constant dense<0.000000e+00> : vector<256x8xf32>
    %94 = tpu.matmul %91, %93, %cst_138 {dimension_numbers = #tpu.dot_dimension_numbers<[1], [0], [0], [1], [0, 0, 1, 1], [], []>} : vector<256x8xbf16>, vector<8x8xbf16>, vector<256x8xf32> -> vector<256x8xf32>
    %95 = arith.addf %88, %94 : vector<256x8xf32>
    %c0_139 = arith.constant 0 : index
    %c0_140 = arith.constant 0 : index
    %c1_141 = arith.constant 1 : index
    %c0_142 = arith.constant 0 : index
    %96 = vector.load %arg10[%c0_139, %c0_140, %c1_141, %c0_142] : memref<1x18x18x8xf32, #tpu.memory_space<vmem>>, vector<1x16x16x8xf32>
    %97 = vector.shape_cast %96 : vector<1x16x16x8xf32> to vector<256x8xf32>
    %98 = arith.truncf %97 : vector<256x8xf32> to vector<256x8xbf16>
    %c0_143 = arith.constant 0 : index
    %c1_144 = arith.constant 1 : index
    %c0_145 = arith.constant 0 : index
    %c0_146 = arith.constant 0 : index
    %99 = vector.load %arg4[%c0_143, %c1_144, %c0_145, %c0_146] : memref<3x3x8x8xbf16, #tpu.memory_space<vmem>>, vector<1x1x8x8xbf16>
    %100 = vector.shape_cast %99 : vector<1x1x8x8xbf16> to vector<8x8xbf16>
    %cst_147 = arith.constant dense<0.000000e+00> : vector<256x8xf32>
    %101 = tpu.matmul %98, %100, %cst_147 {dimension_numbers = #tpu.dot_dimension_numbers<[1], [0], [0], [1], [0, 0, 1, 1], [], []>} : vector<256x8xbf16>, vector<8x8xbf16>, vector<256x8xf32> -> vector<256x8xf32>
    %102 = arith.addf %95, %101 : vector<256x8xf32>
    %c0_148 = arith.constant 0 : index
    %c0_149 = arith.constant 0 : index
    %c2_150 = arith.constant 2 : index
    %c0_151 = arith.constant 0 : index
    %103 = vector.load %arg10[%c0_148, %c0_149, %c2_150, %c0_151] : memref<1x18x18x8xf32, #tpu.memory_space<vmem>>, vector<1x16x16x8xf32>
    %104 = vector.shape_cast %103 : vector<1x16x16x8xf32> to vector<256x8xf32>
    %105 = arith.truncf %104 : vector<256x8xf32> to vector<256x8xbf16>
    %c0_152 = arith.constant 0 : index
    %c2_153 = arith.constant 2 : index
    %c0_154 = arith.constant 0 : index
    %c0_155 = arith.constant 0 : index
    %106 = vector.load %arg4[%c0_152, %c2_153, %c0_154, %c0_155] : memref<3x3x8x8xbf16, #tpu.memory_space<vmem>>, vector<1x1x8x8xbf16>
    %107 = vector.shape_cast %106 : vector<1x1x8x8xbf16> to vector<8x8xbf16>
    %cst_156 = arith.constant dense<0.000000e+00> : vector<256x8xf32>
    %108 = tpu.matmul %105, %107, %cst_156 {dimension_numbers = #tpu.dot_dimension_numbers<[1], [0], [0], [1], [0, 0, 1, 1], [], []>} : vector<256x8xbf16>, vector<8x8xbf16>, vector<256x8xf32> -> vector<256x8xf32>
    %109 = arith.addf %102, %108 : vector<256x8xf32>
    %c0_157 = arith.constant 0 : index
    %c1_158 = arith.constant 1 : index
    %c0_159 = arith.constant 0 : index
    %c0_160 = arith.constant 0 : index
    %110 = vector.load %arg10[%c0_157, %c1_158, %c0_159, %c0_160] : memref<1x18x18x8xf32, #tpu.memory_space<vmem>>, vector<1x16x16x8xf32>
    %111 = vector.shape_cast %110 : vector<1x16x16x8xf32> to vector<256x8xf32>
    %112 = arith.truncf %111 : vector<256x8xf32> to vector<256x8xbf16>
    %c1_161 = arith.constant 1 : index
    %c0_162 = arith.constant 0 : index
    %c0_163 = arith.constant 0 : index
    %c0_164 = arith.constant 0 : index
    %113 = vector.load %arg4[%c1_161, %c0_162, %c0_163, %c0_164] : memref<3x3x8x8xbf16, #tpu.memory_space<vmem>>, vector<1x1x8x8xbf16>
    %114 = vector.shape_cast %113 : vector<1x1x8x8xbf16> to vector<8x8xbf16>
    %cst_165 = arith.constant dense<0.000000e+00> : vector<256x8xf32>
    %115 = tpu.matmul %112, %114, %cst_165 {dimension_numbers = #tpu.dot_dimension_numbers<[1], [0], [0], [1], [0, 0, 1, 1], [], []>} : vector<256x8xbf16>, vector<8x8xbf16>, vector<256x8xf32> -> vector<256x8xf32>
    %116 = arith.addf %109, %115 : vector<256x8xf32>
    %c0_166 = arith.constant 0 : index
    %c1_167 = arith.constant 1 : index
    %c1_168 = arith.constant 1 : index
    %c0_169 = arith.constant 0 : index
    %117 = vector.load %arg10[%c0_166, %c1_167, %c1_168, %c0_169] : memref<1x18x18x8xf32, #tpu.memory_space<vmem>>, vector<1x16x16x8xf32>
    %118 = vector.shape_cast %117 : vector<1x16x16x8xf32> to vector<256x8xf32>
    %119 = arith.truncf %118 : vector<256x8xf32> to vector<256x8xbf16>
    %c1_170 = arith.constant 1 : index
    %c1_171 = arith.constant 1 : index
    %c0_172 = arith.constant 0 : index
    %c0_173 = arith.constant 0 : index
    %120 = vector.load %arg4[%c1_170, %c1_171, %c0_172, %c0_173] : memref<3x3x8x8xbf16, #tpu.memory_space<vmem>>, vector<1x1x8x8xbf16>
    %121 = vector.shape_cast %120 : vector<1x1x8x8xbf16> to vector<8x8xbf16>
    %cst_174 = arith.constant dense<0.000000e+00> : vector<256x8xf32>
    %122 = tpu.matmul %119, %121, %cst_174 {dimension_numbers = #tpu.dot_dimension_numbers<[1], [0], [0], [1], [0, 0, 1, 1], [], []>} : vector<256x8xbf16>, vector<8x8xbf16>, vector<256x8xf32> -> vector<256x8xf32>
    %123 = arith.addf %116, %122 : vector<256x8xf32>
    %c0_175 = arith.constant 0 : index
    %c1_176 = arith.constant 1 : index
    %c2_177 = arith.constant 2 : index
    %c0_178 = arith.constant 0 : index
    %124 = vector.load %arg10[%c0_175, %c1_176, %c2_177, %c0_178] : memref<1x18x18x8xf32, #tpu.memory_space<vmem>>, vector<1x16x16x8xf32>
    %125 = vector.shape_cast %124 : vector<1x16x16x8xf32> to vector<256x8xf32>
    %126 = arith.truncf %125 : vector<256x8xf32> to vector<256x8xbf16>
    %c1_179 = arith.constant 1 : index
    %c2_180 = arith.constant 2 : index
    %c0_181 = arith.constant 0 : index
    %c0_182 = arith.constant 0 : index
    %127 = vector.load %arg4[%c1_179, %c2_180, %c0_181, %c0_182] : memref<3x3x8x8xbf16, #tpu.memory_space<vmem>>, vector<1x1x8x8xbf16>
    %128 = vector.shape_cast %127 : vector<1x1x8x8xbf16> to vector<8x8xbf16>
    %cst_183 = arith.constant dense<0.000000e+00> : vector<256x8xf32>
    %129 = tpu.matmul %126, %128, %cst_183 {dimension_numbers = #tpu.dot_dimension_numbers<[1], [0], [0], [1], [0, 0, 1, 1], [], []>} : vector<256x8xbf16>, vector<8x8xbf16>, vector<256x8xf32> -> vector<256x8xf32>
    %130 = arith.addf %123, %129 : vector<256x8xf32>
    %c0_184 = arith.constant 0 : index
    %c2_185 = arith.constant 2 : index
    %c0_186 = arith.constant 0 : index
    %c0_187 = arith.constant 0 : index
    %131 = vector.load %arg10[%c0_184, %c2_185, %c0_186, %c0_187] : memref<1x18x18x8xf32, #tpu.memory_space<vmem>>, vector<1x16x16x8xf32>
    %132 = vector.shape_cast %131 : vector<1x16x16x8xf32> to vector<256x8xf32>
    %133 = arith.truncf %132 : vector<256x8xf32> to vector<256x8xbf16>
    %c2_188 = arith.constant 2 : index
    %c0_189 = arith.constant 0 : index
    %c0_190 = arith.constant 0 : index
    %c0_191 = arith.constant 0 : index
    %134 = vector.load %arg4[%c2_188, %c0_189, %c0_190, %c0_191] : memref<3x3x8x8xbf16, #tpu.memory_space<vmem>>, vector<1x1x8x8xbf16>
    %135 = vector.shape_cast %134 : vector<1x1x8x8xbf16> to vector<8x8xbf16>
    %cst_192 = arith.constant dense<0.000000e+00> : vector<256x8xf32>
    %136 = tpu.matmul %133, %135, %cst_192 {dimension_numbers = #tpu.dot_dimension_numbers<[1], [0], [0], [1], [0, 0, 1, 1], [], []>} : vector<256x8xbf16>, vector<8x8xbf16>, vector<256x8xf32> -> vector<256x8xf32>
    %137 = arith.addf %130, %136 : vector<256x8xf32>
    %c0_193 = arith.constant 0 : index
    %c2_194 = arith.constant 2 : index
    %c1_195 = arith.constant 1 : index
    %c0_196 = arith.constant 0 : index
    %138 = vector.load %arg10[%c0_193, %c2_194, %c1_195, %c0_196] : memref<1x18x18x8xf32, #tpu.memory_space<vmem>>, vector<1x16x16x8xf32>
    %139 = vector.shape_cast %138 : vector<1x16x16x8xf32> to vector<256x8xf32>
    %140 = arith.truncf %139 : vector<256x8xf32> to vector<256x8xbf16>
    %c2_197 = arith.constant 2 : index
    %c1_198 = arith.constant 1 : index
    %c0_199 = arith.constant 0 : index
    %c0_200 = arith.constant 0 : index
    %141 = vector.load %arg4[%c2_197, %c1_198, %c0_199, %c0_200] : memref<3x3x8x8xbf16, #tpu.memory_space<vmem>>, vector<1x1x8x8xbf16>
    %142 = vector.shape_cast %141 : vector<1x1x8x8xbf16> to vector<8x8xbf16>
    %cst_201 = arith.constant dense<0.000000e+00> : vector<256x8xf32>
    %143 = tpu.matmul %140, %142, %cst_201 {dimension_numbers = #tpu.dot_dimension_numbers<[1], [0], [0], [1], [0, 0, 1, 1], [], []>} : vector<256x8xbf16>, vector<8x8xbf16>, vector<256x8xf32> -> vector<256x8xf32>
    %144 = arith.addf %137, %143 : vector<256x8xf32>
    %c0_202 = arith.constant 0 : index
    %c2_203 = arith.constant 2 : index
    %c2_204 = arith.constant 2 : index
    %c0_205 = arith.constant 0 : index
    %145 = vector.load %arg10[%c0_202, %c2_203, %c2_204, %c0_205] : memref<1x18x18x8xf32, #tpu.memory_space<vmem>>, vector<1x16x16x8xf32>
    %146 = vector.shape_cast %145 : vector<1x16x16x8xf32> to vector<256x8xf32>
    %147 = arith.truncf %146 : vector<256x8xf32> to vector<256x8xbf16>
    %c2_206 = arith.constant 2 : index
    %c2_207 = arith.constant 2 : index
    %c0_208 = arith.constant 0 : index
    %c0_209 = arith.constant 0 : index
    %148 = vector.load %arg4[%c2_206, %c2_207, %c0_208, %c0_209] : memref<3x3x8x8xbf16, #tpu.memory_space<vmem>>, vector<1x1x8x8xbf16>
    %149 = vector.shape_cast %148 : vector<1x1x8x8xbf16> to vector<8x8xbf16>
    %cst_210 = arith.constant dense<0.000000e+00> : vector<256x8xf32>
    %150 = tpu.matmul %147, %149, %cst_210 {dimension_numbers = #tpu.dot_dimension_numbers<[1], [0], [0], [1], [0, 0, 1, 1], [], []>} : vector<256x8xbf16>, vector<8x8xbf16>, vector<256x8xf32> -> vector<256x8xf32>
    %151 = arith.addf %144, %150 : vector<256x8xf32>
    %152 = vector.shape_cast %0 : vector<1x16x16x4xbf16> to vector<256x4xbf16>
    %c0_211 = arith.constant 0 : index
    %c0_212 = arith.constant 0 : index
    %153 = vector.load %arg6[%c0_211, %c0_212] : memref<4x8xbf16, #tpu.memory_space<vmem>>, vector<4x8xbf16>
    %cst_213 = arith.constant dense<0.000000e+00> : vector<256x8xf32>
    %154 = tpu.matmul %152, %153, %cst_213 {dimension_numbers = #tpu.dot_dimension_numbers<[1], [0], [0], [1], [0, 0, 1, 1], [], []>} : vector<256x4xbf16>, vector<4x8xbf16>, vector<256x8xf32> -> vector<256x8xf32>
    %c0_214 = arith.constant 0 : index
    %c0_215 = arith.constant 0 : index
    %155 = vector.load %arg5[%c0_214, %c0_215] : memref<1x8xf32, #tpu.memory_space<vmem>>, vector<1x8xf32>
    %c0_216 = arith.constant 0 : index
    %c0_217 = arith.constant 0 : index
    %156 = vector.load %arg7[%c0_216, %c0_217] : memref<1x8xf32, #tpu.memory_space<vmem>>, vector<1x8xf32>
    %157 = arith.addf %155, %156 : vector<1x8xf32>
    %158 = arith.addf %151, %154 : vector<256x8xf32>
    %159 = vector.broadcast %157 : vector<1x8xf32> to vector<256x8xf32>
    %160 = arith.addf %158, %159 : vector<256x8xf32>
    %c0_218 = arith.constant 0 : index
    %c0_219 = arith.constant 0 : index
    %161 = vector.load %arg11[%c0_218, %c0_219] : memref<256x8xf32, #tpu.memory_space<vmem>>, vector<256x8xf32>
    tpu.vector_store %arg11[%c0_218, %c0_219], %160 {strides = array<i32>} : memref<256x8xf32, #tpu.memory_space<vmem>>, vector<256x8xf32>,
    %c0_220 = arith.constant 0 : index
    %c0_221 = arith.constant 0 : index
    %162 = tpu.strided_load %arg11[%c0_220, %c0_221] {strides = array<i32: 2, 1>} : memref<256x8xf32, #tpu.memory_space<vmem>>, vector<128x8xf32>
    %c1_222 = arith.constant 1 : index
    %c0_223 = arith.constant 0 : index
    %163 = tpu.strided_load %arg11[%c1_222, %c0_223] {strides = array<i32: 2, 1>} : memref<256x8xf32, #tpu.memory_space<vmem>>, vector<128x8xf32>
    %164 = arith.addf %162, %163 : vector<128x8xf32>
    %165 = vector.shape_cast %164 : vector<128x8xf32> to vector<8x2x8x8xf32>
    %166 = vector.extract_strided_slice %165 {offsets = [0, 0, 0, 0], sizes = [8, 1, 8, 8], strides = [1, 1, 1, 1]} : vector<8x2x8x8xf32> to vector<8x1x8x8xf32>
    %167 = vector.shape_cast %166 : vector<8x1x8x8xf32> to vector<8x8x8xf32>
    %168 = vector.extract_strided_slice %165 {offsets = [0, 1, 0, 0], sizes = [8, 1, 8, 8], strides = [1, 1, 1, 1]} : vector<8x2x8x8xf32> to vector<8x1x8x8xf32>
    %169 = vector.shape_cast %168 : vector<8x1x8x8xf32> to vector<8x8x8xf32>
    %170 = arith.addf %167, %169 : vector<8x8x8xf32>
    %cst_224 = arith.constant 2.500000e-01 : f32
    %171 = vector.broadcast %cst_224 : f32 to vector<8x8x8xf32>
    %172 = arith.mulf %170, %171 : vector<8x8x8xf32>
    %173 = vector.shape_cast %172 : vector<8x8x8xf32> to vector<1x8x8x8xf32>
    %c0_225 = arith.constant 0 : index
    %c0_226 = arith.constant 0 : index
    %c0_227 = arith.constant 0 : index
    %c0_228 = arith.constant 0 : index
    %174 = vector.load %arg8[%c0_225, %c0_226, %c0_227, %c0_228] : memref<1x8x8x8xf32, #tpu.memory_space<vmem>>, vector<1x8x8x8xf32>
    tpu.vector_store %arg8[%c0_225, %c0_226, %c0_227, %c0_228], %173 {strides = array<i32>} : memref<1x8x8x8xf32, #tpu.memory_space<vmem>>, vector<1x8x8x8xf32>,
    return
  }
  func.func @transform_0(%arg0: i32) -> (i32, i32, i32, i32) {
    %c0_i32 = arith.constant 0 : i32
    %c0_i32_0 = arith.constant 0 : i32
    %c0_i32_1 = arith.constant 0 : i32
    %c0_i32_2 = arith.constant 0 : i32
    return %arg0, %c0_i32, %c0_i32_0, %c0_i32_1 : i32, i32, i32, i32
  }
  func.func @transform_1(%arg0: i32) -> (i32, i32, i32, i32) {
    %c0_i32 = arith.constant 0 : i32
    %c0_i32_0 = arith.constant 0 : i32
    %c0_i32_1 = arith.constant 0 : i32
    %c0_i32_2 = arith.constant 0 : i32
    %c0_i32_3 = arith.constant 0 : i32
    return %c0_i32, %c0_i32_0, %c0_i32_1, %c0_i32_2 : i32, i32, i32, i32
  }
  func.func @transform_2(%arg0: i32) -> (i32, i32) {
    %c0_i32 = arith.constant 0 : i32
    %c0_i32_0 = arith.constant 0 : i32
    %c0_i32_1 = arith.constant 0 : i32
    return %c0_i32, %c0_i32_0 : i32, i32
  }
  func.func @transform_3(%arg0: i32) -> (i32, i32, i32, i32) {
    %c0_i32 = arith.constant 0 : i32
    %c0_i32_0 = arith.constant 0 : i32
    %c0_i32_1 = arith.constant 0 : i32
    %c0_i32_2 = arith.constant 0 : i32
    %c0_i32_3 = arith.constant 0 : i32
    return %c0_i32, %c0_i32_0, %c0_i32_1, %c0_i32_2 : i32, i32, i32, i32
  }
  func.func @transform_4(%arg0: i32) -> (i32, i32) {
    %c0_i32 = arith.constant 0 : i32
    %c0_i32_0 = arith.constant 0 : i32
    %c0_i32_1 = arith.constant 0 : i32
    return %c0_i32, %c0_i32_0 : i32, i32
  }
  func.func @transform_5(%arg0: i32) -> (i32, i32) {
    %c0_i32 = arith.constant 0 : i32
    %c0_i32_0 = arith.constant 0 : i32
    %c0_i32_1 = arith.constant 0 : i32
    return %c0_i32, %c0_i32_0 : i32, i32
  }
  func.func @transform_6(%arg0: i32) -> (i32, i32) {
    %c0_i32 = arith.constant 0 : i32
    %c0_i32_0 = arith.constant 0 : i32
    %c0_i32_1 = arith.constant 0 : i32
    return %c0_i32, %c0_i32_0 : i32, i32
  }
  func.func @transform_7(%arg0: i32) -> (i32, i32, i32, i32) {
    %c0_i32 = arith.constant 0 : i32
    %c0_i32_0 = arith.constant 0 : i32
    %c0_i32_1 = arith.constant 0 : i32
    %c0_i32_2 = arith.constant 0 : i32
    return %arg0, %c0_i32, %c0_i32_0, %c0_i32_1 : i32, i32, i32, i32
  }
}

</mosaic_0001>

<llo_original>
// kernel: tpu_custom_call.1
$region0: #{tpu_custom_call.1}
  #allocation0 [shape = 'u32[]', space=smem, size = 0x4, offset = 0x4, fixed_abs, tag = 'smem constant byte address 0x4 - core index']
  #allocation1 [shape = 'u32[144,128]{1,0:T(1,128)}', space=vmem, size = 0x12000, scoped, tag = 'internal scratch']
  #allocation2 [shape = 'f32[1,18,18,4]{3,2,1,0:T(8,128)}', space=vmem, size = 0x36000, scoped, tag = 'scratch operand']
  #allocation3 [shape = 'f32[1,18,18,8]{3,2,1,0:T(8,128)}', space=vmem, size = 0x36000, scoped, tag = 'scratch operand']
  #allocation4 [shape = 'f32[256,8]{1,0:T(8,128)}', space=vmem, size = 0x20000, scoped, tag = 'scratch operand']
  %s0 = inlined_call_operand.vmem [shape: bf16[2,16,16,4], index: 0, kind: input, shape index: {}]
  %s1 = inlined_call_operand.vmem [shape: bf16[3,3,4,8], index: 1, kind: input, shape index: {}]
  %s2 = inlined_call_operand.vmem [shape: f32[1,8], index: 2, kind: input, shape index: {}]
  %s3 = inlined_call_operand.vmem [shape: bf16[3,3,8,8], index: 3, kind: input, shape index: {}]
  %s4 = inlined_call_operand.vmem [shape: f32[1,8], index: 4, kind: input, shape index: {}]
  %s5 = inlined_call_operand.vmem [shape: bf16[4,8], index: 5, kind: input, shape index: {}]
  %s6 = inlined_call_operand.vmem [shape: f32[1,8], index: 6, kind: input, shape index: {}]
  %s7 = inlined_call_operand.hbm [shape: f32[2,8,8,8], index: 7, kind: output, shape index: {}]
  %s8 = sld [smem:[#allocation0]]
  $region61: #{tpu_custom_call.1} parent=0
    _
  %s10 = ssub.s32 1, %s8
  %s11 = scalar_select 0, %s10, %s8
  $region1: #{tpu_custom_call.1} parent=0
    #allocation5 [shape = 'u8[65536]{0}', space=vmem, size = 0x10000, scoped, tag = 'output window, operand 0']
    #allocation6 [shape = 's32[2]{0}', space=sflag, size = 0x8, scoped, tag = 'scoped memory for tpu_custom_call.1']
    %12 = vsyncpa [#allocation6], 0
    %s13 = scalar_lea.sflag [#allocation6], 1
    %14 = vsyncpa %s13, 0
    loop: start=0, step=1, limit=4
    $region2: #{tpu_custom_call.1} parent=1 // loop_pre_header
      _
    $region3: #{tpu_custom_call.1} parent=1 // loop_header
      %s16 = sphi 0, %s20
      %p17 = scmp.ge.s32.totalorder %s16, 4
      %s26 = sphi 0, %s28
      %s29 = sphi 0, %s26
      %s30 = sphi 0, %s29
      %s46 = sphi 0, %s30
      %s50 = sphi 0, %s50
      %s52 = sphi 0, %s50
      %s53 = sphi 0, %s52
      %s67 = sphi 0, %s53
      %s71 = sphi 0, %s71
      %s73 = sphi 0, %s71
      %s74 = sphi 0, %s73
      %s88 = sphi 0, %s74
      %s92 = sphi 0, %s92
      %s94 = sphi 0, %s92
      %s95 = sphi 0, %s94
      %s109 = sphi 0, %s95
      %s113 = sphi 0, %s113
      %s115 = sphi 0, %s113
      %s116 = sphi 0, %s115
      %s130 = sphi 0, %s116
      %s134 = sphi 0, %s134
      %s136 = sphi 0, %s134
      %s137 = sphi 0, %s136
      %s151 = sphi 0, %s137
      %s155 = sphi 0, %s155
      %s157 = sphi 0, %s155
      %s158 = sphi 0, %s157
      %s172 = sphi 0, %s158
      %s178 = sphi 0, %s180
      %s181 = sphi 0, %s178
      %s182 = sphi 0, %s181
      %s198 = sphi 0, %s182
    $region4: #{tpu_custom_call.1} parent=1 // loop_header_branch
      %19 = sbr.rel (%p17) target = $region8
    $region5: #{tpu_custom_call.1} parent=1 // loop_body
      %s21 = ssub.s32 %s16, 1
      %s22 = ssub.s32 %s16, 2
      %s23 = sadd.s32 %s16, 1
      %s24 = ssub.s32 %s16, %s23
      %p25 = scmp.eq.s32.totalorder %s24, 0
      %s27 = sadd.s32 %s26, 1
      %s28 = scalar_select %p25, %s26, %s27
      %p31 = pneg %p25
      %p32 = scmp.eq.s32.totalorder %s16, 1
      %p33 = por %p31, %p32
      %p34 = scmp.ne.s32.totalorder %s26, %s29
      %p35 = scmp.eq.s32.totalorder %s16, 0
      %p36 = por %p34, %p35
      %p37 = scmp.ne.s32.totalorder %s26, %s29
      %p38 = scmp.eq.s32.totalorder %s21, 1
      %p39 = por %p37, %p38
      %p40 = scmp.ne.s32.totalorder %s29, %s30
      %p41 = scmp.eq.s32.totalorder %s21, 0
      %p42 = por %p40, %p41
      %p43 = scmp.ne.s32.totalorder %s29, %s30
      %p44 = scmp.eq.s32.totalorder %s22, 1
      %p45 = por %p43, %p44
      %p47 = scmp.ne.s32.totalorder %s30, %s46
      %p48 = scmp.eq.s32.totalorder %s22, 0
      %p49 = por %p47, %p48
      %s51 = sadd.s32 %s50, 1
      %p54 = scmp.eq.s32.totalorder %s16, 1
      %p55 = scmp.ne.s32.totalorder %s50, %s52
      %p56 = scmp.eq.s32.totalorder %s16, 0
      %p57 = por %p55, %p56
      %p58 = scmp.ne.s32.totalorder %s50, %s52
      %p59 = scmp.eq.s32.totalorder %s21, 1
      %p60 = por %p58, %p59
      %p61 = scmp.ne.s32.totalorder %s52, %s53
      %p62 = scmp.eq.s32.totalorder %s21, 0
      %p63 = por %p61, %p62
      %p64 = scmp.ne.s32.totalorder %s52, %s53
      %p65 = scmp.eq.s32.totalorder %s22, 1
      %p66 = por %p64, %p65
      %p68 = scmp.ne.s32.totalorder %s53, %s67
      %p69 = scmp.eq.s32.totalorder %s22, 0
      %p70 = por %p68, %p69
      %s72 = sadd.s32 %s71, 1
      %p75 = scmp.eq.s32.totalorder %s16, 1
      %p76 = scmp.ne.s32.totalorder %s71, %s73
      %p77 = scmp.eq.s32.totalorder %s16, 0
      %p78 = por %p76, %p77
      %p79 = scmp.ne.s32.totalorder %s71, %s73
      %p80 = scmp.eq.s32.totalorder %s21, 1
      %p81 = por %p79, %p80
      %p82 = scmp.ne.s32.totalorder %s73, %s74
      %p83 = scmp.eq.s32.totalorder %s21, 0
      %p84 = por %p82, %p83
      %p85 = scmp.ne.s32.totalorder %s73, %s74
      %p86 = scmp.eq.s32.totalorder %s22, 1
      %p87 = por %p85, %p86
      %p89 = scmp.ne.s32.totalorder %s74, %s88
      %p90 = scmp.eq.s32.totalorder %s22, 0
      %p91 = por %p89, %p90
      %s93 = sadd.s32 %s92, 1
      %p96 = scmp.eq.s32.totalorder %s16, 1
      %p97 = scmp.ne.s32.totalorder %s92, %s94
      %p98 = scmp.eq.s32.totalorder %s16, 0
      %p99 = por %p97, %p98
      %p100 = scmp.ne.s32.totalorder %s92, %s94
      %p101 = scmp.eq.s32.totalorder %s21, 1
      %p102 = por %p100, %p101
      %p103 = scmp.ne.s32.totalorder %s94, %s95
      %p104 = scmp.eq.s32.totalorder %s21, 0
      %p105 = por %p103, %p104
      %p106 = scmp.ne.s32.totalorder %s94, %s95
      %p107 = scmp.eq.s32.totalorder %s22, 1
      %p108 = por %p106, %p107
      %p110 = scmp.ne.s32.totalorder %s95, %s109
      %p111 = scmp.eq.s32.totalorder %s22, 0
      %p112 = por %p110, %p111
      %s114 = sadd.s32 %s113, 1
      %p117 = scmp.eq.s32.totalorder %s16, 1
      %p118 = scmp.ne.s32.totalorder %s113, %s115
      %p119 = scmp.eq.s32.totalorder %s16, 0
      %p120 = por %p118, %p119
      %p121 = scmp.ne.s32.totalorder %s113, %s115
      %p122 = scmp.eq.s32.totalorder %s21, 1
      %p123 = por %p121, %p122
      %p124 = scmp.ne.s32.totalorder %s115, %s116
      %p125 = scmp.eq.s32.totalorder %s21, 0
      %p126 = por %p124, %p125
      %p127 = scmp.ne.s32.totalorder %s115, %s116
      %p128 = scmp.eq.s32.totalorder %s22, 1
      %p129 = por %p127, %p128
      %p131 = scmp.ne.s32.totalorder %s116, %s130
      %p132 = scmp.eq.s32.totalorder %s22, 0
      %p133 = por %p131, %p132
      %s135 = sadd.s32 %s134, 1
      %p138 = scmp.eq.s32.totalorder %s16, 1
      %p139 = scmp.ne.s32.totalorder %s134, %s136
      %p140 = scmp.eq.s32.totalorder %s16, 0
      %p141 = por %p139, %p140
      %p142 = scmp.ne.s32.totalorder %s134, %s136
      %p143 = scmp.eq.s32.totalorder %s21, 1
      %p144 = por %p142, %p143
      %p145 = scmp.ne.s32.totalorder %s136, %s137
      %p146 = scmp.eq.s32.totalorder %s21, 0
      %p147 = por %p145, %p146
      %p148 = scmp.ne.s32.totalorder %s136, %s137
      %p149 = scmp.eq.s32.totalorder %s22, 1
      %p150 = por %p148, %p149
      %p152 = scmp.ne.s32.totalorder %s137, %s151
      %p153 = scmp.eq.s32.totalorder %s22, 0
      %p154 = por %p152, %p153
      %s156 = sadd.s32 %s155, 1
      %p159 = scmp.eq.s32.totalorder %s16, 1
      %p160 = scmp.ne.s32.totalorder %s155, %s157
      %p161 = scmp.eq.s32.totalorder %s16, 0
      %p162 = por %p160, %p161
      %p163 = scmp.ne.s32.totalorder %s155, %s157
      %p164 = scmp.eq.s32.totalorder %s21, 1
      %p165 = por %p163, %p164
      %p166 = scmp.ne.s32.totalorder %s157, %s158
      %p167 = scmp.eq.s32.totalorder %s21, 0
      %p168 = por %p166, %p167
      %p169 = scmp.ne.s32.totalorder %s157, %s158
      %p170 = scmp.eq.s32.totalorder %s22, 1
      %p171 = por %p169, %p170
      %p173 = scmp.ne.s32.totalorder %s158, %s172
      %p174 = scmp.eq.s32.totalorder %s22, 0
      %p175 = por %p173, %p174
      %s176 = ssub.s32 %s16, %s23
      %p177 = scmp.eq.s32.totalorder %s176, 0
      %s179 = sadd.s32 %s178, 1
      %s180 = scalar_select %p177, %s178, %s179
      %p183 = pneg %p177
      %p184 = scmp.eq.s32.totalorder %s16, 1
      %p185 = por %p183, %p184
      %p186 = scmp.ne.s32.totalorder %s178, %s181
      %p187 = scmp.eq.s32.totalorder %s16, 0
      %p188 = por %p186, %p187
      %p189 = scmp.ne.s32.totalorder %s178, %s181
      %p190 = scmp.eq.s32.totalorder %s21, 1
      %p191 = por %p189, %p190
      %p192 = scmp.ne.s32.totalorder %s181, %s182
      %p193 = scmp.eq.s32.totalorder %s21, 0
      %p194 = por %p192, %p193
      %p195 = scmp.ne.s32.totalorder %s181, %s182
      %p196 = scmp.eq.s32.totalorder %s22, 1
      %p197 = por %p195, %p196
      %p199 = scmp.ne.s32.totalorder %s182, %s198
      %p200 = scmp.eq.s32.totalorder %s22, 0
      %p201 = por %p199, %p200
      %p202 = scmp.le.s32.totalorder 1, %s16
      %p203 = scmp.lt.s32.totalorder %s16, 3
      %p204 = pnand %p202, %p203
      %p205 = pneg %p204
      // Predicated region
      $region9: #{tpu_custom_call.1} parent=5 // pred_check
        _
      $region10: #{tpu_custom_call.1} parent=5 // pred_check_branch
        %207 = sbr.rel (%p204) target = $region12
      $region11: #{tpu_custom_call.1} parent=5 // pred_region
        %s208 = ssub.s32 %s16, 1
        // Predicated region
        $region13: #{tpu_custom_call.1} parent=11 // pred_check
          %p209 = pneg %p63
        $region14: #{tpu_custom_call.1} parent=11 // pred_check_branch
          %211 = sbr.rel (%p209) target = $region16
        $region15: #{tpu_custom_call.1} parent=11 // pred_region
          _
        $region16: #{tpu_custom_call.1} parent=11 // pred_fallthru
          _
        // Predicated region
        $region17: #{tpu_custom_call.1} parent=11 // pred_check
          %p212 = pneg %p84
        $region18: #{tpu_custom_call.1} parent=11 // pred_check_branch
          %214 = sbr.rel (%p212) target = $region20
        $region19: #{tpu_custom_call.1} parent=11 // pred_region
          _
        $region20: #{tpu_custom_call.1} parent=11 // pred_fallthru
          _
        // Predicated region
        $region21: #{tpu_custom_call.1} parent=11 // pred_check
          %p215 = pneg %p105
        $region22: #{tpu_custom_call.1} parent=11 // pred_check_branch
          %217 = sbr.rel (%p215) target = $region24
        $region23: #{tpu_custom_call.1} parent=11 // pred_region
          _
        $region24: #{tpu_custom_call.1} parent=11 // pred_fallthru
          _
        // Predicated region
        $region25: #{tpu_custom_call.1} parent=11 // pred_check
          %p218 = pneg %p126
        $region26: #{tpu_custom_call.1} parent=11 // pred_check_branch
          %220 = sbr.rel (%p218) target = $region28
        $region27: #{tpu_custom_call.1} parent=11 // pred_region
          _
        $region28: #{tpu_custom_call.1} parent=11 // pred_fallthru
          _
        // Predicated region
        $region29: #{tpu_custom_call.1} parent=11 // pred_check
          %p221 = pneg %p147
        $region30: #{tpu_custom_call.1} parent=11 // pred_check_branch
          %223 = sbr.rel (%p221) target = $region32
        $region31: #{tpu_custom_call.1} parent=11 // pred_region
          _
        $region32: #{tpu_custom_call.1} parent=11 // pred_fallthru
          _
        // Predicated region
        $region33: #{tpu_custom_call.1} parent=11 // pred_check
          %p224 = pneg %p168
        $region34: #{tpu_custom_call.1} parent=11 // pred_check_branch
          %226 = sbr.rel (%p224) target = $region36
        $region35: #{tpu_custom_call.1} parent=11 // pred_region
          _
        $region36: #{tpu_custom_call.1} parent=11 // pred_fallthru
          _
      $region12: #{tpu_custom_call.1} parent=5 // pred_fallthru
        _
      %p227 = scmp.lt.s32.totalorder %s16, 2
      // Predicated region
      $region37: #{tpu_custom_call.1} parent=5 // pred_check
        %p228 = pneg %p227
      $region38: #{tpu_custom_call.1} parent=5 // pred_check_branch
        %230 = sbr.rel (%p228) target = $region40
      $region39: #{tpu_custom_call.1} parent=5 // pred_region
        // Predicated region
        $region41: #{tpu_custom_call.1} parent=39 // pred_check
          %p231 = pneg %p36
        $region42: #{tpu_custom_call.1} parent=39 // pred_check_branch
          %233 = sbr.rel (%p231) target = $region44
        $region43: #{tpu_custom_call.1} parent=39 // pred_region
          %p234 = scmp.lt.s32.totalorder %s16, 1
          %s235 = scalar_select %p234, %s16, 1
          %s236 = smul.addr %s235, 32
          %s237 = smul.addr %s236, 4
          %s238 = scalar_lea.vmem %s0, %s237
        $region44: #{tpu_custom_call.1} parent=39 // pred_fallthru
          _
      $region40: #{tpu_custom_call.1} parent=5 // pred_fallthru
        _
      %p239 = scmp.le.s32.totalorder 1, %s16
      %p240 = scmp.lt.s32.totalorder %s16, 3
      %p241 = pnand %p239, %p240
      %p242 = pneg %p241
      // Predicated region
      $region45: #{tpu_custom_call.1} parent=5 // pred_check
        _
      $region46: #{tpu_custom_call.1} parent=5 // pred_check_branch
        %244 = sbr.rel (%p241) target = $region48
      $region47: #{tpu_custom_call.1} parent=5 // pred_region
        %s245 = ssub.s32 %s16, 1
        %p246 = scmp.lt.s32.totalorder %s21, 1
        %s247 = scalar_select %p246, %s21, 1
        %s248 = smul.addr %s247, 32
        %s249 = smul.addr %s248, 4
        %s250 = scalar_lea.vmem %s0, %s249
        %p251 = pneg %p42
        %p252 = pneg %p39
        %p253 = pneg %p63
        %p254 = pneg %p60
        %p255 = pneg %p84
        %p256 = pneg %p81
        %p257 = pneg %p105
        %p258 = pneg %p102
        %p259 = pneg %p126
        %p260 = pneg %p123
        %p261 = pneg %p147
        %p262 = pneg %p144
        %p263 = pneg %p168
        %p264 = pneg %p165
        %p265 = pneg %p194
        %p266 = pneg %p191
        %s267 = sand.u32 %s181, 1
        %s268 = scalar_lea.sflag [#allocation6], %s267
        %s269 = sand.u32 %s181, 1
        %s270 = smul.addr %s269, 64
        %s271 = scalar_lea.vmem [#allocation5], %s270
        %p272 = scmp.lt.s32.totalorder %s21, 1
        %s273 = scalar_select %p272, %s21, 1
        %s274 = smul.addr %s273, 32
        %s275 = smul.addr %s274, 4
        %s276 = scalar_lea.vmem %s0, %s275
        %v278 = vld [vmem:[%s276] sm:$0xf]
        %v279 = vld [vmem:[%s276 + $0x4] sm:$0xf]
        %v280 = vld [vmem:[%s276 + $0x8] sm:$0xf]
        %v281 = vld [vmem:[%s276 + $0xc] sm:$0xf]
        %v282 = vld [vmem:[%s276 + $0x10] sm:$0xf]
        %v283 = vld [vmem:[%s276 + $0x14] sm:$0xf]
        %v284 = vld [vmem:[%s276 + $0x18] sm:$0xf]
        %v285 = vld [vmem:[%s276 + $0x1c] sm:$0xf]
        %v286 = vld [vmem:[%s276 + $0x20] sm:$0xf]
        %v287 = vld [vmem:[%s276 + $0x24] sm:$0xf]
        %v288 = vld [vmem:[%s276 + $0x28] sm:$0xf]
        %v289 = vld [vmem:[%s276 + $0x2c] sm:$0xf]
        %v290 = vld [vmem:[%s276 + $0x30] sm:$0xf]
        %v291 = vld [vmem:[%s276 + $0x34] sm:$0xf]
        %v292 = vld [vmem:[%s276 + $0x38] sm:$0xf]
        %v293 = vld [vmem:[%s276 + $0x3c] sm:$0xf]
        %v294 = vld [vmem:[%s276 + $0x40] sm:$0xf]
        %v295 = vld [vmem:[%s276 + $0x44] sm:$0xf]
        %v296 = vld [vmem:[%s276 + $0x48] sm:$0xf]
        %v297 = vld [vmem:[%s276 + $0x4c] sm:$0xf]
        %v298 = vld [vmem:[%s276 + $0x50] sm:$0xf]
        %v299 = vld [vmem:[%s276 + $0x54] sm:$0xf]
        %v300 = vld [vmem:[%s276 + $0x58] sm:$0xf]
        %v301 = vld [vmem:[%s276 + $0x5c] sm:$0xf]
        %v302 = vld [vmem:[%s276 + $0x60] sm:$0xf]
        %v303 = vld [vmem:[%s276 + $0x64] sm:$0xf]
        %v304 = vld [vmem:[%s276 + $0x68] sm:$0xf]
        %v305 = vld [vmem:[%s276 + $0x6c] sm:$0xf]
        %v306 = vld [vmem:[%s276 + $0x70] sm:$0xf]
        %v307 = vld [vmem:[%s276 + $0x74] sm:$0xf]
        %v308 = vld [vmem:[%s276 + $0x78] sm:$0xf]
        %v309 = vld [vmem:[%s276 + $0x7c] sm:$0xf]
        %vm310 = vcmask 31744
        %311 = vst.msk [vmem:[#allocation2] sm:$0xff] %vm310, 0.0
        %312 = vst.msk [vmem:[#allocation2 + $0x8] sm:$0xff] %vm310, 0.0
        %vm313 = vcmask 25600
        %314 = vst.msk [vmem:[#allocation2 + $0x10] sm:$0x3] %vm313, 0.0
        %s315 = scalar_lea.vmem [#allocation2], 408
        %316 = vst.msk [vmem:[%s315] sm:$0xff] %vm310, 0.0
        %317 = vst.msk [vmem:[%s315 + $0x8] sm:$0xff] %vm310, 0.0
        %318 = vst.msk [vmem:[%s315 + $0x10] sm:$0x3] %vm313, 0.0
        %s319 = scalar_lea.vmem [#allocation2], 24
        %vm320 = vcmask 24576
        %321 = vst.msk [vmem:[%s319] sm:$0x1] %vm320, 0.0
        %322 = vst.msk [vmem:[%s319 + $0x18] sm:$0x1] %vm320, 0.0
        %323 = vst.msk [vmem:[%s319 + $0x30] sm:$0x1] %vm320, 0.0
        %324 = vst.msk [vmem:[%s319 + $0x48] sm:$0x1] %vm320, 0.0
        %325 = vst.msk [vmem:[%s319 + $0x60] sm:$0x1] %vm320, 0.0
        %326 = vst.msk [vmem:[%s319 + $0x78] sm:$0x1] %vm320, 0.0
        %327 = vst.msk [vmem:[%s319 + $0x90] sm:$0x1] %vm320, 0.0
        %328 = vst.msk [vmem:[%s319 + $0xa8] sm:$0x1] %vm320, 0.0
        %329 = vst.msk [vmem:[%s319 + $0xc0] sm:$0x1] %vm320, 0.0
        %330 = vst.msk [vmem:[%s319 + $0xd8] sm:$0x1] %vm320, 0.0
        %331 = vst.msk [vmem:[%s319 + $0xf0] sm:$0x1] %vm320, 0.0
        %332 = vst.msk [vmem:[%s319 + $0x108] sm:$0x1] %vm320, 0.0
        %333 = vst.msk [vmem:[%s319 + $0x120] sm:$0x1] %vm320, 0.0
        %334 = vst.msk [vmem:[%s319 + $0x138] sm:$0x1] %vm320, 0.0
        %335 = vst.msk [vmem:[%s319 + $0x150] sm:$0x1] %vm320, 0.0
        %336 = vst.msk [vmem:[%s319 + $0x168] sm:$0x1] %vm320, 0.0
        %337 = vst.msk [vmem:[%s319 + $0x11] sm:$0x1] %vm320, 0.0
        %338 = vst.msk [vmem:[%s319 + $0x29] sm:$0x1] %vm320, 0.0
        %339 = vst.msk [vmem:[%s319 + $0x41] sm:$0x1] %vm320, 0.0
        %340 = vst.msk [vmem:[%s319 + $0x59] sm:$0x1] %vm320, 0.0
        %341 = vst.msk [vmem:[%s319 + $0x71] sm:$0x1] %vm320, 0.0
        %342 = vst.msk [vmem:[%s319 + $0x89] sm:$0x1] %vm320, 0.0
        %343 = vst.msk [vmem:[%s319 + $0xa1] sm:$0x1] %vm320, 0.0
        %344 = vst.msk [vmem:[%s319 + $0xb9] sm:$0x1] %vm320, 0.0
        %345 = vst.msk [vmem:[%s319 + $0xd1] sm:$0x1] %vm320, 0.0
        %346 = vst.msk [vmem:[%s319 + $0xe9] sm:$0x1] %vm320, 0.0
        %347 = vst.msk [vmem:[%s319 + $0x101] sm:$0x1] %vm320, 0.0
        %348 = vst.msk [vmem:[%s319 + $0x119] sm:$0x1] %vm320, 0.0
        %349 = vst.msk [vmem:[%s319 + $0x131] sm:$0x1] %vm320, 0.0
        %350 = vst.msk [vmem:[%s319 + $0x149] sm:$0x1] %vm320, 0.0
        %351 = vst.msk [vmem:[%s319 + $0x161] sm:$0x1] %vm320, 0.0
        %352 = vst.msk [vmem:[%s319 + $0x179] sm:$0x1] %vm320, 0.0
        %v353 = vmax.bf16 %v278, 0
        %v354 = vmax.bf16 %v279, 0
        %v355 = vmax.bf16 %v280, 0
        %v356 = vmax.bf16 %v281, 0
        %v357 = vmax.bf16 %v282, 0
        %v358 = vmax.bf16 %v283, 0
        %v359 = vmax.bf16 %v284, 0
        %v360 = vmax.bf16 %v285, 0
        %v361 = vmax.bf16 %v286, 0
        %v362 = vmax.bf16 %v287, 0
        %v363 = vmax.bf16 %v288, 0
        %v364 = vmax.bf16 %v289, 0
        %v365 = vmax.bf16 %v290, 0
        %v366 = vmax.bf16 %v291, 0
        %v367 = vmax.bf16 %v292, 0
        %v368 = vmax.bf16 %v293, 0
        %v369 = vmax.bf16 %v294, 0
        %v370 = vmax.bf16 %v295, 0
        %v371 = vmax.bf16 %v296, 0
        %v372 = vmax.bf16 %v297, 0
        %v373 = vmax.bf16 %v298, 0
        %v374 = vmax.bf16 %v299, 0
        %v375 = vmax.bf16 %v300, 0
        %v376 = vmax.bf16 %v301, 0
        %v377 = vmax.bf16 %v302, 0
        %v378 = vmax.bf16 %v303, 0
        %v379 = vmax.bf16 %v304, 0
        %v380 = vmax.bf16 %v305, 0
        %v381 = vmax.bf16 %v306, 0
        %v382 = vmax.bf16 %v307, 0
        %v383 = vmax.bf16 %v308, 0
        %v384 = vmax.bf16 %v309, 0
        %v385 = vunpack.c.l.bf16 %v353
        %v386 = vunpack.c.l.bf16 %v354
        %v387 = vunpack.c.l.bf16 %v355
        %v388 = vunpack.c.l.bf16 %v356
        %v389 = vunpack.c.l.bf16 %v357
        %v390 = vunpack.c.l.bf16 %v358
        %v391 = vunpack.c.l.bf16 %v359
        %v392 = vunpack.c.l.bf16 %v360
        %v393 = vunpack.c.l.bf16 %v361
        %v394 = vunpack.c.l.bf16 %v362
        %v395 = vunpack.c.l.bf16 %v363
        %v396 = vunpack.c.l.bf16 %v364
        %v397 = vunpack.c.l.bf16 %v365
        %v398 = vunpack.c.l.bf16 %v366
        %v399 = vunpack.c.l.bf16 %v367
        %v400 = vunpack.c.l.bf16 %v368
        %v401 = vunpack.c.l.bf16 %v369
        %v402 = vunpack.c.l.bf16 %v370
        %v403 = vunpack.c.l.bf16 %v371
        %v404 = vunpack.c.l.bf16 %v372
        %v405 = vunpack.c.l.bf16 %v373
        %v406 = vunpack.c.l.bf16 %v374
        %v407 = vunpack.c.l.bf16 %v375
        %v408 = vunpack.c.l.bf16 %v376
        %v409 = vunpack.c.l.bf16 %v377
        %v410 = vunpack.c.l.bf16 %v378
        %v411 = vunpack.c.l.bf16 %v379
        %v412 = vunpack.c.l.bf16 %v380
        %v413 = vunpack.c.l.bf16 %v381
        %v414 = vunpack.c.l.bf16 %v382
        %v415 = vunpack.c.l.bf16 %v383
        %v416 = vunpack.c.l.bf16 %v384
        %417 = vst.msk [vmem:[%s319 + $0x1] sm:$0xff] %vm310, %v385
        %418 = vst.msk [vmem:[%s319 + $0x9] sm:$0xff] %vm310, %v386
        %419 = vst.msk [vmem:[%s319 + $0x19] sm:$0xff] %vm310, %v387
        %420 = vst.msk [vmem:[%s319 + $0x21] sm:$0xff] %vm310, %v388
        %421 = vst.msk [vmem:[%s319 + $0x31] sm:$0xff] %vm310, %v389
        %422 = vst.msk [vmem:[%s319 + $0x39] sm:$0xff] %vm310, %v390
        %423 = vst.msk [vmem:[%s319 + $0x49] sm:$0xff] %vm310, %v391
        %424 = vst.msk [vmem:[%s319 + $0x51] sm:$0xff] %vm310, %v392
        %425 = vst.msk [vmem:[%s319 + $0x61] sm:$0xff] %vm310, %v393
        %426 = vst.msk [vmem:[%s319 + $0x69] sm:$0xff] %vm310, %v394
        %427 = vst.msk [vmem:[%s319 + $0x79] sm:$0xff] %vm310, %v395
        %428 = vst.msk [vmem:[%s319 + $0x81] sm:$0xff] %vm310, %v396
        %429 = vst.msk [vmem:[%s319 + $0x91] sm:$0xff] %vm310, %v397
        %430 = vst.msk [vmem:[%s319 + $0x99] sm:$0xff] %vm310, %v398
        %431 = vst.msk [vmem:[%s319 + $0xa9] sm:$0xff] %vm310, %v399
        %432 = vst.msk [vmem:[%s319 + $0xb1] sm:$0xff] %vm310, %v400
        %433 = vst.msk [vmem:[%s319 + $0xc1] sm:$0xff] %vm310, %v401
        %434 = vst.msk [vmem:[%s319 + $0xc9] sm:$0xff] %vm310, %v402
        %435 = vst.msk [vmem:[%s319 + $0xd9] sm:$0xff] %vm310, %v403
        %436 = vst.msk [vmem:[%s319 + $0xe1] sm:$0xff] %vm310, %v404
        %437 = vst.msk [vmem:[%s319 + $0xf1] sm:$0xff] %vm310, %v405
        %438 = vst.msk [vmem:[%s319 + $0xf9] sm:$0xff] %vm310, %v406
        %439 = vst.msk [vmem:[%s319 + $0x109] sm:$0xff] %vm310, %v407
        %440 = vst.msk [vmem:[%s319 + $0x111] sm:$0xff] %vm310, %v408
        %441 = vst.msk [vmem:[%s319 + $0x121] sm:$0xff] %vm310, %v409
        %442 = vst.msk [vmem:[%s319 + $0x129] sm:$0xff] %vm310, %v410
        %443 = vst.msk [vmem:[%s319 + $0x139] sm:$0xff] %vm310, %v411
        %444 = vst.msk [vmem:[%s319 + $0x141] sm:$0xff] %vm310, %v412
        %445 = vst.msk [vmem:[%s319 + $0x151] sm:$0xff] %vm310, %v413
        %446 = vst.msk [vmem:[%s319 + $0x159] sm:$0xff] %vm310, %v414
        %447 = vst.msk [vmem:[%s319 + $0x169] sm:$0xff] %vm310, %v415
        %448 = vst.msk [vmem:[%s319 + $0x171] sm:$0xff] %vm310, %v416
        %v449 = vld [vmem:[#allocation2] sm:$0xff]
        %v450 = vld [vmem:[#allocation2 + $0x8] sm:$0xff]
        %v451 = vld [vmem:[#allocation2 + $0x18] sm:$0xff]
        %v452 = vld [vmem:[#allocation2 + $0x20] sm:$0xff]
        %v453 = vld [vmem:[#allocation2 + $0x30] sm:$0xff]
        %v454 = vld [vmem:[#allocation2 + $0x38] sm:$0xff]
        %v455 = vld [vmem:[#allocation2 + $0x48] sm:$0xff]
        %v456 = vld [vmem:[#allocation2 + $0x50] sm:$0xff]
        %v457 = vld [vmem:[#allocation2 + $0x60] sm:$0xff]
        %v458 = vld [vmem:[#allocation2 + $0x68] sm:$0xff]
        %v459 = vld [vmem:[#allocation2 + $0x78] sm:$0xff]
        %v460 = vld [vmem:[#allocation2 + $0x80] sm:$0xff]
        %v461 = vld [vmem:[#allocation2 + $0x90] sm:$0xff]
        %v462 = vld [vmem:[#allocation2 + $0x98] sm:$0xff]
        %v463 = vld [vmem:[#allocation2 + $0xa8] sm:$0xff]
        %v464 = vld [vmem:[#allocation2 + $0xb0] sm:$0xff]
        %v465 = vld [vmem:[#allocation2 + $0xc0] sm:$0xff]
        %v466 = vld [vmem:[#allocation2 + $0xc8] sm:$0xff]
        %v467 = vld [vmem:[#allocation2 + $0xd8] sm:$0xff]
        %v468 = vld [vmem:[#allocation2 + $0xe0] sm:$0xff]
        %v469 = vld [vmem:[#allocation2 + $0xf0] sm:$0xff]
        %v470 = vld [vmem:[#allocation2 + $0xf8] sm:$0xff]
        %v471 = vld [vmem:[#allocation2 + $0x108] sm:$0xff]
        %v472 = vld [vmem:[#allocation2 + $0x110] sm:$0xff]
        %v473 = vld [vmem:[#allocation2 + $0x120] sm:$0xff]
        %v474 = vld [vmem:[#allocation2 + $0x128] sm:$0xff]
        %v475 = vld [vmem:[#allocation2 + $0x138] sm:$0xff]
        %v476 = vld [vmem:[#allocation2 + $0x140] sm:$0xff]
        %v477 = vld [vmem:[#allocation2 + $0x150] sm:$0xff]
        %v478 = vld [vmem:[#allocation2 + $0x158] sm:$0xff]
        %v479 = vld [vmem:[#allocation2 + $0x168] sm:$0xff]
        %v480 = vld [vmem:[#allocation2 + $0x170] sm:$0xff]
        %v481 = vpack.c.bf16 %v450, %v449
        %v482 = vpack.c.bf16 %v452, %v451
        %v483 = vpack.c.bf16 %v454, %v453
        %v484 = vpack.c.bf16 %v456, %v455
        %v485 = vpack.c.bf16 %v458, %v457
        %v486 = vpack.c.bf16 %v460, %v459
        %v487 = vpack.c.bf16 %v462, %v461
        %v488 = vpack.c.bf16 %v464, %v463
        %v489 = vpack.c.bf16 %v466, %v465
        %v490 = vpack.c.bf16 %v468, %v467
        %v491 = vpack.c.bf16 %v470, %v469
        %v492 = vpack.c.bf16 %v472, %v471
        %v493 = vpack.c.bf16 %v474, %v473
        %v494 = vpack.c.bf16 %v476, %v475
        %v495 = vpack.c.bf16 %v478, %v477
        %v496 = vpack.c.bf16 %v480, %v479
        %v497 = vld [vmem:[%s1] sm:$0x3]
        %v498 = vld [vmem:[#allocation2 + $0x1] sm:$0xff]
        %v499 = vld [vmem:[#allocation2 + $0x9] sm:$0xff]
        %v500 = vld [vmem:[#allocation2 + $0x19] sm:$0xff]
        %v501 = vld [vmem:[#allocation2 + $0x21] sm:$0xff]
        %v502 = vld [vmem:[#allocation2 + $0x31] sm:$0xff]
        %v503 = vld [vmem:[#allocation2 + $0x39] sm:$0xff]
        %v504 = vld [vmem:[#allocation2 + $0x49] sm:$0xff]
        %v505 = vld [vmem:[#allocation2 + $0x51] sm:$0xff]
        %v506 = vld [vmem:[#allocation2 + $0x61] sm:$0xff]
        %v507 = vld [vmem:[#allocation2 + $0x69] sm:$0xff]
        %v508 = vld [vmem:[#allocation2 + $0x79] sm:$0xff]
        %v509 = vld [vmem:[#allocation2 + $0x81] sm:$0xff]
        %v510 = vld [vmem:[#allocation2 + $0x91] sm:$0xff]
        %v511 = vld [vmem:[#allocation2 + $0x99] sm:$0xff]
        %v512 = vld [vmem:[#allocation2 + $0xa9] sm:$0xff]
        %v513 = vld [vmem:[#allocation2 + $0xb1] sm:$0xff]
        %v514 = vld [vmem:[#allocation2 + $0xc1] sm:$0xff]
        %v515 = vld [vmem:[#allocation2 + $0xc9] sm:$0xff]
        %v516 = vld [vmem:[#allocation2 + $0xd9] sm:$0xff]
        %v517 = vld [vmem:[#allocation2 + $0xe1] sm:$0xff]
        %v518 = vld [vmem:[#allocation2 + $0xf1] sm:$0xff]
        %v519 = vld [vmem:[#allocation2 + $0xf9] sm:$0xff]
        %v520 = vld [vmem:[#allocation2 + $0x109] sm:$0xff]
        %v521 = vld [vmem:[#allocation2 + $0x111] sm:$0xff]
        %v522 = vld [vmem:[#allocation2 + $0x121] sm:$0xff]
        %v523 = vld [vmem:[#allocation2 + $0x129] sm:$0xff]
        %v524 = vld [vmem:[#allocation2 + $0x139] sm:$0xff]
        %v525 = vld [vmem:[#allocation2 + $0x141] sm:$0xff]
        %v526 = vld [vmem:[#allocation2 + $0x151] sm:$0xff]
        %v527 = vld [vmem:[#allocation2 + $0x159] sm:$0xff]
        %v528 = vld [vmem:[#allocation2 + $0x169] sm:$0xff]
        %v529 = vld [vmem:[#allocation2 + $0x171] sm:$0xff]
        %v530 = vpack.c.bf16 %v499, %v498
        %v531 = vpack.c.bf16 %v501, %v500
        %v532 = vpack.c.bf16 %v503, %v502
        %v533 = vpack.c.bf16 %v505, %v504
        %v534 = vpack.c.bf16 %v507, %v506
        %v535 = vpack.c.bf16 %v509, %v508
        %v536 = vpack.c.bf16 %v511, %v510
        %v537 = vpack.c.bf16 %v513, %v512
        %v538 = vpack.c.bf16 %v515, %v514
        %v539 = vpack.c.bf16 %v517, %v516
        %v540 = vpack.c.bf16 %v519, %v518
        %v541 = vpack.c.bf16 %v521, %v520
        %v542 = vpack.c.bf16 %v523, %v522
        %v543 = vpack.c.bf16 %v525, %v524
        %v544 = vpack.c.bf16 %v527, %v526
        %v545 = vpack.c.bf16 %v529, %v528
        %s546 = scalar_lea.vmem %s1, 2
        %v547 = vld [vmem:[%s546] sm:$0x3]
        %v549 = vsel %vm310, %v530, 0
        %v552 = vsel %vm310, %v531, 0
        %v555 = vsel %vm310, %v532, 0
        %v558 = vsel %vm310, %v533, 0
        %v561 = vsel %vm310, %v534, 0
        %v564 = vsel %vm310, %v535, 0
        %v567 = vsel %vm310, %v536, 0
        %v570 = vsel %vm310, %v537, 0
        %v573 = vsel %vm310, %v538, 0
        %v576 = vsel %vm310, %v539, 0
        %v579 = vsel %vm310, %v540, 0
        %v582 = vsel %vm310, %v541, 0
        %v585 = vsel %vm310, %v542, 0
        %v588 = vsel %vm310, %v543, 0
        %v591 = vsel %vm310, %v544, 0
        %v594 = vsel %vm310, %v545, 0
        %vm596 = vcmask 1041408
        %v598 = vsel %vm596, %v547, 0
        %600 = vmatprep.subr.bf16.mxu0 0
        %601 = vmatpush1.bf16.msra.mxu0 %v598
        %602 = vmatprep.subr.bf16.mxu0 0
        %603 = vmatpush1.bf16.msra.mxu0 0
        %604 = vmatprep.subr.bf16.mxu0 0
        %605 = vmatpush1.bf16.msra.mxu0 0
        %606 = vmatprep.subr.bf16.mxu0 0
        %607 = vmatpush1.bf16.msra.mxu0 0
        %608 = vmatprep.subr.bf16.mxu0 0
        %609 = vmatpush1.bf16.msra.mxu0 0
        %610 = vmatprep.subr.bf16.mxu0 0
        %611 = vmatpush1.bf16.msra.mxu0 0
        %612 = vmatprep.subr.bf16.mxu0 0
        %613 = vmatpush1.bf16.msra.mxu0 0
        %614 = vmatprep.subr.bf16.mxu0 0
        %615 = vmatpush1.bf16.msra.mxu0 0
        %616 = vmatprep.subr.bf16.mxu0 0
        %617 = vmatpush1.bf16.msra.mxu0 0
        %618 = vmatprep.subr.bf16.mxu0 0
        %619 = vmatpush1.bf16.msra.mxu0 0
        %620 = vmatprep.subr.bf16.mxu0 0
        %621 = vmatpush1.bf16.msra.mxu0 0
        %622 = vmatprep.subr.bf16.mxu0 0
        %623 = vmatpush1.bf16.msra.mxu0 0
        %624 = vmatprep.subr.bf16.mxu0 0
        %625 = vmatpush1.bf16.msra.mxu0 0
        %626 = vmatprep.subr.bf16.mxu0 0
        %627 = vmatpush1.bf16.msra.mxu0 0
        %628 = vmatprep.subr.bf16.mxu0 0
        %629 = vmatpush1.bf16.msra.mxu0 0
        %630 = vmatprep.subr.bf16.mxu0 0
        %631 = vmatpush1.bf16.msra.mxu0 0
        %632 = vmatprep.mubr.bf16.mxu0 0
        %633 = vmatmul.mubr.bf16.gmra.mrb[0].mxu0 %v549
        %v634 = vpop.f32.mrb[0].mxu0
        %v635 = vadd.f32 0.0, %v634
        %v636 = vpop.f32.mrb[0].mxu0
        %v637 = vpop.f32.mrb[0].mxu0
        %v638 = vadd.f32 0.0, %v637
        %v639 = vpop.f32.mrb[0].mxu0
        %640 = vmatprep.mubr.bf16.mxu0 0
        %641 = vmatmul.mubr.bf16.gmra.mrb[0].mxu0 %v552
        %v642 = vpop.f32.mrb[0].mxu0
        %v643 = vadd.f32 0.0, %v642
        %v644 = vpop.f32.mrb[0].mxu0
        %v645 = vpop.f32.mrb[0].mxu0
        %v646 = vadd.f32 0.0, %v645
        %v647 = vpop.f32.mrb[0].mxu0
        %648 = vmatprep.mubr.bf16.mxu0 0
        %649 = vmatmul.mubr.bf16.gmra.mrb[0].mxu0 %v555
        %v650 = vpop.f32.mrb[0].mxu0
        %v651 = vadd.f32 0.0, %v650
        %v652 = vpop.f32.mrb[0].mxu0
        %v653 = vpop.f32.mrb[0].mxu0
        %v654 = vadd.f32 0.0, %v653
        %v655 = vpop.f32.mrb[0].mxu0
        %656 = vmatprep.mubr.bf16.mxu0 0
        %657 = vmatmul.mubr.bf16.gmra.mrb[0].mxu0 %v558
        %v658 = vpop.f32.mrb[0].mxu0
        %v659 = vadd.f32 0.0, %v658
        %v660 = vpop.f32.mrb[0].mxu0
        %v661 = vpop.f32.mrb[0].mxu0
        %v662 = vadd.f32 0.0, %v661
        %v663 = vpop.f32.mrb[0].mxu0
        %664 = vmatprep.mubr.bf16.mxu0 0
        %665 = vmatmul.mubr.bf16.gmra.mrb[0].mxu0 %v561
        %v666 = vpop.f32.mrb[0].mxu0
        %v667 = vadd.f32 0.0, %v666
        %v668 = vpop.f32.mrb[0].mxu0
        %v669 = vpop.f32.mrb[0].mxu0
        %v670 = vadd.f32 0.0, %v669
        %v671 = vpop.f32.mrb[0].mxu0
        %672 = vmatprep.mubr.bf16.mxu0 0
        %673 = vmatmul.mubr.bf16.gmra.mrb[0].mxu0 %v564
        %v674 = vpop.f32.mrb[0].mxu0
        %v675 = vadd.f32 0.0, %v674
        %v676 = vpop.f32.mrb[0].mxu0
        %v677 = vpop.f32.mrb[0].mxu0
        %v678 = vadd.f32 0.0, %v677
        %v679 = vpop.f32.mrb[0].mxu0
        %680 = vmatprep.mubr.bf16.mxu0 0
        %681 = vmatmul.mubr.bf16.gmra.mrb[0].mxu0 %v567
        %v682 = vpop.f32.mrb[0].mxu0
        %v683 = vadd.f32 0.0, %v682
        %v684 = vpop.f32.mrb[0].mxu0
        %v685 = vpop.f32.mrb[0].mxu0
        %v686 = vadd.f32 0.0, %v685
        %v687 = vpop.f32.mrb[0].mxu0
        %688 = vmatprep.mubr.bf16.mxu0 0
        %689 = vmatmul.mubr.bf16.gmra.mrb[0].mxu0 %v570
        %v690 = vpop.f32.mrb[0].mxu0
        %v691 = vadd.f32 0.0, %v690
        %v692 = vpop.f32.mrb[0].mxu0
        %v693 = vpop.f32.mrb[0].mxu0
        %v694 = vadd.f32 0.0, %v693
        %v695 = vpop.f32.mrb[0].mxu0
        %696 = vmatprep.mubr.bf16.mxu0 0
        %697 = vmatmul.mubr.bf16.gmra.mrb[0].mxu0 %v573
        %v698 = vpop.f32.mrb[0].mxu0
        %v699 = vadd.f32 0.0, %v698
        %v700 = vpop.f32.mrb[0].mxu0
        %v701 = vpop.f32.mrb[0].mxu0
        %v702 = vadd.f32 0.0, %v701
        %v703 = vpop.f32.mrb[0].mxu0
        %704 = vmatprep.mubr.bf16.mxu0 0
        %705 = vmatmul.mubr.bf16.gmra.mrb[0].mxu0 %v576
        %v706 = vpop.f32.mrb[0].mxu0
        %v707 = vadd.f32 0.0, %v706
        %v708 = vpop.f32.mrb[0].mxu0
        %v709 = vpop.f32.mrb[0].mxu0
        %v710 = vadd.f32 0.0, %v709
        %v711 = vpop.f32.mrb[0].mxu0
        %712 = vmatprep.mubr.bf16.mxu0 0
        %713 = vmatmul.mubr.bf16.gmra.mrb[0].mxu0 %v579
        %v714 = vpop.f32.mrb[0].mxu0
        %v715 = vadd.f32 0.0, %v714
        %v716 = vpop.f32.mrb[0].mxu0
        %v717 = vpop.f32.mrb[0].mxu0
        %v718 = vadd.f32 0.0, %v717
        %v719 = vpop.f32.mrb[0].mxu0
        %720 = vmatprep.mubr.bf16.mxu0 0
        %721 = vmatmul.mubr.bf16.gmra.mrb[0].mxu0 %v582
        %v722 = vpop.f32.mrb[0].mxu0
        %v723 = vadd.f32 0.0, %v722
        %v724 = vpop.f32.mrb[0].mxu0
        %v725 = vpop.f32.mrb[0].mxu0
        %v726 = vadd.f32 0.0, %v725
        %v727 = vpop.f32.mrb[0].mxu0
        %728 = vmatprep.mubr.bf16.mxu0 0
        %729 = vmatmul.mubr.bf16.gmra.mrb[0].mxu0 %v585
        %v730 = vpop.f32.mrb[0].mxu0
        %v731 = vadd.f32 0.0, %v730
        %v732 = vpop.f32.mrb[0].mxu0
        %v733 = vpop.f32.mrb[0].mxu0
        %v734 = vadd.f32 0.0, %v733
        %v735 = vpop.f32.mrb[0].mxu0
        %736 = vmatprep.mubr.bf16.mxu0 0
        %737 = vmatmul.mubr.bf16.gmra.mrb[0].mxu0 %v588
        %v738 = vpop.f32.mrb[0].mxu0
        %v739 = vadd.f32 0.0, %v738
        %v740 = vpop.f32.mrb[0].mxu0
        %v741 = vpop.f32.mrb[0].mxu0
        %v742 = vadd.f32 0.0, %v741
        %v743 = vpop.f32.mrb[0].mxu0
        %744 = vmatprep.mubr.bf16.mxu0 0
        %745 = vmatmul.mubr.bf16.gmra.mrb[0].mxu0 %v591
        %v746 = vpop.f32.mrb[0].mxu0
        %v747 = vadd.f32 0.0, %v746
        %v748 = vpop.f32.mrb[0].mxu0
        %v749 = vpop.f32.mrb[0].mxu0
        %v750 = vadd.f32 0.0, %v749
        %v751 = vpop.f32.mrb[0].mxu0
        %752 = vmatprep.mubr.bf16.mxu0 0
        %753 = vmatmul.mubr.bf16.gmra.mrb[0].mxu0 %v594
        %v754 = vpop.f32.mrb[0].mxu0
        %v755 = vadd.f32 0.0, %v754
        %v756 = vpop.f32.mrb[0].mxu0
        %v757 = vpop.f32.mrb[0].mxu0
        %v758 = vadd.f32 0.0, %v757
        %v759 = vpop.f32.mrb[0].mxu0
        %760 = vdwg.mxu0
        %v762 = vsel %vm310, %v481, 0
        %v765 = vsel %vm310, %v482, 0
        %v768 = vsel %vm310, %v483, 0
        %v771 = vsel %vm310, %v484, 0
        %v774 = vsel %vm310, %v485, 0
        %v777 = vsel %vm310, %v486, 0
        %v780 = vsel %vm310, %v487, 0
        %v783 = vsel %vm310, %v488, 0
        %v786 = vsel %vm310, %v489, 0
        %v789 = vsel %vm310, %v490, 0
        %v792 = vsel %vm310, %v491, 0
        %v795 = vsel %vm310, %v492, 0
        %v798 = vsel %vm310, %v493, 0
        %v801 = vsel %vm310, %v494, 0
        %v804 = vsel %vm310, %v495, 0
        %v807 = vsel %vm310, %v496, 0
        %v810 = vsel %vm596, %v497, 0
        %812 = vmatprep.subr.bf16.mxu0 0
        %813 = vmatpush1.bf16.msra.mxu0 %v810
        %814 = vmatprep.subr.bf16.mxu0 0
        %815 = vmatpush1.bf16.msra.mxu0 0
        %816 = vmatprep.subr.bf16.mxu0 0
        %817 = vmatpush1.bf16.msra.mxu0 0
        %818 = vmatprep.subr.bf16.mxu0 0
        %819 = vmatpush1.bf16.msra.mxu0 0
        %820 = vmatprep.subr.bf16.mxu0 0
        %821 = vmatpush1.bf16.msra.mxu0 0
        %822 = vmatprep.subr.bf16.mxu0 0
        %823 = vmatpush1.bf16.msra.mxu0 0
        %824 = vmatprep.subr.bf16.mxu0 0
        %825 = vmatpush1.bf16.msra.mxu0 0
        %826 = vmatprep.subr.bf16.mxu0 0
        %827 = vmatpush1.bf16.msra.mxu0 0
        %828 = vmatprep.subr.bf16.mxu0 0
        %829 = vmatpush1.bf16.msra.mxu0 0
        %830 = vmatprep.subr.bf16.mxu0 0
        %831 = vmatpush1.bf16.msra.mxu0 0
        %832 = vmatprep.subr.bf16.mxu0 0
        %833 = vmatpush1.bf16.msra.mxu0 0
        %834 = vmatprep.subr.bf16.mxu0 0
        %835 = vmatpush1.bf16.msra.mxu0 0
        %836 = vmatprep.subr.bf16.mxu0 0
        %837 = vmatpush1.bf16.msra.mxu0 0
        %838 = vmatprep.subr.bf16.mxu0 0
        %839 = vmatpush1.bf16.msra.mxu0 0
        %840 = vmatprep.subr.bf16.mxu0 0
        %841 = vmatpush1.bf16.msra.mxu0 0
        %842 = vmatprep.subr.bf16.mxu0 0
        %843 = vmatpush1.bf16.msra.mxu0 0
        %844 = vmatprep.mubr.bf16.mxu0 0
        %845 = vmatmul.mubr.bf16.gmra.mrb[0].mxu0 %v762
        %v846 = vpop.f32.mrb[0].mxu0
        %v847 = vadd.f32 %v635, %v846
        %v848 = vpop.f32.mrb[0].mxu0
        %v849 = vpop.f32.mrb[0].mxu0
        %v850 = vadd.f32 %v638, %v849
        %v851 = vpop.f32.mrb[0].mxu0
        %852 = vmatprep.mubr.bf16.mxu0 0
        %853 = vmatmul.mubr.bf16.gmra.mrb[0].mxu0 %v765
        %v854 = vpop.f32.mrb[0].mxu0
        %v855 = vadd.f32 %v643, %v854
        %v856 = vpop.f32.mrb[0].mxu0
        %v857 = vpop.f32.mrb[0].mxu0
        %v858 = vadd.f32 %v646, %v857
        %v859 = vpop.f32.mrb[0].mxu0
        %860 = vmatprep.mubr.bf16.mxu0 0
        %861 = vmatmul.mubr.bf16.gmra.mrb[0].mxu0 %v768
        %v862 = vpop.f32.mrb[0].mxu0
        %v863 = vadd.f32 %v651, %v862
        %v864 = vpop.f32.mrb[0].mxu0
        %v865 = vpop.f32.mrb[0].mxu0
        %v866 = vadd.f32 %v654, %v865
        %v867 = vpop.f32.mrb[0].mxu0
        %868 = vmatprep.mubr.bf16.mxu0 0
        %869 = vmatmul.mubr.bf16.gmra.mrb[0].mxu0 %v771
        %v870 = vpop.f32.mrb[0].mxu0
        %v871 = vadd.f32 %v659, %v870
        %v872 = vpop.f32.mrb[0].mxu0
        %v873 = vpop.f32.mrb[0].mxu0
        %v874 = vadd.f32 %v662, %v873
        %v875 = vpop.f32.mrb[0].mxu0
        %876 = vmatprep.mubr.bf16.mxu0 0
        %877 = vmatmul.mubr.bf16.gmra.mrb[0].mxu0 %v774
        %v878 = vpop.f32.mrb[0].mxu0
        %v879 = vadd.f32 %v667, %v878
        %v880 = vpop.f32.mrb[0].mxu0
        %v881 = vpop.f32.mrb[0].mxu0
        %v882 = vadd.f32 %v670, %v881
        %v883 = vpop.f32.mrb[0].mxu0
        %884 = vmatprep.mubr.bf16.mxu0 0
        %885 = vmatmul.mubr.bf16.gmra.mrb[0].mxu0 %v777
        %v886 = vpop.f32.mrb[0].mxu0
        %v887 = vadd.f32 %v675, %v886
        %v888 = vpop.f32.mrb[0].mxu0
        %v889 = vpop.f32.mrb[0].mxu0
        %v890 = vadd.f32 %v678, %v889
        %v891 = vpop.f32.mrb[0].mxu0
        %892 = vmatprep.mubr.bf16.mxu0 0
        %893 = vmatmul.mubr.bf16.gmra.mrb[0].mxu0 %v780
        %v894 = vpop.f32.mrb[0].mxu0
        %v895 = vadd.f32 %v683, %v894
        %v896 = vpop.f32.mrb[0].mxu0
        %v897 = vpop.f32.mrb[0].mxu0
        %v898 = vadd.f32 %v686, %v897
        %v899 = vpop.f32.mrb[0].mxu0
        %900 = vmatprep.mubr.bf16.mxu0 0
        %901 = vmatmul.mubr.bf16.gmra.mrb[0].mxu0 %v783
        %v902 = vpop.f32.mrb[0].mxu0
        %v903 = vadd.f32 %v691, %v902
        %v904 = vpop.f32.mrb[0].mxu0
        %v905 = vpop.f32.mrb[0].mxu0
        %v906 = vadd.f32 %v694, %v905
        %v907 = vpop.f32.mrb[0].mxu0
        %908 = vmatprep.mubr.bf16.mxu0 0
        %909 = vmatmul.mubr.bf16.gmra.mrb[0].mxu0 %v786
        %v910 = vpop.f32.mrb[0].mxu0
        %v911 = vadd.f32 %v699, %v910
        %v912 = vpop.f32.mrb[0].mxu0
        %v913 = vpop.f32.mrb[0].mxu0
        %v914 = vadd.f32 %v702, %v913
        %v915 = vpop.f32.mrb[0].mxu0
        %916 = vmatprep.mubr.bf16.mxu0 0
        %917 = vmatmul.mubr.bf16.gmra.mrb[0].mxu0 %v789
        %v918 = vpop.f32.mrb[0].mxu0
        %v919 = vadd.f32 %v707, %v918
        %v920 = vpop.f32.mrb[0].mxu0
        %v921 = vpop.f32.mrb[0].mxu0
        %v922 = vadd.f32 %v710, %v921
        %v923 = vpop.f32.mrb[0].mxu0
        %924 = vmatprep.mubr.bf16.mxu0 0
        %925 = vmatmul.mubr.bf16.gmra.mrb[0].mxu0 %v792
        %v926 = vpop.f32.mrb[0].mxu0
        %v927 = vadd.f32 %v715, %v926
        %v928 = vpop.f32.mrb[0].mxu0
        %v929 = vpop.f32.mrb[0].mxu0
        %v930 = vadd.f32 %v718, %v929
        %v931 = vpop.f32.mrb[0].mxu0
        %932 = vmatprep.mubr.bf16.mxu0 0
        %933 = vmatmul.mubr.bf16.gmra.mrb[0].mxu0 %v795
        %v934 = vpop.f32.mrb[0].mxu0
        %v935 = vadd.f32 %v723, %v934
        %v936 = vpop.f32.mrb[0].mxu0
        %v937 = vpop.f32.mrb[0].mxu0
        %v938 = vadd.f32 %v726, %v937
        %v939 = vpop.f32.mrb[0].mxu0
        %940 = vmatprep.mubr.bf16.mxu0 0
        %941 = vmatmul.mubr.bf16.gmra.mrb[0].mxu0 %v798
        %v942 = vpop.f32.mrb[0].mxu0
        %v943 = vadd.f32 %v731, %v942
        %v944 = vpop.f32.mrb[0].mxu0
        %v945 = vpop.f32.mrb[0].mxu0
        %v946 = vadd.f32 %v734, %v945
        %v947 = vpop.f32.mrb[0].mxu0
        %948 = vmatprep.mubr.bf16.mxu0 0
        %949 = vmatmul.mubr.bf16.gmra.mrb[0].mxu0 %v801
        %v950 = vpop.f32.mrb[0].mxu0
        %v951 = vadd.f32 %v739, %v950
        %v952 = vpop.f32.mrb[0].mxu0
        %v953 = vpop.f32.mrb[0].mxu0
        %v954 = vadd.f32 %v742, %v953
        %v955 = vpop.f32.mrb[0].mxu0
        %956 = vmatprep.mubr.bf16.mxu0 0
        %957 = vmatmul.mubr.bf16.gmra.mrb[0].mxu0 %v804
        %v958 = vpop.f32.mrb[0].mxu0
        %v959 = vadd.f32 %v747, %v958
        %v960 = vpop.f32.mrb[0].mxu0
        %v961 = vpop.f32.mrb[0].mxu0
        %v962 = vadd.f32 %v750, %v961
        %v963 = vpop.f32.mrb[0].mxu0
        %964 = vmatprep.mubr.bf16.mxu0 0
        %965 = vmatmul.mubr.bf16.gmra.mrb[0].mxu0 %v807
        %v966 = vpop.f32.mrb[0].mxu0
        %v967 = vadd.f32 %v755, %v966
        %v968 = vpop.f32.mrb[0].mxu0
        %v969 = vpop.f32.mrb[0].mxu0
        %v970 = vadd.f32 %v758, %v969
        %v971 = vpop.f32.mrb[0].mxu0
        %972 = vdwg.mxu0
        %v973 = vld [vmem:[#allocation2 + $0x2] sm:$0xff]
        %v974 = vld [vmem:[#allocation2 + $0xa] sm:$0xff]
        %v975 = vld [vmem:[#allocation2 + $0x1a] sm:$0xff]
        %v976 = vld [vmem:[#allocation2 + $0x22] sm:$0xff]
        %v977 = vld [vmem:[#allocation2 + $0x32] sm:$0xff]
        %v978 = vld [vmem:[#allocation2 + $0x3a] sm:$0xff]
        %v979 = vld [vmem:[#allocation2 + $0x4a] sm:$0xff]
        %v980 = vld [vmem:[#allocation2 + $0x52] sm:$0xff]
        %v981 = vld [vmem:[#allocation2 + $0x62] sm:$0xff]
        %v982 = vld [vmem:[#allocation2 + $0x6a] sm:$0xff]
        %v983 = vld [vmem:[#allocation2 + $0x7a] sm:$0xff]
        %v984 = vld [vmem:[#allocation2 + $0x82] sm:$0xff]
        %v985 = vld [vmem:[#allocation2 + $0x92] sm:$0xff]
        %v986 = vld [vmem:[#allocation2 + $0x9a] sm:$0xff]
        %v987 = vld [vmem:[#allocation2 + $0xaa] sm:$0xff]
        %v988 = vld [vmem:[#allocation2 + $0xb2] sm:$0xff]
        %v989 = vld [vmem:[#allocation2 + $0xc2] sm:$0xff]
        %v990 = vld [vmem:[#allocation2 + $0xca] sm:$0xff]
        %v991 = vld [vmem:[#allocation2 + $0xda] sm:$0xff]
        %v992 = vld [vmem:[#allocation2 + $0xe2] sm:$0xff]
        %v993 = vld [vmem:[#allocation2 + $0xf2] sm:$0xff]
        %v994 = vld [vmem:[#allocation2 + $0xfa] sm:$0xff]
        %v995 = vld [vmem:[#allocation2 + $0x10a] sm:$0xff]
        %v996 = vld [vmem:[#allocation2 + $0x112] sm:$0xff]
        %v997 = vld [vmem:[#allocation2 + $0x122] sm:$0xff]
        %v998 = vld [vmem:[#allocation2 + $0x12a] sm:$0xff]
        %v999 = vld [vmem:[#allocation2 + $0x13a] sm:$0xff]
        %v1000 = vld [vmem:[#allocation2 + $0x142] sm:$0xff]
        %v1001 = vld [vmem:[#allocation2 + $0x152] sm:$0xff]
        %v1002 = vld [vmem:[#allocation2 + $0x15a] sm:$0xff]
        %v1003 = vld [vmem:[#allocation2 + $0x16a] sm:$0xff]
        %v1004 = vld [vmem:[#allocation2 + $0x172] sm:$0xff]
        %v1005 = vpack.c.bf16 %v974, %v973
        %v1006 = vpack.c.bf16 %v976, %v975
        %v1007 = vpack.c.bf16 %v978, %v977
        %v1008 = vpack.c.bf16 %v980, %v979
        %v1009 = vpack.c.bf16 %v982, %v981
        %v1010 = vpack.c.bf16 %v984, %v983
        %v1011 = vpack.c.bf16 %v986, %v985
        %v1012 = vpack.c.bf16 %v988, %v987
        %v1013 = vpack.c.bf16 %v990, %v989
        %v1014 = vpack.c.bf16 %v992, %v991
        %v1015 = vpack.c.bf16 %v994, %v993
        %v1016 = vpack.c.bf16 %v996, %v995
        %v1017 = vpack.c.bf16 %v998, %v997
        %v1018 = vpack.c.bf16 %v1000, %v999
        %v1019 = vpack.c.bf16 %v1002, %v1001
        %v1020 = vpack.c.bf16 %v1004, %v1003
        %s1021 = scalar_lea.vmem %s1, 4
        %v1022 = vld [vmem:[%s1021] sm:$0x3]
        %v1024 = vsel %vm310, %v1005, 0
        %v1027 = vsel %vm310, %v1006, 0
        %v1030 = vsel %vm310, %v1007, 0
        %v1033 = vsel %vm310, %v1008, 0
        %v1036 = vsel %vm310, %v1009, 0
        %v1039 = vsel %vm310, %v1010, 0
        %v1042 = vsel %vm310, %v1011, 0
        %v1045 = vsel %vm310, %v1012, 0
        %v1048 = vsel %vm310, %v1013, 0
        %v1051 = vsel %vm310, %v1014, 0
        %v1054 = vsel %vm310, %v1015, 0
        %v1057 = vsel %vm310, %v1016, 0
        %v1060 = vsel %vm310, %v1017, 0
        %v1063 = vsel %vm310, %v1018, 0
        %v1066 = vsel %vm310, %v1019, 0
        %v1069 = vsel %vm310, %v1020, 0
        %v1072 = vsel %vm596, %v1022, 0
        %1074 = vmatprep.subr.bf16.mxu0 0
        %1075 = vmatpush1.bf16.msra.mxu0 %v1072
        %1076 = vmatprep.subr.bf16.mxu0 0
        %1077 = vmatpush1.bf16.msra.mxu0 0
        %1078 = vmatprep.subr.bf16.mxu0 0
        %1079 = vmatpush1.bf16.msra.mxu0 0
        %1080 = vmatprep.subr.bf16.mxu0 0
        %1081 = vmatpush1.bf16.msra.mxu0 0
        %1082 = vmatprep.subr.bf16.mxu0 0
        %1083 = vmatpush1.bf16.msra.mxu0 0
        %1084 = vmatprep.subr.bf16.mxu0 0
        %1085 = vmatpush1.bf16.msra.mxu0 0
        %1086 = vmatprep.subr.bf16.mxu0 0
        %1087 = vmatpush1.bf16.msra.mxu0 0
        %1088 = vmatprep.subr.bf16.mxu0 0
        %1089 = vmatpush1.bf16.msra.mxu0 0
        %1090 = vmatprep.subr.bf16.mxu0 0
        %1091 = vmatpush1.bf16.msra.mxu0 0
        %1092 = vmatprep.subr.bf16.mxu0 0
        %1093 = vmatpush1.bf16.msra.mxu0 0
        %1094 = vmatprep.subr.bf16.mxu0 0
        %1095 = vmatpush1.bf16.msra.mxu0 0
        %1096 = vmatprep.subr.bf16.mxu0 0
        %1097 = vmatpush1.bf16.msra.mxu0 0
        %1098 = vmatprep.subr.bf16.mxu0 0
        %1099 = vmatpush1.bf16.msra.mxu0 0
        %1100 = vmatprep.subr.bf16.mxu0 0
        %1101 = vmatpush1.bf16.msra.mxu0 0
        %1102 = vmatprep.subr.bf16.mxu0 0
        %1103 = vmatpush1.bf16.msra.mxu0 0
        %1104 = vmatprep.subr.bf16.mxu0 0
        %1105 = vmatpush1.bf16.msra.mxu0 0
        %1106 = vmatprep.mubr.bf16.mxu0 0
        %1107 = vmatmul.mubr.bf16.gmra.mrb[0].mxu0 %v1024
        %v1108 = vpop.f32.mrb[0].mxu0
        %v1109 = vadd.f32 0.0, %v1108
        %v1110 = vpop.f32.mrb[0].mxu0
        %v1111 = vpop.f32.mrb[0].mxu0
        %v1112 = vadd.f32 0.0, %v1111
        %v1113 = vpop.f32.mrb[0].mxu0
        %1114 = vmatprep.mubr.bf16.mxu0 0
        %1115 = vmatmul.mubr.bf16.gmra.mrb[0].mxu0 %v1027
        %v1116 = vpop.f32.mrb[0].mxu0
        %v1117 = vadd.f32 0.0, %v1116
        %v1118 = vpop.f32.mrb[0].mxu0
        %v1119 = vpop.f32.mrb[0].mxu0
        %v1120 = vadd.f32 0.0, %v1119
        %v1121 = vpop.f32.mrb[0].mxu0
        %1122 = vmatprep.mubr.bf16.mxu0 0
        %1123 = vmatmul.mubr.bf16.gmra.mrb[0].mxu0 %v1030
        %v1124 = vpop.f32.mrb[0].mxu0
        %v1125 = vadd.f32 0.0, %v1124
        %v1126 = vpop.f32.mrb[0].mxu0
        %v1127 = vpop.f32.mrb[0].mxu0
        %v1128 = vadd.f32 0.0, %v1127
        %v1129 = vpop.f32.mrb[0].mxu0
        %1130 = vmatprep.mubr.bf16.mxu0 0
        %1131 = vmatmul.mubr.bf16.gmra.mrb[0].mxu0 %v1033
        %v1132 = vpop.f32.mrb[0].mxu0
        %v1133 = vadd.f32 0.0, %v1132
        %v1134 = vpop.f32.mrb[0].mxu0
        %v1135 = vpop.f32.mrb[0].mxu0
        %v1136 = vadd.f32 0.0, %v1135
        %v1137 = vpop.f32.mrb[0].mxu0
        %1138 = vmatprep.mubr.bf16.mxu0 0
        %1139 = vmatmul.mubr.bf16.gmra.mrb[0].mxu0 %v1036
        %v1140 = vpop.f32.mrb[0].mxu0
        %v1141 = vadd.f32 0.0, %v1140
        %v1142 = vpop.f32.mrb[0].mxu0
        %v1143 = vpop.f32.mrb[0].mxu0
        %v1144 = vadd.f32 0.0, %v1143
        %v1145 = vpop.f32.mrb[0].mxu0
        %1146 = vmatprep.mubr.bf16.mxu0 0
        %1147 = vmatmul.mubr.bf16.gmra.mrb[0].mxu0 %v1039
        %v1148 = vpop.f32.mrb[0].mxu0
        %v1149 = vadd.f32 0.0, %v1148
        %v1150 = vpop.f32.mrb[0].mxu0
        %v1151 = vpop.f32.mrb[0].mxu0
        %v1152 = vadd.f32 0.0, %v1151
        %v1153 = vpop.f32.mrb[0].mxu0
        %1154 = vmatprep.mubr.bf16.mxu0 0
        %1155 = vmatmul.mubr.bf16.gmra.mrb[0].mxu0 %v1042
        %v1156 = vpop.f32.mrb[0].mxu0
        %v1157 = vadd.f32 0.0, %v1156
        %v1158 = vpop.f32.mrb[0].mxu0
        %v1159 = vpop.f32.mrb[0].mxu0
        %v1160 = vadd.f32 0.0, %v1159
        %v1161 = vpop.f32.mrb[0].mxu0
        %1162 = vmatprep.mubr.bf16.mxu0 0
        %1163 = vmatmul.mubr.bf16.gmra.mrb[0].mxu0 %v1045
        %v1164 = vpop.f32.mrb[0].mxu0
        %v1165 = vadd.f32 0.0, %v1164
        %v1166 = vpop.f32.mrb[0].mxu0
        %v1167 = vpop.f32.mrb[0].mxu0
        %v1168 = vadd.f32 0.0, %v1167
        %v1169 = vpop.f32.mrb[0].mxu0
        %1170 = vmatprep.mubr.bf16.mxu0 0
        %1171 = vmatmul.mubr.bf16.gmra.mrb[0].mxu0 %v1048
        %v1172 = vpop.f32.mrb[0].mxu0
        %v1173 = vadd.f32 0.0, %v1172
        %v1174 = vpop.f32.mrb[0].mxu0
        %v1175 = vpop.f32.mrb[0].mxu0
        %v1176 = vadd.f32 0.0, %v1175
        %v1177 = vpop.f32.mrb[0].mxu0
        %1178 = vmatprep.mubr.bf16.mxu0 0
        %1179 = vmatmul.mubr.bf16.gmra.mrb[0].mxu0 %v1051
        %v1180 = vpop.f32.mrb[0].mxu0
        %v1181 = vadd.f32 0.0, %v1180
        %v1182 = vpop.f32.mrb[0].mxu0
        %v1183 = vpop.f32.mrb[0].mxu0
        %v1184 = vadd.f32 0.0, %v1183
        %v1185 = vpop.f32.mrb[0].mxu0
        %1186 = vmatprep.mubr.bf16.mxu0 0
        %1187 = vmatmul.mubr.bf16.gmra.mrb[0].mxu0 %v1054
        %v1188 = vpop.f32.mrb[0].mxu0
        %v1189 = vadd.f32 0.0, %v1188
        %v1190 = vpop.f32.mrb[0].mxu0
        %v1191 = vpop.f32.mrb[0].mxu0
        %v1192 = vadd.f32 0.0, %v1191
        %v1193 = vpop.f32.mrb[0].mxu0
        %1194 = vmatprep.mubr.bf16.mxu0 0
        %1195 = vmatmul.mubr.bf16.gmra.mrb[0].mxu0 %v1057
        %v1196 = vpop.f32.mrb[0].mxu0
        %v1197 = vadd.f32 0.0, %v1196
        %v1198 = vpop.f32.mrb[0].mxu0
        %v1199 = vpop.f32.mrb[0].mxu0
        %v1200 = vadd.f32 0.0, %v1199
        %v1201 = vpop.f32.mrb[0].mxu0
        %1202 = vmatprep.mubr.bf16.mxu0 0
        %1203 = vmatmul.mubr.bf16.gmra.mrb[0].mxu0 %v1060
        %v1204 = vpop.f32.mrb[0].mxu0
        %v1205 = vadd.f32 0.0, %v1204
        %v1206 = vpop.f32.mrb[0].mxu0
        %v1207 = vpop.f32.mrb[0].mxu0
        %v1208 = vadd.f32 0.0, %v1207
        %v1209 = vpop.f32.mrb[0].mxu0
        %1210 = vmatprep.mubr.bf16.mxu0 0
        %1211 = vmatmul.mubr.bf16.gmra.mrb[0].mxu0 %v1063
        %v1212 = vpop.f32.mrb[0].mxu0
        %v1213 = vadd.f32 0.0, %v1212
        %v1214 = vpop.f32.mrb[0].mxu0
        %v1215 = vpop.f32.mrb[0].mxu0
        %v1216 = vadd.f32 0.0, %v1215
        %v1217 = vpop.f32.mrb[0].mxu0
        %1218 = vmatprep.mubr.bf16.mxu0 0
        %1219 = vmatmul.mubr.bf16.gmra.mrb[0].mxu0 %v1066
        %v1220 = vpop.f32.mrb[0].mxu0
        %v1221 = vadd.f32 0.0, %v1220
        %v1222 = vpop.f32.mrb[0].mxu0
        %v1223 = vpop.f32.mrb[0].mxu0
        %v1224 = vadd.f32 0.0, %v1223
        %v1225 = vpop.f32.mrb[0].mxu0
        %1226 = vmatprep.mubr.bf16.mxu0 0
        %1227 = vmatmul.mubr.bf16.gmra.mrb[0].mxu0 %v1069
        %v1228 = vpop.f32.mrb[0].mxu0
        %v1229 = vadd.f32 0.0, %v1228
        %v1230 = vpop.f32.mrb[0].mxu0
        %v1231 = vpop.f32.mrb[0].mxu0
        %v1232 = vadd.f32 0.0, %v1231
        %v1233 = vpop.f32.mrb[0].mxu0
        %1234 = vdwg.mxu0
        %v1235 = vadd.f32 %v847, %v1109
        %v1236 = vadd.f32 %v850, %v1112
        %v1237 = vadd.f32 %v855, %v1117
        %v1238 = vadd.f32 %v858, %v1120
        %v1239 = vadd.f32 %v863, %v1125
        %v1240 = vadd.f32 %v866, %v1128
        %v1241 = vadd.f32 %v871, %v1133
        %v1242 = vadd.f32 %v874, %v1136
        %v1243 = vadd.f32 %v879, %v1141
        %v1244 = vadd.f32 %v882, %v1144
        %v1245 = vadd.f32 %v887, %v1149
        %v1246 = vadd.f32 %v890, %v1152
        %v1247 = vadd.f32 %v895, %v1157
        %v1248 = vadd.f32 %v898, %v1160
        %v1249 = vadd.f32 %v903, %v1165
        %v1250 = vadd.f32 %v906, %v1168
        %v1251 = vadd.f32 %v911, %v1173
        %v1252 = vadd.f32 %v914, %v1176
        %v1253 = vadd.f32 %v919, %v1181
        %v1254 = vadd.f32 %v922, %v1184
        %v1255 = vadd.f32 %v927, %v1189
        %v1256 = vadd.f32 %v930, %v1192
        %v1257 = vadd.f32 %v935, %v1197
        %v1258 = vadd.f32 %v938, %v1200
        %v1259 = vadd.f32 %v943, %v1205
        %v1260 = vadd.f32 %v946, %v1208
        %v1261 = vadd.f32 %v951, %v1213
        %v1262 = vadd.f32 %v954, %v1216
        %v1263 = vadd.f32 %v959, %v1221
        %v1264 = vadd.f32 %v962, %v1224
        %v1265 = vadd.f32 %v967, %v1229
        %v1266 = vadd.f32 %v970, %v1232
        %v1267 = vld [vmem:[%s319] sm:$0xff]
        %v1268 = vld [vmem:[%s319 + $0x8] sm:$0xff]
        %v1269 = vld [vmem:[%s319 + $0x18] sm:$0xff]
        %v1270 = vld [vmem:[%s319 + $0x20] sm:$0xff]
        %v1271 = vld [vmem:[%s319 + $0x30] sm:$0xff]
        %v1272 = vld [vmem:[%s319 + $0x38] sm:$0xff]
        %v1273 = vld [vmem:[%s319 + $0x48] sm:$0xff]
        %v1274 = vld [vmem:[%s319 + $0x50] sm:$0xff]
        %v1275 = vld [vmem:[%s319 + $0x60] sm:$0xff]
        %v1276 = vld [vmem:[%s319 + $0x68] sm:$0xff]
        %v1277 = vld [vmem:[%s319 + $0x78] sm:$0xff]
        %v1278 = vld [vmem:[%s319 + $0x80] sm:$0xff]
        %v1279 = vld [vmem:[%s319 + $0x90] sm:$0xff]
        %v1280 = vld [vmem:[%s319 + $0x98] sm:$0xff]
        %v1281 = vld [vmem:[%s319 + $0xa8] sm:$0xff]
        %v1282 = vld [vmem:[%s319 + $0xb0] sm:$0xff]
        %v1283 = vld [vmem:[%s319 + $0xc0] sm:$0xff]
        %v1284 = vld [vmem:[%s319 + $0xc8] sm:$0xff]
        %v1285 = vld [vmem:[%s319 + $0xd8] sm:$0xff]
        %v1286 = vld [vmem:[%s319 + $0xe0] sm:$0xff]
        %v1287 = vld [vmem:[%s319 + $0xf0] sm:$0xff]
        %v1288 = vld [vmem:[%s319 + $0xf8] sm:$0xff]
        %v1289 = vld [vmem:[%s319 + $0x108] sm:$0xff]
        %v1290 = vld [vmem:[%s319 + $0x110] sm:$0xff]
        %v1291 = vld [vmem:[%s319 + $0x120] sm:$0xff]
        %v1292 = vld [vmem:[%s319 + $0x128] sm:$0xff]
        %v1293 = vld [vmem:[%s319 + $0x138] sm:$0xff]
        %v1294 = vld [vmem:[%s319 + $0x140] sm:$0xff]
        %v1295 = vld [vmem:[%s319 + $0x150] sm:$0xff]
        %v1296 = vld [vmem:[%s319 + $0x158] sm:$0xff]
        %v1297 = vld [vmem:[%s319 + $0x168] sm:$0xff]
        %v1298 = vld [vmem:[%s319 + $0x170] sm:$0xff]
        %v1299 = vpack.c.bf16 %v1268, %v1267
        %v1300 = vpack.c.bf16 %v1270, %v1269
        %v1301 = vpack.c.bf16 %v1272, %v1271
        %v1302 = vpack.c.bf16 %v1274, %v1273
        %v1303 = vpack.c.bf16 %v1276, %v1275
        %v1304 = vpack.c.bf16 %v1278, %v1277
        %v1305 = vpack.c.bf16 %v1280, %v1279
        %v1306 = vpack.c.bf16 %v1282, %v1281
        %v1307 = vpack.c.bf16 %v1284, %v1283
        %v1308 = vpack.c.bf16 %v1286, %v1285
        %v1309 = vpack.c.bf16 %v1288, %v1287
        %v1310 = vpack.c.bf16 %v1290, %v1289
        %v1311 = vpack.c.bf16 %v1292, %v1291
        %v1312 = vpack.c.bf16 %v1294, %v1293
        %v1313 = vpack.c.bf16 %v1296, %v1295
        %v1314 = vpack.c.bf16 %v1298, %v1297
        %s1315 = scalar_lea.vmem %s1, 6
        %v1316 = vld [vmem:[%s1315] sm:$0x3]
        %v1318 = vsel %vm310, %v1299, 0
        %v1321 = vsel %vm310, %v1300, 0
        %v1324 = vsel %vm310, %v1301, 0
        %v1327 = vsel %vm310, %v1302, 0
        %v1330 = vsel %vm310, %v1303, 0
        %v1333 = vsel %vm310, %v1304, 0
        %v1336 = vsel %vm310, %v1305, 0
        %v1339 = vsel %vm310, %v1306, 0
        %v1342 = vsel %vm310, %v1307, 0
        %v1345 = vsel %vm310, %v1308, 0
        %v1348 = vsel %vm310, %v1309, 0
        %v1351 = vsel %vm310, %v1310, 0
        %v1354 = vsel %vm310, %v1311, 0
        %v1357 = vsel %vm310, %v1312, 0
        %v1360 = vsel %vm310, %v1313, 0
        %v1363 = vsel %vm310, %v1314, 0
        %v1366 = vsel %vm596, %v1316, 0
        %1368 = vmatprep.subr.bf16.mxu0 0
        %1369 = vmatpush1.bf16.msra.mxu0 %v1366
        %1370 = vmatprep.subr.bf16.mxu0 0
        %1371 = vmatpush1.bf16.msra.mxu0 0
        %1372 = vmatprep.subr.bf16.mxu0 0
        %1373 = vmatpush1.bf16.msra.mxu0 0
        %1374 = vmatprep.subr.bf16.mxu0 0
        %1375 = vmatpush1.bf16.msra.mxu0 0
        %1376 = vmatprep.subr.bf16.mxu0 0
        %1377 = vmatpush1.bf16.msra.mxu0 0
        %1378 = vmatprep.subr.bf16.mxu0 0
        %1379 = vmatpush1.bf16.msra.mxu0 0
        %1380 = vmatprep.subr.bf16.mxu0 0
        %1381 = vmatpush1.bf16.msra.mxu0 0
        %1382 = vmatprep.subr.bf16.mxu0 0
        %1383 = vmatpush1.bf16.msra.mxu0 0
        %1384 = vmatprep.subr.bf16.mxu0 0
        %1385 = vmatpush1.bf16.msra.mxu0 0
        %1386 = vmatprep.subr.bf16.mxu0 0
        %1387 = vmatpush1.bf16.msra.mxu0 0
        %1388 = vmatprep.subr.bf16.mxu0 0
        %1389 = vmatpush1.bf16.msra.mxu0 0
        %1390 = vmatprep.subr.bf16.mxu0 0
        %1391 = vmatpush1.bf16.msra.mxu0 0
        %1392 = vmatprep.subr.bf16.mxu0 0
        %1393 = vmatpush1.bf16.msra.mxu0 0
        %1394 = vmatprep.subr.bf16.mxu0 0
        %1395 = vmatpush1.bf16.msra.mxu0 0
        %1396 = vmatprep.subr.bf16.mxu0 0
        %1397 = vmatpush1.bf16.msra.mxu0 0
        %1398 = vmatprep.subr.bf16.mxu0 0
        %1399 = vmatpush1.bf16.msra.mxu0 0
        %1400 = vmatprep.mubr.bf16.mxu0 0
        %1401 = vmatmul.mubr.bf16.gmra.mrb[0].mxu0 %v1318
        %v1402 = vpop.f32.mrb[0].mxu0
        %v1403 = vadd.f32 0.0, %v1402
        %v1404 = vpop.f32.mrb[0].mxu0
        %v1405 = vpop.f32.mrb[0].mxu0
        %v1406 = vadd.f32 0.0, %v1405
        %v1407 = vpop.f32.mrb[0].mxu0
        %1408 = vmatprep.mubr.bf16.mxu0 0
        %1409 = vmatmul.mubr.bf16.gmra.mrb[0].mxu0 %v1321
        %v1410 = vpop.f32.mrb[0].mxu0
        %v1411 = vadd.f32 0.0, %v1410
        %v1412 = vpop.f32.mrb[0].mxu0
        %v1413 = vpop.f32.mrb[0].mxu0
        %v1414 = vadd.f32 0.0, %v1413
        %v1415 = vpop.f32.mrb[0].mxu0
        %1416 = vmatprep.mubr.bf16.mxu0 0
        %1417 = vmatmul.mubr.bf16.gmra.mrb[0].mxu0 %v1324
        %v1418 = vpop.f32.mrb[0].mxu0
        %v1419 = vadd.f32 0.0, %v1418
        %v1420 = vpop.f32.mrb[0].mxu0
        %v1421 = vpop.f32.mrb[0].mxu0
        %v1422 = vadd.f32 0.0, %v1421
        %v1423 = vpop.f32.mrb[0].mxu0
        %1424 = vmatprep.mubr.bf16.mxu0 0
        %1425 = vmatmul.mubr.bf16.gmra.mrb[0].mxu0 %v1327
        %v1426 = vpop.f32.mrb[0].mxu0
        %v1427 = vadd.f32 0.0, %v1426
        %v1428 = vpop.f32.mrb[0].mxu0
        %v1429 = vpop.f32.mrb[0].mxu0
        %v1430 = vadd.f32 0.0, %v1429
        %v1431 = vpop.f32.mrb[0].mxu0
        %1432 = vmatprep.mubr.bf16.mxu0 0
        %1433 = vmatmul.mubr.bf16.gmra.mrb[0].mxu0 %v1330
        %v1434 = vpop.f32.mrb[0].mxu0
        %v1435 = vadd.f32 0.0, %v1434
        %v1436 = vpop.f32.mrb[0].mxu0
        %v1437 = vpop.f32.mrb[0].mxu0
        %v1438 = vadd.f32 0.0, %v1437
        %v1439 = vpop.f32.mrb[0].mxu0
        %1440 = vmatprep.mubr.bf16.mxu0 0
        %1441 = vmatmul.mubr.bf16.gmra.mrb[0].mxu0 %v1333
        %v1442 = vpop.f32.mrb[0].mxu0
        %v1443 = vadd.f32 0.0, %v1442
        %v1444 = vpop.f32.mrb[0].mxu0
        %v1445 = vpop.f32.mrb[0].mxu0
        %v1446 = vadd.f32 0.0, %v1445
        %v1447 = vpop.f32.mrb[0].mxu0
        %1448 = vmatprep.mubr.bf16.mxu0 0
        %1449 = vmatmul.mubr.bf16.gmra.mrb[0].mxu0 %v1336
        %v1450 = vpop.f32.mrb[0].mxu0
        %v1451 = vadd.f32 0.0, %v1450
        %v1452 = vpop.f32.mrb[0].mxu0
        %v1453 = vpop.f32.mrb[0].mxu0
        %v1454 = vadd.f32 0.0, %v1453
        %v1455 = vpop.f32.mrb[0].mxu0
        %1456 = vmatprep.mubr.bf16.mxu0 0
        %1457 = vmatmul.mubr.bf16.gmra.mrb[0].mxu0 %v1339
        %v1458 = vpop.f32.mrb[0].mxu0
        %v1459 = vadd.f32 0.0, %v1458
        %v1460 = vpop.f32.mrb[0].mxu0
        %v1461 = vpop.f32.mrb[0].mxu0
        %v1462 = vadd.f32 0.0, %v1461
        %v1463 = vpop.f32.mrb[0].mxu0
        %1464 = vmatprep.mubr.bf16.mxu0 0
        %1465 = vmatmul.mubr.bf16.gmra.mrb[0].mxu0 %v1342
        %v1466 = vpop.f32.mrb[0].mxu0
        %v1467 = vadd.f32 0.0, %v1466
        %v1468 = vpop.f32.mrb[0].mxu0
        %v1469 = vpop.f32.mrb[0].mxu0
        %v1470 = vadd.f32 0.0, %v1469
        %v1471 = vpop.f32.mrb[0].mxu0
        %1472 = vmatprep.mubr.bf16.mxu0 0
        %1473 = vmatmul.mubr.bf16.gmra.mrb[0].mxu0 %v1345
        %v1474 = vpop.f32.mrb[0].mxu0
        %v1475 = vadd.f32 0.0, %v1474
        %v1476 = vpop.f32.mrb[0].mxu0
        %v1477 = vpop.f32.mrb[0].mxu0
        %v1478 = vadd.f32 0.0, %v1477
        %v1479 = vpop.f32.mrb[0].mxu0
        %1480 = vmatprep.mubr.bf16.mxu0 0
        %1481 = vmatmul.mubr.bf16.gmra.mrb[0].mxu0 %v1348
        %v1482 = vpop.f32.mrb[0].mxu0
        %v1483 = vadd.f32 0.0, %v1482
        %v1484 = vpop.f32.mrb[0].mxu0
        %v1485 = vpop.f32.mrb[0].mxu0
        %v1486 = vadd.f32 0.0, %v1485
        %v1487 = vpop.f32.mrb[0].mxu0
        %1488 = vmatprep.mubr.bf16.mxu0 0
        %1489 = vmatmul.mubr.bf16.gmra.mrb[0].mxu0 %v1351
        %v1490 = vpop.f32.mrb[0].mxu0
        %v1491 = vadd.f32 0.0, %v1490
        %v1492 = vpop.f32.mrb[0].mxu0
        %v1493 = vpop.f32.mrb[0].mxu0
        %v1494 = vadd.f32 0.0, %v1493
        %v1495 = vpop.f32.mrb[0].mxu0
        %1496 = vmatprep.mubr.bf16.mxu0 0
        %1497 = vmatmul.mubr.bf16.gmra.mrb[0].mxu0 %v1354
        %v1498 = vpop.f32.mrb[0].mxu0
        %v1499 = vadd.f32 0.0, %v1498
        %v1500 = vpop.f32.mrb[0].mxu0
        %v1501 = vpop.f32.mrb[0].mxu0
        %v1502 = vadd.f32 0.0, %v1501
        %v1503 = vpop.f32.mrb[0].mxu0
        %1504 = vmatprep.mubr.bf16.mxu0 0
        %1505 = vmatmul.mubr.bf16.gmra.mrb[0].mxu0 %v1357
        %v1506 = vpop.f32.mrb[0].mxu0
        %v1507 = vadd.f32 0.0, %v1506
        %v1508 = vpop.f32.mrb[0].mxu0
        %v1509 = vpop.f32.mrb[0].mxu0
        %v1510 = vadd.f32 0.0, %v1509
        %v1511 = vpop.f32.mrb[0].mxu0
        %1512 = vmatprep.mubr.bf16.mxu0 0
        %1513 = vmatmul.mubr.bf16.gmra.mrb[0].mxu0 %v1360
        %v1514 = vpop.f32.mrb[0].mxu0
        %v1515 = vadd.f32 0.0, %v1514
        %v1516 = vpop.f32.mrb[0].mxu0
        %v1517 = vpop.f32.mrb[0].mxu0
        %v1518 = vadd.f32 0.0, %v1517
        %v1519 = vpop.f32.mrb[0].mxu0
        %1520 = vmatprep.mubr.bf16.mxu0 0
        %1521 = vmatmul.mubr.bf16.gmra.mrb[0].mxu0 %v1363
        %v1522 = vpop.f32.mrb[0].mxu0
        %v1523 = vadd.f32 0.0, %v1522
        %v1524 = vpop.f32.mrb[0].mxu0
        %v1525 = vpop.f32.mrb[0].mxu0
        %v1526 = vadd.f32 0.0, %v1525
        %v1527 = vpop.f32.mrb[0].mxu0
        %1528 = vdwg.mxu0
        %v1529 = vadd.f32 %v1235, %v1403
        %v1530 = vadd.f32 %v1236, %v1406
        %v1531 = vadd.f32 %v1237, %v1411
        %v1532 = vadd.f32 %v1238, %v1414
        %v1533 = vadd.f32 %v1239, %v1419
        %v1534 = vadd.f32 %v1240, %v1422
        %v1535 = vadd.f32 %v1241, %v1427
        %v1536 = vadd.f32 %v1242, %v1430
        %v1537 = vadd.f32 %v1243, %v1435
        %v1538 = vadd.f32 %v1244, %v1438
        %v1539 = vadd.f32 %v1245, %v1443
        %v1540 = vadd.f32 %v1246, %v1446
        %v1541 = vadd.f32 %v1247, %v1451
        %v1542 = vadd.f32 %v1248, %v1454
        %v1543 = vadd.f32 %v1249, %v1459
        %v1544 = vadd.f32 %v1250, %v1462
        %v1545 = vadd.f32 %v1251, %v1467
        %v1546 = vadd.f32 %v1252, %v1470
        %v1547 = vadd.f32 %v1253, %v1475
        %v1548 = vadd.f32 %v1254, %v1478
        %v1549 = vadd.f32 %v1255, %v1483
        %v1550 = vadd.f32 %v1256, %v1486
        %v1551 = vadd.f32 %v1257, %v1491
        %v1552 = vadd.f32 %v1258, %v1494
        %v1553 = vadd.f32 %v1259, %v1499
        %v1554 = vadd.f32 %v1260, %v1502
        %v1555 = vadd.f32 %v1261, %v1507
        %v1556 = vadd.f32 %v1262, %v1510
        %v1557 = vadd.f32 %v1263, %v1515
        %v1558 = vadd.f32 %v1264, %v1518
        %v1559 = vadd.f32 %v1265, %v1523
        %v1560 = vadd.f32 %v1266, %v1526
        %v1561 = vld [vmem:[%s319 + $0x1] sm:$0xff]
        %v1562 = vld [vmem:[%s319 + $0x9] sm:$0xff]
        %v1563 = vld [vmem:[%s319 + $0x19] sm:$0xff]
        %v1564 = vld [vmem:[%s319 + $0x21] sm:$0xff]
        %v1565 = vld [vmem:[%s319 + $0x31] sm:$0xff]
        %v1566 = vld [vmem:[%s319 + $0x39] sm:$0xff]
        %v1567 = vld [vmem:[%s319 + $0x49] sm:$0xff]
        %v1568 = vld [vmem:[%s319 + $0x51] sm:$0xff]
        %v1569 = vld [vmem:[%s319 + $0x61] sm:$0xff]
        %v1570 = vld [vmem:[%s319 + $0x69] sm:$0xff]
        %v1571 = vld [vmem:[%s319 + $0x79] sm:$0xff]
        %v1572 = vld [vmem:[%s319 + $0x81] sm:$0xff]
        %v1573 = vld [vmem:[%s319 + $0x91] sm:$0xff]
        %v1574 = vld [vmem:[%s319 + $0x99] sm:$0xff]
        %v1575 = vld [vmem:[%s319 + $0xa9] sm:$0xff]
        %v1576 = vld [vmem:[%s319 + $0xb1] sm:$0xff]
        %v1577 = vld [vmem:[%s319 + $0xc1] sm:$0xff]
        %v1578 = vld [vmem:[%s319 + $0xc9] sm:$0xff]
        %v1579 = vld [vmem:[%s319 + $0xd9] sm:$0xff]
        %v1580 = vld [vmem:[%s319 + $0xe1] sm:$0xff]
        %v1581 = vld [vmem:[%s319 + $0xf1] sm:$0xff]
        %v1582 = vld [vmem:[%s319 + $0xf9] sm:$0xff]
        %v1583 = vld [vmem:[%s319 + $0x109] sm:$0xff]
        %v1584 = vld [vmem:[%s319 + $0x111] sm:$0xff]
        %v1585 = vld [vmem:[%s319 + $0x121] sm:$0xff]
        %v1586 = vld [vmem:[%s319 + $0x129] sm:$0xff]
        %v1587 = vld [vmem:[%s319 + $0x139] sm:$0xff]
        %v1588 = vld [vmem:[%s319 + $0x141] sm:$0xff]
        %v1589 = vld [vmem:[%s319 + $0x151] sm:$0xff]
        %v1590 = vld [vmem:[%s319 + $0x159] sm:$0xff]
        %v1591 = vld [vmem:[%s319 + $0x169] sm:$0xff]
        %v1592 = vld [vmem:[%s319 + $0x171] sm:$0xff]
        %v1593 = vpack.c.bf16 %v1562, %v1561
        %v1594 = vpack.c.bf16 %v1564, %v1563
        %v1595 = vpack.c.bf16 %v1566, %v1565
        %v1596 = vpack.c.bf16 %v1568, %v1567
        %v1597 = vpack.c.bf16 %v1570, %v1569
        %v1598 = vpack.c.bf16 %v1572, %v1571
        %v1599 = vpack.c.bf16 %v1574, %v1573
        %v1600 = vpack.c.bf16 %v1576, %v1575
        %v1601 = vpack.c.bf16 %v1578, %v1577
        %v1602 = vpack.c.bf16 %v1580, %v1579
        %v1603 = vpack.c.bf16 %v1582, %v1581
        %v1604 = vpack.c.bf16 %v1584, %v1583
        %v1605 = vpack.c.bf16 %v1586, %v1585
        %v1606 = vpack.c.bf16 %v1588, %v1587
        %v1607 = vpack.c.bf16 %v1590, %v1589
        %v1608 = vpack.c.bf16 %v1592, %v1591
        %s1609 = scalar_lea.vmem %s1, 8
        %v1610 = vld [vmem:[%s1609] sm:$0x3]
        %v1612 = vsel %vm310, %v1593, 0
        %v1615 = vsel %vm310, %v1594, 0
        %v1618 = vsel %vm310, %v1595, 0
        %v1621 = vsel %vm310, %v1596, 0
        %v1624 = vsel %vm310, %v1597, 0
        %v1627 = vsel %vm310, %v1598, 0
        %v1630 = vsel %vm310, %v1599, 0
        %v1633 = vsel %vm310, %v1600, 0
        %v1636 = vsel %vm310, %v1601, 0
        %v1639 = vsel %vm310, %v1602, 0
        %v1642 = vsel %vm310, %v1603, 0
        %v1645 = vsel %vm310, %v1604, 0
        %v1648 = vsel %vm310, %v1605, 0
        %v1651 = vsel %vm310, %v1606, 0
        %v1654 = vsel %vm310, %v1607, 0
        %v1657 = vsel %vm310, %v1608, 0
        %v1660 = vsel %vm596, %v1610, 0
        %1662 = vmatprep.subr.bf16.mxu0 0
        %1663 = vmatpush1.bf16.msra.mxu0 %v1660
        %1664 = vmatprep.subr.bf16.mxu0 0
        %1665 = vmatpush1.bf16.msra.mxu0 0
        %1666 = vmatprep.subr.bf16.mxu0 0
        %1667 = vmatpush1.bf16.msra.mxu0 0
        %1668 = vmatprep.subr.bf16.mxu0 0
        %1669 = vmatpush1.bf16.msra.mxu0 0
        %1670 = vmatprep.subr.bf16.mxu0 0
        %1671 = vmatpush1.bf16.msra.mxu0 0
        %1672 = vmatprep.subr.bf16.mxu0 0
        %1673 = vmatpush1.bf16.msra.mxu0 0
        %1674 = vmatprep.subr.bf16.mxu0 0
        %1675 = vmatpush1.bf16.msra.mxu0 0
        %1676 = vmatprep.subr.bf16.mxu0 0
        %1677 = vmatpush1.bf16.msra.mxu0 0
        %1678 = vmatprep.subr.bf16.mxu0 0
        %1679 = vmatpush1.bf16.msra.mxu0 0
        %1680 = vmatprep.subr.bf16.mxu0 0
        %1681 = vmatpush1.bf16.msra.mxu0 0
        %1682 = vmatprep.subr.bf16.mxu0 0
        %1683 = vmatpush1.bf16.msra.mxu0 0
        %1684 = vmatprep.subr.bf16.mxu0 0
        %1685 = vmatpush1.bf16.msra.mxu0 0
        %1686 = vmatprep.subr.bf16.mxu0 0
        %1687 = vmatpush1.bf16.msra.mxu0 0
        %1688 = vmatprep.subr.bf16.mxu0 0
        %1689 = vmatpush1.bf16.msra.mxu0 0
        %1690 = vmatprep.subr.bf16.mxu0 0
        %1691 = vmatpush1.bf16.msra.mxu0 0
        %1692 = vmatprep.subr.bf16.mxu0 0
        %1693 = vmatpush1.bf16.msra.mxu0 0
        %1694 = vmatprep.mubr.bf16.mxu0 0
        %1695 = vmatmul.mubr.bf16.gmra.mrb[0].mxu0 %v1612
        %v1696 = vpop.f32.mrb[0].mxu0
        %v1697 = vadd.f32 0.0, %v1696
        %v1698 = vpop.f32.mrb[0].mxu0
        %v1699 = vpop.f32.mrb[0].mxu0
        %v1700 = vadd.f32 0.0, %v1699
        %v1701 = vpop.f32.mrb[0].mxu0
        %1702 = vmatprep.mubr.bf16.mxu0 0
        %1703 = vmatmul.mubr.bf16.gmra.mrb[0].mxu0 %v1615
        %v1704 = vpop.f32.mrb[0].mxu0
        %v1705 = vadd.f32 0.0, %v1704
        %v1706 = vpop.f32.mrb[0].mxu0
        %v1707 = vpop.f32.mrb[0].mxu0
        %v1708 = vadd.f32 0.0, %v1707
        %v1709 = vpop.f32.mrb[0].mxu0
        %1710 = vmatprep.mubr.bf16.mxu0 0
        %1711 = vmatmul.mubr.bf16.gmra.mrb[0].mxu0 %v1618
        %v1712 = vpop.f32.mrb[0].mxu0
        %v1713 = vadd.f32 0.0, %v1712
        %v1714 = vpop.f32.mrb[0].mxu0
        %v1715 = vpop.f32.mrb[0].mxu0
        %v1716 = vadd.f32 0.0, %v1715
        %v1717 = vpop.f32.mrb[0].mxu0
        %1718 = vmatprep.mubr.bf16.mxu0 0
        %1719 = vmatmul.mubr.bf16.gmra.mrb[0].mxu0 %v1621
        %v1720 = vpop.f32.mrb[0].mxu0
        %v1721 = vadd.f32 0.0, %v1720
        %v1722 = vpop.f32.mrb[0].mxu0
        %v1723 = vpop.f32.mrb[0].mxu0
        %v1724 = vadd.f32 0.0, %v1723
        %v1725 = vpop.f32.mrb[0].mxu0
        %1726 = vmatprep.mubr.bf16.mxu0 0
        %1727 = vmatmul.mubr.bf16.gmra.mrb[0].mxu0 %v1624
        %v1728 = vpop.f32.mrb[0].mxu0
        %v1729 = vadd.f32 0.0, %v1728
        %v1730 = vpop.f32.mrb[0].mxu0
        %v1731 = vpop.f32.mrb[0].mxu0
        %v1732 = vadd.f32 0.0, %v1731
        %v1733 = vpop.f32.mrb[0].mxu0
        %1734 = vmatprep.mubr.bf16.mxu0 0
        %1735 = vmatmul.mubr.bf16.gmra.mrb[0].mxu0 %v1627
        %v1736 = vpop.f32.mrb[0].mxu0
        %v1737 = vadd.f32 0.0, %v1736
        %v1738 = vpop.f32.mrb[0].mxu0
        %v1739 = vpop.f32.mrb[0].mxu0
        %v1740 = vadd.f32 0.0, %v1739
        %v1741 = vpop.f32.mrb[0].mxu0
        %1742 = vmatprep.mubr.bf16.mxu0 0
        %1743 = vmatmul.mubr.bf16.gmra.mrb[0].mxu0 %v1630
        %v1744 = vpop.f32.mrb[0].mxu0
        %v1745 = vadd.f32 0.0, %v1744
        %v1746 = vpop.f32.mrb[0].mxu0
        %v1747 = vpop.f32.mrb[0].mxu0
        %v1748 = vadd.f32 0.0, %v1747
        %v1749 = vpop.f32.mrb[0].mxu0
        %1750 = vmatprep.mubr.bf16.mxu0 0
        %1751 = vmatmul.mubr.bf16.gmra.mrb[0].mxu0 %v1633
        %v1752 = vpop.f32.mrb[0].mxu0
        %v1753 = vadd.f32 0.0, %v1752
        %v1754 = vpop.f32.mrb[0].mxu0
        %v1755 = vpop.f32.mrb[0].mxu0
        %v1756 = vadd.f32 0.0, %v1755
        %v1757 = vpop.f32.mrb[0].mxu0
        %1758 = vmatprep.mubr.bf16.mxu0 0
        %1759 = vmatmul.mubr.bf16.gmra.mrb[0].mxu0 %v1636
        %v1760 = vpop.f32.mrb[0].mxu0
        %v1761 = vadd.f32 0.0, %v1760
        %v1762 = vpop.f32.mrb[0].mxu0
        %v1763 = vpop.f32.mrb[0].mxu0
        %v1764 = vadd.f32 0.0, %v1763
        %v1765 = vpop.f32.mrb[0].mxu0
        %1766 = vmatprep.mubr.bf16.mxu0 0
        %1767 = vmatmul.mubr.bf16.gmra.mrb[0].mxu0 %v1639
        %v1768 = vpop.f32.mrb[0].mxu0
        %v1769 = vadd.f32 0.0, %v1768
        %v1770 = vpop.f32.mrb[0].mxu0
        %v1771 = vpop.f32.mrb[0].mxu0
        %v1772 = vadd.f32 0.0, %v1771
        %v1773 = vpop.f32.mrb[0].mxu0
        %1774 = vmatprep.mubr.bf16.mxu0 0
        %1775 = vmatmul.mubr.bf16.gmra.mrb[0].mxu0 %v1642
        %v1776 = vpop.f32.mrb[0].mxu0
        %v1777 = vadd.f32 0.0, %v1776
        %v1778 = vpop.f32.mrb[0].mxu0
        %v1779 = vpop.f32.mrb[0].mxu0
        %v1780 = vadd.f32 0.0, %v1779
        %v1781 = vpop.f32.mrb[0].mxu0
        %1782 = vmatprep.mubr.bf16.mxu0 0
        %1783 = vmatmul.mubr.bf16.gmra.mrb[0].mxu0 %v1645
        %v1784 = vpop.f32.mrb[0].mxu0
        %v1785 = vadd.f32 0.0, %v1784
        %v1786 = vpop.f32.mrb[0].mxu0
        %v1787 = vpop.f32.mrb[0].mxu0
        %v1788 = vadd.f32 0.0, %v1787
        %v1789 = vpop.f32.mrb[0].mxu0
        %1790 = vmatprep.mubr.bf16.mxu0 0
        %1791 = vmatmul.mubr.bf16.gmra.mrb[0].mxu0 %v1648
        %v1792 = vpop.f32.mrb[0].mxu0
        %v1793 = vadd.f32 0.0, %v1792
        %v1794 = vpop.f32.mrb[0].mxu0
        %v1795 = vpop.f32.mrb[0].mxu0
        %v1796 = vadd.f32 0.0, %v1795
        %v1797 = vpop.f32.mrb[0].mxu0
        %1798 = vmatprep.mubr.bf16.mxu0 0
        %1799 = vmatmul.mubr.bf16.gmra.mrb[0].mxu0 %v1651
        %v1800 = vpop.f32.mrb[0].mxu0
        %v1801 = vadd.f32 0.0, %v1800
        %v1802 = vpop.f32.mrb[0].mxu0
        %v1803 = vpop.f32.mrb[0].mxu0
        %v1804 = vadd.f32 0.0, %v1803
        %v1805 = vpop.f32.mrb[0].mxu0
        %1806 = vmatprep.mubr.bf16.mxu0 0
        %1807 = vmatmul.mubr.bf16.gmra.mrb[0].mxu0 %v1654
        %v1808 = vpop.f32.mrb[0].mxu0
        %v1809 = vadd.f32 0.0, %v1808
        %v1810 = vpop.f32.mrb[0].mxu0
        %v1811 = vpop.f32.mrb[0].mxu0
        %v1812 = vadd.f32 0.0, %v1811
        %v1813 = vpop.f32.mrb[0].mxu0
        %1814 = vmatprep.mubr.bf16.mxu0 0
        %1815 = vmatmul.mubr.bf16.gmra.mrb[0].mxu0 %v1657
        %v1816 = vpop.f32.mrb[0].mxu0
        %v1817 = vadd.f32 0.0, %v1816
        %v1818 = vpop.f32.mrb[0].mxu0
        %v1819 = vpop.f32.mrb[0].mxu0
        %v1820 = vadd.f32 0.0, %v1819
        %v1821 = vpop.f32.mrb[0].mxu0
        %1822 = vdwg.mxu0
        %v1823 = vadd.f32 %v1529, %v1697
        %v1824 = vadd.f32 %v1530, %v1700
        %v1825 = vadd.f32 %v1531, %v1705
        %v1826 = vadd.f32 %v1532, %v1708
        %v1827 = vadd.f32 %v1533, %v1713
        %v1828 = vadd.f32 %v1534, %v1716
        %v1829 = vadd.f32 %v1535, %v1721
        %v1830 = vadd.f32 %v1536, %v1724
        %v1831 = vadd.f32 %v1537, %v1729
        %v1832 = vadd.f32 %v1538, %v1732
        %v1833 = vadd.f32 %v1539, %v1737
        %v1834 = vadd.f32 %v1540, %v1740
        %v1835 = vadd.f32 %v1541, %v1745
        %v1836 = vadd.f32 %v1542, %v1748
        %v1837 = vadd.f32 %v1543, %v1753
        %v1838 = vadd.f32 %v1544, %v1756
        %v1839 = vadd.f32 %v1545, %v1761
        %v1840 = vadd.f32 %v1546, %v1764
        %v1841 = vadd.f32 %v1547, %v1769
        %v1842 = vadd.f32 %v1548, %v1772
        %v1843 = vadd.f32 %v1549, %v1777
        %v1844 = vadd.f32 %v1550, %v1780
        %v1845 = vadd.f32 %v1551, %v1785
        %v1846 = vadd.f32 %v1552, %v1788
        %v1847 = vadd.f32 %v1553, %v1793
        %v1848 = vadd.f32 %v1554, %v1796
        %v1849 = vadd.f32 %v1555, %v1801
        %v1850 = vadd.f32 %v1556, %v1804
        %v1851 = vadd.f32 %v1557, %v1809
        %v1852 = vadd.f32 %v1558, %v1812
        %v1853 = vadd.f32 %v1559, %v1817
        %v1854 = vadd.f32 %v1560, %v1820
        %v1855 = vld [vmem:[%s319 + $0x2] sm:$0xff]
        %v1856 = vld [vmem:[%s319 + $0xa] sm:$0xff]
        %v1857 = vld [vmem:[%s319 + $0x1a] sm:$0xff]
        %v1858 = vld [vmem:[%s319 + $0x22] sm:$0xff]
        %v1859 = vld [vmem:[%s319 + $0x32] sm:$0xff]
        %v1860 = vld [vmem:[%s319 + $0x3a] sm:$0xff]
        %v1861 = vld [vmem:[%s319 + $0x4a] sm:$0xff]
        %v1862 = vld [vmem:[%s319 + $0x52] sm:$0xff]
        %v1863 = vld [vmem:[%s319 + $0x62] sm:$0xff]
        %v1864 = vld [vmem:[%s319 + $0x6a] sm:$0xff]
        %v1865 = vld [vmem:[%s319 + $0x7a] sm:$0xff]
        %v1866 = vld [vmem:[%s319 + $0x82] sm:$0xff]
        %v1867 = vld [vmem:[%s319 + $0x92] sm:$0xff]
        %v1868 = vld [vmem:[%s319 + $0x9a] sm:$0xff]
        %v1869 = vld [vmem:[%s319 + $0xaa] sm:$0xff]
        %v1870 = vld [vmem:[%s319 + $0xb2] sm:$0xff]
        %v1871 = vld [vmem:[%s319 + $0xc2] sm:$0xff]
        %v1872 = vld [vmem:[%s319 + $0xca] sm:$0xff]
        %v1873 = vld [vmem:[%s319 + $0xda] sm:$0xff]
        %v1874 = vld [vmem:[%s319 + $0xe2] sm:$0xff]
        %v1875 = vld [vmem:[%s319 + $0xf2] sm:$0xff]
        %v1876 = vld [vmem:[%s319 + $0xfa] sm:$0xff]
        %v1877 = vld [vmem:[%s319 + $0x10a] sm:$0xff]
        %v1878 = vld [vmem:[%s319 + $0x112] sm:$0xff]
        %v1879 = vld [vmem:[%s319 + $0x122] sm:$0xff]
        %v1880 = vld [vmem:[%s319 + $0x12a] sm:$0xff]
        %v1881 = vld [vmem:[%s319 + $0x13a] sm:$0xff]
        %v1882 = vld [vmem:[%s319 + $0x142] sm:$0xff]
        %v1883 = vld [vmem:[%s319 + $0x152] sm:$0xff]
        %v1884 = vld [vmem:[%s319 + $0x15a] sm:$0xff]
        %v1885 = vld [vmem:[%s319 + $0x16a] sm:$0xff]
        %v1886 = vld [vmem:[%s319 + $0x172] sm:$0xff]
        %v1887 = vpack.c.bf16 %v1856, %v1855
        %v1888 = vpack.c.bf16 %v1858, %v1857
        %v1889 = vpack.c.bf16 %v1860, %v1859
        %v1890 = vpack.c.bf16 %v1862, %v1861
        %v1891 = vpack.c.bf16 %v1864, %v1863
        %v1892 = vpack.c.bf16 %v1866, %v1865
        %v1893 = vpack.c.bf16 %v1868, %v1867
        %v1894 = vpack.c.bf16 %v1870, %v1869
        %v1895 = vpack.c.bf16 %v1872, %v1871
        %v1896 = vpack.c.bf16 %v1874, %v1873
        %v1897 = vpack.c.bf16 %v1876, %v1875
        %v1898 = vpack.c.bf16 %v1878, %v1877
        %v1899 = vpack.c.bf16 %v1880, %v1879
        %v1900 = vpack.c.bf16 %v1882, %v1881
        %v1901 = vpack.c.bf16 %v1884, %v1883
        %v1902 = vpack.c.bf16 %v1886, %v1885
        %s1903 = scalar_lea.vmem %s1, 10
        %v1904 = vld [vmem:[%s1903] sm:$0x3]
        %v1906 = vsel %vm310, %v1887, 0
        %v1909 = vsel %vm310, %v1888, 0
        %v1912 = vsel %vm310, %v1889, 0
        %v1915 = vsel %vm310, %v1890, 0
        %v1918 = vsel %vm310, %v1891, 0
        %v1921 = vsel %vm310, %v1892, 0
        %v1924 = vsel %vm310, %v1893, 0
        %v1927 = vsel %vm310, %v1894, 0
        %v1930 = vsel %vm310, %v1895, 0
        %v1933 = vsel %vm310, %v1896, 0
        %v1936 = vsel %vm310, %v1897, 0
        %v1939 = vsel %vm310, %v1898, 0
        %v1942 = vsel %vm310, %v1899, 0
        %v1945 = vsel %vm310, %v1900, 0
        %v1948 = vsel %vm310, %v1901, 0
        %v1951 = vsel %vm310, %v1902, 0
        %v1954 = vsel %vm596, %v1904, 0
        %1956 = vmatprep.subr.bf16.mxu0 0
        %1957 = vmatpush1.bf16.msra.mxu0 %v1954
        %1958 = vmatprep.subr.bf16.mxu0 0
        %1959 = vmatpush1.bf16.msra.mxu0 0
        %1960 = vmatprep.subr.bf16.mxu0 0
        %1961 = vmatpush1.bf16.msra.mxu0 0
        %1962 = vmatprep.subr.bf16.mxu0 0
        %1963 = vmatpush1.bf16.msra.mxu0 0
        %1964 = vmatprep.subr.bf16.mxu0 0
        %1965 = vmatpush1.bf16.msra.mxu0 0
        %1966 = vmatprep.subr.bf16.mxu0 0
        %1967 = vmatpush1.bf16.msra.mxu0 0
        %1968 = vmatprep.subr.bf16.mxu0 0
        %1969 = vmatpush1.bf16.msra.mxu0 0
        %1970 = vmatprep.subr.bf16.mxu0 0
        %1971 = vmatpush1.bf16.msra.mxu0 0
        %1972 = vmatprep.subr.bf16.mxu0 0
        %1973 = vmatpush1.bf16.msra.mxu0 0
        %1974 = vmatprep.subr.bf16.mxu0 0
        %1975 = vmatpush1.bf16.msra.mxu0 0
        %1976 = vmatprep.subr.bf16.mxu0 0
        %1977 = vmatpush1.bf16.msra.mxu0 0
        %1978 = vmatprep.subr.bf16.mxu0 0
        %1979 = vmatpush1.bf16.msra.mxu0 0
        %1980 = vmatprep.subr.bf16.mxu0 0
        %1981 = vmatpush1.bf16.msra.mxu0 0
        %1982 = vmatprep.subr.bf16.mxu0 0
        %1983 = vmatpush1.bf16.msra.mxu0 0
        %1984 = vmatprep.subr.bf16.mxu0 0
        %1985 = vmatpush1.bf16.msra.mxu0 0
        %1986 = vmatprep.subr.bf16.mxu0 0
        %1987 = vmatpush1.bf16.msra.mxu0 0
        %1988 = vmatprep.mubr.bf16.mxu0 0
        %1989 = vmatmul.mubr.bf16.gmra.mrb[0].mxu0 %v1906
        %v1990 = vpop.f32.mrb[0].mxu0
        %v1991 = vadd.f32 0.0, %v1990
        %v1992 = vpop.f32.mrb[0].mxu0
        %v1993 = vpop.f32.mrb[0].mxu0
        %v1994 = vadd.f32 0.0, %v1993
        %v1995 = vpop.f32.mrb[0].mxu0
        %1996 = vmatprep.mubr.bf16.mxu0 0
        %1997 = vmatmul.mubr.bf16.gmra.mrb[0].mxu0 %v1909
        %v1998 = vpop.f32.mrb[0].mxu0
        %v1999 = vadd.f32 0.0, %v1998
        %v2000 = vpop.f32.mrb[0].mxu0
        %v2001 = vpop.f32.mrb[0].mxu0
        %v2002 = vadd.f32 0.0, %v2001
        %v2003 = vpop.f32.mrb[0].mxu0
        %2004 = vmatprep.mubr.bf16.mxu0 0
        %2005 = vmatmul.mubr.bf16.gmra.mrb[0].mxu0 %v1912
        %v2006 = vpop.f32.mrb[0].mxu0
        %v2007 = vadd.f32 0.0, %v2006
        %v2008 = vpop.f32.mrb[0].mxu0
        %v2009 = vpop.f32.mrb[0].mxu0
        %v2010 = vadd.f32 0.0, %v2009
        %v2011 = vpop.f32.mrb[0].mxu0
        %2012 = vmatprep.mubr.bf16.mxu0 0
        %2013 = vmatmul.mubr.bf16.gmra.mrb[0].mxu0 %v1915
        %v2014 = vpop.f32.mrb[0].mxu0
        %v2015 = vadd.f32 0.0, %v2014
        %v2016 = vpop.f32.mrb[0].mxu0
        %v2017 = vpop.f32.mrb[0].mxu0
        %v2018 = vadd.f32 0.0, %v2017
        %v2019 = vpop.f32.mrb[0].mxu0
        %2020 = vmatprep.mubr.bf16.mxu0 0
        %2021 = vmatmul.mubr.bf16.gmra.mrb[0].mxu0 %v1918
        %v2022 = vpop.f32.mrb[0].mxu0
        %v2023 = vadd.f32 0.0, %v2022
        %v2024 = vpop.f32.mrb[0].mxu0
        %v2025 = vpop.f32.mrb[0].mxu0
        %v2026 = vadd.f32 0.0, %v2025
        %v2027 = vpop.f32.mrb[0].mxu0
        %2028 = vmatprep.mubr.bf16.mxu0 0
        %2029 = vmatmul.mubr.bf16.gmra.mrb[0].mxu0 %v1921
        %v2030 = vpop.f32.mrb[0].mxu0
        %v2031 = vadd.f32 0.0, %v2030
        %v2032 = vpop.f32.mrb[0].mxu0
        %v2033 = vpop.f32.mrb[0].mxu0
        %v2034 = vadd.f32 0.0, %v2033
        %v2035 = vpop.f32.mrb[0].mxu0
        %2036 = vmatprep.mubr.bf16.mxu0 0
        %2037 = vmatmul.mubr.bf16.gmra.mrb[0].mxu0 %v1924
        %v2038 = vpop.f32.mrb[0].mxu0
        %v2039 = vadd.f32 0.0, %v2038
        %v2040 = vpop.f32.mrb[0].mxu0
        %v2041 = vpop.f32.mrb[0].mxu0
        %v2042 = vadd.f32 0.0, %v2041
        %v2043 = vpop.f32.mrb[0].mxu0
        %2044 = vmatprep.mubr.bf16.mxu0 0
        %2045 = vmatmul.mubr.bf16.gmra.mrb[0].mxu0 %v1927
        %v2046 = vpop.f32.mrb[0].mxu0
        %v2047 = vadd.f32 0.0, %v2046
        %v2048 = vpop.f32.mrb[0].mxu0
        %v2049 = vpop.f32.mrb[0].mxu0
        %v2050 = vadd.f32 0.0, %v2049
        %v2051 = vpop.f32.mrb[0].mxu0
        %2052 = vmatprep.mubr.bf16.mxu0 0
        %2053 = vmatmul.mubr.bf16.gmra.mrb[0].mxu0 %v1930
        %v2054 = vpop.f32.mrb[0].mxu0
        %v2055 = vadd.f32 0.0, %v2054
        %v2056 = vpop.f32.mrb[0].mxu0
        %v2057 = vpop.f32.mrb[0].mxu0
        %v2058 = vadd.f32 0.0, %v2057
        %v2059 = vpop.f32.mrb[0].mxu0
        %2060 = vmatprep.mubr.bf16.mxu0 0
        %2061 = vmatmul.mubr.bf16.gmra.mrb[0].mxu0 %v1933
        %v2062 = vpop.f32.mrb[0].mxu0
        %v2063 = vadd.f32 0.0, %v2062
        %v2064 = vpop.f32.mrb[0].mxu0
        %v2065 = vpop.f32.mrb[0].mxu0
        %v2066 = vadd.f32 0.0, %v2065
        %v2067 = vpop.f32.mrb[0].mxu0
        %2068 = vmatprep.mubr.bf16.mxu0 0
        %2069 = vmatmul.mubr.bf16.gmra.mrb[0].mxu0 %v1936
        %v2070 = vpop.f32.mrb[0].mxu0
        %v2071 = vadd.f32 0.0, %v2070
        %v2072 = vpop.f32.mrb[0].mxu0
        %v2073 = vpop.f32.mrb[0].mxu0
        %v2074 = vadd.f32 0.0, %v2073
        %v2075 = vpop.f32.mrb[0].mxu0
        %2076 = vmatprep.mubr.bf16.mxu0 0
        %2077 = vmatmul.mubr.bf16.gmra.mrb[0].mxu0 %v1939
        %v2078 = vpop.f32.mrb[0].mxu0
        %v2079 = vadd.f32 0.0, %v2078
        %v2080 = vpop.f32.mrb[0].mxu0
        %v2081 = vpop.f32.mrb[0].mxu0
        %v2082 = vadd.f32 0.0, %v2081
        %v2083 = vpop.f32.mrb[0].mxu0
        %2084 = vmatprep.mubr.bf16.mxu0 0
        %2085 = vmatmul.mubr.bf16.gmra.mrb[0].mxu0 %v1942
        %v2086 = vpop.f32.mrb[0].mxu0
        %v2087 = vadd.f32 0.0, %v2086
        %v2088 = vpop.f32.mrb[0].mxu0
        %v2089 = vpop.f32.mrb[0].mxu0
        %v2090 = vadd.f32 0.0, %v2089
        %v2091 = vpop.f32.mrb[0].mxu0
        %2092 = vmatprep.mubr.bf16.mxu0 0
        %2093 = vmatmul.mubr.bf16.gmra.mrb[0].mxu0 %v1945
        %v2094 = vpop.f32.mrb[0].mxu0
        %v2095 = vadd.f32 0.0, %v2094
        %v2096 = vpop.f32.mrb[0].mxu0
        %v2097 = vpop.f32.mrb[0].mxu0
        %v2098 = vadd.f32 0.0, %v2097
        %v2099 = vpop.f32.mrb[0].mxu0
        %2100 = vmatprep.mubr.bf16.mxu0 0
        %2101 = vmatmul.mubr.bf16.gmra.mrb[0].mxu0 %v1948
        %v2102 = vpop.f32.mrb[0].mxu0
        %v2103 = vadd.f32 0.0, %v2102
        %v2104 = vpop.f32.mrb[0].mxu0
        %v2105 = vpop.f32.mrb[0].mxu0
        %v2106 = vadd.f32 0.0, %v2105
        %v2107 = vpop.f32.mrb[0].mxu0
        %2108 = vmatprep.mubr.bf16.mxu0 0
        %2109 = vmatmul.mubr.bf16.gmra.mrb[0].mxu0 %v1951
        %v2110 = vpop.f32.mrb[0].mxu0
        %v2111 = vadd.f32 0.0, %v2110
        %v2112 = vpop.f32.mrb[0].mxu0
        %v2113 = vpop.f32.mrb[0].mxu0
        %v2114 = vadd.f32 0.0, %v2113
        %v2115 = vpop.f32.mrb[0].mxu0
        %2116 = vdwg.mxu0
        %v2117 = vadd.f32 %v1823, %v1991
        %v2118 = vadd.f32 %v1824, %v1994
        %v2119 = vadd.f32 %v1825, %v1999
        %v2120 = vadd.f32 %v1826, %v2002
        %v2121 = vadd.f32 %v1827, %v2007
        %v2122 = vadd.f32 %v1828, %v2010
        %v2123 = vadd.f32 %v1829, %v2015
        %v2124 = vadd.f32 %v1830, %v2018
        %v2125 = vadd.f32 %v1831, %v2023
        %v2126 = vadd.f32 %v1832, %v2026
        %v2127 = vadd.f32 %v1833, %v2031
        %v2128 = vadd.f32 %v1834, %v2034
        %v2129 = vadd.f32 %v1835, %v2039
        %v2130 = vadd.f32 %v1836, %v2042
        %v2131 = vadd.f32 %v1837, %v2047
        %v2132 = vadd.f32 %v1838, %v2050
        %v2133 = vadd.f32 %v1839, %v2055
        %v2134 = vadd.f32 %v1840, %v2058
        %v2135 = vadd.f32 %v1841, %v2063
        %v2136 = vadd.f32 %v1842, %v2066
        %v2137 = vadd.f32 %v1843, %v2071
        %v2138 = vadd.f32 %v1844, %v2074
        %v2139 = vadd.f32 %v1845, %v2079
        %v2140 = vadd.f32 %v1846, %v2082
        %v2141 = vadd.f32 %v1847, %v2087
        %v2142 = vadd.f32 %v1848, %v2090
        %v2143 = vadd.f32 %v1849, %v2095
        %v2144 = vadd.f32 %v1850, %v2098
        %v2145 = vadd.f32 %v1851, %v2103
        %v2146 = vadd.f32 %v1852, %v2106
        %v2147 = vadd.f32 %v1853, %v2111
        %v2148 = vadd.f32 %v1854, %v2114
        %s2149 = scalar_lea.vmem [#allocation2], 48
        %v2150 = vld [vmem:[%s2149] sm:$0xff]
        %v2151 = vld [vmem:[%s2149 + $0x8] sm:$0xff]
        %v2152 = vld [vmem:[%s2149 + $0x18] sm:$0xff]
        %v2153 = vld [vmem:[%s2149 + $0x20] sm:$0xff]
        %v2154 = vld [vmem:[%s2149 + $0x30] sm:$0xff]
        %v2155 = vld [vmem:[%s2149 + $0x38] sm:$0xff]
        %v2156 = vld [vmem:[%s2149 + $0x48] sm:$0xff]
        %v2157 = vld [vmem:[%s2149 + $0x50] sm:$0xff]
        %v2158 = vld [vmem:[%s2149 + $0x60] sm:$0xff]
        %v2159 = vld [vmem:[%s2149 + $0x68] sm:$0xff]
        %v2160 = vld [vmem:[%s2149 + $0x78] sm:$0xff]
        %v2161 = vld [vmem:[%s2149 + $0x80] sm:$0xff]
        %v2162 = vld [vmem:[%s2149 + $0x90] sm:$0xff]
        %v2163 = vld [vmem:[%s2149 + $0x98] sm:$0xff]
        %v2164 = vld [vmem:[%s2149 + $0xa8] sm:$0xff]
        %v2165 = vld [vmem:[%s2149 + $0xb0] sm:$0xff]
        %v2166 = vld [vmem:[%s2149 + $0xc0] sm:$0xff]
        %v2167 = vld [vmem:[%s2149 + $0xc8] sm:$0xff]
        %v2168 = vld [vmem:[%s2149 + $0xd8] sm:$0xff]
        %v2169 = vld [vmem:[%s2149 + $0xe0] sm:$0xff]
        %v2170 = vld [vmem:[%s2149 + $0xf0] sm:$0xff]
        %v2171 = vld [vmem:[%s2149 + $0xf8] sm:$0xff]
        %v2172 = vld [vmem:[%s2149 + $0x108] sm:$0xff]
        %v2173 = vld [vmem:[%s2149 + $0x110] sm:$0xff]
        %v2174 = vld [vmem:[%s2149 + $0x120] sm:$0xff]
        %v2175 = vld [vmem:[%s2149 + $0x128] sm:$0xff]
        %v2176 = vld [vmem:[%s2149 + $0x138] sm:$0xff]
        %v2177 = vld [vmem:[%s2149 + $0x140] sm:$0xff]
        %v2178 = vld [vmem:[%s2149 + $0x150] sm:$0xff]
        %v2179 = vld [vmem:[%s2149 + $0x158] sm:$0xff]
        %v2180 = vld [vmem:[%s2149 + $0x168] sm:$0xff]
        %v2181 = vld [vmem:[%s2149 + $0x170] sm:$0xff]
        %v2182 = vpack.c.bf16 %v2151, %v2150
        %v2183 = vpack.c.bf16 %v2153, %v2152
        %v2184 = vpack.c.bf16 %v2155, %v2154
        %v2185 = vpack.c.bf16 %v2157, %v2156
        %v2186 = vpack.c.bf16 %v2159, %v2158
        %v2187 = vpack.c.bf16 %v2161, %v2160
        %v2188 = vpack.c.bf16 %v2163, %v2162
        %v2189 = vpack.c.bf16 %v2165, %v2164
        %v2190 = vpack.c.bf16 %v2167, %v2166
        %v2191 = vpack.c.bf16 %v2169, %v2168
        %v2192 = vpack.c.bf16 %v2171, %v2170
        %v2193 = vpack.c.bf16 %v2173, %v2172
        %v2194 = vpack.c.bf16 %v2175, %v2174
        %v2195 = vpack.c.bf16 %v2177, %v2176
        %v2196 = vpack.c.bf16 %v2179, %v2178
        %v2197 = vpack.c.bf16 %v2181, %v2180
        %s2198 = scalar_lea.vmem %s1, 12
        %v2199 = vld [vmem:[%s2198] sm:$0x3]
        %v2201 = vsel %vm310, %v2182, 0
        %v2204 = vsel %vm310, %v2183, 0
        %v2207 = vsel %vm310, %v2184, 0
        %v2210 = vsel %vm310, %v2185, 0
        %v2213 = vsel %vm310, %v2186, 0
        %v2216 = vsel %vm310, %v2187, 0
        %v2219 = vsel %vm310, %v2188, 0
        %v2222 = vsel %vm310, %v2189, 0
        %v2225 = vsel %vm310, %v2190, 0
        %v2228 = vsel %vm310, %v2191, 0
        %v2231 = vsel %vm310, %v2192, 0
        %v2234 = vsel %vm310, %v2193, 0
        %v2237 = vsel %vm310, %v2194, 0
        %v2240 = vsel %vm310, %v2195, 0
        %v2243 = vsel %vm310, %v2196, 0
        %v2246 = vsel %vm310, %v2197, 0
        %v2249 = vsel %vm596, %v2199, 0
        %2251 = vmatprep.subr.bf16.mxu0 0
        %2252 = vmatpush1.bf16.msra.mxu0 %v2249
        %2253 = vmatprep.subr.bf16.mxu0 0
        %2254 = vmatpush1.bf16.msra.mxu0 0
        %2255 = vmatprep.subr.bf16.mxu0 0
        %2256 = vmatpush1.bf16.msra.mxu0 0
        %2257 = vmatprep.subr.bf16.mxu0 0
        %2258 = vmatpush1.bf16.msra.mxu0 0
        %2259 = vmatprep.subr.bf16.mxu0 0
        %2260 = vmatpush1.bf16.msra.mxu0 0
        %2261 = vmatprep.subr.bf16.mxu0 0
        %2262 = vmatpush1.bf16.msra.mxu0 0
        %2263 = vmatprep.subr.bf16.mxu0 0
        %2264 = vmatpush1.bf16.msra.mxu0 0
        %2265 = vmatprep.subr.bf16.mxu0 0
        %2266 = vmatpush1.bf16.msra.mxu0 0
        %2267 = vmatprep.subr.bf16.mxu0 0
        %2268 = vmatpush1.bf16.msra.mxu0 0
        %2269 = vmatprep.subr.bf16.mxu0 0
        %2270 = vmatpush1.bf16.msra.mxu0 0
        %2271 = vmatprep.subr.bf16.mxu0 0
        %2272 = vmatpush1.bf16.msra.mxu0 0
        %2273 = vmatprep.subr.bf16.mxu0 0
        %2274 = vmatpush1.bf16.msra.mxu0 0
        %2275 = vmatprep.subr.bf16.mxu0 0
        %2276 = vmatpush1.bf16.msra.mxu0 0
        %2277 = vmatprep.subr.bf16.mxu0 0
        %2278 = vmatpush1.bf16.msra.mxu0 0
        %2279 = vmatprep.subr.bf16.mxu0 0
        %2280 = vmatpush1.bf16.msra.mxu0 0
        %2281 = vmatprep.subr.bf16.mxu0 0
        %2282 = vmatpush1.bf16.msra.mxu0 0
        %2283 = vmatprep.mubr.bf16.mxu0 0
        %2284 = vmatmul.mubr.bf16.gmra.mrb[0].mxu0 %v2201
        %v2285 = vpop.f32.mrb[0].mxu0
        %v2286 = vadd.f32 0.0, %v2285
        %v2287 = vpop.f32.mrb[0].mxu0
        %v2288 = vpop.f32.mrb[0].mxu0
        %v2289 = vadd.f32 0.0, %v2288
        %v2290 = vpop.f32.mrb[0].mxu0
        %2291 = vmatprep.mubr.bf16.mxu0 0
        %2292 = vmatmul.mubr.bf16.gmra.mrb[0].mxu0 %v2204
        %v2293 = vpop.f32.mrb[0].mxu0
        %v2294 = vadd.f32 0.0, %v2293
        %v2295 = vpop.f32.mrb[0].mxu0
        %v2296 = vpop.f32.mrb[0].mxu0
        %v2297 = vadd.f32 0.0, %v2296
        %v2298 = vpop.f32.mrb[0].mxu0
        %2299 = vmatprep.mubr.bf16.mxu0 0
        %2300 = vmatmul.mubr.bf16.gmra.mrb[0].mxu0 %v2207
        %v2301 = vpop.f32.mrb[0].mxu0
        %v2302 = vadd.f32 0.0, %v2301
        %v2303 = vpop.f32.mrb[0].mxu0
        %v2304 = vpop.f32.mrb[0].mxu0
        %v2305 = vadd.f32 0.0, %v2304
        %v2306 = vpop.f32.mrb[0].mxu0
        %2307 = vmatprep.mubr.bf16.mxu0 0
        %2308 = vmatmul.mubr.bf16.gmra.mrb[0].mxu0 %v2210
        %v2309 = vpop.f32.mrb[0].mxu0
        %v2310 = vadd.f32 0.0, %v2309
        %v2311 = vpop.f32.mrb[0].mxu0
        %v2312 = vpop.f32.mrb[0].mxu0
        %v2313 = vadd.f32 0.0, %v2312
        %v2314 = vpop.f32.mrb[0].mxu0
        %2315 = vmatprep.mubr.bf16.mxu0 0
        %2316 = vmatmul.mubr.bf16.gmra.mrb[0].mxu0 %v2213
        %v2317 = vpop.f32.mrb[0].mxu0
        %v2318 = vadd.f32 0.0, %v2317
        %v2319 = vpop.f32.mrb[0].mxu0
        %v2320 = vpop.f32.mrb[0].mxu0
        %v2321 = vadd.f32 0.0, %v2320
        %v2322 = vpop.f32.mrb[0].mxu0
        %2323 = vmatprep.mubr.bf16.mxu0 0
        %2324 = vmatmul.mubr.bf16.gmra.mrb[0].mxu0 %v2216
        %v2325 = vpop.f32.mrb[0].mxu0
        %v2326 = vadd.f32 0.0, %v2325
        %v2327 = vpop.f32.mrb[0].mxu0
        %v2328 = vpop.f32.mrb[0].mxu0
        %v2329 = vadd.f32 0.0, %v2328
        %v2330 = vpop.f32.mrb[0].mxu0
        %2331 = vmatprep.mubr.bf16.mxu0 0
        %2332 = vmatmul.mubr.bf16.gmra.mrb[0].mxu0 %v2219
        %v2333 = vpop.f32.mrb[0].mxu0
        %v2334 = vadd.f32 0.0, %v2333
        %v2335 = vpop.f32.mrb[0].mxu0
        %v2336 = vpop.f32.mrb[0].mxu0
        %v2337 = vadd.f32 0.0, %v2336
        %v2338 = vpop.f32.mrb[0].mxu0
        %2339 = vmatprep.mubr.bf16.mxu0 0
        %2340 = vmatmul.mubr.bf16.gmra.mrb[0].mxu0 %v2222
        %v2341 = vpop.f32.mrb[0].mxu0
        %v2342 = vadd.f32 0.0, %v2341
        %v2343 = vpop.f32.mrb[0].mxu0
        %v2344 = vpop.f32.mrb[0].mxu0
        %v2345 = vadd.f32 0.0, %v2344
        %v2346 = vpop.f32.mrb[0].mxu0
        %2347 = vmatprep.mubr.bf16.mxu0 0
        %2348 = vmatmul.mubr.bf16.gmra.mrb[0].mxu0 %v2225
        %v2349 = vpop.f32.mrb[0].mxu0
        %v2350 = vadd.f32 0.0, %v2349
        %v2351 = vpop.f32.mrb[0].mxu0
        %v2352 = vpop.f32.mrb[0].mxu0
        %v2353 = vadd.f32 0.0, %v2352
        %v2354 = vpop.f32.mrb[0].mxu0
        %2355 = vmatprep.mubr.bf16.mxu0 0
        %2356 = vmatmul.mubr.bf16.gmra.mrb[0].mxu0 %v2228
        %v2357 = vpop.f32.mrb[0].mxu0
        %v2358 = vadd.f32 0.0, %v2357
        %v2359 = vpop.f32.mrb[0].mxu0
        %v2360 = vpop.f32.mrb[0].mxu0
        %v2361 = vadd.f32 0.0, %v2360
        %v2362 = vpop.f32.mrb[0].mxu0
        %2363 = vmatprep.mubr.bf16.mxu0 0
        %2364 = vmatmul.mubr.bf16.gmra.mrb[0].mxu0 %v2231
        %v2365 = vpop.f32.mrb[0].mxu0
        %v2366 = vadd.f32 0.0, %v2365
        %v2367 = vpop.f32.mrb[0].mxu0
        %v2368 = vpop.f32.mrb[0].mxu0
        %v2369 = vadd.f32 0.0, %v2368
        %v2370 = vpop.f32.mrb[0].mxu0
        %2371 = vmatprep.mubr.bf16.mxu0 0
        %2372 = vmatmul.mubr.bf16.gmra.mrb[0].mxu0 %v2234
        %v2373 = vpop.f32.mrb[0].mxu0
        %v2374 = vadd.f32 0.0, %v2373
        %v2375 = vpop.f32.mrb[0].mxu0
        %v2376 = vpop.f32.mrb[0].mxu0
        %v2377 = vadd.f32 0.0, %v2376
        %v2378 = vpop.f32.mrb[0].mxu0
        %2379 = vmatprep.mubr.bf16.mxu0 0
        %2380 = vmatmul.mubr.bf16.gmra.mrb[0].mxu0 %v2237
        %v2381 = vpop.f32.mrb[0].mxu0
        %v2382 = vadd.f32 0.0, %v2381
        %v2383 = vpop.f32.mrb[0].mxu0
        %v2384 = vpop.f32.mrb[0].mxu0
        %v2385 = vadd.f32 0.0, %v2384
        %v2386 = vpop.f32.mrb[0].mxu0
        %2387 = vmatprep.mubr.bf16.mxu0 0
        %2388 = vmatmul.mubr.bf16.gmra.mrb[0].mxu0 %v2240
        %v2389 = vpop.f32.mrb[0].mxu0
        %v2390 = vadd.f32 0.0, %v2389
        %v2391 = vpop.f32.mrb[0].mxu0
        %v2392 = vpop.f32.mrb[0].mxu0
        %v2393 = vadd.f32 0.0, %v2392
        %v2394 = vpop.f32.mrb[0].mxu0
        %2395 = vmatprep.mubr.bf16.mxu0 0
        %2396 = vmatmul.mubr.bf16.gmra.mrb[0].mxu0 %v2243
        %v2397 = vpop.f32.mrb[0].mxu0
        %v2398 = vadd.f32 0.0, %v2397
        %v2399 = vpop.f32.mrb[0].mxu0
        %v2400 = vpop.f32.mrb[0].mxu0
        %v2401 = vadd.f32 0.0, %v2400
        %v2402 = vpop.f32.mrb[0].mxu0
        %2403 = vmatprep.mubr.bf16.mxu0 0
        %2404 = vmatmul.mubr.bf16.gmra.mrb[0].mxu0 %v2246
        %v2405 = vpop.f32.mrb[0].mxu0
        %v2406 = vadd.f32 0.0, %v2405
        %v2407 = vpop.f32.mrb[0].mxu0
        %v2408 = vpop.f32.mrb[0].mxu0
        %v2409 = vadd.f32 0.0, %v2408
        %v2410 = vpop.f32.mrb[0].mxu0
        %2411 = vdwg.mxu0
        %v2412 = vadd.f32 %v2117, %v2286
        %v2413 = vadd.f32 %v2118, %v2289
        %v2414 = vadd.f32 %v2119, %v2294
        %v2415 = vadd.f32 %v2120, %v2297
        %v2416 = vadd.f32 %v2121, %v2302
        %v2417 = vadd.f32 %v2122, %v2305
        %v2418 = vadd.f32 %v2123, %v2310
        %v2419 = vadd.f32 %v2124, %v2313
        %v2420 = vadd.f32 %v2125, %v2318
        %v2421 = vadd.f32 %v2126, %v2321
        %v2422 = vadd.f32 %v2127, %v2326
        %v2423 = vadd.f32 %v2128, %v2329
        %v2424 = vadd.f32 %v2129, %v2334
        %v2425 = vadd.f32 %v2130, %v2337
        %v2426 = vadd.f32 %v2131, %v2342
        %v2427 = vadd.f32 %v2132, %v2345
        %v2428 = vadd.f32 %v2133, %v2350
        %v2429 = vadd.f32 %v2134, %v2353
        %v2430 = vadd.f32 %v2135, %v2358
        %v2431 = vadd.f32 %v2136, %v2361
        %v2432 = vadd.f32 %v2137, %v2366
        %v2433 = vadd.f32 %v2138, %v2369
        %v2434 = vadd.f32 %v2139, %v2374
        %v2435 = vadd.f32 %v2140, %v2377
        %v2436 = vadd.f32 %v2141, %v2382
        %v2437 = vadd.f32 %v2142, %v2385
        %v2438 = vadd.f32 %v2143, %v2390
        %v2439 = vadd.f32 %v2144, %v2393
        %v2440 = vadd.f32 %v2145, %v2398
        %v2441 = vadd.f32 %v2146, %v2401
        %v2442 = vadd.f32 %v2147, %v2406
        %v2443 = vadd.f32 %v2148, %v2409
        %v2444 = vld [vmem:[%s2149 + $0x1] sm:$0xff]
        %v2445 = vld [vmem:[%s2149 + $0x9] sm:$0xff]
        %v2446 = vld [vmem:[%s2149 + $0x19] sm:$0xff]
        %v2447 = vld [vmem:[%s2149 + $0x21] sm:$0xff]
        %v2448 = vld [vmem:[%s2149 + $0x31] sm:$0xff]
        %v2449 = vld [vmem:[%s2149 + $0x39] sm:$0xff]
        %v2450 = vld [vmem:[%s2149 + $0x49] sm:$0xff]
        %v2451 = vld [vmem:[%s2149 + $0x51] sm:$0xff]
        %v2452 = vld [vmem:[%s2149 + $0x61] sm:$0xff]
        %v2453 = vld [vmem:[%s2149 + $0x69] sm:$0xff]
        %v2454 = vld [vmem:[%s2149 + $0x79] sm:$0xff]
        %v2455 = vld [vmem:[%s2149 + $0x81] sm:$0xff]
        %v2456 = vld [vmem:[%s2149 + $0x91] sm:$0xff]
        %v2457 = vld [vmem:[%s2149 + $0x99] sm:$0xff]
        %v2458 = vld [vmem:[%s2149 + $0xa9] sm:$0xff]
        %v2459 = vld [vmem:[%s2149 + $0xb1] sm:$0xff]
        %v2460 = vld [vmem:[%s2149 + $0xc1] sm:$0xff]
        %v2461 = vld [vmem:[%s2149 + $0xc9] sm:$0xff]
        %v2462 = vld [vmem:[%s2149 + $0xd9] sm:$0xff]
        %v2463 = vld [vmem:[%s2149 + $0xe1] sm:$0xff]
        %v2464 = vld [vmem:[%s2149 + $0xf1] sm:$0xff]
        %v2465 = vld [vmem:[%s2149 + $0xf9] sm:$0xff]
        %v2466 = vld [vmem:[%s2149 + $0x109] sm:$0xff]
        %v2467 = vld [vmem:[%s2149 + $0x111] sm:$0xff]
        %v2468 = vld [vmem:[%s2149 + $0x121] sm:$0xff]
        %v2469 = vld [vmem:[%s2149 + $0x129] sm:$0xff]
        %v2470 = vld [vmem:[%s2149 + $0x139] sm:$0xff]
        %v2471 = vld [vmem:[%s2149 + $0x141] sm:$0xff]
        %v2472 = vld [vmem:[%s2149 + $0x151] sm:$0xff]
        %v2473 = vld [vmem:[%s2149 + $0x159] sm:$0xff]
        %v2474 = vld [vmem:[%s2149 + $0x169] sm:$0xff]
        %v2475 = vld [vmem:[%s2149 + $0x171] sm:$0xff]
        %v2476 = vpack.c.bf16 %v2445, %v2444
        %v2477 = vpack.c.bf16 %v2447, %v2446
        %v2478 = vpack.c.bf16 %v2449, %v2448
        %v2479 = vpack.c.bf16 %v2451, %v2450
        %v2480 = vpack.c.bf16 %v2453, %v2452
        %v2481 = vpack.c.bf16 %v2455, %v2454
        %v2482 = vpack.c.bf16 %v2457, %v2456
        %v2483 = vpack.c.bf16 %v2459, %v2458
        %v2484 = vpack.c.bf16 %v2461, %v2460
        %v2485 = vpack.c.bf16 %v2463, %v2462
        %v2486 = vpack.c.bf16 %v2465, %v2464
        %v2487 = vpack.c.bf16 %v2467, %v2466
        %v2488 = vpack.c.bf16 %v2469, %v2468
        %v2489 = vpack.c.bf16 %v2471, %v2470
        %v2490 = vpack.c.bf16 %v2473, %v2472
        %v2491 = vpack.c.bf16 %v2475, %v2474
        %s2492 = scalar_lea.vmem %s1, 14
        %v2493 = vld [vmem:[%s2492] sm:$0x3]
        %v2495 = vsel %vm310, %v2476, 0
        %v2498 = vsel %vm310, %v2477, 0
        %v2501 = vsel %vm310, %v2478, 0
        %v2504 = vsel %vm310, %v2479, 0
        %v2507 = vsel %vm310, %v2480, 0
        %v2510 = vsel %vm310, %v2481, 0
        %v2513 = vsel %vm310, %v2482, 0
        %v2516 = vsel %vm310, %v2483, 0
        %v2519 = vsel %vm310, %v2484, 0
        %v2522 = vsel %vm310, %v2485, 0
        %v2525 = vsel %vm310, %v2486, 0
        %v2528 = vsel %vm310, %v2487, 0
        %v2531 = vsel %vm310, %v2488, 0
        %v2534 = vsel %vm310, %v2489, 0
        %v2537 = vsel %vm310, %v2490, 0
        %v2540 = vsel %vm310, %v2491, 0
        %v2543 = vsel %vm596, %v2493, 0
        %2545 = vmatprep.subr.bf16.mxu0 0
        %2546 = vmatpush1.bf16.msra.mxu0 %v2543
        %2547 = vmatprep.subr.bf16.mxu0 0
        %2548 = vmatpush1.bf16.msra.mxu0 0
        %2549 = vmatprep.subr.bf16.mxu0 0
        %2550 = vmatpush1.bf16.msra.mxu0 0
        %2551 = vmatprep.subr.bf16.mxu0 0
        %2552 = vmatpush1.bf16.msra.mxu0 0
        %2553 = vmatprep.subr.bf16.mxu0 0
        %2554 = vmatpush1.bf16.msra.mxu0 0
        %2555 = vmatprep.subr.bf16.mxu0 0
        %2556 = vmatpush1.bf16.msra.mxu0 0
        %2557 = vmatprep.subr.bf16.mxu0 0
        %2558 = vmatpush1.bf16.msra.mxu0 0
        %2559 = vmatprep.subr.bf16.mxu0 0
        %2560 = vmatpush1.bf16.msra.mxu0 0
        %2561 = vmatprep.subr.bf16.mxu0 0
        %2562 = vmatpush1.bf16.msra.mxu0 0
        %2563 = vmatprep.subr.bf16.mxu0 0
        %2564 = vmatpush1.bf16.msra.mxu0 0
        %2565 = vmatprep.subr.bf16.mxu0 0
        %2566 = vmatpush1.bf16.msra.mxu0 0
        %2567 = vmatprep.subr.bf16.mxu0 0
        %2568 = vmatpush1.bf16.msra.mxu0 0
        %2569 = vmatprep.subr.bf16.mxu0 0
        %2570 = vmatpush1.bf16.msra.mxu0 0
        %2571 = vmatprep.subr.bf16.mxu0 0
        %2572 = vmatpush1.bf16.msra.mxu0 0
        %2573 = vmatprep.subr.bf16.mxu0 0
        %2574 = vmatpush1.bf16.msra.mxu0 0
        %2575 = vmatprep.subr.bf16.mxu0 0
        %2576 = vmatpush1.bf16.msra.mxu0 0
        %2577 = vmatprep.mubr.bf16.mxu0 0
        %2578 = vmatmul.mubr.bf16.gmra.mrb[0].mxu0 %v2495
        %v2579 = vpop.f32.mrb[0].mxu0
        %v2580 = vadd.f32 0.0, %v2579
        %v2581 = vpop.f32.mrb[0].mxu0
        %v2582 = vpop.f32.mrb[0].mxu0
        %v2583 = vadd.f32 0.0, %v2582
        %v2584 = vpop.f32.mrb[0].mxu0
        %2585 = vmatprep.mubr.bf16.mxu0 0
        %2586 = vmatmul.mubr.bf16.gmra.mrb[0].mxu0 %v2498
        %v2587 = vpop.f32.mrb[0].mxu0
        %v2588 = vadd.f32 0.0, %v2587
        %v2589 = vpop.f32.mrb[0].mxu0
        %v2590 = vpop.f32.mrb[0].mxu0
        %v2591 = vadd.f32 0.0, %v2590
        %v2592 = vpop.f32.mrb[0].mxu0
        %2593 = vmatprep.mubr.bf16.mxu0 0
        %2594 = vmatmul.mubr.bf16.gmra.mrb[0].mxu0 %v2501
        %v2595 = vpop.f32.mrb[0].mxu0
        %v2596 = vadd.f32 0.0, %v2595
        %v2597 = vpop.f32.mrb[0].mxu0
        %v2598 = vpop.f32.mrb[0].mxu0
        %v2599 = vadd.f32 0.0, %v2598
        %v2600 = vpop.f32.mrb[0].mxu0
        %2601 = vmatprep.mubr.bf16.mxu0 0
        %2602 = vmatmul.mubr.bf16.gmra.mrb[0].mxu0 %v2504
        %v2603 = vpop.f32.mrb[0].mxu0
        %v2604 = vadd.f32 0.0, %v2603
        %v2605 = vpop.f32.mrb[0].mxu0
        %v2606 = vpop.f32.mrb[0].mxu0
        %v2607 = vadd.f32 0.0, %v2606
        %v2608 = vpop.f32.mrb[0].mxu0
        %2609 = vmatprep.mubr.bf16.mxu0 0
        %2610 = vmatmul.mubr.bf16.gmra.mrb[0].mxu0 %v2507
        %v2611 = vpop.f32.mrb[0].mxu0
        %v2612 = vadd.f32 0.0, %v2611
        %v2613 = vpop.f32.mrb[0].mxu0
        %v2614 = vpop.f32.mrb[0].mxu0
        %v2615 = vadd.f32 0.0, %v2614
        %v2616 = vpop.f32.mrb[0].mxu0
        %2617 = vmatprep.mubr.bf16.mxu0 0
        %2618 = vmatmul.mubr.bf16.gmra.mrb[0].mxu0 %v2510
        %v2619 = vpop.f32.mrb[0].mxu0
        %v2620 = vadd.f32 0.0, %v2619
        %v2621 = vpop.f32.mrb[0].mxu0
        %v2622 = vpop.f32.mrb[0].mxu0
        %v2623 = vadd.f32 0.0, %v2622
        %v2624 = vpop.f32.mrb[0].mxu0
        %2625 = vmatprep.mubr.bf16.mxu0 0
        %2626 = vmatmul.mubr.bf16.gmra.mrb[0].mxu0 %v2513
        %v2627 = vpop.f32.mrb[0].mxu0
        %v2628 = vadd.f32 0.0, %v2627
        %v2629 = vpop.f32.mrb[0].mxu0
        %v2630 = vpop.f32.mrb[0].mxu0
        %v2631 = vadd.f32 0.0, %v2630
        %v2632 = vpop.f32.mrb[0].mxu0
        %2633 = vmatprep.mubr.bf16.mxu0 0
        %2634 = vmatmul.mubr.bf16.gmra.mrb[0].mxu0 %v2516
        %v2635 = vpop.f32.mrb[0].mxu0
        %v2636 = vadd.f32 0.0, %v2635
        %v2637 = vpop.f32.mrb[0].mxu0
        %v2638 = vpop.f32.mrb[0].mxu0
        %v2639 = vadd.f32 0.0, %v2638
        %v2640 = vpop.f32.mrb[0].mxu0
        %2641 = vmatprep.mubr.bf16.mxu0 0
        %2642 = vmatmul.mubr.bf16.gmra.mrb[0].mxu0 %v2519
        %v2643 = vpop.f32.mrb[0].mxu0
        %v2644 = vadd.f32 0.0, %v2643
        %v2645 = vpop.f32.mrb[0].mxu0
        %v2646 = vpop.f32.mrb[0].mxu0
        %v2647 = vadd.f32 0.0, %v2646
        %v2648 = vpop.f32.mrb[0].mxu0
        %2649 = vmatprep.mubr.bf16.mxu0 0
        %2650 = vmatmul.mubr.bf16.gmra.mrb[0].mxu0 %v2522
        %v2651 = vpop.f32.mrb[0].mxu0
        %v2652 = vadd.f32 0.0, %v2651
        %v2653 = vpop.f32.mrb[0].mxu0
        %v2654 = vpop.f32.mrb[0].mxu0
        %v2655 = vadd.f32 0.0, %v2654
        %v2656 = vpop.f32.mrb[0].mxu0
        %2657 = vmatprep.mubr.bf16.mxu0 0
        %2658 = vmatmul.mubr.bf16.gmra.mrb[0].mxu0 %v2525
        %v2659 = vpop.f32.mrb[0].mxu0
        %v2660 = vadd.f32 0.0, %v2659
        %v2661 = vpop.f32.mrb[0].mxu0
        %v2662 = vpop.f32.mrb[0].mxu0
        %v2663 = vadd.f32 0.0, %v2662
        %v2664 = vpop.f32.mrb[0].mxu0
        %2665 = vmatprep.mubr.bf16.mxu0 0
        %2666 = vmatmul.mubr.bf16.gmra.mrb[0].mxu0 %v2528
        %v2667 = vpop.f32.mrb[0].mxu0
        %v2668 = vadd.f32 0.0, %v2667
        %v2669 = vpop.f32.mrb[0].mxu0
        %v2670 = vpop.f32.mrb[0].mxu0
        %v2671 = vadd.f32 0.0, %v2670
        %v2672 = vpop.f32.mrb[0].mxu0
        %2673 = vmatprep.mubr.bf16.mxu0 0
        %2674 = vmatmul.mubr.bf16.gmra.mrb[0].mxu0 %v2531
        %v2675 = vpop.f32.mrb[0].mxu0
        %v2676 = vadd.f32 0.0, %v2675
        %v2677 = vpop.f32.mrb[0].mxu0
        %v2678 = vpop.f32.mrb[0].mxu0
        %v2679 = vadd.f32 0.0, %v2678
        %v2680 = vpop.f32.mrb[0].mxu0
        %2681 = vmatprep.mubr.bf16.mxu0 0
        %2682 = vmatmul.mubr.bf16.gmra.mrb[0].mxu0 %v2534
        %v2683 = vpop.f32.mrb[0].mxu0
        %v2684 = vadd.f32 0.0, %v2683
        %v2685 = vpop.f32.mrb[0].mxu0
        %v2686 = vpop.f32.mrb[0].mxu0
        %v2687 = vadd.f32 0.0, %v2686
        %v2688 = vpop.f32.mrb[0].mxu0
        %2689 = vmatprep.mubr.bf16.mxu0 0
        %2690 = vmatmul.mubr.bf16.gmra.mrb[0].mxu0 %v2537
        %v2691 = vpop.f32.mrb[0].mxu0
        %v2692 = vadd.f32 0.0, %v2691
        %v2693 = vpop.f32.mrb[0].mxu0
        %v2694 = vpop.f32.mrb[0].mxu0
        %v2695 = vadd.f32 0.0, %v2694
        %v2696 = vpop.f32.mrb[0].mxu0
        %2697 = vmatprep.mubr.bf16.mxu0 0
        %2698 = vmatmul.mubr.bf16.gmra.mrb[0].mxu0 %v2540
        %v2699 = vpop.f32.mrb[0].mxu0
        %v2700 = vadd.f32 0.0, %v2699
        %v2701 = vpop.f32.mrb[0].mxu0
        %v2702 = vpop.f32.mrb[0].mxu0
        %v2703 = vadd.f32 0.0, %v2702
        %v2704 = vpop.f32.mrb[0].mxu0
        %2705 = vdwg.mxu0
        %v2706 = vadd.f32 %v2412, %v2580
        %v2707 = vadd.f32 %v2413, %v2583
        %v2708 = vadd.f32 %v2414, %v2588
        %v2709 = vadd.f32 %v2415, %v2591
        %v2710 = vadd.f32 %v2416, %v2596
        %v2711 = vadd.f32 %v2417, %v2599
        %v2712 = vadd.f32 %v2418, %v2604
        %v2713 = vadd.f32 %v2419, %v2607
        %v2714 = vadd.f32 %v2420, %v2612
        %v2715 = vadd.f32 %v2421, %v2615
        %v2716 = vadd.f32 %v2422, %v2620
        %v2717 = vadd.f32 %v2423, %v2623
        %v2718 = vadd.f32 %v2424, %v2628
        %v2719 = vadd.f32 %v2425, %v2631
        %v2720 = vadd.f32 %v2426, %v2636
        %v2721 = vadd.f32 %v2427, %v2639
        %v2722 = vadd.f32 %v2428, %v2644
        %v2723 = vadd.f32 %v2429, %v2647
        %v2724 = vadd.f32 %v2430, %v2652
        %v2725 = vadd.f32 %v2431, %v2655
        %v2726 = vadd.f32 %v2432, %v2660
        %v2727 = vadd.f32 %v2433, %v2663
        %v2728 = vadd.f32 %v2434, %v2668
        %v2729 = vadd.f32 %v2435, %v2671
        %v2730 = vadd.f32 %v2436, %v2676
        %v2731 = vadd.f32 %v2437, %v2679
        %v2732 = vadd.f32 %v2438, %v2684
        %v2733 = vadd.f32 %v2439, %v2687
        %v2734 = vadd.f32 %v2440, %v2692
        %v2735 = vadd.f32 %v2441, %v2695
        %v2736 = vadd.f32 %v2442, %v2700
        %v2737 = vadd.f32 %v2443, %v2703
        %v2738 = vld [vmem:[%s2149 + $0x2] sm:$0xff]
        %v2739 = vld [vmem:[%s2149 + $0xa] sm:$0xff]
        %v2740 = vld [vmem:[%s2149 + $0x1a] sm:$0xff]
        %v2741 = vld [vmem:[%s2149 + $0x22] sm:$0xff]
        %v2742 = vld [vmem:[%s2149 + $0x32] sm:$0xff]
        %v2743 = vld [vmem:[%s2149 + $0x3a] sm:$0xff]
        %v2744 = vld [vmem:[%s2149 + $0x4a] sm:$0xff]
        %v2745 = vld [vmem:[%s2149 + $0x52] sm:$0xff]
        %v2746 = vld [vmem:[%s2149 + $0x62] sm:$0xff]
        %v2747 = vld [vmem:[%s2149 + $0x6a] sm:$0xff]
        %v2748 = vld [vmem:[%s2149 + $0x7a] sm:$0xff]
        %v2749 = vld [vmem:[%s2149 + $0x82] sm:$0xff]
        %v2750 = vld [vmem:[%s2149 + $0x92] sm:$0xff]
        %v2751 = vld [vmem:[%s2149 + $0x9a] sm:$0xff]
        %v2752 = vld [vmem:[%s2149 + $0xaa] sm:$0xff]
        %v2753 = vld [vmem:[%s2149 + $0xb2] sm:$0xff]
        %v2754 = vld [vmem:[%s2149 + $0xc2] sm:$0xff]
        %v2755 = vld [vmem:[%s2149 + $0xca] sm:$0xff]
        %v2756 = vld [vmem:[%s2149 + $0xda] sm:$0xff]
        %v2757 = vld [vmem:[%s2149 + $0xe2] sm:$0xff]
        %v2758 = vld [vmem:[%s2149 + $0xf2] sm:$0xff]
        %v2759 = vld [vmem:[%s2149 + $0xfa] sm:$0xff]
        %v2760 = vld [vmem:[%s2149 + $0x10a] sm:$0xff]
        %v2761 = vld [vmem:[%s2149 + $0x112] sm:$0xff]
        %v2762 = vld [vmem:[%s2149 + $0x122] sm:$0xff]
        %v2763 = vld [vmem:[%s2149 + $0x12a] sm:$0xff]
        %v2764 = vld [vmem:[%s2149 + $0x13a] sm:$0xff]
        %v2765 = vld [vmem:[%s2149 + $0x142] sm:$0xff]
        %v2766 = vld [vmem:[%s2149 + $0x152] sm:$0xff]
        %v2767 = vld [vmem:[%s2149 + $0x15a] sm:$0xff]
        %v2768 = vld [vmem:[%s2149 + $0x16a] sm:$0xff]
        %v2769 = vld [vmem:[%s2149 + $0x172] sm:$0xff]
        %v2770 = vpack.c.bf16 %v2739, %v2738
        %v2771 = vpack.c.bf16 %v2741, %v2740
        %v2772 = vpack.c.bf16 %v2743, %v2742
        %v2773 = vpack.c.bf16 %v2745, %v2744
        %v2774 = vpack.c.bf16 %v2747, %v2746
        %v2775 = vpack.c.bf16 %v2749, %v2748
        %v2776 = vpack.c.bf16 %v2751, %v2750
        %v2777 = vpack.c.bf16 %v2753, %v2752
        %v2778 = vpack.c.bf16 %v2755, %v2754
        %v2779 = vpack.c.bf16 %v2757, %v2756
        %v2780 = vpack.c.bf16 %v2759, %v2758
        %v2781 = vpack.c.bf16 %v2761, %v2760
        %v2782 = vpack.c.bf16 %v2763, %v2762
        %v2783 = vpack.c.bf16 %v2765, %v2764
        %v2784 = vpack.c.bf16 %v2767, %v2766
        %v2785 = vpack.c.bf16 %v2769, %v2768
        %s2786 = scalar_lea.vmem %s1, 16
        %v2787 = vld [vmem:[%s2786] sm:$0x3]
        %v2789 = vsel %vm310, %v2770, 0
        %v2792 = vsel %vm310, %v2771, 0
        %v2795 = vsel %vm310, %v2772, 0
        %v2798 = vsel %vm310, %v2773, 0
        %v2801 = vsel %vm310, %v2774, 0
        %v2804 = vsel %vm310, %v2775, 0
        %v2807 = vsel %vm310, %v2776, 0
        %v2810 = vsel %vm310, %v2777, 0
        %v2813 = vsel %vm310, %v2778, 0
        %v2816 = vsel %vm310, %v2779, 0
        %v2819 = vsel %vm310, %v2780, 0
        %v2822 = vsel %vm310, %v2781, 0
        %v2825 = vsel %vm310, %v2782, 0
        %v2828 = vsel %vm310, %v2783, 0
        %v2831 = vsel %vm310, %v2784, 0
        %v2834 = vsel %vm310, %v2785, 0
        %v2837 = vsel %vm596, %v2787, 0
        %2839 = vmatprep.subr.bf16.mxu0 0
        %2840 = vmatpush1.bf16.msra.mxu0 %v2837
        %2841 = vmatprep.subr.bf16.mxu0 0
        %2842 = vmatpush1.bf16.msra.mxu0 0
        %2843 = vmatprep.subr.bf16.mxu0 0
        %2844 = vmatpush1.bf16.msra.mxu0 0
        %2845 = vmatprep.subr.bf16.mxu0 0
        %2846 = vmatpush1.bf16.msra.mxu0 0
        %2847 = vmatprep.subr.bf16.mxu0 0
        %2848 = vmatpush1.bf16.msra.mxu0 0
        %2849 = vmatprep.subr.bf16.mxu0 0
        %2850 = vmatpush1.bf16.msra.mxu0 0
        %2851 = vmatprep.subr.bf16.mxu0 0
        %2852 = vmatpush1.bf16.msra.mxu0 0
        %2853 = vmatprep.subr.bf16.mxu0 0
        %2854 = vmatpush1.bf16.msra.mxu0 0
        %2855 = vmatprep.subr.bf16.mxu0 0
        %2856 = vmatpush1.bf16.msra.mxu0 0
        %2857 = vmatprep.subr.bf16.mxu0 0
        %2858 = vmatpush1.bf16.msra.mxu0 0
        %2859 = vmatprep.subr.bf16.mxu0 0
        %2860 = vmatpush1.bf16.msra.mxu0 0
        %2861 = vmatprep.subr.bf16.mxu0 0
        %2862 = vmatpush1.bf16.msra.mxu0 0
        %2863 = vmatprep.subr.bf16.mxu0 0
        %2864 = vmatpush1.bf16.msra.mxu0 0
        %2865 = vmatprep.subr.bf16.mxu0 0
        %2866 = vmatpush1.bf16.msra.mxu0 0
        %2867 = vmatprep.subr.bf16.mxu0 0
        %2868 = vmatpush1.bf16.msra.mxu0 0
        %2869 = vmatprep.subr.bf16.mxu0 0
        %2870 = vmatpush1.bf16.msra.mxu0 0
        %2871 = vmatprep.mubr.bf16.mxu0 0
        %2872 = vmatmul.mubr.bf16.gmra.mrb[0].mxu0 %v2789
        %v2873 = vpop.f32.mrb[0].mxu0
        %v2874 = vadd.f32 0.0, %v2873
        %v2875 = vpop.f32.mrb[0].mxu0
        %v2876 = vpop.f32.mrb[0].mxu0
        %v2877 = vadd.f32 0.0, %v2876
        %v2878 = vpop.f32.mrb[0].mxu0
        %2879 = vmatprep.mubr.bf16.mxu0 0
        %2880 = vmatmul.mubr.bf16.gmra.mrb[0].mxu0 %v2792
        %v2881 = vpop.f32.mrb[0].mxu0
        %v2882 = vadd.f32 0.0, %v2881
        %v2883 = vpop.f32.mrb[0].mxu0
        %v2884 = vpop.f32.mrb[0].mxu0
        %v2885 = vadd.f32 0.0, %v2884
        %v2886 = vpop.f32.mrb[0].mxu0
        %2887 = vmatprep.mubr.bf16.mxu0 0
        %2888 = vmatmul.mubr.bf16.gmra.mrb[0].mxu0 %v2795
        %v2889 = vpop.f32.mrb[0].mxu0
        %v2890 = vadd.f32 0.0, %v2889
        %v2891 = vpop.f32.mrb[0].mxu0
        %v2892 = vpop.f32.mrb[0].mxu0
        %v2893 = vadd.f32 0.0, %v2892
        %v2894 = vpop.f32.mrb[0].mxu0
        %2895 = vmatprep.mubr.bf16.mxu0 0
        %2896 = vmatmul.mubr.bf16.gmra.mrb[0].mxu0 %v2798
        %v2897 = vpop.f32.mrb[0].mxu0
        %v2898 = vadd.f32 0.0, %v2897
        %v2899 = vpop.f32.mrb[0].mxu0
        %v2900 = vpop.f32.mrb[0].mxu0
        %v2901 = vadd.f32 0.0, %v2900
        %v2902 = vpop.f32.mrb[0].mxu0
        %2903 = vmatprep.mubr.bf16.mxu0 0
        %2904 = vmatmul.mubr.bf16.gmra.mrb[0].mxu0 %v2801
        %v2905 = vpop.f32.mrb[0].mxu0
        %v2906 = vadd.f32 0.0, %v2905
        %v2907 = vpop.f32.mrb[0].mxu0
        %v2908 = vpop.f32.mrb[0].mxu0
        %v2909 = vadd.f32 0.0, %v2908
        %v2910 = vpop.f32.mrb[0].mxu0
        %2911 = vmatprep.mubr.bf16.mxu0 0
        %2912 = vmatmul.mubr.bf16.gmra.mrb[0].mxu0 %v2804
        %v2913 = vpop.f32.mrb[0].mxu0
        %v2914 = vadd.f32 0.0, %v2913
        %v2915 = vpop.f32.mrb[0].mxu0
        %v2916 = vpop.f32.mrb[0].mxu0
        %v2917 = vadd.f32 0.0, %v2916
        %v2918 = vpop.f32.mrb[0].mxu0
        %2919 = vmatprep.mubr.bf16.mxu0 0
        %2920 = vmatmul.mubr.bf16.gmra.mrb[0].mxu0 %v2807
        %v2921 = vpop.f32.mrb[0].mxu0
        %v2922 = vadd.f32 0.0, %v2921
        %v2923 = vpop.f32.mrb[0].mxu0
        %v2924 = vpop.f32.mrb[0].mxu0
        %v2925 = vadd.f32 0.0, %v2924
        %v2926 = vpop.f32.mrb[0].mxu0
        %2927 = vmatprep.mubr.bf16.mxu0 0
        %2928 = vmatmul.mubr.bf16.gmra.mrb[0].mxu0 %v2810
        %v2929 = vpop.f32.mrb[0].mxu0
        %v2930 = vadd.f32 0.0, %v2929
        %v2931 = vpop.f32.mrb[0].mxu0
        %v2932 = vpop.f32.mrb[0].mxu0
        %v2933 = vadd.f32 0.0, %v2932
        %v2934 = vpop.f32.mrb[0].mxu0
        %2935 = vmatprep.mubr.bf16.mxu0 0
        %2936 = vmatmul.mubr.bf16.gmra.mrb[0].mxu0 %v2813
        %v2937 = vpop.f32.mrb[0].mxu0
        %v2938 = vadd.f32 0.0, %v2937
        %v2939 = vpop.f32.mrb[0].mxu0
        %v2940 = vpop.f32.mrb[0].mxu0
        %v2941 = vadd.f32 0.0, %v2940
        %v2942 = vpop.f32.mrb[0].mxu0
        %2943 = vmatprep.mubr.bf16.mxu0 0
        %2944 = vmatmul.mubr.bf16.gmra.mrb[0].mxu0 %v2816
        %v2945 = vpop.f32.mrb[0].mxu0
        %v2946 = vadd.f32 0.0, %v2945
        %v2947 = vpop.f32.mrb[0].mxu0
        %v2948 = vpop.f32.mrb[0].mxu0
        %v2949 = vadd.f32 0.0, %v2948
        %v2950 = vpop.f32.mrb[0].mxu0
        %2951 = vmatprep.mubr.bf16.mxu0 0
        %2952 = vmatmul.mubr.bf16.gmra.mrb[0].mxu0 %v2819
        %v2953 = vpop.f32.mrb[0].mxu0
        %v2954 = vadd.f32 0.0, %v2953
        %v2955 = vpop.f32.mrb[0].mxu0
        %v2956 = vpop.f32.mrb[0].mxu0
        %v2957 = vadd.f32 0.0, %v2956
        %v2958 = vpop.f32.mrb[0].mxu0
        %2959 = vmatprep.mubr.bf16.mxu0 0
        %2960 = vmatmul.mubr.bf16.gmra.mrb[0].mxu0 %v2822
        %v2961 = vpop.f32.mrb[0].mxu0
        %v2962 = vadd.f32 0.0, %v2961
        %v2963 = vpop.f32.mrb[0].mxu0
        %v2964 = vpop.f32.mrb[0].mxu0
        %v2965 = vadd.f32 0.0, %v2964
        %v2966 = vpop.f32.mrb[0].mxu0
        %2967 = vmatprep.mubr.bf16.mxu0 0
        %2968 = vmatmul.mubr.bf16.gmra.mrb[0].mxu0 %v2825
        %v2969 = vpop.f32.mrb[0].mxu0
        %v2970 = vadd.f32 0.0, %v2969
        %v2971 = vpop.f32.mrb[0].mxu0
        %v2972 = vpop.f32.mrb[0].mxu0
        %v2973 = vadd.f32 0.0, %v2972
        %v2974 = vpop.f32.mrb[0].mxu0
        %2975 = vmatprep.mubr.bf16.mxu0 0
        %2976 = vmatmul.mubr.bf16.gmra.mrb[0].mxu0 %v2828
        %v2977 = vpop.f32.mrb[0].mxu0
        %v2978 = vadd.f32 0.0, %v2977
        %v2979 = vpop.f32.mrb[0].mxu0
        %v2980 = vpop.f32.mrb[0].mxu0
        %v2981 = vadd.f32 0.0, %v2980
        %v2982 = vpop.f32.mrb[0].mxu0
        %2983 = vmatprep.mubr.bf16.mxu0 0
        %2984 = vmatmul.mubr.bf16.gmra.mrb[0].mxu0 %v2831
        %v2985 = vpop.f32.mrb[0].mxu0
        %v2986 = vadd.f32 0.0, %v2985
        %v2987 = vpop.f32.mrb[0].mxu0
        %v2988 = vpop.f32.mrb[0].mxu0
        %v2989 = vadd.f32 0.0, %v2988
        %v2990 = vpop.f32.mrb[0].mxu0
        %2991 = vmatprep.mubr.bf16.mxu0 0
        %2992 = vmatmul.mubr.bf16.gmra.mrb[0].mxu0 %v2834
        %v2993 = vpop.f32.mrb[0].mxu0
        %v2994 = vadd.f32 0.0, %v2993
        %v2995 = vpop.f32.mrb[0].mxu0
        %v2996 = vpop.f32.mrb[0].mxu0
        %v2997 = vadd.f32 0.0, %v2996
        %v2998 = vpop.f32.mrb[0].mxu0
        %2999 = vdwg.mxu0
        %v3000 = vadd.f32 %v2706, %v2874
        %v3001 = vadd.f32 %v2707, %v2877
        %v3002 = vadd.f32 %v2708, %v2882
        %v3003 = vadd.f32 %v2709, %v2885
        %v3004 = vadd.f32 %v2710, %v2890
        %v3005 = vadd.f32 %v2711, %v2893
        %v3006 = vadd.f32 %v2712, %v2898
        %v3007 = vadd.f32 %v2713, %v2901
        %v3008 = vadd.f32 %v2714, %v2906
        %v3009 = vadd.f32 %v2715, %v2909
        %v3010 = vadd.f32 %v2716, %v2914
        %v3011 = vadd.f32 %v2717, %v2917
        %v3012 = vadd.f32 %v2718, %v2922
        %v3013 = vadd.f32 %v2719, %v2925
        %v3014 = vadd.f32 %v2720, %v2930
        %v3015 = vadd.f32 %v2721, %v2933
        %v3016 = vadd.f32 %v2722, %v2938
        %v3017 = vadd.f32 %v2723, %v2941
        %v3018 = vadd.f32 %v2724, %v2946
        %v3019 = vadd.f32 %v2725, %v2949
        %v3020 = vadd.f32 %v2726, %v2954
        %v3021 = vadd.f32 %v2727, %v2957
        %v3022 = vadd.f32 %v2728, %v2962
        %v3023 = vadd.f32 %v2729, %v2965
        %v3024 = vadd.f32 %v2730, %v2970
        %v3025 = vadd.f32 %v2731, %v2973
        %v3026 = vadd.f32 %v2732, %v2978
        %v3027 = vadd.f32 %v2733, %v2981
        %v3028 = vadd.f32 %v2734, %v2986
        %v3029 = vadd.f32 %v2735, %v2989
        %v3030 = vadd.f32 %v2736, %v2994
        %v3031 = vadd.f32 %v2737, %v2997
        %v3032 = vld [vmem:[%s2] sm:$0x1]
        %v3034 = vlaneseq
        %v3035 = vshrl.u32 %v3034, 7
        %v3036 = vsub.s32 0, %v3035
        %v3037 = vrot.slane %v3032, %v3036
        %v3039 = vadd.f32 %v3000, %v3037
        %v3040 = vadd.f32 %v3001, %v3037
        %v3041 = vadd.f32 %v3002, %v3037
        %v3042 = vadd.f32 %v3003, %v3037
        %v3043 = vadd.f32 %v3004, %v3037
        %v3044 = vadd.f32 %v3005, %v3037
        %v3045 = vadd.f32 %v3006, %v3037
        %v3046 = vadd.f32 %v3007, %v3037
        %v3047 = vadd.f32 %v3008, %v3037
        %v3048 = vadd.f32 %v3009, %v3037
        %v3049 = vadd.f32 %v3010, %v3037
        %v3050 = vadd.f32 %v3011, %v3037
        %v3051 = vadd.f32 %v3012, %v3037
        %v3052 = vadd.f32 %v3013, %v3037
        %v3053 = vadd.f32 %v3014, %v3037
        %v3054 = vadd.f32 %v3015, %v3037
        %v3055 = vadd.f32 %v3016, %v3037
        %v3056 = vadd.f32 %v3017, %v3037
        %v3057 = vadd.f32 %v3018, %v3037
        %v3058 = vadd.f32 %v3019, %v3037
        %v3059 = vadd.f32 %v3020, %v3037
        %v3060 = vadd.f32 %v3021, %v3037
        %v3061 = vadd.f32 %v3022, %v3037
        %v3062 = vadd.f32 %v3023, %v3037
        %v3063 = vadd.f32 %v3024, %v3037
        %v3064 = vadd.f32 %v3025, %v3037
        %v3065 = vadd.f32 %v3026, %v3037
        %v3066 = vadd.f32 %v3027, %v3037
        %v3067 = vadd.f32 %v3028, %v3037
        %v3068 = vadd.f32 %v3029, %v3037
        %v3069 = vadd.f32 %v3030, %v3037
        %v3070 = vadd.f32 %v3031, %v3037
        %v3071 = vmax.f32 %v3039, 0.0
        %v3072 = vmax.f32 %v3040, 0.0
        %v3073 = vmax.f32 %v3041, 0.0
        %v3074 = vmax.f32 %v3042, 0.0
        %v3075 = vmax.f32 %v3043, 0.0
        %v3076 = vmax.f32 %v3044, 0.0
        %v3077 = vmax.f32 %v3045, 0.0
        %v3078 = vmax.f32 %v3046, 0.0
        %v3079 = vmax.f32 %v3047, 0.0
        %v3080 = vmax.f32 %v3048, 0.0
        %v3081 = vmax.f32 %v3049, 0.0
        %v3082 = vmax.f32 %v3050, 0.0
        %v3083 = vmax.f32 %v3051, 0.0
        %v3084 = vmax.f32 %v3052, 0.0
        %v3085 = vmax.f32 %v3053, 0.0
        %v3086 = vmax.f32 %v3054, 0.0
        %v3087 = vmax.f32 %v3055, 0.0
        %v3088 = vmax.f32 %v3056, 0.0
        %v3089 = vmax.f32 %v3057, 0.0
        %v3090 = vmax.f32 %v3058, 0.0
        %v3091 = vmax.f32 %v3059, 0.0
        %v3092 = vmax.f32 %v3060, 0.0
        %v3093 = vmax.f32 %v3061, 0.0
        %v3094 = vmax.f32 %v3062, 0.0
        %v3095 = vmax.f32 %v3063, 0.0
        %v3096 = vmax.f32 %v3064, 0.0
        %v3097 = vmax.f32 %v3065, 0.0
        %v3098 = vmax.f32 %v3066, 0.0
        %v3099 = vmax.f32 %v3067, 0.0
        %v3100 = vmax.f32 %v3068, 0.0
        %v3101 = vmax.f32 %v3069, 0.0
        %v3102 = vmax.f32 %v3070, 0.0
        %vm3103 = vcmask 64512
        %3104 = vst.msk [vmem:[#allocation3] sm:$0xff] %vm3103, 0.0
        %3105 = vst.msk [vmem:[#allocation3 + $0x8] sm:$0xff] %vm3103, 0.0
        %vm3106 = vcmask 58368
        %3107 = vst.msk [vmem:[#allocation3 + $0x10] sm:$0x3] %vm3106, 0.0
        %s3108 = scalar_lea.vmem [#allocation3], 408
        %3109 = vst.msk [vmem:[%s3108] sm:$0xff] %vm3103, 0.0
        %3110 = vst.msk [vmem:[%s3108 + $0x8] sm:$0xff] %vm3103, 0.0
        %3111 = vst.msk [vmem:[%s3108 + $0x10] sm:$0x3] %vm3106, 0.0
        %s3112 = scalar_lea.vmem [#allocation3], 24
        %vm3113 = vcmask 57344
        %3114 = vst.msk [vmem:[%s3112] sm:$0x1] %vm3113, 0.0
        %3115 = vst.msk [vmem:[%s3112 + $0x18] sm:$0x1] %vm3113, 0.0
        %3116 = vst.msk [vmem:[%s3112 + $0x30] sm:$0x1] %vm3113, 0.0
        %3117 = vst.msk [vmem:[%s3112 + $0x48] sm:$0x1] %vm3113, 0.0
        %3118 = vst.msk [vmem:[%s3112 + $0x60] sm:$0x1] %vm3113, 0.0
        %3119 = vst.msk [vmem:[%s3112 + $0x78] sm:$0x1] %vm3113, 0.0
        %3120 = vst.msk [vmem:[%s3112 + $0x90] sm:$0x1] %vm3113, 0.0
        %3121 = vst.msk [vmem:[%s3112 + $0xa8] sm:$0x1] %vm3113, 0.0
        %3122 = vst.msk [vmem:[%s3112 + $0xc0] sm:$0x1] %vm3113, 0.0
        %3123 = vst.msk [vmem:[%s3112 + $0xd8] sm:$0x1] %vm3113, 0.0
        %3124 = vst.msk [vmem:[%s3112 + $0xf0] sm:$0x1] %vm3113, 0.0
        %3125 = vst.msk [vmem:[%s3112 + $0x108] sm:$0x1] %vm3113, 0.0
        %3126 = vst.msk [vmem:[%s3112 + $0x120] sm:$0x1] %vm3113, 0.0
        %3127 = vst.msk [vmem:[%s3112 + $0x138] sm:$0x1] %vm3113, 0.0
        %3128 = vst.msk [vmem:[%s3112 + $0x150] sm:$0x1] %vm3113, 0.0
        %3129 = vst.msk [vmem:[%s3112 + $0x168] sm:$0x1] %vm3113, 0.0
        %3130 = vst.msk [vmem:[%s3112 + $0x11] sm:$0x1] %vm3113, 0.0
        %3131 = vst.msk [vmem:[%s3112 + $0x29] sm:$0x1] %vm3113, 0.0
        %3132 = vst.msk [vmem:[%s3112 + $0x41] sm:$0x1] %vm3113, 0.0
        %3133 = vst.msk [vmem:[%s3112 + $0x59] sm:$0x1] %vm3113, 0.0
        %3134 = vst.msk [vmem:[%s3112 + $0x71] sm:$0x1] %vm3113, 0.0
        %3135 = vst.msk [vmem:[%s3112 + $0x89] sm:$0x1] %vm3113, 0.0
        %3136 = vst.msk [vmem:[%s3112 + $0xa1] sm:$0x1] %vm3113, 0.0
        %3137 = vst.msk [vmem:[%s3112 + $0xb9] sm:$0x1] %vm3113, 0.0
        %3138 = vst.msk [vmem:[%s3112 + $0xd1] sm:$0x1] %vm3113, 0.0
        %3139 = vst.msk [vmem:[%s3112 + $0xe9] sm:$0x1] %vm3113, 0.0
        %3140 = vst.msk [vmem:[%s3112 + $0x101] sm:$0x1] %vm3113, 0.0
        %3141 = vst.msk [vmem:[%s3112 + $0x119] sm:$0x1] %vm3113, 0.0
        %3142 = vst.msk [vmem:[%s3112 + $0x131] sm:$0x1] %vm3113, 0.0
        %3143 = vst.msk [vmem:[%s3112 + $0x149] sm:$0x1] %vm3113, 0.0
        %3144 = vst.msk [vmem:[%s3112 + $0x161] sm:$0x1] %vm3113, 0.0
        %3145 = vst.msk [vmem:[%s3112 + $0x179] sm:$0x1] %vm3113, 0.0
        %3146 = vst.msk [vmem:[%s3112 + $0x1] sm:$0xff] %vm3103, %v3071
        %3147 = vst.msk [vmem:[%s3112 + $0x9] sm:$0xff] %vm3103, %v3072
        %3148 = vst.msk [vmem:[%s3112 + $0x19] sm:$0xff] %vm3103, %v3073
        %3149 = vst.msk [vmem:[%s3112 + $0x21] sm:$0xff] %vm3103, %v3074
        %3150 = vst.msk [vmem:[%s3112 + $0x31] sm:$0xff] %vm3103, %v3075
        %3151 = vst.msk [vmem:[%s3112 + $0x39] sm:$0xff] %vm3103, %v3076
        %3152 = vst.msk [vmem:[%s3112 + $0x49] sm:$0xff] %vm3103, %v3077
        %3153 = vst.msk [vmem:[%s3112 + $0x51] sm:$0xff] %vm3103, %v3078
        %3154 = vst.msk [vmem:[%s3112 + $0x61] sm:$0xff] %vm3103, %v3079
        %3155 = vst.msk [vmem:[%s3112 + $0x69] sm:$0xff] %vm3103, %v3080
        %3156 = vst.msk [vmem:[%s3112 + $0x79] sm:$0xff] %vm3103, %v3081
        %3157 = vst.msk [vmem:[%s3112 + $0x81] sm:$0xff] %vm3103, %v3082
        %3158 = vst.msk [vmem:[%s3112 + $0x91] sm:$0xff] %vm3103, %v3083
        %3159 = vst.msk [vmem:[%s3112 + $0x99] sm:$0xff] %vm3103, %v3084
        %3160 = vst.msk [vmem:[%s3112 + $0xa9] sm:$0xff] %vm3103, %v3085
        %3161 = vst.msk [vmem:[%s3112 + $0xb1] sm:$0xff] %vm3103, %v3086
        %3162 = vst.msk [vmem:[%s3112 + $0xc1] sm:$0xff] %vm3103, %v3087
        %3163 = vst.msk [vmem:[%s3112 + $0xc9] sm:$0xff] %vm3103, %v3088
        %3164 = vst.msk [vmem:[%s3112 + $0xd9] sm:$0xff] %vm3103, %v3089
        %3165 = vst.msk [vmem:[%s3112 + $0xe1] sm:$0xff] %vm3103, %v3090
        %3166 = vst.msk [vmem:[%s3112 + $0xf1] sm:$0xff] %vm3103, %v3091
        %3167 = vst.msk [vmem:[%s3112 + $0xf9] sm:$0xff] %vm3103, %v3092
        %3168 = vst.msk [vmem:[%s3112 + $0x109] sm:$0xff] %vm3103, %v3093
        %3169 = vst.msk [vmem:[%s3112 + $0x111] sm:$0xff] %vm3103, %v3094
        %3170 = vst.msk [vmem:[%s3112 + $0x121] sm:$0xff] %vm3103, %v3095
        %3171 = vst.msk [vmem:[%s3112 + $0x129] sm:$0xff] %vm3103, %v3096
        %3172 = vst.msk [vmem:[%s3112 + $0x139] sm:$0xff] %vm3103, %v3097
        %3173 = vst.msk [vmem:[%s3112 + $0x141] sm:$0xff] %vm3103, %v3098
        %3174 = vst.msk [vmem:[%s3112 + $0x151] sm:$0xff] %vm3103, %v3099
        %3175 = vst.msk [vmem:[%s3112 + $0x159] sm:$0xff] %vm3103, %v3100
        %3176 = vst.msk [vmem:[%s3112 + $0x169] sm:$0xff] %vm3103, %v3101
        %3177 = vst.msk [vmem:[%s3112 + $0x171] sm:$0xff] %vm3103, %v3102
        %v3178 = vld [vmem:[#allocation3] sm:$0xff]
        %v3179 = vld [vmem:[#allocation3 + $0x8] sm:$0xff]
        %v3180 = vld [vmem:[#allocation3 + $0x18] sm:$0xff]
        %v3181 = vld [vmem:[#allocation3 + $0x20] sm:$0xff]
        %v3182 = vld [vmem:[#allocation3 + $0x30] sm:$0xff]
        %v3183 = vld [vmem:[#allocation3 + $0x38] sm:$0xff]
        %v3184 = vld [vmem:[#allocation3 + $0x48] sm:$0xff]
        %v3185 = vld [vmem:[#allocation3 + $0x50] sm:$0xff]
        %v3186 = vld [vmem:[#allocation3 + $0x60] sm:$0xff]
        %v3187 = vld [vmem:[#allocation3 + $0x68] sm:$0xff]
        %v3188 = vld [vmem:[#allocation3 + $0x78] sm:$0xff]
        %v3189 = vld [vmem:[#allocation3 + $0x80] sm:$0xff]
        %v3190 = vld [vmem:[#allocation3 + $0x90] sm:$0xff]
        %v3191 = vld [vmem:[#allocation3 + $0x98] sm:$0xff]
        %v3192 = vld [vmem:[#allocation3 + $0xa8] sm:$0xff]
        %v3193 = vld [vmem:[#allocation3 + $0xb0] sm:$0xff]
        %v3194 = vld [vmem:[#allocation3 + $0xc0] sm:$0xff]
        %v3195 = vld [vmem:[#allocation3 + $0xc8] sm:$0xff]
        %v3196 = vld [vmem:[#allocation3 + $0xd8] sm:$0xff]
        %v3197 = vld [vmem:[#allocation3 + $0xe0] sm:$0xff]
        %v3198 = vld [vmem:[#allocation3 + $0xf0] sm:$0xff]
        %v3199 = vld [vmem:[#allocation3 + $0xf8] sm:$0xff]
        %v3200 = vld [vmem:[#allocation3 + $0x108] sm:$0xff]
        %v3201 = vld [vmem:[#allocation3 + $0x110] sm:$0xff]
        %v3202 = vld [vmem:[#allocation3 + $0x120] sm:$0xff]
        %v3203 = vld [vmem:[#allocation3 + $0x128] sm:$0xff]
        %v3204 = vld [vmem:[#allocation3 + $0x138] sm:$0xff]
        %v3205 = vld [vmem:[#allocation3 + $0x140] sm:$0xff]
        %v3206 = vld [vmem:[#allocation3 + $0x150] sm:$0xff]
        %v3207 = vld [vmem:[#allocation3 + $0x158] sm:$0xff]
        %v3208 = vld [vmem:[#allocation3 + $0x168] sm:$0xff]
        %v3209 = vld [vmem:[#allocation3 + $0x170] sm:$0xff]
        %v3210 = vpack.c.bf16 %v3179, %v3178
        %v3211 = vpack.c.bf16 %v3181, %v3180
        %v3212 = vpack.c.bf16 %v3183, %v3182
        %v3213 = vpack.c.bf16 %v3185, %v3184
        %v3214 = vpack.c.bf16 %v3187, %v3186
        %v3215 = vpack.c.bf16 %v3189, %v3188
        %v3216 = vpack.c.bf16 %v3191, %v3190
        %v3217 = vpack.c.bf16 %v3193, %v3192
        %v3218 = vpack.c.bf16 %v3195, %v3194
        %v3219 = vpack.c.bf16 %v3197, %v3196
        %v3220 = vpack.c.bf16 %v3199, %v3198
        %v3221 = vpack.c.bf16 %v3201, %v3200
        %v3222 = vpack.c.bf16 %v3203, %v3202
        %v3223 = vpack.c.bf16 %v3205, %v3204
        %v3224 = vpack.c.bf16 %v3207, %v3206
        %v3225 = vpack.c.bf16 %v3209, %v3208
        %v3226 = vld [vmem:[%s3] sm:$0xf]
        %v3227 = vld [vmem:[#allocation3 + $0x1] sm:$0xff]
        %v3228 = vld [vmem:[#allocation3 + $0x9] sm:$0xff]
        %v3229 = vld [vmem:[#allocation3 + $0x19] sm:$0xff]
        %v3230 = vld [vmem:[#allocation3 + $0x21] sm:$0xff]
        %v3231 = vld [vmem:[#allocation3 + $0x31] sm:$0xff]
        %v3232 = vld [vmem:[#allocation3 + $0x39] sm:$0xff]
        %v3233 = vld [vmem:[#allocation3 + $0x49] sm:$0xff]
        %v3234 = vld [vmem:[#allocation3 + $0x51] sm:$0xff]
        %v3235 = vld [vmem:[#allocation3 + $0x61] sm:$0xff]
        %v3236 = vld [vmem:[#allocation3 + $0x69] sm:$0xff]
        %v3237 = vld [vmem:[#allocation3 + $0x79] sm:$0xff]
        %v3238 = vld [vmem:[#allocation3 + $0x81] sm:$0xff]
        %v3239 = vld [vmem:[#allocation3 + $0x91] sm:$0xff]
        %v3240 = vld [vmem:[#allocation3 + $0x99] sm:$0xff]
        %v3241 = vld [vmem:[#allocation3 + $0xa9] sm:$0xff]
        %v3242 = vld [vmem:[#allocation3 + $0xb1] sm:$0xff]
        %v3243 = vld [vmem:[#allocation3 + $0xc1] sm:$0xff]
        %v3244 = vld [vmem:[#allocation3 + $0xc9] sm:$0xff]
        %v3245 = vld [vmem:[#allocation3 + $0xd9] sm:$0xff]
        %v3246 = vld [vmem:[#allocation3 + $0xe1] sm:$0xff]
        %v3247 = vld [vmem:[#allocation3 + $0xf1] sm:$0xff]
        %v3248 = vld [vmem:[#allocation3 + $0xf9] sm:$0xff]
        %v3249 = vld [vmem:[#allocation3 + $0x109] sm:$0xff]
        %v3250 = vld [vmem:[#allocation3 + $0x111] sm:$0xff]
        %v3251 = vld [vmem:[#allocation3 + $0x121] sm:$0xff]
        %v3252 = vld [vmem:[#allocation3 + $0x129] sm:$0xff]
        %v3253 = vld [vmem:[#allocation3 + $0x139] sm:$0xff]
        %v3254 = vld [vmem:[#allocation3 + $0x141] sm:$0xff]
        %v3255 = vld [vmem:[#allocation3 + $0x151] sm:$0xff]
        %v3256 = vld [vmem:[#allocation3 + $0x159] sm:$0xff]
        %v3257 = vld [vmem:[#allocation3 + $0x169] sm:$0xff]
        %v3258 = vld [vmem:[#allocation3 + $0x171] sm:$0xff]
        %v3259 = vpack.c.bf16 %v3228, %v3227
        %v3260 = vpack.c.bf16 %v3230, %v3229
        %v3261 = vpack.c.bf16 %v3232, %v3231
        %v3262 = vpack.c.bf16 %v3234, %v3233
        %v3263 = vpack.c.bf16 %v3236, %v3235
        %v3264 = vpack.c.bf16 %v3238, %v3237
        %v3265 = vpack.c.bf16 %v3240, %v3239
        %v3266 = vpack.c.bf16 %v3242, %v3241
        %v3267 = vpack.c.bf16 %v3244, %v3243
        %v3268 = vpack.c.bf16 %v3246, %v3245
        %v3269 = vpack.c.bf16 %v3248, %v3247
        %v3270 = vpack.c.bf16 %v3250, %v3249
        %v3271 = vpack.c.bf16 %v3252, %v3251
        %v3272 = vpack.c.bf16 %v3254, %v3253
        %v3273 = vpack.c.bf16 %v3256, %v3255
        %v3274 = vpack.c.bf16 %v3258, %v3257
        %s3275 = scalar_lea.vmem %s3, 4
        %v3276 = vld [vmem:[%s3275] sm:$0xf]
        %v3278 = vsel %vm3103, %v3259, 0
        %v3281 = vsel %vm3103, %v3260, 0
        %v3284 = vsel %vm3103, %v3261, 0
        %v3287 = vsel %vm3103, %v3262, 0
        %v3290 = vsel %vm3103, %v3263, 0
        %v3293 = vsel %vm3103, %v3264, 0
        %v3296 = vsel %vm3103, %v3265, 0
        %v3299 = vsel %vm3103, %v3266, 0
        %v3302 = vsel %vm3103, %v3267, 0
        %v3305 = vsel %vm3103, %v3268, 0
        %v3308 = vsel %vm3103, %v3269, 0
        %v3311 = vsel %vm3103, %v3270, 0
        %v3314 = vsel %vm3103, %v3271, 0
        %v3317 = vsel %vm3103, %v3272, 0
        %v3320 = vsel %vm3103, %v3273, 0
        %v3323 = vsel %vm3103, %v3274, 0
        %vm3325 = vcmask 1043456
        %v3327 = vsel %vm3325, %v3276, 0
        %3329 = vmatprep.subr.bf16.mxu0 0
        %3330 = vmatpush1.bf16.msra.mxu0 %v3327
        %3331 = vmatprep.subr.bf16.mxu0 0
        %3332 = vmatpush1.bf16.msra.mxu0 0
        %3333 = vmatprep.subr.bf16.mxu0 0
        %3334 = vmatpush1.bf16.msra.mxu0 0
        %3335 = vmatprep.subr.bf16.mxu0 0
        %3336 = vmatpush1.bf16.msra.mxu0 0
        %3337 = vmatprep.subr.bf16.mxu0 0
        %3338 = vmatpush1.bf16.msra.mxu0 0
        %3339 = vmatprep.subr.bf16.mxu0 0
        %3340 = vmatpush1.bf16.msra.mxu0 0
        %3341 = vmatprep.subr.bf16.mxu0 0
        %3342 = vmatpush1.bf16.msra.mxu0 0
        %3343 = vmatprep.subr.bf16.mxu0 0
        %3344 = vmatpush1.bf16.msra.mxu0 0
        %3345 = vmatprep.subr.bf16.mxu0 0
        %3346 = vmatpush1.bf16.msra.mxu0 0
        %3347 = vmatprep.subr.bf16.mxu0 0
        %3348 = vmatpush1.bf16.msra.mxu0 0
        %3349 = vmatprep.subr.bf16.mxu0 0
        %3350 = vmatpush1.bf16.msra.mxu0 0
        %3351 = vmatprep.subr.bf16.mxu0 0
        %3352 = vmatpush1.bf16.msra.mxu0 0
        %3353 = vmatprep.subr.bf16.mxu0 0
        %3354 = vmatpush1.bf16.msra.mxu0 0
        %3355 = vmatprep.subr.bf16.mxu0 0
        %3356 = vmatpush1.bf16.msra.mxu0 0
        %3357 = vmatprep.subr.bf16.mxu0 0
        %3358 = vmatpush1.bf16.msra.mxu0 0
        %3359 = vmatprep.subr.bf16.mxu0 0
        %3360 = vmatpush1.bf16.msra.mxu0 0
        %3361 = vmatprep.mubr.bf16.mxu0 0
        %3362 = vmatmul.mubr.bf16.gmra.mrb[0].mxu0 %v3278
        %v3363 = vpop.f32.mrb[0].mxu0
        %v3364 = vadd.f32 0.0, %v3363
        %v3365 = vpop.f32.mrb[0].mxu0
        %v3366 = vpop.f32.mrb[0].mxu0
        %v3367 = vadd.f32 0.0, %v3366
        %v3368 = vpop.f32.mrb[0].mxu0
        %3369 = vmatprep.mubr.bf16.mxu0 0
        %3370 = vmatmul.mubr.bf16.gmra.mrb[0].mxu0 %v3281
        %v3371 = vpop.f32.mrb[0].mxu0
        %v3372 = vadd.f32 0.0, %v3371
        %v3373 = vpop.f32.mrb[0].mxu0
        %v3374 = vpop.f32.mrb[0].mxu0
        %v3375 = vadd.f32 0.0, %v3374
        %v3376 = vpop.f32.mrb[0].mxu0
        %3377 = vmatprep.mubr.bf16.mxu0 0
        %3378 = vmatmul.mubr.bf16.gmra.mrb[0].mxu0 %v3284
        %v3379 = vpop.f32.mrb[0].mxu0
        %v3380 = vadd.f32 0.0, %v3379
        %v3381 = vpop.f32.mrb[0].mxu0
        %v3382 = vpop.f32.mrb[0].mxu0
        %v3383 = vadd.f32 0.0, %v3382
        %v3384 = vpop.f32.mrb[0].mxu0
        %3385 = vmatprep.mubr.bf16.mxu0 0
        %3386 = vmatmul.mubr.bf16.gmra.mrb[0].mxu0 %v3287
        %v3387 = vpop.f32.mrb[0].mxu0
        %v3388 = vadd.f32 0.0, %v3387
        %v3389 = vpop.f32.mrb[0].mxu0
        %v3390 = vpop.f32.mrb[0].mxu0
        %v3391 = vadd.f32 0.0, %v3390
        %v3392 = vpop.f32.mrb[0].mxu0
        %3393 = vmatprep.mubr.bf16.mxu0 0
        %3394 = vmatmul.mubr.bf16.gmra.mrb[0].mxu0 %v3290
        %v3395 = vpop.f32.mrb[0].mxu0
        %v3396 = vadd.f32 0.0, %v3395
        %v3397 = vpop.f32.mrb[0].mxu0
        %v3398 = vpop.f32.mrb[0].mxu0
        %v3399 = vadd.f32 0.0, %v3398
        %v3400 = vpop.f32.mrb[0].mxu0
        %3401 = vmatprep.mubr.bf16.mxu0 0
        %3402 = vmatmul.mubr.bf16.gmra.mrb[0].mxu0 %v3293
        %v3403 = vpop.f32.mrb[0].mxu0
        %v3404 = vadd.f32 0.0, %v3403
        %v3405 = vpop.f32.mrb[0].mxu0
        %v3406 = vpop.f32.mrb[0].mxu0
        %v3407 = vadd.f32 0.0, %v3406
        %v3408 = vpop.f32.mrb[0].mxu0
        %3409 = vmatprep.mubr.bf16.mxu0 0
        %3410 = vmatmul.mubr.bf16.gmra.mrb[0].mxu0 %v3296
        %v3411 = vpop.f32.mrb[0].mxu0
        %v3412 = vadd.f32 0.0, %v3411
        %v3413 = vpop.f32.mrb[0].mxu0
        %v3414 = vpop.f32.mrb[0].mxu0
        %v3415 = vadd.f32 0.0, %v3414
        %v3416 = vpop.f32.mrb[0].mxu0
        %3417 = vmatprep.mubr.bf16.mxu0 0
        %3418 = vmatmul.mubr.bf16.gmra.mrb[0].mxu0 %v3299
        %v3419 = vpop.f32.mrb[0].mxu0
        %v3420 = vadd.f32 0.0, %v3419
        %v3421 = vpop.f32.mrb[0].mxu0
        %v3422 = vpop.f32.mrb[0].mxu0
        %v3423 = vadd.f32 0.0, %v3422
        %v3424 = vpop.f32.mrb[0].mxu0
        %3425 = vmatprep.mubr.bf16.mxu0 0
        %3426 = vmatmul.mubr.bf16.gmra.mrb[0].mxu0 %v3302
        %v3427 = vpop.f32.mrb[0].mxu0
        %v3428 = vadd.f32 0.0, %v3427
        %v3429 = vpop.f32.mrb[0].mxu0
        %v3430 = vpop.f32.mrb[0].mxu0
        %v3431 = vadd.f32 0.0, %v3430
        %v3432 = vpop.f32.mrb[0].mxu0
        %3433 = vmatprep.mubr.bf16.mxu0 0
        %3434 = vmatmul.mubr.bf16.gmra.mrb[0].mxu0 %v3305
        %v3435 = vpop.f32.mrb[0].mxu0
        %v3436 = vadd.f32 0.0, %v3435
        %v3437 = vpop.f32.mrb[0].mxu0
        %v3438 = vpop.f32.mrb[0].mxu0
        %v3439 = vadd.f32 0.0, %v3438
        %v3440 = vpop.f32.mrb[0].mxu0
        %3441 = vmatprep.mubr.bf16.mxu0 0
        %3442 = vmatmul.mubr.bf16.gmra.mrb[0].mxu0 %v3308
        %v3443 = vpop.f32.mrb[0].mxu0
        %v3444 = vadd.f32 0.0, %v3443
        %v3445 = vpop.f32.mrb[0].mxu0
        %v3446 = vpop.f32.mrb[0].mxu0
        %v3447 = vadd.f32 0.0, %v3446
        %v3448 = vpop.f32.mrb[0].mxu0
        %3449 = vmatprep.mubr.bf16.mxu0 0
        %3450 = vmatmul.mubr.bf16.gmra.mrb[0].mxu0 %v3311
        %v3451 = vpop.f32.mrb[0].mxu0
        %v3452 = vadd.f32 0.0, %v3451
        %v3453 = vpop.f32.mrb[0].mxu0
        %v3454 = vpop.f32.mrb[0].mxu0
        %v3455 = vadd.f32 0.0, %v3454
        %v3456 = vpop.f32.mrb[0].mxu0
        %3457 = vmatprep.mubr.bf16.mxu0 0
        %3458 = vmatmul.mubr.bf16.gmra.mrb[0].mxu0 %v3314
        %v3459 = vpop.f32.mrb[0].mxu0
        %v3460 = vadd.f32 0.0, %v3459
        %v3461 = vpop.f32.mrb[0].mxu0
        %v3462 = vpop.f32.mrb[0].mxu0
        %v3463 = vadd.f32 0.0, %v3462
        %v3464 = vpop.f32.mrb[0].mxu0
        %3465 = vmatprep.mubr.bf16.mxu0 0
        %3466 = vmatmul.mubr.bf16.gmra.mrb[0].mxu0 %v3317
        %v3467 = vpop.f32.mrb[0].mxu0
        %v3468 = vadd.f32 0.0, %v3467
        %v3469 = vpop.f32.mrb[0].mxu0
        %v3470 = vpop.f32.mrb[0].mxu0
        %v3471 = vadd.f32 0.0, %v3470
        %v3472 = vpop.f32.mrb[0].mxu0
        %3473 = vmatprep.mubr.bf16.mxu0 0
        %3474 = vmatmul.mubr.bf16.gmra.mrb[0].mxu0 %v3320
        %v3475 = vpop.f32.mrb[0].mxu0
        %v3476 = vadd.f32 0.0, %v3475
        %v3477 = vpop.f32.mrb[0].mxu0
        %v3478 = vpop.f32.mrb[0].mxu0
        %v3479 = vadd.f32 0.0, %v3478
        %v3480 = vpop.f32.mrb[0].mxu0
        %3481 = vmatprep.mubr.bf16.mxu0 0
        %3482 = vmatmul.mubr.bf16.gmra.mrb[0].mxu0 %v3323
        %v3483 = vpop.f32.mrb[0].mxu0
        %v3484 = vadd.f32 0.0, %v3483
        %v3485 = vpop.f32.mrb[0].mxu0
        %v3486 = vpop.f32.mrb[0].mxu0
        %v3487 = vadd.f32 0.0, %v3486
        %v3488 = vpop.f32.mrb[0].mxu0
        %3489 = vdwg.mxu0
        %v3491 = vsel %vm3103, %v3210, 0
        %v3494 = vsel %vm3103, %v3211, 0
        %v3497 = vsel %vm3103, %v3212, 0
        %v3500 = vsel %vm3103, %v3213, 0
        %v3503 = vsel %vm3103, %v3214, 0
        %v3506 = vsel %vm3103, %v3215, 0
        %v3509 = vsel %vm3103, %v3216, 0
        %v3512 = vsel %vm3103, %v3217, 0
        %v3515 = vsel %vm3103, %v3218, 0
        %v3518 = vsel %vm3103, %v3219, 0
        %v3521 = vsel %vm3103, %v3220, 0
        %v3524 = vsel %vm3103, %v3221, 0
        %v3527 = vsel %vm3103, %v3222, 0
        %v3530 = vsel %vm3103, %v3223, 0
        %v3533 = vsel %vm3103, %v3224, 0
        %v3536 = vsel %vm3103, %v3225, 0
        %v3539 = vsel %vm3325, %v3226, 0
        %3541 = vmatprep.subr.bf16.mxu0 0
        %3542 = vmatpush1.bf16.msra.mxu0 %v3539
        %3543 = vmatprep.subr.bf16.mxu0 0
        %3544 = vmatpush1.bf16.msra.mxu0 0
        %3545 = vmatprep.subr.bf16.mxu0 0
        %3546 = vmatpush1.bf16.msra.mxu0 0
        %3547 = vmatprep.subr.bf16.mxu0 0
        %3548 = vmatpush1.bf16.msra.mxu0 0
        %3549 = vmatprep.subr.bf16.mxu0 0
        %3550 = vmatpush1.bf16.msra.mxu0 0
        %3551 = vmatprep.subr.bf16.mxu0 0
        %3552 = vmatpush1.bf16.msra.mxu0 0
        %3553 = vmatprep.subr.bf16.mxu0 0
        %3554 = vmatpush1.bf16.msra.mxu0 0
        %3555 = vmatprep.subr.bf16.mxu0 0
        %3556 = vmatpush1.bf16.msra.mxu0 0
        %3557 = vmatprep.subr.bf16.mxu0 0
        %3558 = vmatpush1.bf16.msra.mxu0 0
        %3559 = vmatprep.subr.bf16.mxu0 0
        %3560 = vmatpush1.bf16.msra.mxu0 0
        %3561 = vmatprep.subr.bf16.mxu0 0
        %3562 = vmatpush1.bf16.msra.mxu0 0
        %3563 = vmatprep.subr.bf16.mxu0 0
        %3564 = vmatpush1.bf16.msra.mxu0 0
        %3565 = vmatprep.subr.bf16.mxu0 0
        %3566 = vmatpush1.bf16.msra.mxu0 0
        %3567 = vmatprep.subr.bf16.mxu0 0
        %3568 = vmatpush1.bf16.msra.mxu0 0
        %3569 = vmatprep.subr.bf16.mxu0 0
        %3570 = vmatpush1.bf16.msra.mxu0 0
        %3571 = vmatprep.subr.bf16.mxu0 0
        %3572 = vmatpush1.bf16.msra.mxu0 0
        %3573 = vmatprep.mubr.bf16.mxu0 0
        %3574 = vmatmul.mubr.bf16.gmra.mrb[0].mxu0 %v3491
        %v3575 = vpop.f32.mrb[0].mxu0
        %v3576 = vadd.f32 %v3364, %v3575
        %v3577 = vpop.f32.mrb[0].mxu0
        %v3578 = vpop.f32.mrb[0].mxu0
        %v3579 = vadd.f32 %v3367, %v3578
        %v3580 = vpop.f32.mrb[0].mxu0
        %3581 = vmatprep.mubr.bf16.mxu0 0
        %3582 = vmatmul.mubr.bf16.gmra.mrb[0].mxu0 %v3494
        %v3583 = vpop.f32.mrb[0].mxu0
        %v3584 = vadd.f32 %v3372, %v3583
        %v3585 = vpop.f32.mrb[0].mxu0
        %v3586 = vpop.f32.mrb[0].mxu0
        %v3587 = vadd.f32 %v3375, %v3586
        %v3588 = vpop.f32.mrb[0].mxu0
        %3589 = vmatprep.mubr.bf16.mxu0 0
        %3590 = vmatmul.mubr.bf16.gmra.mrb[0].mxu0 %v3497
        %v3591 = vpop.f32.mrb[0].mxu0
        %v3592 = vadd.f32 %v3380, %v3591
        %v3593 = vpop.f32.mrb[0].mxu0
        %v3594 = vpop.f32.mrb[0].mxu0
        %v3595 = vadd.f32 %v3383, %v3594
        %v3596 = vpop.f32.mrb[0].mxu0
        %3597 = vmatprep.mubr.bf16.mxu0 0
        %3598 = vmatmul.mubr.bf16.gmra.mrb[0].mxu0 %v3500
        %v3599 = vpop.f32.mrb[0].mxu0
        %v3600 = vadd.f32 %v3388, %v3599
        %v3601 = vpop.f32.mrb[0].mxu0
        %v3602 = vpop.f32.mrb[0].mxu0
        %v3603 = vadd.f32 %v3391, %v3602
        %v3604 = vpop.f32.mrb[0].mxu0
        %3605 = vmatprep.mubr.bf16.mxu0 0
        %3606 = vmatmul.mubr.bf16.gmra.mrb[0].mxu0 %v3503
        %v3607 = vpop.f32.mrb[0].mxu0
        %v3608 = vadd.f32 %v3396, %v3607
        %v3609 = vpop.f32.mrb[0].mxu0
        %v3610 = vpop.f32.mrb[0].mxu0
        %v3611 = vadd.f32 %v3399, %v3610
        %v3612 = vpop.f32.mrb[0].mxu0
        %3613 = vmatprep.mubr.bf16.mxu0 0
        %3614 = vmatmul.mubr.bf16.gmra.mrb[0].mxu0 %v3506
        %v3615 = vpop.f32.mrb[0].mxu0
        %v3616 = vadd.f32 %v3404, %v3615
        %v3617 = vpop.f32.mrb[0].mxu0
        %v3618 = vpop.f32.mrb[0].mxu0
        %v3619 = vadd.f32 %v3407, %v3618
        %v3620 = vpop.f32.mrb[0].mxu0
        %3621 = vmatprep.mubr.bf16.mxu0 0
        %3622 = vmatmul.mubr.bf16.gmra.mrb[0].mxu0 %v3509
        %v3623 = vpop.f32.mrb[0].mxu0
        %v3624 = vadd.f32 %v3412, %v3623
        %v3625 = vpop.f32.mrb[0].mxu0
        %v3626 = vpop.f32.mrb[0].mxu0
        %v3627 = vadd.f32 %v3415, %v3626
        %v3628 = vpop.f32.mrb[0].mxu0
        %3629 = vmatprep.mubr.bf16.mxu0 0
        %3630 = vmatmul.mubr.bf16.gmra.mrb[0].mxu0 %v3512
        %v3631 = vpop.f32.mrb[0].mxu0
        %v3632 = vadd.f32 %v3420, %v3631
        %v3633 = vpop.f32.mrb[0].mxu0
        %v3634 = vpop.f32.mrb[0].mxu0
        %v3635 = vadd.f32 %v3423, %v3634
        %v3636 = vpop.f32.mrb[0].mxu0
        %3637 = vmatprep.mubr.bf16.mxu0 0
        %3638 = vmatmul.mubr.bf16.gmra.mrb[0].mxu0 %v3515
        %v3639 = vpop.f32.mrb[0].mxu0
        %v3640 = vadd.f32 %v3428, %v3639
        %v3641 = vpop.f32.mrb[0].mxu0
        %v3642 = vpop.f32.mrb[0].mxu0
        %v3643 = vadd.f32 %v3431, %v3642
        %v3644 = vpop.f32.mrb[0].mxu0
        %3645 = vmatprep.mubr.bf16.mxu0 0
        %3646 = vmatmul.mubr.bf16.gmra.mrb[0].mxu0 %v3518
        %v3647 = vpop.f32.mrb[0].mxu0
        %v3648 = vadd.f32 %v3436, %v3647
        %v3649 = vpop.f32.mrb[0].mxu0
        %v3650 = vpop.f32.mrb[0].mxu0
        %v3651 = vadd.f32 %v3439, %v3650
        %v3652 = vpop.f32.mrb[0].mxu0
        %3653 = vmatprep.mubr.bf16.mxu0 0
        %3654 = vmatmul.mubr.bf16.gmra.mrb[0].mxu0 %v3521
        %v3655 = vpop.f32.mrb[0].mxu0
        %v3656 = vadd.f32 %v3444, %v3655
        %v3657 = vpop.f32.mrb[0].mxu0
        %v3658 = vpop.f32.mrb[0].mxu0
        %v3659 = vadd.f32 %v3447, %v3658
        %v3660 = vpop.f32.mrb[0].mxu0
        %3661 = vmatprep.mubr.bf16.mxu0 0
        %3662 = vmatmul.mubr.bf16.gmra.mrb[0].mxu0 %v3524
        %v3663 = vpop.f32.mrb[0].mxu0
        %v3664 = vadd.f32 %v3452, %v3663
        %v3665 = vpop.f32.mrb[0].mxu0
        %v3666 = vpop.f32.mrb[0].mxu0
        %v3667 = vadd.f32 %v3455, %v3666
        %v3668 = vpop.f32.mrb[0].mxu0
        %3669 = vmatprep.mubr.bf16.mxu0 0
        %3670 = vmatmul.mubr.bf16.gmra.mrb[0].mxu0 %v3527
        %v3671 = vpop.f32.mrb[0].mxu0
        %v3672 = vadd.f32 %v3460, %v3671
        %v3673 = vpop.f32.mrb[0].mxu0
        %v3674 = vpop.f32.mrb[0].mxu0
        %v3675 = vadd.f32 %v3463, %v3674
        %v3676 = vpop.f32.mrb[0].mxu0
        %3677 = vmatprep.mubr.bf16.mxu0 0
        %3678 = vmatmul.mubr.bf16.gmra.mrb[0].mxu0 %v3530
        %v3679 = vpop.f32.mrb[0].mxu0
        %v3680 = vadd.f32 %v3468, %v3679
        %v3681 = vpop.f32.mrb[0].mxu0
        %v3682 = vpop.f32.mrb[0].mxu0
        %v3683 = vadd.f32 %v3471, %v3682
        %v3684 = vpop.f32.mrb[0].mxu0
        %3685 = vmatprep.mubr.bf16.mxu0 0
        %3686 = vmatmul.mubr.bf16.gmra.mrb[0].mxu0 %v3533
        %v3687 = vpop.f32.mrb[0].mxu0
        %v3688 = vadd.f32 %v3476, %v3687
        %v3689 = vpop.f32.mrb[0].mxu0
        %v3690 = vpop.f32.mrb[0].mxu0
        %v3691 = vadd.f32 %v3479, %v3690
        %v3692 = vpop.f32.mrb[0].mxu0
        %3693 = vmatprep.mubr.bf16.mxu0 0
        %3694 = vmatmul.mubr.bf16.gmra.mrb[0].mxu0 %v3536
        %v3695 = vpop.f32.mrb[0].mxu0
        %v3696 = vadd.f32 %v3484, %v3695
        %v3697 = vpop.f32.mrb[0].mxu0
        %v3698 = vpop.f32.mrb[0].mxu0
        %v3699 = vadd.f32 %v3487, %v3698
        %v3700 = vpop.f32.mrb[0].mxu0
        %3701 = vdwg.mxu0
        %v3702 = vld [vmem:[#allocation3 + $0x2] sm:$0xff]
        %v3703 = vld [vmem:[#allocation3 + $0xa] sm:$0xff]
        %v3704 = vld [vmem:[#allocation3 + $0x1a] sm:$0xff]
        %v3705 = vld [vmem:[#allocation3 + $0x22] sm:$0xff]
        %v3706 = vld [vmem:[#allocation3 + $0x32] sm:$0xff]
        %v3707 = vld [vmem:[#allocation3 + $0x3a] sm:$0xff]
        %v3708 = vld [vmem:[#allocation3 + $0x4a] sm:$0xff]
        %v3709 = vld [vmem:[#allocation3 + $0x52] sm:$0xff]
        %v3710 = vld [vmem:[#allocation3 + $0x62] sm:$0xff]
        %v3711 = vld [vmem:[#allocation3 + $0x6a] sm:$0xff]
        %v3712 = vld [vmem:[#allocation3 + $0x7a] sm:$0xff]
        %v3713 = vld [vmem:[#allocation3 + $0x82] sm:$0xff]
        %v3714 = vld [vmem:[#allocation3 + $0x92] sm:$0xff]
        %v3715 = vld [vmem:[#allocation3 + $0x9a] sm:$0xff]
        %v3716 = vld [vmem:[#allocation3 + $0xaa] sm:$0xff]
        %v3717 = vld [vmem:[#allocation3 + $0xb2] sm:$0xff]
        %v3718 = vld [vmem:[#allocation3 + $0xc2] sm:$0xff]
        %v3719 = vld [vmem:[#allocation3 + $0xca] sm:$0xff]
        %v3720 = vld [vmem:[#allocation3 + $0xda] sm:$0xff]
        %v3721 = vld [vmem:[#allocation3 + $0xe2] sm:$0xff]
        %v3722 = vld [vmem:[#allocation3 + $0xf2] sm:$0xff]
        %v3723 = vld [vmem:[#allocation3 + $0xfa] sm:$0xff]
        %v3724 = vld [vmem:[#allocation3 + $0x10a] sm:$0xff]
        %v3725 = vld [vmem:[#allocation3 + $0x112] sm:$0xff]
        %v3726 = vld [vmem:[#allocation3 + $0x122] sm:$0xff]
        %v3727 = vld [vmem:[#allocation3 + $0x12a] sm:$0xff]
        %v3728 = vld [vmem:[#allocation3 + $0x13a] sm:$0xff]
        %v3729 = vld [vmem:[#allocation3 + $0x142] sm:$0xff]
        %v3730 = vld [vmem:[#allocation3 + $0x152] sm:$0xff]
        %v3731 = vld [vmem:[#allocation3 + $0x15a] sm:$0xff]
        %v3732 = vld [vmem:[#allocation3 + $0x16a] sm:$0xff]
        %v3733 = vld [vmem:[#allocation3 + $0x172] sm:$0xff]
        %v3734 = vpack.c.bf16 %v3703, %v3702
        %v3735 = vpack.c.bf16 %v3705, %v3704
        %v3736 = vpack.c.bf16 %v3707, %v3706
        %v3737 = vpack.c.bf16 %v3709, %v3708
        %v3738 = vpack.c.bf16 %v3711, %v3710
        %v3739 = vpack.c.bf16 %v3713, %v3712
        %v3740 = vpack.c.bf16 %v3715, %v3714
        %v3741 = vpack.c.bf16 %v3717, %v3716
        %v3742 = vpack.c.bf16 %v3719, %v3718
        %v3743 = vpack.c.bf16 %v3721, %v3720
        %v3744 = vpack.c.bf16 %v3723, %v3722
        %v3745 = vpack.c.bf16 %v3725, %v3724
        %v3746 = vpack.c.bf16 %v3727, %v3726
        %v3747 = vpack.c.bf16 %v3729, %v3728
        %v3748 = vpack.c.bf16 %v3731, %v3730
        %v3749 = vpack.c.bf16 %v3733, %v3732
        %s3750 = scalar_lea.vmem %s3, 8
        %v3751 = vld [vmem:[%s3750] sm:$0xf]
        %v3753 = vsel %vm3103, %v3734, 0
        %v3756 = vsel %vm3103, %v3735, 0
        %v3759 = vsel %vm3103, %v3736, 0
        %v3762 = vsel %vm3103, %v3737, 0
        %v3765 = vsel %vm3103, %v3738, 0
        %v3768 = vsel %vm3103, %v3739, 0
        %v3771 = vsel %vm3103, %v3740, 0
        %v3774 = vsel %vm3103, %v3741, 0
        %v3777 = vsel %vm3103, %v3742, 0
        %v3780 = vsel %vm3103, %v3743, 0
        %v3783 = vsel %vm3103, %v3744, 0
        %v3786 = vsel %vm3103, %v3745, 0
        %v3789 = vsel %vm3103, %v3746, 0
        %v3792 = vsel %vm3103, %v3747, 0
        %v3795 = vsel %vm3103, %v3748, 0
        %v3798 = vsel %vm3103, %v3749, 0
        %v3801 = vsel %vm3325, %v3751, 0
        %3803 = vmatprep.subr.bf16.mxu0 0
        %3804 = vmatpush1.bf16.msra.mxu0 %v3801
        %3805 = vmatprep.subr.bf16.mxu0 0
        %3806 = vmatpush1.bf16.msra.mxu0 0
        %3807 = vmatprep.subr.bf16.mxu0 0
        %3808 = vmatpush1.bf16.msra.mxu0 0
        %3809 = vmatprep.subr.bf16.mxu0 0
        %3810 = vmatpush1.bf16.msra.mxu0 0
        %3811 = vmatprep.subr.bf16.mxu0 0
        %3812 = vmatpush1.bf16.msra.mxu0 0
        %3813 = vmatprep.subr.bf16.mxu0 0
        %3814 = vmatpush1.bf16.msra.mxu0 0
        %3815 = vmatprep.subr.bf16.mxu0 0
        %3816 = vmatpush1.bf16.msra.mxu0 0
        %3817 = vmatprep.subr.bf16.mxu0 0
        %3818 = vmatpush1.bf16.msra.mxu0 0
        %3819 = vmatprep.subr.bf16.mxu0 0
        %3820 = vmatpush1.bf16.msra.mxu0 0
        %3821 = vmatprep.subr.bf16.mxu0 0
        %3822 = vmatpush1.bf16.msra.mxu0 0
        %3823 = vmatprep.subr.bf16.mxu0 0
        %3824 = vmatpush1.bf16.msra.mxu0 0
        %3825 = vmatprep.subr.bf16.mxu0 0
        %3826 = vmatpush1.bf16.msra.mxu0 0
        %3827 = vmatprep.subr.bf16.mxu0 0
        %3828 = vmatpush1.bf16.msra.mxu0 0
        %3829 = vmatprep.subr.bf16.mxu0 0
        %3830 = vmatpush1.bf16.msra.mxu0 0
        %3831 = vmatprep.subr.bf16.mxu0 0
        %3832 = vmatpush1.bf16.msra.mxu0 0
        %3833 = vmatprep.subr.bf16.mxu0 0
        %3834 = vmatpush1.bf16.msra.mxu0 0
        %3835 = vmatprep.mubr.bf16.mxu0 0
        %3836 = vmatmul.mubr.bf16.gmra.mrb[0].mxu0 %v3753
        %v3837 = vpop.f32.mrb[0].mxu0
        %v3838 = vadd.f32 0.0, %v3837
        %v3839 = vpop.f32.mrb[0].mxu0
        %v3840 = vpop.f32.mrb[0].mxu0
        %v3841 = vadd.f32 0.0, %v3840
        %v3842 = vpop.f32.mrb[0].mxu0
        %3843 = vmatprep.mubr.bf16.mxu0 0
        %3844 = vmatmul.mubr.bf16.gmra.mrb[0].mxu0 %v3756
        %v3845 = vpop.f32.mrb[0].mxu0
        %v3846 = vadd.f32 0.0, %v3845
        %v3847 = vpop.f32.mrb[0].mxu0
        %v3848 = vpop.f32.mrb[0].mxu0
        %v3849 = vadd.f32 0.0, %v3848
        %v3850 = vpop.f32.mrb[0].mxu0
        %3851 = vmatprep.mubr.bf16.mxu0 0
        %3852 = vmatmul.mubr.bf16.gmra.mrb[0].mxu0 %v3759
        %v3853 = vpop.f32.mrb[0].mxu0
        %v3854 = vadd.f32 0.0, %v3853
        %v3855 = vpop.f32.mrb[0].mxu0
        %v3856 = vpop.f32.mrb[0].mxu0
        %v3857 = vadd.f32 0.0, %v3856
        %v3858 = vpop.f32.mrb[0].mxu0
        %3859 = vmatprep.mubr.bf16.mxu0 0
        %3860 = vmatmul.mubr.bf16.gmra.mrb[0].mxu0 %v3762
        %v3861 = vpop.f32.mrb[0].mxu0
        %v3862 = vadd.f32 0.0, %v3861
        %v3863 = vpop.f32.mrb[0].mxu0
        %v3864 = vpop.f32.mrb[0].mxu0
        %v3865 = vadd.f32 0.0, %v3864
        %v3866 = vpop.f32.mrb[0].mxu0
        %3867 = vmatprep.mubr.bf16.mxu0 0
        %3868 = vmatmul.mubr.bf16.gmra.mrb[0].mxu0 %v3765
        %v3869 = vpop.f32.mrb[0].mxu0
        %v3870 = vadd.f32 0.0, %v3869
        %v3871 = vpop.f32.mrb[0].mxu0
        %v3872 = vpop.f32.mrb[0].mxu0
        %v3873 = vadd.f32 0.0, %v3872
        %v3874 = vpop.f32.mrb[0].mxu0
        %3875 = vmatprep.mubr.bf16.mxu0 0
        %3876 = vmatmul.mubr.bf16.gmra.mrb[0].mxu0 %v3768
        %v3877 = vpop.f32.mrb[0].mxu0
        %v3878 = vadd.f32 0.0, %v3877
        %v3879 = vpop.f32.mrb[0].mxu0
        %v3880 = vpop.f32.mrb[0].mxu0
        %v3881 = vadd.f32 0.0, %v3880
        %v3882 = vpop.f32.mrb[0].mxu0
        %3883 = vmatprep.mubr.bf16.mxu0 0
        %3884 = vmatmul.mubr.bf16.gmra.mrb[0].mxu0 %v3771
        %v3885 = vpop.f32.mrb[0].mxu0
        %v3886 = vadd.f32 0.0, %v3885
        %v3887 = vpop.f32.mrb[0].mxu0
        %v3888 = vpop.f32.mrb[0].mxu0
        %v3889 = vadd.f32 0.0, %v3888
        %v3890 = vpop.f32.mrb[0].mxu0
        %3891 = vmatprep.mubr.bf16.mxu0 0
        %3892 = vmatmul.mubr.bf16.gmra.mrb[0].mxu0 %v3774
        %v3893 = vpop.f32.mrb[0].mxu0
        %v3894 = vadd.f32 0.0, %v3893
        %v3895 = vpop.f32.mrb[0].mxu0
        %v3896 = vpop.f32.mrb[0].mxu0
        %v3897 = vadd.f32 0.0, %v3896
        %v3898 = vpop.f32.mrb[0].mxu0
        %3899 = vmatprep.mubr.bf16.mxu0 0
        %3900 = vmatmul.mubr.bf16.gmra.mrb[0].mxu0 %v3777
        %v3901 = vpop.f32.mrb[0].mxu0
        %v3902 = vadd.f32 0.0, %v3901
        %v3903 = vpop.f32.mrb[0].mxu0
        %v3904 = vpop.f32.mrb[0].mxu0
        %v3905 = vadd.f32 0.0, %v3904
        %v3906 = vpop.f32.mrb[0].mxu0
        %3907 = vmatprep.mubr.bf16.mxu0 0
        %3908 = vmatmul.mubr.bf16.gmra.mrb[0].mxu0 %v3780
        %v3909 = vpop.f32.mrb[0].mxu0
        %v3910 = vadd.f32 0.0, %v3909
        %v3911 = vpop.f32.mrb[0].mxu0
        %v3912 = vpop.f32.mrb[0].mxu0
        %v3913 = vadd.f32 0.0, %v3912
        %v3914 = vpop.f32.mrb[0].mxu0
        %3915 = vmatprep.mubr.bf16.mxu0 0
        %3916 = vmatmul.mubr.bf16.gmra.mrb[0].mxu0 %v3783
        %v3917 = vpop.f32.mrb[0].mxu0
        %v3918 = vadd.f32 0.0, %v3917
        %v3919 = vpop.f32.mrb[0].mxu0
        %v3920 = vpop.f32.mrb[0].mxu0
        %v3921 = vadd.f32 0.0, %v3920
        %v3922 = vpop.f32.mrb[0].mxu0
        %3923 = vmatprep.mubr.bf16.mxu0 0
        %3924 = vmatmul.mubr.bf16.gmra.mrb[0].mxu0 %v3786
        %v3925 = vpop.f32.mrb[0].mxu0
        %v3926 = vadd.f32 0.0, %v3925
        %v3927 = vpop.f32.mrb[0].mxu0
        %v3928 = vpop.f32.mrb[0].mxu0
        %v3929 = vadd.f32 0.0, %v3928
        %v3930 = vpop.f32.mrb[0].mxu0
        %3931 = vmatprep.mubr.bf16.mxu0 0
        %3932 = vmatmul.mubr.bf16.gmra.mrb[0].mxu0 %v3789
        %v3933 = vpop.f32.mrb[0].mxu0
        %v3934 = vadd.f32 0.0, %v3933
        %v3935 = vpop.f32.mrb[0].mxu0
        %v3936 = vpop.f32.mrb[0].mxu0
        %v3937 = vadd.f32 0.0, %v3936
        %v3938 = vpop.f32.mrb[0].mxu0
        %3939 = vmatprep.mubr.bf16.mxu0 0
        %3940 = vmatmul.mubr.bf16.gmra.mrb[0].mxu0 %v3792
        %v3941 = vpop.f32.mrb[0].mxu0
        %v3942 = vadd.f32 0.0, %v3941
        %v3943 = vpop.f32.mrb[0].mxu0
        %v3944 = vpop.f32.mrb[0].mxu0
        %v3945 = vadd.f32 0.0, %v3944
        %v3946 = vpop.f32.mrb[0].mxu0
        %3947 = vmatprep.mubr.bf16.mxu0 0
        %3948 = vmatmul.mubr.bf16.gmra.mrb[0].mxu0 %v3795
        %v3949 = vpop.f32.mrb[0].mxu0
        %v3950 = vadd.f32 0.0, %v3949
        %v3951 = vpop.f32.mrb[0].mxu0
        %v3952 = vpop.f32.mrb[0].mxu0
        %v3953 = vadd.f32 0.0, %v3952
        %v3954 = vpop.f32.mrb[0].mxu0
        %3955 = vmatprep.mubr.bf16.mxu0 0
        %3956 = vmatmul.mubr.bf16.gmra.mrb[0].mxu0 %v3798
        %v3957 = vpop.f32.mrb[0].mxu0
        %v3958 = vadd.f32 0.0, %v3957
        %v3959 = vpop.f32.mrb[0].mxu0
        %v3960 = vpop.f32.mrb[0].mxu0
        %v3961 = vadd.f32 0.0, %v3960
        %v3962 = vpop.f32.mrb[0].mxu0
        %3963 = vdwg.mxu0
        %v3964 = vadd.f32 %v3576, %v3838
        %v3965 = vadd.f32 %v3579, %v3841
        %v3966 = vadd.f32 %v3584, %v3846
        %v3967 = vadd.f32 %v3587, %v3849
        %v3968 = vadd.f32 %v3592, %v3854
        %v3969 = vadd.f32 %v3595, %v3857
        %v3970 = vadd.f32 %v3600, %v3862
        %v3971 = vadd.f32 %v3603, %v3865
        %v3972 = vadd.f32 %v3608, %v3870
        %v3973 = vadd.f32 %v3611, %v3873
        %v3974 = vadd.f32 %v3616, %v3878
        %v3975 = vadd.f32 %v3619, %v3881
        %v3976 = vadd.f32 %v3624, %v3886
        %v3977 = vadd.f32 %v3627, %v3889
        %v3978 = vadd.f32 %v3632, %v3894
        %v3979 = vadd.f32 %v3635, %v3897
        %v3980 = vadd.f32 %v3640, %v3902
        %v3981 = vadd.f32 %v3643, %v3905
        %v3982 = vadd.f32 %v3648, %v3910
        %v3983 = vadd.f32 %v3651, %v3913
        %v3984 = vadd.f32 %v3656, %v3918
        %v3985 = vadd.f32 %v3659, %v3921
        %v3986 = vadd.f32 %v3664, %v3926
        %v3987 = vadd.f32 %v3667, %v3929
        %v3988 = vadd.f32 %v3672, %v3934
        %v3989 = vadd.f32 %v3675, %v3937
        %v3990 = vadd.f32 %v3680, %v3942
        %v3991 = vadd.f32 %v3683, %v3945
        %v3992 = vadd.f32 %v3688, %v3950
        %v3993 = vadd.f32 %v3691, %v3953
        %v3994 = vadd.f32 %v3696, %v3958
        %v3995 = vadd.f32 %v3699, %v3961
        %v3996 = vld [vmem:[%s3112] sm:$0xff]
        %v3997 = vld [vmem:[%s3112 + $0x8] sm:$0xff]
        %v3998 = vld [vmem:[%s3112 + $0x18] sm:$0xff]
        %v3999 = vld [vmem:[%s3112 + $0x20] sm:$0xff]
        %v4000 = vld [vmem:[%s3112 + $0x30] sm:$0xff]
        %v4001 = vld [vmem:[%s3112 + $0x38] sm:$0xff]
        %v4002 = vld [vmem:[%s3112 + $0x48] sm:$0xff]
        %v4003 = vld [vmem:[%s3112 + $0x50] sm:$0xff]
        %v4004 = vld [vmem:[%s3112 + $0x60] sm:$0xff]
        %v4005 = vld [vmem:[%s3112 + $0x68] sm:$0xff]
        %v4006 = vld [vmem:[%s3112 + $0x78] sm:$0xff]
        %v4007 = vld [vmem:[%s3112 + $0x80] sm:$0xff]
        %v4008 = vld [vmem:[%s3112 + $0x90] sm:$0xff]
        %v4009 = vld [vmem:[%s3112 + $0x98] sm:$0xff]
        %v4010 = vld [vmem:[%s3112 + $0xa8] sm:$0xff]
        %v4011 = vld [vmem:[%s3112 + $0xb0] sm:$0xff]
        %v4012 = vld [vmem:[%s3112 + $0xc0] sm:$0xff]
        %v4013 = vld [vmem:[%s3112 + $0xc8] sm:$0xff]
        %v4014 = vld [vmem:[%s3112 + $0xd8] sm:$0xff]
        %v4015 = vld [vmem:[%s3112 + $0xe0] sm:$0xff]
        %v4016 = vld [vmem:[%s3112 + $0xf0] sm:$0xff]
        %v4017 = vld [vmem:[%s3112 + $0xf8] sm:$0xff]
        %v4018 = vld [vmem:[%s3112 + $0x108] sm:$0xff]
        %v4019 = vld [vmem:[%s3112 + $0x110] sm:$0xff]
        %v4020 = vld [vmem:[%s3112 + $0x120] sm:$0xff]
        %v4021 = vld [vmem:[%s3112 + $0x128] sm:$0xff]
        %v4022 = vld [vmem:[%s3112 + $0x138] sm:$0xff]
        %v4023 = vld [vmem:[%s3112 + $0x140] sm:$0xff]
        %v4024 = vld [vmem:[%s3112 + $0x150] sm:$0xff]
        %v4025 = vld [vmem:[%s3112 + $0x158] sm:$0xff]
        %v4026 = vld [vmem:[%s3112 + $0x168] sm:$0xff]
        %v4027 = vld [vmem:[%s3112 + $0x170] sm:$0xff]
        %v4028 = vpack.c.bf16 %v3997, %v3996
        %v4029 = vpack.c.bf16 %v3999, %v3998
        %v4030 = vpack.c.bf16 %v4001, %v4000
        %v4031 = vpack.c.bf16 %v4003, %v4002
        %v4032 = vpack.c.bf16 %v4005, %v4004
        %v4033 = vpack.c.bf16 %v4007, %v4006
        %v4034 = vpack.c.bf16 %v4009, %v4008
        %v4035 = vpack.c.bf16 %v4011, %v4010
        %v4036 = vpack.c.bf16 %v4013, %v4012
        %v4037 = vpack.c.bf16 %v4015, %v4014
        %v4038 = vpack.c.bf16 %v4017, %v4016
        %v4039 = vpack.c.bf16 %v4019, %v4018
        %v4040 = vpack.c.bf16 %v4021, %v4020
        %v4041 = vpack.c.bf16 %v4023, %v4022
        %v4042 = vpack.c.bf16 %v4025, %v4024
        %v4043 = vpack.c.bf16 %v4027, %v4026
        %s4044 = scalar_lea.vmem %s3, 12
        %v4045 = vld [vmem:[%s4044] sm:$0xf]
        %v4047 = vsel %vm3103, %v4028, 0
        %v4050 = vsel %vm3103, %v4029, 0
        %v4053 = vsel %vm3103, %v4030, 0
        %v4056 = vsel %vm3103, %v4031, 0
        %v4059 = vsel %vm3103, %v4032, 0
        %v4062 = vsel %vm3103, %v4033, 0
        %v4065 = vsel %vm3103, %v4034, 0
        %v4068 = vsel %vm3103, %v4035, 0
        %v4071 = vsel %vm3103, %v4036, 0
        %v4074 = vsel %vm3103, %v4037, 0
        %v4077 = vsel %vm3103, %v4038, 0
        %v4080 = vsel %vm3103, %v4039, 0
        %v4083 = vsel %vm3103, %v4040, 0
        %v4086 = vsel %vm3103, %v4041, 0
        %v4089 = vsel %vm3103, %v4042, 0
        %v4092 = vsel %vm3103, %v4043, 0
        %v4095 = vsel %vm3325, %v4045, 0
        %4097 = vmatprep.subr.bf16.mxu0 0
        %4098 = vmatpush1.bf16.msra.mxu0 %v4095
        %4099 = vmatprep.subr.bf16.mxu0 0
        %4100 = vmatpush1.bf16.msra.mxu0 0
        %4101 = vmatprep.subr.bf16.mxu0 0
        %4102 = vmatpush1.bf16.msra.mxu0 0
        %4103 = vmatprep.subr.bf16.mxu0 0
        %4104 = vmatpush1.bf16.msra.mxu0 0
        %4105 = vmatprep.subr.bf16.mxu0 0
        %4106 = vmatpush1.bf16.msra.mxu0 0
        %4107 = vmatprep.subr.bf16.mxu0 0
        %4108 = vmatpush1.bf16.msra.mxu0 0
        %4109 = vmatprep.subr.bf16.mxu0 0
        %4110 = vmatpush1.bf16.msra.mxu0 0
        %4111 = vmatprep.subr.bf16.mxu0 0
        %4112 = vmatpush1.bf16.msra.mxu0 0
        %4113 = vmatprep.subr.bf16.mxu0 0
        %4114 = vmatpush1.bf16.msra.mxu0 0
        %4115 = vmatprep.subr.bf16.mxu0 0
        %4116 = vmatpush1.bf16.msra.mxu0 0
        %4117 = vmatprep.subr.bf16.mxu0 0
        %4118 = vmatpush1.bf16.msra.mxu0 0
        %4119 = vmatprep.subr.bf16.mxu0 0
        %4120 = vmatpush1.bf16.msra.mxu0 0
        %4121 = vmatprep.subr.bf16.mxu0 0
        %4122 = vmatpush1.bf16.msra.mxu0 0
        %4123 = vmatprep.subr.bf16.mxu0 0
        %4124 = vmatpush1.bf16.msra.mxu0 0
        %4125 = vmatprep.subr.bf16.mxu0 0
        %4126 = vmatpush1.bf16.msra.mxu0 0
        %4127 = vmatprep.subr.bf16.mxu0 0
        %4128 = vmatpush1.bf16.msra.mxu0 0
        %4129 = vmatprep.mubr.bf16.mxu0 0
        %4130 = vmatmul.mubr.bf16.gmra.mrb[0].mxu0 %v4047
        %v4131 = vpop.f32.mrb[0].mxu0
        %v4132 = vadd.f32 0.0, %v4131
        %v4133 = vpop.f32.mrb[0].mxu0
        %v4134 = vpop.f32.mrb[0].mxu0
        %v4135 = vadd.f32 0.0, %v4134
        %v4136 = vpop.f32.mrb[0].mxu0
        %4137 = vmatprep.mubr.bf16.mxu0 0
        %4138 = vmatmul.mubr.bf16.gmra.mrb[0].mxu0 %v4050
        %v4139 = vpop.f32.mrb[0].mxu0
        %v4140 = vadd.f32 0.0, %v4139
        %v4141 = vpop.f32.mrb[0].mxu0
        %v4142 = vpop.f32.mrb[0].mxu0
        %v4143 = vadd.f32 0.0, %v4142
        %v4144 = vpop.f32.mrb[0].mxu0
        %4145 = vmatprep.mubr.bf16.mxu0 0
        %4146 = vmatmul.mubr.bf16.gmra.mrb[0].mxu0 %v4053
        %v4147 = vpop.f32.mrb[0].mxu0
        %v4148 = vadd.f32 0.0, %v4147
        %v4149 = vpop.f32.mrb[0].mxu0
        %v4150 = vpop.f32.mrb[0].mxu0
        %v4151 = vadd.f32 0.0, %v4150
        %v4152 = vpop.f32.mrb[0].mxu0
        %4153 = vmatprep.mubr.bf16.mxu0 0
        %4154 = vmatmul.mubr.bf16.gmra.mrb[0].mxu0 %v4056
        %v4155 = vpop.f32.mrb[0].mxu0
        %v4156 = vadd.f32 0.0, %v4155
        %v4157 = vpop.f32.mrb[0].mxu0
        %v4158 = vpop.f32.mrb[0].mxu0
        %v4159 = vadd.f32 0.0, %v4158
        %v4160 = vpop.f32.mrb[0].mxu0
        %4161 = vmatprep.mubr.bf16.mxu0 0
        %4162 = vmatmul.mubr.bf16.gmra.mrb[0].mxu0 %v4059
        %v4163 = vpop.f32.mrb[0].mxu0
        %v4164 = vadd.f32 0.0, %v4163
        %v4165 = vpop.f32.mrb[0].mxu0
        %v4166 = vpop.f32.mrb[0].mxu0
        %v4167 = vadd.f32 0.0, %v4166
        %v4168 = vpop.f32.mrb[0].mxu0
        %4169 = vmatprep.mubr.bf16.mxu0 0
        %4170 = vmatmul.mubr.bf16.gmra.mrb[0].mxu0 %v4062
        %v4171 = vpop.f32.mrb[0].mxu0
        %v4172 = vadd.f32 0.0, %v4171
        %v4173 = vpop.f32.mrb[0].mxu0
        %v4174 = vpop.f32.mrb[0].mxu0
        %v4175 = vadd.f32 0.0, %v4174
        %v4176 = vpop.f32.mrb[0].mxu0
        %4177 = vmatprep.mubr.bf16.mxu0 0
        %4178 = vmatmul.mubr.bf16.gmra.mrb[0].mxu0 %v4065
        %v4179 = vpop.f32.mrb[0].mxu0
        %v4180 = vadd.f32 0.0, %v4179
        %v4181 = vpop.f32.mrb[0].mxu0
        %v4182 = vpop.f32.mrb[0].mxu0
        %v4183 = vadd.f32 0.0, %v4182
        %v4184 = vpop.f32.mrb[0].mxu0
        %4185 = vmatprep.mubr.bf16.mxu0 0
        %4186 = vmatmul.mubr.bf16.gmra.mrb[0].mxu0 %v4068
        %v4187 = vpop.f32.mrb[0].mxu0
        %v4188 = vadd.f32 0.0, %v4187
        %v4189 = vpop.f32.mrb[0].mxu0
        %v4190 = vpop.f32.mrb[0].mxu0
        %v4191 = vadd.f32 0.0, %v4190
        %v4192 = vpop.f32.mrb[0].mxu0
        %4193 = vmatprep.mubr.bf16.mxu0 0
        %4194 = vmatmul.mubr.bf16.gmra.mrb[0].mxu0 %v4071
        %v4195 = vpop.f32.mrb[0].mxu0
        %v4196 = vadd.f32 0.0, %v4195
        %v4197 = vpop.f32.mrb[0].mxu0
        %v4198 = vpop.f32.mrb[0].mxu0
        %v4199 = vadd.f32 0.0, %v4198
        %v4200 = vpop.f32.mrb[0].mxu0
        %4201 = vmatprep.mubr.bf16.mxu0 0
        %4202 = vmatmul.mubr.bf16.gmra.mrb[0].mxu0 %v4074
        %v4203 = vpop.f32.mrb[0].mxu0
        %v4204 = vadd.f32 0.0, %v4203
        %v4205 = vpop.f32.mrb[0].mxu0
        %v4206 = vpop.f32.mrb[0].mxu0
        %v4207 = vadd.f32 0.0, %v4206
        %v4208 = vpop.f32.mrb[0].mxu0
        %4209 = vmatprep.mubr.bf16.mxu0 0
        %4210 = vmatmul.mubr.bf16.gmra.mrb[0].mxu0 %v4077
        %v4211 = vpop.f32.mrb[0].mxu0
        %v4212 = vadd.f32 0.0, %v4211
        %v4213 = vpop.f32.mrb[0].mxu0
        %v4214 = vpop.f32.mrb[0].mxu0
        %v4215 = vadd.f32 0.0, %v4214
        %v4216 = vpop.f32.mrb[0].mxu0
        %4217 = vmatprep.mubr.bf16.mxu0 0
        %4218 = vmatmul.mubr.bf16.gmra.mrb[0].mxu0 %v4080
        %v4219 = vpop.f32.mrb[0].mxu0
        %v4220 = vadd.f32 0.0, %v4219
        %v4221 = vpop.f32.mrb[0].mxu0
        %v4222 = vpop.f32.mrb[0].mxu0
        %v4223 = vadd.f32 0.0, %v4222
        %v4224 = vpop.f32.mrb[0].mxu0
        %4225 = vmatprep.mubr.bf16.mxu0 0
        %4226 = vmatmul.mubr.bf16.gmra.mrb[0].mxu0 %v4083
        %v4227 = vpop.f32.mrb[0].mxu0
        %v4228 = vadd.f32 0.0, %v4227
        %v4229 = vpop.f32.mrb[0].mxu0
        %v4230 = vpop.f32.mrb[0].mxu0
        %v4231 = vadd.f32 0.0, %v4230
        %v4232 = vpop.f32.mrb[0].mxu0
        %4233 = vmatprep.mubr.bf16.mxu0 0
        %4234 = vmatmul.mubr.bf16.gmra.mrb[0].mxu0 %v4086
        %v4235 = vpop.f32.mrb[0].mxu0
        %v4236 = vadd.f32 0.0, %v4235
        %v4237 = vpop.f32.mrb[0].mxu0
        %v4238 = vpop.f32.mrb[0].mxu0
        %v4239 = vadd.f32 0.0, %v4238
        %v4240 = vpop.f32.mrb[0].mxu0
        %4241 = vmatprep.mubr.bf16.mxu0 0
        %4242 = vmatmul.mubr.bf16.gmra.mrb[0].mxu0 %v4089
        %v4243 = vpop.f32.mrb[0].mxu0
        %v4244 = vadd.f32 0.0, %v4243
        %v4245 = vpop.f32.mrb[0].mxu0
        %v4246 = vpop.f32.mrb[0].mxu0
        %v4247 = vadd.f32 0.0, %v4246
        %v4248 = vpop.f32.mrb[0].mxu0
        %4249 = vmatprep.mubr.bf16.mxu0 0
        %4250 = vmatmul.mubr.bf16.gmra.mrb[0].mxu0 %v4092
        %v4251 = vpop.f32.mrb[0].mxu0
        %v4252 = vadd.f32 0.0, %v4251
        %v4253 = vpop.f32.mrb[0].mxu0
        %v4254 = vpop.f32.mrb[0].mxu0
        %v4255 = vadd.f32 0.0, %v4254
        %v4256 = vpop.f32.mrb[0].mxu0
        %4257 = vdwg.mxu0
        %v4258 = vadd.f32 %v3964, %v4132
        %v4259 = vadd.f32 %v3965, %v4135
        %v4260 = vadd.f32 %v3966, %v4140
        %v4261 = vadd.f32 %v3967, %v4143
        %v4262 = vadd.f32 %v3968, %v4148
        %v4263 = vadd.f32 %v3969, %v4151
        %v4264 = vadd.f32 %v3970, %v4156
        %v4265 = vadd.f32 %v3971, %v4159
        %v4266 = vadd.f32 %v3972, %v4164
        %v4267 = vadd.f32 %v3973, %v4167
        %v4268 = vadd.f32 %v3974, %v4172
        %v4269 = vadd.f32 %v3975, %v4175
        %v4270 = vadd.f32 %v3976, %v4180
        %v4271 = vadd.f32 %v3977, %v4183
        %v4272 = vadd.f32 %v3978, %v4188
        %v4273 = vadd.f32 %v3979, %v4191
        %v4274 = vadd.f32 %v3980, %v4196
        %v4275 = vadd.f32 %v3981, %v4199
        %v4276 = vadd.f32 %v3982, %v4204
        %v4277 = vadd.f32 %v3983, %v4207
        %v4278 = vadd.f32 %v3984, %v4212
        %v4279 = vadd.f32 %v3985, %v4215
        %v4280 = vadd.f32 %v3986, %v4220
        %v4281 = vadd.f32 %v3987, %v4223
        %v4282 = vadd.f32 %v3988, %v4228
        %v4283 = vadd.f32 %v3989, %v4231
        %v4284 = vadd.f32 %v3990, %v4236
        %v4285 = vadd.f32 %v3991, %v4239
        %v4286 = vadd.f32 %v3992, %v4244
        %v4287 = vadd.f32 %v3993, %v4247
        %v4288 = vadd.f32 %v3994, %v4252
        %v4289 = vadd.f32 %v3995, %v4255
        %v4290 = vld [vmem:[%s3112 + $0x1] sm:$0xff]
        %v4291 = vld [vmem:[%s3112 + $0x9] sm:$0xff]
        %v4292 = vld [vmem:[%s3112 + $0x19] sm:$0xff]
        %v4293 = vld [vmem:[%s3112 + $0x21] sm:$0xff]
        %v4294 = vld [vmem:[%s3112 + $0x31] sm:$0xff]
        %v4295 = vld [vmem:[%s3112 + $0x39] sm:$0xff]
        %v4296 = vld [vmem:[%s3112 + $0x49] sm:$0xff]
        %v4297 = vld [vmem:[%s3112 + $0x51] sm:$0xff]
        %v4298 = vld [vmem:[%s3112 + $0x61] sm:$0xff]
        %v4299 = vld [vmem:[%s3112 + $0x69] sm:$0xff]
        %v4300 = vld [vmem:[%s3112 + $0x79] sm:$0xff]
        %v4301 = vld [vmem:[%s3112 + $0x81] sm:$0xff]
        %v4302 = vld [vmem:[%s3112 + $0x91] sm:$0xff]
        %v4303 = vld [vmem:[%s3112 + $0x99] sm:$0xff]
        %v4304 = vld [vmem:[%s3112 + $0xa9] sm:$0xff]
        %v4305 = vld [vmem:[%s3112 + $0xb1] sm:$0xff]
        %v4306 = vld [vmem:[%s3112 + $0xc1] sm:$0xff]
        %v4307 = vld [vmem:[%s3112 + $0xc9] sm:$0xff]
        %v4308 = vld [vmem:[%s3112 + $0xd9] sm:$0xff]
        %v4309 = vld [vmem:[%s3112 + $0xe1] sm:$0xff]
        %v4310 = vld [vmem:[%s3112 + $0xf1] sm:$0xff]
        %v4311 = vld [vmem:[%s3112 + $0xf9] sm:$0xff]
        %v4312 = vld [vmem:[%s3112 + $0x109] sm:$0xff]
        %v4313 = vld [vmem:[%s3112 + $0x111] sm:$0xff]
        %v4314 = vld [vmem:[%s3112 + $0x121] sm:$0xff]
        %v4315 = vld [vmem:[%s3112 + $0x129] sm:$0xff]
        %v4316 = vld [vmem:[%s3112 + $0x139] sm:$0xff]
        %v4317 = vld [vmem:[%s3112 + $0x141] sm:$0xff]
        %v4318 = vld [vmem:[%s3112 + $0x151] sm:$0xff]
        %v4319 = vld [vmem:[%s3112 + $0x159] sm:$0xff]
        %v4320 = vld [vmem:[%s3112 + $0x169] sm:$0xff]
        %v4321 = vld [vmem:[%s3112 + $0x171] sm:$0xff]
        %v4322 = vpack.c.bf16 %v4291, %v4290
        %v4323 = vpack.c.bf16 %v4293, %v4292
        %v4324 = vpack.c.bf16 %v4295, %v4294
        %v4325 = vpack.c.bf16 %v4297, %v4296
        %v4326 = vpack.c.bf16 %v4299, %v4298
        %v4327 = vpack.c.bf16 %v4301, %v4300
        %v4328 = vpack.c.bf16 %v4303, %v4302
        %v4329 = vpack.c.bf16 %v4305, %v4304
        %v4330 = vpack.c.bf16 %v4307, %v4306
        %v4331 = vpack.c.bf16 %v4309, %v4308
        %v4332 = vpack.c.bf16 %v4311, %v4310
        %v4333 = vpack.c.bf16 %v4313, %v4312
        %v4334 = vpack.c.bf16 %v4315, %v4314
        %v4335 = vpack.c.bf16 %v4317, %v4316
        %v4336 = vpack.c.bf16 %v4319, %v4318
        %v4337 = vpack.c.bf16 %v4321, %v4320
        %s4338 = scalar_lea.vmem %s3, 16
        %v4339 = vld [vmem:[%s4338] sm:$0xf]
        %v4341 = vsel %vm3103, %v4322, 0
        %v4344 = vsel %vm3103, %v4323, 0
        %v4347 = vsel %vm3103, %v4324, 0
        %v4350 = vsel %vm3103, %v4325, 0
        %v4353 = vsel %vm3103, %v4326, 0
        %v4356 = vsel %vm3103, %v4327, 0
        %v4359 = vsel %vm3103, %v4328, 0
        %v4362 = vsel %vm3103, %v4329, 0
        %v4365 = vsel %vm3103, %v4330, 0
        %v4368 = vsel %vm3103, %v4331, 0
        %v4371 = vsel %vm3103, %v4332, 0
        %v4374 = vsel %vm3103, %v4333, 0
        %v4377 = vsel %vm3103, %v4334, 0
        %v4380 = vsel %vm3103, %v4335, 0
        %v4383 = vsel %vm3103, %v4336, 0
        %v4386 = vsel %vm3103, %v4337, 0
        %v4389 = vsel %vm3325, %v4339, 0
        %4391 = vmatprep.subr.bf16.mxu0 0
        %4392 = vmatpush1.bf16.msra.mxu0 %v4389
        %4393 = vmatprep.subr.bf16.mxu0 0
        %4394 = vmatpush1.bf16.msra.mxu0 0
        %4395 = vmatprep.subr.bf16.mxu0 0
        %4396 = vmatpush1.bf16.msra.mxu0 0
        %4397 = vmatprep.subr.bf16.mxu0 0
        %4398 = vmatpush1.bf16.msra.mxu0 0
        %4399 = vmatprep.subr.bf16.mxu0 0
        %4400 = vmatpush1.bf16.msra.mxu0 0
        %4401 = vmatprep.subr.bf16.mxu0 0
        %4402 = vmatpush1.bf16.msra.mxu0 0
        %4403 = vmatprep.subr.bf16.mxu0 0
        %4404 = vmatpush1.bf16.msra.mxu0 0
        %4405 = vmatprep.subr.bf16.mxu0 0
        %4406 = vmatpush1.bf16.msra.mxu0 0
        %4407 = vmatprep.subr.bf16.mxu0 0
        %4408 = vmatpush1.bf16.msra.mxu0 0
        %4409 = vmatprep.subr.bf16.mxu0 0
        %4410 = vmatpush1.bf16.msra.mxu0 0
        %4411 = vmatprep.subr.bf16.mxu0 0
        %4412 = vmatpush1.bf16.msra.mxu0 0
        %4413 = vmatprep.subr.bf16.mxu0 0
        %4414 = vmatpush1.bf16.msra.mxu0 0
        %4415 = vmatprep.subr.bf16.mxu0 0
        %4416 = vmatpush1.bf16.msra.mxu0 0
        %4417 = vmatprep.subr.bf16.mxu0 0
        %4418 = vmatpush1.bf16.msra.mxu0 0
        %4419 = vmatprep.subr.bf16.mxu0 0
        %4420 = vmatpush1.bf16.msra.mxu0 0
        %4421 = vmatprep.subr.bf16.mxu0 0
        %4422 = vmatpush1.bf16.msra.mxu0 0
        %4423 = vmatprep.mubr.bf16.mxu0 0
        %4424 = vmatmul.mubr.bf16.gmra.mrb[0].mxu0 %v4341
        %v4425 = vpop.f32.mrb[0].mxu0
        %v4426 = vadd.f32 0.0, %v4425
        %v4427 = vpop.f32.mrb[0].mxu0
        %v4428 = vpop.f32.mrb[0].mxu0
        %v4429 = vadd.f32 0.0, %v4428
        %v4430 = vpop.f32.mrb[0].mxu0
        %4431 = vmatprep.mubr.bf16.mxu0 0
        %4432 = vmatmul.mubr.bf16.gmra.mrb[0].mxu0 %v4344
        %v4433 = vpop.f32.mrb[0].mxu0
        %v4434 = vadd.f32 0.0, %v4433
        %v4435 = vpop.f32.mrb[0].mxu0
        %v4436 = vpop.f32.mrb[0].mxu0
        %v4437 = vadd.f32 0.0, %v4436
        %v4438 = vpop.f32.mrb[0].mxu0
        %4439 = vmatprep.mubr.bf16.mxu0 0
        %4440 = vmatmul.mubr.bf16.gmra.mrb[0].mxu0 %v4347
        %v4441 = vpop.f32.mrb[0].mxu0
        %v4442 = vadd.f32 0.0, %v4441
        %v4443 = vpop.f32.mrb[0].mxu0
        %v4444 = vpop.f32.mrb[0].mxu0
        %v4445 = vadd.f32 0.0, %v4444
        %v4446 = vpop.f32.mrb[0].mxu0
        %4447 = vmatprep.mubr.bf16.mxu0 0
        %4448 = vmatmul.mubr.bf16.gmra.mrb[0].mxu0 %v4350
        %v4449 = vpop.f32.mrb[0].mxu0
        %v4450 = vadd.f32 0.0, %v4449
        %v4451 = vpop.f32.mrb[0].mxu0
        %v4452 = vpop.f32.mrb[0].mxu0
        %v4453 = vadd.f32 0.0, %v4452
        %v4454 = vpop.f32.mrb[0].mxu0
        %4455 = vmatprep.mubr.bf16.mxu0 0
        %4456 = vmatmul.mubr.bf16.gmra.mrb[0].mxu0 %v4353
        %v4457 = vpop.f32.mrb[0].mxu0
        %v4458 = vadd.f32 0.0, %v4457
        %v4459 = vpop.f32.mrb[0].mxu0
        %v4460 = vpop.f32.mrb[0].mxu0
        %v4461 = vadd.f32 0.0, %v4460
        %v4462 = vpop.f32.mrb[0].mxu0
        %4463 = vmatprep.mubr.bf16.mxu0 0
        %4464 = vmatmul.mubr.bf16.gmra.mrb[0].mxu0 %v4356
        %v4465 = vpop.f32.mrb[0].mxu0
        %v4466 = vadd.f32 0.0, %v4465
        %v4467 = vpop.f32.mrb[0].mxu0
        %v4468 = vpop.f32.mrb[0].mxu0
        %v4469 = vadd.f32 0.0, %v4468
        %v4470 = vpop.f32.mrb[0].mxu0
        %4471 = vmatprep.mubr.bf16.mxu0 0
        %4472 = vmatmul.mubr.bf16.gmra.mrb[0].mxu0 %v4359
        %v4473 = vpop.f32.mrb[0].mxu0
        %v4474 = vadd.f32 0.0, %v4473
        %v4475 = vpop.f32.mrb[0].mxu0
        %v4476 = vpop.f32.mrb[0].mxu0
        %v4477 = vadd.f32 0.0, %v4476
        %v4478 = vpop.f32.mrb[0].mxu0
        %4479 = vmatprep.mubr.bf16.mxu0 0
        %4480 = vmatmul.mubr.bf16.gmra.mrb[0].mxu0 %v4362
        %v4481 = vpop.f32.mrb[0].mxu0
        %v4482 = vadd.f32 0.0, %v4481
        %v4483 = vpop.f32.mrb[0].mxu0
        %v4484 = vpop.f32.mrb[0].mxu0
        %v4485 = vadd.f32 0.0, %v4484
        %v4486 = vpop.f32.mrb[0].mxu0
        %4487 = vmatprep.mubr.bf16.mxu0 0
        %4488 = vmatmul.mubr.bf16.gmra.mrb[0].mxu0 %v4365
        %v4489 = vpop.f32.mrb[0].mxu0
        %v4490 = vadd.f32 0.0, %v4489
        %v4491 = vpop.f32.mrb[0].mxu0
        %v4492 = vpop.f32.mrb[0].mxu0
        %v4493 = vadd.f32 0.0, %v4492
        %v4494 = vpop.f32.mrb[0].mxu0
        %4495 = vmatprep.mubr.bf16.mxu0 0
        %4496 = vmatmul.mubr.bf16.gmra.mrb[0].mxu0 %v4368
        %v4497 = vpop.f32.mrb[0].mxu0
        %v4498 = vadd.f32 0.0, %v4497
        %v4499 = vpop.f32.mrb[0].mxu0
        %v4500 = vpop.f32.mrb[0].mxu0
        %v4501 = vadd.f32 0.0, %v4500
        %v4502 = vpop.f32.mrb[0].mxu0
        %4503 = vmatprep.mubr.bf16.mxu0 0
        %4504 = vmatmul.mubr.bf16.gmra.mrb[0].mxu0 %v4371
        %v4505 = vpop.f32.mrb[0].mxu0
        %v4506 = vadd.f32 0.0, %v4505
        %v4507 = vpop.f32.mrb[0].mxu0
        %v4508 = vpop.f32.mrb[0].mxu0
        %v4509 = vadd.f32 0.0, %v4508
        %v4510 = vpop.f32.mrb[0].mxu0
        %4511 = vmatprep.mubr.bf16.mxu0 0
        %4512 = vmatmul.mubr.bf16.gmra.mrb[0].mxu0 %v4374
        %v4513 = vpop.f32.mrb[0].mxu0
        %v4514 = vadd.f32 0.0, %v4513
        %v4515 = vpop.f32.mrb[0].mxu0
        %v4516 = vpop.f32.mrb[0].mxu0
        %v4517 = vadd.f32 0.0, %v4516
        %v4518 = vpop.f32.mrb[0].mxu0
        %4519 = vmatprep.mubr.bf16.mxu0 0
        %4520 = vmatmul.mubr.bf16.gmra.mrb[0].mxu0 %v4377
        %v4521 = vpop.f32.mrb[0].mxu0
        %v4522 = vadd.f32 0.0, %v4521
        %v4523 = vpop.f32.mrb[0].mxu0
        %v4524 = vpop.f32.mrb[0].mxu0
        %v4525 = vadd.f32 0.0, %v4524
        %v4526 = vpop.f32.mrb[0].mxu0
        %4527 = vmatprep.mubr.bf16.mxu0 0
        %4528 = vmatmul.mubr.bf16.gmra.mrb[0].mxu0 %v4380
        %v4529 = vpop.f32.mrb[0].mxu0
        %v4530 = vadd.f32 0.0, %v4529
        %v4531 = vpop.f32.mrb[0].mxu0
        %v4532 = vpop.f32.mrb[0].mxu0
        %v4533 = vadd.f32 0.0, %v4532
        %v4534 = vpop.f32.mrb[0].mxu0
        %4535 = vmatprep.mubr.bf16.mxu0 0
        %4536 = vmatmul.mubr.bf16.gmra.mrb[0].mxu0 %v4383
        %v4537 = vpop.f32.mrb[0].mxu0
        %v4538 = vadd.f32 0.0, %v4537
        %v4539 = vpop.f32.mrb[0].mxu0
        %v4540 = vpop.f32.mrb[0].mxu0
        %v4541 = vadd.f32 0.0, %v4540
        %v4542 = vpop.f32.mrb[0].mxu0
        %4543 = vmatprep.mubr.bf16.mxu0 0
        %4544 = vmatmul.mubr.bf16.gmra.mrb[0].mxu0 %v4386
        %v4545 = vpop.f32.mrb[0].mxu0
        %v4546 = vadd.f32 0.0, %v4545
        %v4547 = vpop.f32.mrb[0].mxu0
        %v4548 = vpop.f32.mrb[0].mxu0
        %v4549 = vadd.f32 0.0, %v4548
        %v4550 = vpop.f32.mrb[0].mxu0
        %4551 = vdwg.mxu0
        %v4552 = vadd.f32 %v4258, %v4426
        %v4553 = vadd.f32 %v4259, %v4429
        %v4554 = vadd.f32 %v4260, %v4434
        %v4555 = vadd.f32 %v4261, %v4437
        %v4556 = vadd.f32 %v4262, %v4442
        %v4557 = vadd.f32 %v4263, %v4445
        %v4558 = vadd.f32 %v4264, %v4450
        %v4559 = vadd.f32 %v4265, %v4453
        %v4560 = vadd.f32 %v4266, %v4458
        %v4561 = vadd.f32 %v4267, %v4461
        %v4562 = vadd.f32 %v4268, %v4466
        %v4563 = vadd.f32 %v4269, %v4469
        %v4564 = vadd.f32 %v4270, %v4474
        %v4565 = vadd.f32 %v4271, %v4477
        %v4566 = vadd.f32 %v4272, %v4482
        %v4567 = vadd.f32 %v4273, %v4485
        %v4568 = vadd.f32 %v4274, %v4490
        %v4569 = vadd.f32 %v4275, %v4493
        %v4570 = vadd.f32 %v4276, %v4498
        %v4571 = vadd.f32 %v4277, %v4501
        %v4572 = vadd.f32 %v4278, %v4506
        %v4573 = vadd.f32 %v4279, %v4509
        %v4574 = vadd.f32 %v4280, %v4514
        %v4575 = vadd.f32 %v4281, %v4517
        %v4576 = vadd.f32 %v4282, %v4522
        %v4577 = vadd.f32 %v4283, %v4525
        %v4578 = vadd.f32 %v4284, %v4530
        %v4579 = vadd.f32 %v4285, %v4533
        %v4580 = vadd.f32 %v4286, %v4538
        %v4581 = vadd.f32 %v4287, %v4541
        %v4582 = vadd.f32 %v4288, %v4546
        %v4583 = vadd.f32 %v4289, %v4549
        %v4584 = vld [vmem:[%s3112 + $0x2] sm:$0xff]
        %v4585 = vld [vmem:[%s3112 + $0xa] sm:$0xff]
        %v4586 = vld [vmem:[%s3112 + $0x1a] sm:$0xff]
        %v4587 = vld [vmem:[%s3112 + $0x22] sm:$0xff]
        %v4588 = vld [vmem:[%s3112 + $0x32] sm:$0xff]
        %v4589 = vld [vmem:[%s3112 + $0x3a] sm:$0xff]
        %v4590 = vld [vmem:[%s3112 + $0x4a] sm:$0xff]
        %v4591 = vld [vmem:[%s3112 + $0x52] sm:$0xff]
        %v4592 = vld [vmem:[%s3112 + $0x62] sm:$0xff]
        %v4593 = vld [vmem:[%s3112 + $0x6a] sm:$0xff]
        %v4594 = vld [vmem:[%s3112 + $0x7a] sm:$0xff]
        %v4595 = vld [vmem:[%s3112 + $0x82] sm:$0xff]
        %v4596 = vld [vmem:[%s3112 + $0x92] sm:$0xff]
        %v4597 = vld [vmem:[%s3112 + $0x9a] sm:$0xff]
        %v4598 = vld [vmem:[%s3112 + $0xaa] sm:$0xff]
        %v4599 = vld [vmem:[%s3112 + $0xb2] sm:$0xff]
        %v4600 = vld [vmem:[%s3112 + $0xc2] sm:$0xff]
        %v4601 = vld [vmem:[%s3112 + $0xca] sm:$0xff]
        %v4602 = vld [vmem:[%s3112 + $0xda] sm:$0xff]
        %v4603 = vld [vmem:[%s3112 + $0xe2] sm:$0xff]
        %v4604 = vld [vmem:[%s3112 + $0xf2] sm:$0xff]
        %v4605 = vld [vmem:[%s3112 + $0xfa] sm:$0xff]
        %v4606 = vld [vmem:[%s3112 + $0x10a] sm:$0xff]
        %v4607 = vld [vmem:[%s3112 + $0x112] sm:$0xff]
        %v4608 = vld [vmem:[%s3112 + $0x122] sm:$0xff]
        %v4609 = vld [vmem:[%s3112 + $0x12a] sm:$0xff]
        %v4610 = vld [vmem:[%s3112 + $0x13a] sm:$0xff]
        %v4611 = vld [vmem:[%s3112 + $0x142] sm:$0xff]
        %v4612 = vld [vmem:[%s3112 + $0x152] sm:$0xff]
        %v4613 = vld [vmem:[%s3112 + $0x15a] sm:$0xff]
        %v4614 = vld [vmem:[%s3112 + $0x16a] sm:$0xff]
        %v4615 = vld [vmem:[%s3112 + $0x172] sm:$0xff]
        %v4616 = vpack.c.bf16 %v4585, %v4584
        %v4617 = vpack.c.bf16 %v4587, %v4586
        %v4618 = vpack.c.bf16 %v4589, %v4588
        %v4619 = vpack.c.bf16 %v4591, %v4590
        %v4620 = vpack.c.bf16 %v4593, %v4592
        %v4621 = vpack.c.bf16 %v4595, %v4594
        %v4622 = vpack.c.bf16 %v4597, %v4596
        %v4623 = vpack.c.bf16 %v4599, %v4598
        %v4624 = vpack.c.bf16 %v4601, %v4600
        %v4625 = vpack.c.bf16 %v4603, %v4602
        %v4626 = vpack.c.bf16 %v4605, %v4604
        %v4627 = vpack.c.bf16 %v4607, %v4606
        %v4628 = vpack.c.bf16 %v4609, %v4608
        %v4629 = vpack.c.bf16 %v4611, %v4610
        %v4630 = vpack.c.bf16 %v4613, %v4612
        %v4631 = vpack.c.bf16 %v4615, %v4614
        %s4632 = scalar_lea.vmem %s3, 20
        %v4633 = vld [vmem:[%s4632] sm:$0xf]
        %v4635 = vsel %vm3103, %v4616, 0
        %v4638 = vsel %vm3103, %v4617, 0
        %v4641 = vsel %vm3103, %v4618, 0
        %v4644 = vsel %vm3103, %v4619, 0
        %v4647 = vsel %vm3103, %v4620, 0
        %v4650 = vsel %vm3103, %v4621, 0
        %v4653 = vsel %vm3103, %v4622, 0
        %v4656 = vsel %vm3103, %v4623, 0
        %v4659 = vsel %vm3103, %v4624, 0
        %v4662 = vsel %vm3103, %v4625, 0
        %v4665 = vsel %vm3103, %v4626, 0
        %v4668 = vsel %vm3103, %v4627, 0
        %v4671 = vsel %vm3103, %v4628, 0
        %v4674 = vsel %vm3103, %v4629, 0
        %v4677 = vsel %vm3103, %v4630, 0
        %v4680 = vsel %vm3103, %v4631, 0
        %v4683 = vsel %vm3325, %v4633, 0
        %4685 = vmatprep.subr.bf16.mxu0 0
        %4686 = vmatpush1.bf16.msra.mxu0 %v4683
        %4687 = vmatprep.subr.bf16.mxu0 0
        %4688 = vmatpush1.bf16.msra.mxu0 0
        %4689 = vmatprep.subr.bf16.mxu0 0
        %4690 = vmatpush1.bf16.msra.mxu0 0
        %4691 = vmatprep.subr.bf16.mxu0 0
        %4692 = vmatpush1.bf16.msra.mxu0 0
        %4693 = vmatprep.subr.bf16.mxu0 0
        %4694 = vmatpush1.bf16.msra.mxu0 0
        %4695 = vmatprep.subr.bf16.mxu0 0
        %4696 = vmatpush1.bf16.msra.mxu0 0
        %4697 = vmatprep.subr.bf16.mxu0 0
        %4698 = vmatpush1.bf16.msra.mxu0 0
        %4699 = vmatprep.subr.bf16.mxu0 0
        %4700 = vmatpush1.bf16.msra.mxu0 0
        %4701 = vmatprep.subr.bf16.mxu0 0
        %4702 = vmatpush1.bf16.msra.mxu0 0
        %4703 = vmatprep.subr.bf16.mxu0 0
        %4704 = vmatpush1.bf16.msra.mxu0 0
        %4705 = vmatprep.subr.bf16.mxu0 0
        %4706 = vmatpush1.bf16.msra.mxu0 0
        %4707 = vmatprep.subr.bf16.mxu0 0
        %4708 = vmatpush1.bf16.msra.mxu0 0
        %4709 = vmatprep.subr.bf16.mxu0 0
        %4710 = vmatpush1.bf16.msra.mxu0 0
        %4711 = vmatprep.subr.bf16.mxu0 0
        %4712 = vmatpush1.bf16.msra.mxu0 0
        %4713 = vmatprep.subr.bf16.mxu0 0
        %4714 = vmatpush1.bf16.msra.mxu0 0
        %4715 = vmatprep.subr.bf16.mxu0 0
        %4716 = vmatpush1.bf16.msra.mxu0 0
        %4717 = vmatprep.mubr.bf16.mxu0 0
        %4718 = vmatmul.mubr.bf16.gmra.mrb[0].mxu0 %v4635
        %v4719 = vpop.f32.mrb[0].mxu0
        %v4720 = vadd.f32 0.0, %v4719
        %v4721 = vpop.f32.mrb[0].mxu0
        %v4722 = vpop.f32.mrb[0].mxu0
        %v4723 = vadd.f32 0.0, %v4722
        %v4724 = vpop.f32.mrb[0].mxu0
        %4725 = vmatprep.mubr.bf16.mxu0 0
        %4726 = vmatmul.mubr.bf16.gmra.mrb[0].mxu0 %v4638
        %v4727 = vpop.f32.mrb[0].mxu0
        %v4728 = vadd.f32 0.0, %v4727
        %v4729 = vpop.f32.mrb[0].mxu0
        %v4730 = vpop.f32.mrb[0].mxu0
        %v4731 = vadd.f32 0.0, %v4730
        %v4732 = vpop.f32.mrb[0].mxu0
        %4733 = vmatprep.mubr.bf16.mxu0 0
        %4734 = vmatmul.mubr.bf16.gmra.mrb[0].mxu0 %v4641
        %v4735 = vpop.f32.mrb[0].mxu0
        %v4736 = vadd.f32 0.0, %v4735
        %v4737 = vpop.f32.mrb[0].mxu0
        %v4738 = vpop.f32.mrb[0].mxu0
        %v4739 = vadd.f32 0.0, %v4738
        %v4740 = vpop.f32.mrb[0].mxu0
        %4741 = vmatprep.mubr.bf16.mxu0 0
        %4742 = vmatmul.mubr.bf16.gmra.mrb[0].mxu0 %v4644
        %v4743 = vpop.f32.mrb[0].mxu0
        %v4744 = vadd.f32 0.0, %v4743
        %v4745 = vpop.f32.mrb[0].mxu0
        %v4746 = vpop.f32.mrb[0].mxu0
        %v4747 = vadd.f32 0.0, %v4746
        %v4748 = vpop.f32.mrb[0].mxu0
        %4749 = vmatprep.mubr.bf16.mxu0 0
        %4750 = vmatmul.mubr.bf16.gmra.mrb[0].mxu0 %v4647
        %v4751 = vpop.f32.mrb[0].mxu0
        %v4752 = vadd.f32 0.0, %v4751
        %v4753 = vpop.f32.mrb[0].mxu0
        %v4754 = vpop.f32.mrb[0].mxu0
        %v4755 = vadd.f32 0.0, %v4754
        %v4756 = vpop.f32.mrb[0].mxu0
        %4757 = vmatprep.mubr.bf16.mxu0 0
        %4758 = vmatmul.mubr.bf16.gmra.mrb[0].mxu0 %v4650
        %v4759 = vpop.f32.mrb[0].mxu0
        %v4760 = vadd.f32 0.0, %v4759
        %v4761 = vpop.f32.mrb[0].mxu0
        %v4762 = vpop.f32.mrb[0].mxu0
        %v4763 = vadd.f32 0.0, %v4762
        %v4764 = vpop.f32.mrb[0].mxu0
        %4765 = vmatprep.mubr.bf16.mxu0 0
        %4766 = vmatmul.mubr.bf16.gmra.mrb[0].mxu0 %v4653
        %v4767 = vpop.f32.mrb[0].mxu0
        %v4768 = vadd.f32 0.0, %v4767
        %v4769 = vpop.f32.mrb[0].mxu0
        %v4770 = vpop.f32.mrb[0].mxu0
        %v4771 = vadd.f32 0.0, %v4770
        %v4772 = vpop.f32.mrb[0].mxu0
        %4773 = vmatprep.mubr.bf16.mxu0 0
        %4774 = vmatmul.mubr.bf16.gmra.mrb[0].mxu0 %v4656
        %v4775 = vpop.f32.mrb[0].mxu0
        %v4776 = vadd.f32 0.0, %v4775
        %v4777 = vpop.f32.mrb[0].mxu0
        %v4778 = vpop.f32.mrb[0].mxu0
        %v4779 = vadd.f32 0.0, %v4778
        %v4780 = vpop.f32.mrb[0].mxu0
        %4781 = vmatprep.mubr.bf16.mxu0 0
        %4782 = vmatmul.mubr.bf16.gmra.mrb[0].mxu0 %v4659
        %v4783 = vpop.f32.mrb[0].mxu0
        %v4784 = vadd.f32 0.0, %v4783
        %v4785 = vpop.f32.mrb[0].mxu0
        %v4786 = vpop.f32.mrb[0].mxu0
        %v4787 = vadd.f32 0.0, %v4786
        %v4788 = vpop.f32.mrb[0].mxu0
        %4789 = vmatprep.mubr.bf16.mxu0 0
        %4790 = vmatmul.mubr.bf16.gmra.mrb[0].mxu0 %v4662
        %v4791 = vpop.f32.mrb[0].mxu0
        %v4792 = vadd.f32 0.0, %v4791
        %v4793 = vpop.f32.mrb[0].mxu0
        %v4794 = vpop.f32.mrb[0].mxu0
        %v4795 = vadd.f32 0.0, %v4794
        %v4796 = vpop.f32.mrb[0].mxu0
        %4797 = vmatprep.mubr.bf16.mxu0 0
        %4798 = vmatmul.mubr.bf16.gmra.mrb[0].mxu0 %v4665
        %v4799 = vpop.f32.mrb[0].mxu0
        %v4800 = vadd.f32 0.0, %v4799
        %v4801 = vpop.f32.mrb[0].mxu0
        %v4802 = vpop.f32.mrb[0].mxu0
        %v4803 = vadd.f32 0.0, %v4802
        %v4804 = vpop.f32.mrb[0].mxu0
        %4805 = vmatprep.mubr.bf16.mxu0 0
        %4806 = vmatmul.mubr.bf16.gmra.mrb[0].mxu0 %v4668
        %v4807 = vpop.f32.mrb[0].mxu0
        %v4808 = vadd.f32 0.0, %v4807
        %v4809 = vpop.f32.mrb[0].mxu0
        %v4810 = vpop.f32.mrb[0].mxu0
        %v4811 = vadd.f32 0.0, %v4810
        %v4812 = vpop.f32.mrb[0].mxu0
        %4813 = vmatprep.mubr.bf16.mxu0 0
        %4814 = vmatmul.mubr.bf16.gmra.mrb[0].mxu0 %v4671
        %v4815 = vpop.f32.mrb[0].mxu0
        %v4816 = vadd.f32 0.0, %v4815
        %v4817 = vpop.f32.mrb[0].mxu0
        %v4818 = vpop.f32.mrb[0].mxu0
        %v4819 = vadd.f32 0.0, %v4818
        %v4820 = vpop.f32.mrb[0].mxu0
        %4821 = vmatprep.mubr.bf16.mxu0 0
        %4822 = vmatmul.mubr.bf16.gmra.mrb[0].mxu0 %v4674
        %v4823 = vpop.f32.mrb[0].mxu0
        %v4824 = vadd.f32 0.0, %v4823
        %v4825 = vpop.f32.mrb[0].mxu0
        %v4826 = vpop.f32.mrb[0].mxu0
        %v4827 = vadd.f32 0.0, %v4826
        %v4828 = vpop.f32.mrb[0].mxu0
        %4829 = vmatprep.mubr.bf16.mxu0 0
        %4830 = vmatmul.mubr.bf16.gmra.mrb[0].mxu0 %v4677
        %v4831 = vpop.f32.mrb[0].mxu0
        %v4832 = vadd.f32 0.0, %v4831
        %v4833 = vpop.f32.mrb[0].mxu0
        %v4834 = vpop.f32.mrb[0].mxu0
        %v4835 = vadd.f32 0.0, %v4834
        %v4836 = vpop.f32.mrb[0].mxu0
        %4837 = vmatprep.mubr.bf16.mxu0 0
        %4838 = vmatmul.mubr.bf16.gmra.mrb[0].mxu0 %v4680
        %v4839 = vpop.f32.mrb[0].mxu0
        %v4840 = vadd.f32 0.0, %v4839
        %v4841 = vpop.f32.mrb[0].mxu0
        %v4842 = vpop.f32.mrb[0].mxu0
        %v4843 = vadd.f32 0.0, %v4842
        %v4844 = vpop.f32.mrb[0].mxu0
        %4845 = vdwg.mxu0
        %v4846 = vadd.f32 %v4552, %v4720
        %v4847 = vadd.f32 %v4553, %v4723
        %v4848 = vadd.f32 %v4554, %v4728
        %v4849 = vadd.f32 %v4555, %v4731
        %v4850 = vadd.f32 %v4556, %v4736
        %v4851 = vadd.f32 %v4557, %v4739
        %v4852 = vadd.f32 %v4558, %v4744
        %v4853 = vadd.f32 %v4559, %v4747
        %v4854 = vadd.f32 %v4560, %v4752
        %v4855 = vadd.f32 %v4561, %v4755
        %v4856 = vadd.f32 %v4562, %v4760
        %v4857 = vadd.f32 %v4563, %v4763
        %v4858 = vadd.f32 %v4564, %v4768
        %v4859 = vadd.f32 %v4565, %v4771
        %v4860 = vadd.f32 %v4566, %v4776
        %v4861 = vadd.f32 %v4567, %v4779
        %v4862 = vadd.f32 %v4568, %v4784
        %v4863 = vadd.f32 %v4569, %v4787
        %v4864 = vadd.f32 %v4570, %v4792
        %v4865 = vadd.f32 %v4571, %v4795
        %v4866 = vadd.f32 %v4572, %v4800
        %v4867 = vadd.f32 %v4573, %v4803
        %v4868 = vadd.f32 %v4574, %v4808
        %v4869 = vadd.f32 %v4575, %v4811
        %v4870 = vadd.f32 %v4576, %v4816
        %v4871 = vadd.f32 %v4577, %v4819
        %v4872 = vadd.f32 %v4578, %v4824
        %v4873 = vadd.f32 %v4579, %v4827
        %v4874 = vadd.f32 %v4580, %v4832
        %v4875 = vadd.f32 %v4581, %v4835
        %v4876 = vadd.f32 %v4582, %v4840
        %v4877 = vadd.f32 %v4583, %v4843
        %s4878 = scalar_lea.vmem [#allocation3], 48
        %v4879 = vld [vmem:[%s4878] sm:$0xff]
        %v4880 = vld [vmem:[%s4878 + $0x8] sm:$0xff]
        %v4881 = vld [vmem:[%s4878 + $0x18] sm:$0xff]
        %v4882 = vld [vmem:[%s4878 + $0x20] sm:$0xff]
        %v4883 = vld [vmem:[%s4878 + $0x30] sm:$0xff]
        %v4884 = vld [vmem:[%s4878 + $0x38] sm:$0xff]
        %v4885 = vld [vmem:[%s4878 + $0x48] sm:$0xff]
        %v4886 = vld [vmem:[%s4878 + $0x50] sm:$0xff]
        %v4887 = vld [vmem:[%s4878 + $0x60] sm:$0xff]
        %v4888 = vld [vmem:[%s4878 + $0x68] sm:$0xff]
        %v4889 = vld [vmem:[%s4878 + $0x78] sm:$0xff]
        %v4890 = vld [vmem:[%s4878 + $0x80] sm:$0xff]
        %v4891 = vld [vmem:[%s4878 + $0x90] sm:$0xff]
        %v4892 = vld [vmem:[%s4878 + $0x98] sm:$0xff]
        %v4893 = vld [vmem:[%s4878 + $0xa8] sm:$0xff]
        %v4894 = vld [vmem:[%s4878 + $0xb0] sm:$0xff]
        %v4895 = vld [vmem:[%s4878 + $0xc0] sm:$0xff]
        %v4896 = vld [vmem:[%s4878 + $0xc8] sm:$0xff]
        %v4897 = vld [vmem:[%s4878 + $0xd8] sm:$0xff]
        %v4898 = vld [vmem:[%s4878 + $0xe0] sm:$0xff]
        %v4899 = vld [vmem:[%s4878 + $0xf0] sm:$0xff]
        %v4900 = vld [vmem:[%s4878 + $0xf8] sm:$0xff]
        %v4901 = vld [vmem:[%s4878 + $0x108] sm:$0xff]
        %v4902 = vld [vmem:[%s4878 + $0x110] sm:$0xff]
        %v4903 = vld [vmem:[%s4878 + $0x120] sm:$0xff]
        %v4904 = vld [vmem:[%s4878 + $0x128] sm:$0xff]
        %v4905 = vld [vmem:[%s4878 + $0x138] sm:$0xff]
        %v4906 = vld [vmem:[%s4878 + $0x140] sm:$0xff]
        %v4907 = vld [vmem:[%s4878 + $0x150] sm:$0xff]
        %v4908 = vld [vmem:[%s4878 + $0x158] sm:$0xff]
        %v4909 = vld [vmem:[%s4878 + $0x168] sm:$0xff]
        %v4910 = vld [vmem:[%s4878 + $0x170] sm:$0xff]
        %v4911 = vpack.c.bf16 %v4880, %v4879
        %v4912 = vpack.c.bf16 %v4882, %v4881
        %v4913 = vpack.c.bf16 %v4884, %v4883
        %v4914 = vpack.c.bf16 %v4886, %v4885
        %v4915 = vpack.c.bf16 %v4888, %v4887
        %v4916 = vpack.c.bf16 %v4890, %v4889
        %v4917 = vpack.c.bf16 %v4892, %v4891
        %v4918 = vpack.c.bf16 %v4894, %v4893
        %v4919 = vpack.c.bf16 %v4896, %v4895
        %v4920 = vpack.c.bf16 %v4898, %v4897
        %v4921 = vpack.c.bf16 %v4900, %v4899
        %v4922 = vpack.c.bf16 %v4902, %v4901
        %v4923 = vpack.c.bf16 %v4904, %v4903
        %v4924 = vpack.c.bf16 %v4906, %v4905
        %v4925 = vpack.c.bf16 %v4908, %v4907
        %v4926 = vpack.c.bf16 %v4910, %v4909
        %s4927 = scalar_lea.vmem %s3, 24
        %v4928 = vld [vmem:[%s4927] sm:$0xf]
        %v4930 = vsel %vm3103, %v4911, 0
        %v4933 = vsel %vm3103, %v4912, 0
        %v4936 = vsel %vm3103, %v4913, 0
        %v4939 = vsel %vm3103, %v4914, 0
        %v4942 = vsel %vm3103, %v4915, 0
        %v4945 = vsel %vm3103, %v4916, 0
        %v4948 = vsel %vm3103, %v4917, 0
        %v4951 = vsel %vm3103, %v4918, 0
        %v4954 = vsel %vm3103, %v4919, 0
        %v4957 = vsel %vm3103, %v4920, 0
        %v4960 = vsel %vm3103, %v4921, 0
        %v4963 = vsel %vm3103, %v4922, 0
        %v4966 = vsel %vm3103, %v4923, 0
        %v4969 = vsel %vm3103, %v4924, 0
        %v4972 = vsel %vm3103, %v4925, 0
        %v4975 = vsel %vm3103, %v4926, 0
        %v4978 = vsel %vm3325, %v4928, 0
        %4980 = vmatprep.subr.bf16.mxu0 0
        %4981 = vmatpush1.bf16.msra.mxu0 %v4978
        %4982 = vmatprep.subr.bf16.mxu0 0
        %4983 = vmatpush1.bf16.msra.mxu0 0
        %4984 = vmatprep.subr.bf16.mxu0 0
        %4985 = vmatpush1.bf16.msra.mxu0 0
        %4986 = vmatprep.subr.bf16.mxu0 0
        %4987 = vmatpush1.bf16.msra.mxu0 0
        %4988 = vmatprep.subr.bf16.mxu0 0
        %4989 = vmatpush1.bf16.msra.mxu0 0
        %4990 = vmatprep.subr.bf16.mxu0 0
        %4991 = vmatpush1.bf16.msra.mxu0 0
        %4992 = vmatprep.subr.bf16.mxu0 0
        %4993 = vmatpush1.bf16.msra.mxu0 0
        %4994 = vmatprep.subr.bf16.mxu0 0
        %4995 = vmatpush1.bf16.msra.mxu0 0
        %4996 = vmatprep.subr.bf16.mxu0 0
        %4997 = vmatpush1.bf16.msra.mxu0 0
        %4998 = vmatprep.subr.bf16.mxu0 0
        %4999 = vmatpush1.bf16.msra.mxu0 0
        %5000 = vmatprep.subr.bf16.mxu0 0
        %5001 = vmatpush1.bf16.msra.mxu0 0
        %5002 = vmatprep.subr.bf16.mxu0 0
        %5003 = vmatpush1.bf16.msra.mxu0 0
        %5004 = vmatprep.subr.bf16.mxu0 0
        %5005 = vmatpush1.bf16.msra.mxu0 0
        %5006 = vmatprep.subr.bf16.mxu0 0
        %5007 = vmatpush1.bf16.msra.mxu0 0
        %5008 = vmatprep.subr.bf16.mxu0 0
        %5009 = vmatpush1.bf16.msra.mxu0 0
        %5010 = vmatprep.subr.bf16.mxu0 0
        %5011 = vmatpush1.bf16.msra.mxu0 0
        %5012 = vmatprep.mubr.bf16.mxu0 0
        %5013 = vmatmul.mubr.bf16.gmra.mrb[0].mxu0 %v4930
        %v5014 = vpop.f32.mrb[0].mxu0
        %v5015 = vadd.f32 0.0, %v5014
        %v5016 = vpop.f32.mrb[0].mxu0
        %v5017 = vpop.f32.mrb[0].mxu0
        %v5018 = vadd.f32 0.0, %v5017
        %v5019 = vpop.f32.mrb[0].mxu0
        %5020 = vmatprep.mubr.bf16.mxu0 0
        %5021 = vmatmul.mubr.bf16.gmra.mrb[0].mxu0 %v4933
        %v5022 = vpop.f32.mrb[0].mxu0
        %v5023 = vadd.f32 0.0, %v5022
        %v5024 = vpop.f32.mrb[0].mxu0
        %v5025 = vpop.f32.mrb[0].mxu0
        %v5026 = vadd.f32 0.0, %v5025
        %v5027 = vpop.f32.mrb[0].mxu0
        %5028 = vmatprep.mubr.bf16.mxu0 0
        %5029 = vmatmul.mubr.bf16.gmra.mrb[0].mxu0 %v4936
        %v5030 = vpop.f32.mrb[0].mxu0
        %v5031 = vadd.f32 0.0, %v5030
        %v5032 = vpop.f32.mrb[0].mxu0
        %v5033 = vpop.f32.mrb[0].mxu0
        %v5034 = vadd.f32 0.0, %v5033
        %v5035 = vpop.f32.mrb[0].mxu0
        %5036 = vmatprep.mubr.bf16.mxu0 0
        %5037 = vmatmul.mubr.bf16.gmra.mrb[0].mxu0 %v4939
        %v5038 = vpop.f32.mrb[0].mxu0
        %v5039 = vadd.f32 0.0, %v5038
        %v5040 = vpop.f32.mrb[0].mxu0
        %v5041 = vpop.f32.mrb[0].mxu0
        %v5042 = vadd.f32 0.0, %v5041
        %v5043 = vpop.f32.mrb[0].mxu0
        %5044 = vmatprep.mubr.bf16.mxu0 0
        %5045 = vmatmul.mubr.bf16.gmra.mrb[0].mxu0 %v4942
        %v5046 = vpop.f32.mrb[0].mxu0
        %v5047 = vadd.f32 0.0, %v5046
        %v5048 = vpop.f32.mrb[0].mxu0
        %v5049 = vpop.f32.mrb[0].mxu0
        %v5050 = vadd.f32 0.0, %v5049
        %v5051 = vpop.f32.mrb[0].mxu0
        %5052 = vmatprep.mubr.bf16.mxu0 0
        %5053 = vmatmul.mubr.bf16.gmra.mrb[0].mxu0 %v4945
        %v5054 = vpop.f32.mrb[0].mxu0
        %v5055 = vadd.f32 0.0, %v5054
        %v5056 = vpop.f32.mrb[0].mxu0
        %v5057 = vpop.f32.mrb[0].mxu0
        %v5058 = vadd.f32 0.0, %v5057
        %v5059 = vpop.f32.mrb[0].mxu0
        %5060 = vmatprep.mubr.bf16.mxu0 0
        %5061 = vmatmul.mubr.bf16.gmra.mrb[0].mxu0 %v4948
        %v5062 = vpop.f32.mrb[0].mxu0
        %v5063 = vadd.f32 0.0, %v5062
        %v5064 = vpop.f32.mrb[0].mxu0
        %v5065 = vpop.f32.mrb[0].mxu0
        %v5066 = vadd.f32 0.0, %v5065
        %v5067 = vpop.f32.mrb[0].mxu0
        %5068 = vmatprep.mubr.bf16.mxu0 0
        %5069 = vmatmul.mubr.bf16.gmra.mrb[0].mxu0 %v4951
        %v5070 = vpop.f32.mrb[0].mxu0
        %v5071 = vadd.f32 0.0, %v5070
        %v5072 = vpop.f32.mrb[0].mxu0
        %v5073 = vpop.f32.mrb[0].mxu0
        %v5074 = vadd.f32 0.0, %v5073
        %v5075 = vpop.f32.mrb[0].mxu0
        %5076 = vmatprep.mubr.bf16.mxu0 0
        %5077 = vmatmul.mubr.bf16.gmra.mrb[0].mxu0 %v4954
        %v5078 = vpop.f32.mrb[0].mxu0
        %v5079 = vadd.f32 0.0, %v5078
        %v5080 = vpop.f32.mrb[0].mxu0
        %v5081 = vpop.f32.mrb[0].mxu0
        %v5082 = vadd.f32 0.0, %v5081
        %v5083 = vpop.f32.mrb[0].mxu0
        %5084 = vmatprep.mubr.bf16.mxu0 0
        %5085 = vmatmul.mubr.bf16.gmra.mrb[0].mxu0 %v4957
        %v5086 = vpop.f32.mrb[0].mxu0
        %v5087 = vadd.f32 0.0, %v5086
        %v5088 = vpop.f32.mrb[0].mxu0
        %v5089 = vpop.f32.mrb[0].mxu0
        %v5090 = vadd.f32 0.0, %v5089
        %v5091 = vpop.f32.mrb[0].mxu0
        %5092 = vmatprep.mubr.bf16.mxu0 0
        %5093 = vmatmul.mubr.bf16.gmra.mrb[0].mxu0 %v4960
        %v5094 = vpop.f32.mrb[0].mxu0
        %v5095 = vadd.f32 0.0, %v5094
        %v5096 = vpop.f32.mrb[0].mxu0
        %v5097 = vpop.f32.mrb[0].mxu0
        %v5098 = vadd.f32 0.0, %v5097
        %v5099 = vpop.f32.mrb[0].mxu0
        %5100 = vmatprep.mubr.bf16.mxu0 0
        %5101 = vmatmul.mubr.bf16.gmra.mrb[0].mxu0 %v4963
        %v5102 = vpop.f32.mrb[0].mxu0
        %v5103 = vadd.f32 0.0, %v5102
        %v5104 = vpop.f32.mrb[0].mxu0
        %v5105 = vpop.f32.mrb[0].mxu0
        %v5106 = vadd.f32 0.0, %v5105
        %v5107 = vpop.f32.mrb[0].mxu0
        %5108 = vmatprep.mubr.bf16.mxu0 0
        %5109 = vmatmul.mubr.bf16.gmra.mrb[0].mxu0 %v4966
        %v5110 = vpop.f32.mrb[0].mxu0
        %v5111 = vadd.f32 0.0, %v5110
        %v5112 = vpop.f32.mrb[0].mxu0
        %v5113 = vpop.f32.mrb[0].mxu0
        %v5114 = vadd.f32 0.0, %v5113
        %v5115 = vpop.f32.mrb[0].mxu0
        %5116 = vmatprep.mubr.bf16.mxu0 0
        %5117 = vmatmul.mubr.bf16.gmra.mrb[0].mxu0 %v4969
        %v5118 = vpop.f32.mrb[0].mxu0
        %v5119 = vadd.f32 0.0, %v5118
        %v5120 = vpop.f32.mrb[0].mxu0
        %v5121 = vpop.f32.mrb[0].mxu0
        %v5122 = vadd.f32 0.0, %v5121
        %v5123 = vpop.f32.mrb[0].mxu0
        %5124 = vmatprep.mubr.bf16.mxu0 0
        %5125 = vmatmul.mubr.bf16.gmra.mrb[0].mxu0 %v4972
        %v5126 = vpop.f32.mrb[0].mxu0
        %v5127 = vadd.f32 0.0, %v5126
        %v5128 = vpop.f32.mrb[0].mxu0
        %v5129 = vpop.f32.mrb[0].mxu0
        %v5130 = vadd.f32 0.0, %v5129
        %v5131 = vpop.f32.mrb[0].mxu0
        %5132 = vmatprep.mubr.bf16.mxu0 0
        %5133 = vmatmul.mubr.bf16.gmra.mrb[0].mxu0 %v4975
        %v5134 = vpop.f32.mrb[0].mxu0
        %v5135 = vadd.f32 0.0, %v5134
        %v5136 = vpop.f32.mrb[0].mxu0
        %v5137 = vpop.f32.mrb[0].mxu0
        %v5138 = vadd.f32 0.0, %v5137
        %v5139 = vpop.f32.mrb[0].mxu0
        %5140 = vdwg.mxu0
        %v5141 = vadd.f32 %v4846, %v5015
        %v5142 = vadd.f32 %v4847, %v5018
        %v5143 = vadd.f32 %v4848, %v5023
        %v5144 = vadd.f32 %v4849, %v5026
        %v5145 = vadd.f32 %v4850, %v5031
        %v5146 = vadd.f32 %v4851, %v5034
        %v5147 = vadd.f32 %v4852, %v5039
        %v5148 = vadd.f32 %v4853, %v5042
        %v5149 = vadd.f32 %v4854, %v5047
        %v5150 = vadd.f32 %v4855, %v5050
        %v5151 = vadd.f32 %v4856, %v5055
        %v5152 = vadd.f32 %v4857, %v5058
        %v5153 = vadd.f32 %v4858, %v5063
        %v5154 = vadd.f32 %v4859, %v5066
        %v5155 = vadd.f32 %v4860, %v5071
        %v5156 = vadd.f32 %v4861, %v5074
        %v5157 = vadd.f32 %v4862, %v5079
        %v5158 = vadd.f32 %v4863, %v5082
        %v5159 = vadd.f32 %v4864, %v5087
        %v5160 = vadd.f32 %v4865, %v5090
        %v5161 = vadd.f32 %v4866, %v5095
        %v5162 = vadd.f32 %v4867, %v5098
        %v5163 = vadd.f32 %v4868, %v5103
        %v5164 = vadd.f32 %v4869, %v5106
        %v5165 = vadd.f32 %v4870, %v5111
        %v5166 = vadd.f32 %v4871, %v5114
        %v5167 = vadd.f32 %v4872, %v5119
        %v5168 = vadd.f32 %v4873, %v5122
        %v5169 = vadd.f32 %v4874, %v5127
        %v5170 = vadd.f32 %v4875, %v5130
        %v5171 = vadd.f32 %v4876, %v5135
        %v5172 = vadd.f32 %v4877, %v5138
        %v5173 = vld [vmem:[%s4878 + $0x1] sm:$0xff]
        %v5174 = vld [vmem:[%s4878 + $0x9] sm:$0xff]
        %v5175 = vld [vmem:[%s4878 + $0x19] sm:$0xff]
        %v5176 = vld [vmem:[%s4878 + $0x21] sm:$0xff]
        %v5177 = vld [vmem:[%s4878 + $0x31] sm:$0xff]
        %v5178 = vld [vmem:[%s4878 + $0x39] sm:$0xff]
        %v5179 = vld [vmem:[%s4878 + $0x49] sm:$0xff]
        %v5180 = vld [vmem:[%s4878 + $0x51] sm:$0xff]
        %v5181 = vld [vmem:[%s4878 + $0x61] sm:$0xff]
        %v5182 = vld [vmem:[%s4878 + $0x69] sm:$0xff]
        %v5183 = vld [vmem:[%s4878 + $0x79] sm:$0xff]
        %v5184 = vld [vmem:[%s4878 + $0x81] sm:$0xff]
        %v5185 = vld [vmem:[%s4878 + $0x91] sm:$0xff]
        %v5186 = vld [vmem:[%s4878 + $0x99] sm:$0xff]
        %v5187 = vld [vmem:[%s4878 + $0xa9] sm:$0xff]
        %v5188 = vld [vmem:[%s4878 + $0xb1] sm:$0xff]
        %v5189 = vld [vmem:[%s4878 + $0xc1] sm:$0xff]
        %v5190 = vld [vmem:[%s4878 + $0xc9] sm:$0xff]
        %v5191 = vld [vmem:[%s4878 + $0xd9] sm:$0xff]
        %v5192 = vld [vmem:[%s4878 + $0xe1] sm:$0xff]
        %v5193 = vld [vmem:[%s4878 + $0xf1] sm:$0xff]
        %v5194 = vld [vmem:[%s4878 + $0xf9] sm:$0xff]
        %v5195 = vld [vmem:[%s4878 + $0x109] sm:$0xff]
        %v5196 = vld [vmem:[%s4878 + $0x111] sm:$0xff]
        %v5197 = vld [vmem:[%s4878 + $0x121] sm:$0xff]
        %v5198 = vld [vmem:[%s4878 + $0x129] sm:$0xff]
        %v5199 = vld [vmem:[%s4878 + $0x139] sm:$0xff]
        %v5200 = vld [vmem:[%s4878 + $0x141] sm:$0xff]
        %v5201 = vld [vmem:[%s4878 + $0x151] sm:$0xff]
        %v5202 = vld [vmem:[%s4878 + $0x159] sm:$0xff]
        %v5203 = vld [vmem:[%s4878 + $0x169] sm:$0xff]
        %v5204 = vld [vmem:[%s4878 + $0x171] sm:$0xff]
        %v5205 = vpack.c.bf16 %v5174, %v5173
        %v5206 = vpack.c.bf16 %v5176, %v5175
        %v5207 = vpack.c.bf16 %v5178, %v5177
        %v5208 = vpack.c.bf16 %v5180, %v5179
        %v5209 = vpack.c.bf16 %v5182, %v5181
        %v5210 = vpack.c.bf16 %v5184, %v5183
        %v5211 = vpack.c.bf16 %v5186, %v5185
        %v5212 = vpack.c.bf16 %v5188, %v5187
        %v5213 = vpack.c.bf16 %v5190, %v5189
        %v5214 = vpack.c.bf16 %v5192, %v5191
        %v5215 = vpack.c.bf16 %v5194, %v5193
        %v5216 = vpack.c.bf16 %v5196, %v5195
        %v5217 = vpack.c.bf16 %v5198, %v5197
        %v5218 = vpack.c.bf16 %v5200, %v5199
        %v5219 = vpack.c.bf16 %v5202, %v5201
        %v5220 = vpack.c.bf16 %v5204, %v5203
        %s5221 = scalar_lea.vmem %s3, 28
        %v5222 = vld [vmem:[%s5221] sm:$0xf]
        %v5224 = vsel %vm3103, %v5205, 0
        %v5227 = vsel %vm3103, %v5206, 0
        %v5230 = vsel %vm3103, %v5207, 0
        %v5233 = vsel %vm3103, %v5208, 0
        %v5236 = vsel %vm3103, %v5209, 0
        %v5239 = vsel %vm3103, %v5210, 0
        %v5242 = vsel %vm3103, %v5211, 0
        %v5245 = vsel %vm3103, %v5212, 0
        %v5248 = vsel %vm3103, %v5213, 0
        %v5251 = vsel %vm3103, %v5214, 0
        %v5254 = vsel %vm3103, %v5215, 0
        %v5257 = vsel %vm3103, %v5216, 0
        %v5260 = vsel %vm3103, %v5217, 0
        %v5263 = vsel %vm3103, %v5218, 0
        %v5266 = vsel %vm3103, %v5219, 0
        %v5269 = vsel %vm3103, %v5220, 0
        %v5272 = vsel %vm3325, %v5222, 0
        %5274 = vmatprep.subr.bf16.mxu0 0
        %5275 = vmatpush1.bf16.msra.mxu0 %v5272
        %5276 = vmatprep.subr.bf16.mxu0 0
        %5277 = vmatpush1.bf16.msra.mxu0 0
        %5278 = vmatprep.subr.bf16.mxu0 0
        %5279 = vmatpush1.bf16.msra.mxu0 0
        %5280 = vmatprep.subr.bf16.mxu0 0
        %5281 = vmatpush1.bf16.msra.mxu0 0
        %5282 = vmatprep.subr.bf16.mxu0 0
        %5283 = vmatpush1.bf16.msra.mxu0 0
        %5284 = vmatprep.subr.bf16.mxu0 0
        %5285 = vmatpush1.bf16.msra.mxu0 0
        %5286 = vmatprep.subr.bf16.mxu0 0
        %5287 = vmatpush1.bf16.msra.mxu0 0
        %5288 = vmatprep.subr.bf16.mxu0 0
        %5289 = vmatpush1.bf16.msra.mxu0 0
        %5290 = vmatprep.subr.bf16.mxu0 0
        %5291 = vmatpush1.bf16.msra.mxu0 0
        %5292 = vmatprep.subr.bf16.mxu0 0
        %5293 = vmatpush1.bf16.msra.mxu0 0
        %5294 = vmatprep.subr.bf16.mxu0 0
        %5295 = vmatpush1.bf16.msra.mxu0 0
        %5296 = vmatprep.subr.bf16.mxu0 0
        %5297 = vmatpush1.bf16.msra.mxu0 0
        %5298 = vmatprep.subr.bf16.mxu0 0
        %5299 = vmatpush1.bf16.msra.mxu0 0
        %5300 = vmatprep.subr.bf16.mxu0 0
        %5301 = vmatpush1.bf16.msra.mxu0 0
        %5302 = vmatprep.subr.bf16.mxu0 0
        %5303 = vmatpush1.bf16.msra.mxu0 0
        %5304 = vmatprep.subr.bf16.mxu0 0
        %5305 = vmatpush1.bf16.msra.mxu0 0
        %5306 = vmatprep.mubr.bf16.mxu0 0
        %5307 = vmatmul.mubr.bf16.gmra.mrb[0].mxu0 %v5224
        %v5308 = vpop.f32.mrb[0].mxu0
        %v5309 = vadd.f32 0.0, %v5308
        %v5310 = vpop.f32.mrb[0].mxu0
        %v5311 = vpop.f32.mrb[0].mxu0
        %v5312 = vadd.f32 0.0, %v5311
        %v5313 = vpop.f32.mrb[0].mxu0
        %5314 = vmatprep.mubr.bf16.mxu0 0
        %5315 = vmatmul.mubr.bf16.gmra.mrb[0].mxu0 %v5227
        %v5316 = vpop.f32.mrb[0].mxu0
        %v5317 = vadd.f32 0.0, %v5316
        %v5318 = vpop.f32.mrb[0].mxu0
        %v5319 = vpop.f32.mrb[0].mxu0
        %v5320 = vadd.f32 0.0, %v5319
        %v5321 = vpop.f32.mrb[0].mxu0
        %5322 = vmatprep.mubr.bf16.mxu0 0
        %5323 = vmatmul.mubr.bf16.gmra.mrb[0].mxu0 %v5230
        %v5324 = vpop.f32.mrb[0].mxu0
        %v5325 = vadd.f32 0.0, %v5324
        %v5326 = vpop.f32.mrb[0].mxu0
        %v5327 = vpop.f32.mrb[0].mxu0
        %v5328 = vadd.f32 0.0, %v5327
        %v5329 = vpop.f32.mrb[0].mxu0
        %5330 = vmatprep.mubr.bf16.mxu0 0
        %5331 = vmatmul.mubr.bf16.gmra.mrb[0].mxu0 %v5233
        %v5332 = vpop.f32.mrb[0].mxu0
        %v5333 = vadd.f32 0.0, %v5332
        %v5334 = vpop.f32.mrb[0].mxu0
        %v5335 = vpop.f32.mrb[0].mxu0
        %v5336 = vadd.f32 0.0, %v5335
        %v5337 = vpop.f32.mrb[0].mxu0
        %5338 = vmatprep.mubr.bf16.mxu0 0
        %5339 = vmatmul.mubr.bf16.gmra.mrb[0].mxu0 %v5236
        %v5340 = vpop.f32.mrb[0].mxu0
        %v5341 = vadd.f32 0.0, %v5340
        %v5342 = vpop.f32.mrb[0].mxu0
        %v5343 = vpop.f32.mrb[0].mxu0
        %v5344 = vadd.f32 0.0, %v5343
        %v5345 = vpop.f32.mrb[0].mxu0
        %5346 = vmatprep.mubr.bf16.mxu0 0
        %5347 = vmatmul.mubr.bf16.gmra.mrb[0].mxu0 %v5239
        %v5348 = vpop.f32.mrb[0].mxu0
        %v5349 = vadd.f32 0.0, %v5348
        %v5350 = vpop.f32.mrb[0].mxu0
        %v5351 = vpop.f32.mrb[0].mxu0
        %v5352 = vadd.f32 0.0, %v5351
        %v5353 = vpop.f32.mrb[0].mxu0
        %5354 = vmatprep.mubr.bf16.mxu0 0
        %5355 = vmatmul.mubr.bf16.gmra.mrb[0].mxu0 %v5242
        %v5356 = vpop.f32.mrb[0].mxu0
        %v5357 = vadd.f32 0.0, %v5356
        %v5358 = vpop.f32.mrb[0].mxu0
        %v5359 = vpop.f32.mrb[0].mxu0
        %v5360 = vadd.f32 0.0, %v5359
        %v5361 = vpop.f32.mrb[0].mxu0
        %5362 = vmatprep.mubr.bf16.mxu0 0
        %5363 = vmatmul.mubr.bf16.gmra.mrb[0].mxu0 %v5245
        %v5364 = vpop.f32.mrb[0].mxu0
        %v5365 = vadd.f32 0.0, %v5364
        %v5366 = vpop.f32.mrb[0].mxu0
        %v5367 = vpop.f32.mrb[0].mxu0
        %v5368 = vadd.f32 0.0, %v5367
        %v5369 = vpop.f32.mrb[0].mxu0
        %5370 = vmatprep.mubr.bf16.mxu0 0
        %5371 = vmatmul.mubr.bf16.gmra.mrb[0].mxu0 %v5248
        %v5372 = vpop.f32.mrb[0].mxu0
        %v5373 = vadd.f32 0.0, %v5372
        %v5374 = vpop.f32.mrb[0].mxu0
        %v5375 = vpop.f32.mrb[0].mxu0
        %v5376 = vadd.f32 0.0, %v5375
        %v5377 = vpop.f32.mrb[0].mxu0
        %5378 = vmatprep.mubr.bf16.mxu0 0
        %5379 = vmatmul.mubr.bf16.gmra.mrb[0].mxu0 %v5251
        %v5380 = vpop.f32.mrb[0].mxu0
        %v5381 = vadd.f32 0.0, %v5380
        %v5382 = vpop.f32.mrb[0].mxu0
        %v5383 = vpop.f32.mrb[0].mxu0
        %v5384 = vadd.f32 0.0, %v5383
        %v5385 = vpop.f32.mrb[0].mxu0
        %5386 = vmatprep.mubr.bf16.mxu0 0
        %5387 = vmatmul.mubr.bf16.gmra.mrb[0].mxu0 %v5254
        %v5388 = vpop.f32.mrb[0].mxu0
        %v5389 = vadd.f32 0.0, %v5388
        %v5390 = vpop.f32.mrb[0].mxu0
        %v5391 = vpop.f32.mrb[0].mxu0
        %v5392 = vadd.f32 0.0, %v5391
        %v5393 = vpop.f32.mrb[0].mxu0
        %5394 = vmatprep.mubr.bf16.mxu0 0
        %5395 = vmatmul.mubr.bf16.gmra.mrb[0].mxu0 %v5257
        %v5396 = vpop.f32.mrb[0].mxu0
        %v5397 = vadd.f32 0.0, %v5396
        %v5398 = vpop.f32.mrb[0].mxu0
        %v5399 = vpop.f32.mrb[0].mxu0
        %v5400 = vadd.f32 0.0, %v5399
        %v5401 = vpop.f32.mrb[0].mxu0
        %5402 = vmatprep.mubr.bf16.mxu0 0
        %5403 = vmatmul.mubr.bf16.gmra.mrb[0].mxu0 %v5260
        %v5404 = vpop.f32.mrb[0].mxu0
        %v5405 = vadd.f32 0.0, %v5404
        %v5406 = vpop.f32.mrb[0].mxu0
        %v5407 = vpop.f32.mrb[0].mxu0
        %v5408 = vadd.f32 0.0, %v5407
        %v5409 = vpop.f32.mrb[0].mxu0
        %5410 = vmatprep.mubr.bf16.mxu0 0
        %5411 = vmatmul.mubr.bf16.gmra.mrb[0].mxu0 %v5263
        %v5412 = vpop.f32.mrb[0].mxu0
        %v5413 = vadd.f32 0.0, %v5412
        %v5414 = vpop.f32.mrb[0].mxu0
        %v5415 = vpop.f32.mrb[0].mxu0
        %v5416 = vadd.f32 0.0, %v5415
        %v5417 = vpop.f32.mrb[0].mxu0
        %5418 = vmatprep.mubr.bf16.mxu0 0
        %5419 = vmatmul.mubr.bf16.gmra.mrb[0].mxu0 %v5266
        %v5420 = vpop.f32.mrb[0].mxu0
        %v5421 = vadd.f32 0.0, %v5420
        %v5422 = vpop.f32.mrb[0].mxu0
        %v5423 = vpop.f32.mrb[0].mxu0
        %v5424 = vadd.f32 0.0, %v5423
        %v5425 = vpop.f32.mrb[0].mxu0
        %5426 = vmatprep.mubr.bf16.mxu0 0
        %5427 = vmatmul.mubr.bf16.gmra.mrb[0].mxu0 %v5269
        %v5428 = vpop.f32.mrb[0].mxu0
        %v5429 = vadd.f32 0.0, %v5428
        %v5430 = vpop.f32.mrb[0].mxu0
        %v5431 = vpop.f32.mrb[0].mxu0
        %v5432 = vadd.f32 0.0, %v5431
        %v5433 = vpop.f32.mrb[0].mxu0
        %5434 = vdwg.mxu0
        %v5435 = vadd.f32 %v5141, %v5309
        %v5436 = vadd.f32 %v5142, %v5312
        %v5437 = vadd.f32 %v5143, %v5317
        %v5438 = vadd.f32 %v5144, %v5320
        %v5439 = vadd.f32 %v5145, %v5325
        %v5440 = vadd.f32 %v5146, %v5328
        %v5441 = vadd.f32 %v5147, %v5333
        %v5442 = vadd.f32 %v5148, %v5336
        %v5443 = vadd.f32 %v5149, %v5341
        %v5444 = vadd.f32 %v5150, %v5344
        %v5445 = vadd.f32 %v5151, %v5349
        %v5446 = vadd.f32 %v5152, %v5352
        %v5447 = vadd.f32 %v5153, %v5357
        %v5448 = vadd.f32 %v5154, %v5360
        %v5449 = vadd.f32 %v5155, %v5365
        %v5450 = vadd.f32 %v5156, %v5368
        %v5451 = vadd.f32 %v5157, %v5373
        %v5452 = vadd.f32 %v5158, %v5376
        %v5453 = vadd.f32 %v5159, %v5381
        %v5454 = vadd.f32 %v5160, %v5384
        %v5455 = vadd.f32 %v5161, %v5389
        %v5456 = vadd.f32 %v5162, %v5392
        %v5457 = vadd.f32 %v5163, %v5397
        %v5458 = vadd.f32 %v5164, %v5400
        %v5459 = vadd.f32 %v5165, %v5405
        %v5460 = vadd.f32 %v5166, %v5408
        %v5461 = vadd.f32 %v5167, %v5413
        %v5462 = vadd.f32 %v5168, %v5416
        %v5463 = vadd.f32 %v5169, %v5421
        %v5464 = vadd.f32 %v5170, %v5424
        %v5465 = vadd.f32 %v5171, %v5429
        %v5466 = vadd.f32 %v5172, %v5432
        %v5467 = vld [vmem:[%s4878 + $0x2] sm:$0xff]
        %v5468 = vld [vmem:[%s4878 + $0xa] sm:$0xff]
        %v5469 = vld [vmem:[%s4878 + $0x1a] sm:$0xff]
        %v5470 = vld [vmem:[%s4878 + $0x22] sm:$0xff]
        %v5471 = vld [vmem:[%s4878 + $0x32] sm:$0xff]
        %v5472 = vld [vmem:[%s4878 + $0x3a] sm:$0xff]
        %v5473 = vld [vmem:[%s4878 + $0x4a] sm:$0xff]
        %v5474 = vld [vmem:[%s4878 + $0x52] sm:$0xff]
        %v5475 = vld [vmem:[%s4878 + $0x62] sm:$0xff]
        %v5476 = vld [vmem:[%s4878 + $0x6a] sm:$0xff]
        %v5477 = vld [vmem:[%s4878 + $0x7a] sm:$0xff]
        %v5478 = vld [vmem:[%s4878 + $0x82] sm:$0xff]
        %v5479 = vld [vmem:[%s4878 + $0x92] sm:$0xff]
        %v5480 = vld [vmem:[%s4878 + $0x9a] sm:$0xff]
        %v5481 = vld [vmem:[%s4878 + $0xaa] sm:$0xff]
        %v5482 = vld [vmem:[%s4878 + $0xb2] sm:$0xff]
        %v5483 = vld [vmem:[%s4878 + $0xc2] sm:$0xff]
        %v5484 = vld [vmem:[%s4878 + $0xca] sm:$0xff]
        %v5485 = vld [vmem:[%s4878 + $0xda] sm:$0xff]
        %v5486 = vld [vmem:[%s4878 + $0xe2] sm:$0xff]
        %v5487 = vld [vmem:[%s4878 + $0xf2] sm:$0xff]
        %v5488 = vld [vmem:[%s4878 + $0xfa] sm:$0xff]
        %v5489 = vld [vmem:[%s4878 + $0x10a] sm:$0xff]
        %v5490 = vld [vmem:[%s4878 + $0x112] sm:$0xff]
        %v5491 = vld [vmem:[%s4878 + $0x122] sm:$0xff]
        %v5492 = vld [vmem:[%s4878 + $0x12a] sm:$0xff]
        %v5493 = vld [vmem:[%s4878 + $0x13a] sm:$0xff]
        %v5494 = vld [vmem:[%s4878 + $0x142] sm:$0xff]
        %v5495 = vld [vmem:[%s4878 + $0x152] sm:$0xff]
        %v5496 = vld [vmem:[%s4878 + $0x15a] sm:$0xff]
        %v5497 = vld [vmem:[%s4878 + $0x16a] sm:$0xff]
        %v5498 = vld [vmem:[%s4878 + $0x172] sm:$0xff]
        %v5499 = vpack.c.bf16 %v5468, %v5467
        %v5500 = vpack.c.bf16 %v5470, %v5469
        %v5501 = vpack.c.bf16 %v5472, %v5471
        %v5502 = vpack.c.bf16 %v5474, %v5473
        %v5503 = vpack.c.bf16 %v5476, %v5475
        %v5504 = vpack.c.bf16 %v5478, %v5477
        %v5505 = vpack.c.bf16 %v5480, %v5479
        %v5506 = vpack.c.bf16 %v5482, %v5481
        %v5507 = vpack.c.bf16 %v5484, %v5483
        %v5508 = vpack.c.bf16 %v5486, %v5485
        %v5509 = vpack.c.bf16 %v5488, %v5487
        %v5510 = vpack.c.bf16 %v5490, %v5489
        %v5511 = vpack.c.bf16 %v5492, %v5491
        %v5512 = vpack.c.bf16 %v5494, %v5493
        %v5513 = vpack.c.bf16 %v5496, %v5495
        %v5514 = vpack.c.bf16 %v5498, %v5497
        %s5515 = scalar_lea.vmem %s3, 32
        %v5516 = vld [vmem:[%s5515] sm:$0xf]
        %v5518 = vsel %vm3103, %v5499, 0
        %v5521 = vsel %vm3103, %v5500, 0
        %v5524 = vsel %vm3103, %v5501, 0
        %v5527 = vsel %vm3103, %v5502, 0
        %v5530 = vsel %vm3103, %v5503, 0
        %v5533 = vsel %vm3103, %v5504, 0
        %v5536 = vsel %vm3103, %v5505, 0
        %v5539 = vsel %vm3103, %v5506, 0
        %v5542 = vsel %vm3103, %v5507, 0
        %v5545 = vsel %vm3103, %v5508, 0
        %v5548 = vsel %vm3103, %v5509, 0
        %v5551 = vsel %vm3103, %v5510, 0
        %v5554 = vsel %vm3103, %v5511, 0
        %v5557 = vsel %vm3103, %v5512, 0
        %v5560 = vsel %vm3103, %v5513, 0
        %v5563 = vsel %vm3103, %v5514, 0
        %v5566 = vsel %vm3325, %v5516, 0
        %5568 = vmatprep.subr.bf16.mxu0 0
        %5569 = vmatpush1.bf16.msra.mxu0 %v5566
        %5570 = vmatprep.subr.bf16.mxu0 0
        %5571 = vmatpush1.bf16.msra.mxu0 0
        %5572 = vmatprep.subr.bf16.mxu0 0
        %5573 = vmatpush1.bf16.msra.mxu0 0
        %5574 = vmatprep.subr.bf16.mxu0 0
        %5575 = vmatpush1.bf16.msra.mxu0 0
        %5576 = vmatprep.subr.bf16.mxu0 0
        %5577 = vmatpush1.bf16.msra.mxu0 0
        %5578 = vmatprep.subr.bf16.mxu0 0
        %5579 = vmatpush1.bf16.msra.mxu0 0
        %5580 = vmatprep.subr.bf16.mxu0 0
        %5581 = vmatpush1.bf16.msra.mxu0 0
        %5582 = vmatprep.subr.bf16.mxu0 0
        %5583 = vmatpush1.bf16.msra.mxu0 0
        %5584 = vmatprep.subr.bf16.mxu0 0
        %5585 = vmatpush1.bf16.msra.mxu0 0
        %5586 = vmatprep.subr.bf16.mxu0 0
        %5587 = vmatpush1.bf16.msra.mxu0 0
        %5588 = vmatprep.subr.bf16.mxu0 0
        %5589 = vmatpush1.bf16.msra.mxu0 0
        %5590 = vmatprep.subr.bf16.mxu0 0
        %5591 = vmatpush1.bf16.msra.mxu0 0
        %5592 = vmatprep.subr.bf16.mxu0 0
        %5593 = vmatpush1.bf16.msra.mxu0 0
        %5594 = vmatprep.subr.bf16.mxu0 0
        %5595 = vmatpush1.bf16.msra.mxu0 0
        %5596 = vmatprep.subr.bf16.mxu0 0
        %5597 = vmatpush1.bf16.msra.mxu0 0
        %5598 = vmatprep.subr.bf16.mxu0 0
        %5599 = vmatpush1.bf16.msra.mxu0 0
        %5600 = vmatprep.mubr.bf16.mxu0 0
        %5601 = vmatmul.mubr.bf16.gmra.mrb[0].mxu0 %v5518
        %v5602 = vpop.f32.mrb[0].mxu0
        %v5603 = vadd.f32 0.0, %v5602
        %v5604 = vpop.f32.mrb[0].mxu0
        %v5605 = vpop.f32.mrb[0].mxu0
        %v5606 = vadd.f32 0.0, %v5605
        %v5607 = vpop.f32.mrb[0].mxu0
        %5608 = vmatprep.mubr.bf16.mxu0 0
        %5609 = vmatmul.mubr.bf16.gmra.mrb[0].mxu0 %v5521
        %v5610 = vpop.f32.mrb[0].mxu0
        %v5611 = vadd.f32 0.0, %v5610
        %v5612 = vpop.f32.mrb[0].mxu0
        %v5613 = vpop.f32.mrb[0].mxu0
        %v5614 = vadd.f32 0.0, %v5613
        %v5615 = vpop.f32.mrb[0].mxu0
        %5616 = vmatprep.mubr.bf16.mxu0 0
        %5617 = vmatmul.mubr.bf16.gmra.mrb[0].mxu0 %v5524
        %v5618 = vpop.f32.mrb[0].mxu0
        %v5619 = vadd.f32 0.0, %v5618
        %v5620 = vpop.f32.mrb[0].mxu0
        %v5621 = vpop.f32.mrb[0].mxu0
        %v5622 = vadd.f32 0.0, %v5621
        %v5623 = vpop.f32.mrb[0].mxu0
        %5624 = vmatprep.mubr.bf16.mxu0 0
        %5625 = vmatmul.mubr.bf16.gmra.mrb[0].mxu0 %v5527
        %v5626 = vpop.f32.mrb[0].mxu0
        %v5627 = vadd.f32 0.0, %v5626
        %v5628 = vpop.f32.mrb[0].mxu0
        %v5629 = vpop.f32.mrb[0].mxu0
        %v5630 = vadd.f32 0.0, %v5629
        %v5631 = vpop.f32.mrb[0].mxu0
        %5632 = vmatprep.mubr.bf16.mxu0 0
        %5633 = vmatmul.mubr.bf16.gmra.mrb[0].mxu0 %v5530
        %v5634 = vpop.f32.mrb[0].mxu0
        %v5635 = vadd.f32 0.0, %v5634
        %v5636 = vpop.f32.mrb[0].mxu0
        %v5637 = vpop.f32.mrb[0].mxu0
        %v5638 = vadd.f32 0.0, %v5637
        %v5639 = vpop.f32.mrb[0].mxu0
        %5640 = vmatprep.mubr.bf16.mxu0 0
        %5641 = vmatmul.mubr.bf16.gmra.mrb[0].mxu0 %v5533
        %v5642 = vpop.f32.mrb[0].mxu0
        %v5643 = vadd.f32 0.0, %v5642
        %v5644 = vpop.f32.mrb[0].mxu0
        %v5645 = vpop.f32.mrb[0].mxu0
        %v5646 = vadd.f32 0.0, %v5645
        %v5647 = vpop.f32.mrb[0].mxu0
        %5648 = vmatprep.mubr.bf16.mxu0 0
        %5649 = vmatmul.mubr.bf16.gmra.mrb[0].mxu0 %v5536
        %v5650 = vpop.f32.mrb[0].mxu0
        %v5651 = vadd.f32 0.0, %v5650
        %v5652 = vpop.f32.mrb[0].mxu0
        %v5653 = vpop.f32.mrb[0].mxu0
        %v5654 = vadd.f32 0.0, %v5653
        %v5655 = vpop.f32.mrb[0].mxu0
        %5656 = vmatprep.mubr.bf16.mxu0 0
        %5657 = vmatmul.mubr.bf16.gmra.mrb[0].mxu0 %v5539
        %v5658 = vpop.f32.mrb[0].mxu0
        %v5659 = vadd.f32 0.0, %v5658
        %v5660 = vpop.f32.mrb[0].mxu0
        %v5661 = vpop.f32.mrb[0].mxu0
        %v5662 = vadd.f32 0.0, %v5661
        %v5663 = vpop.f32.mrb[0].mxu0
        %5664 = vmatprep.mubr.bf16.mxu0 0
        %5665 = vmatmul.mubr.bf16.gmra.mrb[0].mxu0 %v5542
        %v5666 = vpop.f32.mrb[0].mxu0
        %v5667 = vadd.f32 0.0, %v5666
        %v5668 = vpop.f32.mrb[0].mxu0
        %v5669 = vpop.f32.mrb[0].mxu0
        %v5670 = vadd.f32 0.0, %v5669
        %v5671 = vpop.f32.mrb[0].mxu0
        %5672 = vmatprep.mubr.bf16.mxu0 0
        %5673 = vmatmul.mubr.bf16.gmra.mrb[0].mxu0 %v5545
        %v5674 = vpop.f32.mrb[0].mxu0
        %v5675 = vadd.f32 0.0, %v5674
        %v5676 = vpop.f32.mrb[0].mxu0
        %v5677 = vpop.f32.mrb[0].mxu0
        %v5678 = vadd.f32 0.0, %v5677
        %v5679 = vpop.f32.mrb[0].mxu0
        %5680 = vmatprep.mubr.bf16.mxu0 0
        %5681 = vmatmul.mubr.bf16.gmra.mrb[0].mxu0 %v5548
        %v5682 = vpop.f32.mrb[0].mxu0
        %v5683 = vadd.f32 0.0, %v5682
        %v5684 = vpop.f32.mrb[0].mxu0
        %v5685 = vpop.f32.mrb[0].mxu0
        %v5686 = vadd.f32 0.0, %v5685
        %v5687 = vpop.f32.mrb[0].mxu0
        %5688 = vmatprep.mubr.bf16.mxu0 0
        %5689 = vmatmul.mubr.bf16.gmra.mrb[0].mxu0 %v5551
        %v5690 = vpop.f32.mrb[0].mxu0
        %v5691 = vadd.f32 0.0, %v5690
        %v5692 = vpop.f32.mrb[0].mxu0
        %v5693 = vpop.f32.mrb[0].mxu0
        %v5694 = vadd.f32 0.0, %v5693
        %v5695 = vpop.f32.mrb[0].mxu0
        %5696 = vmatprep.mubr.bf16.mxu0 0
        %5697 = vmatmul.mubr.bf16.gmra.mrb[0].mxu0 %v5554
        %v5698 = vpop.f32.mrb[0].mxu0
        %v5699 = vadd.f32 0.0, %v5698
        %v5700 = vpop.f32.mrb[0].mxu0
        %v5701 = vpop.f32.mrb[0].mxu0
        %v5702 = vadd.f32 0.0, %v5701
        %v5703 = vpop.f32.mrb[0].mxu0
        %5704 = vmatprep.mubr.bf16.mxu0 0
        %5705 = vmatmul.mubr.bf16.gmra.mrb[0].mxu0 %v5557
        %v5706 = vpop.f32.mrb[0].mxu0
        %v5707 = vadd.f32 0.0, %v5706
        %v5708 = vpop.f32.mrb[0].mxu0
        %v5709 = vpop.f32.mrb[0].mxu0
        %v5710 = vadd.f32 0.0, %v5709
        %v5711 = vpop.f32.mrb[0].mxu0
        %5712 = vmatprep.mubr.bf16.mxu0 0
        %5713 = vmatmul.mubr.bf16.gmra.mrb[0].mxu0 %v5560
        %v5714 = vpop.f32.mrb[0].mxu0
        %v5715 = vadd.f32 0.0, %v5714
        %v5716 = vpop.f32.mrb[0].mxu0
        %v5717 = vpop.f32.mrb[0].mxu0
        %v5718 = vadd.f32 0.0, %v5717
        %v5719 = vpop.f32.mrb[0].mxu0
        %5720 = vmatprep.mubr.bf16.mxu0 0
        %5721 = vmatmul.mubr.bf16.gmra.mrb[0].mxu0 %v5563
        %v5722 = vpop.f32.mrb[0].mxu0
        %v5723 = vadd.f32 0.0, %v5722
        %v5724 = vpop.f32.mrb[0].mxu0
        %v5725 = vpop.f32.mrb[0].mxu0
        %v5726 = vadd.f32 0.0, %v5725
        %v5727 = vpop.f32.mrb[0].mxu0
        %5728 = vdwg.mxu0
        %v5729 = vadd.f32 %v5435, %v5603
        %v5730 = vadd.f32 %v5436, %v5606
        %v5731 = vadd.f32 %v5437, %v5611
        %v5732 = vadd.f32 %v5438, %v5614
        %v5733 = vadd.f32 %v5439, %v5619
        %v5734 = vadd.f32 %v5440, %v5622
        %v5735 = vadd.f32 %v5441, %v5627
        %v5736 = vadd.f32 %v5442, %v5630
        %v5737 = vadd.f32 %v5443, %v5635
        %v5738 = vadd.f32 %v5444, %v5638
        %v5739 = vadd.f32 %v5445, %v5643
        %v5740 = vadd.f32 %v5446, %v5646
        %v5741 = vadd.f32 %v5447, %v5651
        %v5742 = vadd.f32 %v5448, %v5654
        %v5743 = vadd.f32 %v5449, %v5659
        %v5744 = vadd.f32 %v5450, %v5662
        %v5745 = vadd.f32 %v5451, %v5667
        %v5746 = vadd.f32 %v5452, %v5670
        %v5747 = vadd.f32 %v5453, %v5675
        %v5748 = vadd.f32 %v5454, %v5678
        %v5749 = vadd.f32 %v5455, %v5683
        %v5750 = vadd.f32 %v5456, %v5686
        %v5751 = vadd.f32 %v5457, %v5691
        %v5752 = vadd.f32 %v5458, %v5694
        %v5753 = vadd.f32 %v5459, %v5699
        %v5754 = vadd.f32 %v5460, %v5702
        %v5755 = vadd.f32 %v5461, %v5707
        %v5756 = vadd.f32 %v5462, %v5710
        %v5757 = vadd.f32 %v5463, %v5715
        %v5758 = vadd.f32 %v5464, %v5718
        %v5759 = vadd.f32 %v5465, %v5723
        %v5760 = vadd.f32 %v5466, %v5726
        %v5761 = vld [vmem:[%s5] sm:$0x3]
        %v5794 = vunpack.c.l.b16 %v278
        %v5795 = vunpack.c.l.b16 %v279
        %v5796 = vunpack.c.l.b16 %v280
        %v5797 = vunpack.c.l.b16 %v281
        %v5798 = vunpack.c.l.b16 %v282
        %v5799 = vunpack.c.l.b16 %v283
        %v5800 = vunpack.c.l.b16 %v284
        %v5801 = vunpack.c.l.b16 %v285
        %v5802 = vunpack.c.l.b16 %v286
        %v5803 = vunpack.c.l.b16 %v287
        %v5804 = vunpack.c.l.b16 %v288
        %v5805 = vunpack.c.l.b16 %v289
        %v5806 = vunpack.c.l.b16 %v290
        %v5807 = vunpack.c.l.b16 %v291
        %v5808 = vunpack.c.l.b16 %v292
        %v5809 = vunpack.c.l.b16 %v293
        %v5810 = vunpack.c.l.b16 %v294
        %v5811 = vunpack.c.l.b16 %v295
        %v5812 = vunpack.c.l.b16 %v296
        %v5813 = vunpack.c.l.b16 %v297
        %v5814 = vunpack.c.l.b16 %v298
        %v5815 = vunpack.c.l.b16 %v299
        %v5816 = vunpack.c.l.b16 %v300
        %v5817 = vunpack.c.l.b16 %v301
        %v5818 = vunpack.c.l.b16 %v302
        %v5819 = vunpack.c.l.b16 %v303
        %v5820 = vunpack.c.l.b16 %v304
        %v5821 = vunpack.c.l.b16 %v305
        %v5822 = vunpack.c.l.b16 %v306
        %v5823 = vunpack.c.l.b16 %v307
        %v5824 = vunpack.c.l.b16 %v308
        %v5825 = vunpack.c.l.b16 %v309
        %v5826 = vpack.c.b16 %v5795, %v5794
        %v5827 = vpack.c.b16 %v5797, %v5796
        %v5828 = vpack.c.b16 %v5799, %v5798
        %v5829 = vpack.c.b16 %v5801, %v5800
        %v5830 = vpack.c.b16 %v5803, %v5802
        %v5831 = vpack.c.b16 %v5805, %v5804
        %v5832 = vpack.c.b16 %v5807, %v5806
        %v5833 = vpack.c.b16 %v5809, %v5808
        %v5834 = vpack.c.b16 %v5811, %v5810
        %v5835 = vpack.c.b16 %v5813, %v5812
        %v5836 = vpack.c.b16 %v5815, %v5814
        %v5837 = vpack.c.b16 %v5817, %v5816
        %v5838 = vpack.c.b16 %v5819, %v5818
        %v5839 = vpack.c.b16 %v5821, %v5820
        %v5840 = vpack.c.b16 %v5823, %v5822
        %v5841 = vpack.c.b16 %v5825, %v5824
        %v5843 = vsel %vm310, %v5826, 0
        %v5846 = vsel %vm310, %v5827, 0
        %v5849 = vsel %vm310, %v5828, 0
        %v5852 = vsel %vm310, %v5829, 0
        %v5855 = vsel %vm310, %v5830, 0
        %v5858 = vsel %vm310, %v5831, 0
        %v5861 = vsel %vm310, %v5832, 0
        %v5864 = vsel %vm310, %v5833, 0
        %v5867 = vsel %vm310, %v5834, 0
        %v5870 = vsel %vm310, %v5835, 0
        %v5873 = vsel %vm310, %v5836, 0
        %v5876 = vsel %vm310, %v5837, 0
        %v5879 = vsel %vm310, %v5838, 0
        %v5882 = vsel %vm310, %v5839, 0
        %v5885 = vsel %vm310, %v5840, 0
        %v5888 = vsel %vm310, %v5841, 0
        %v5891 = vsel %vm596, %v5761, 0
        %5893 = vmatprep.subr.bf16.mxu0 0
        %5894 = vmatpush1.bf16.msra.mxu0 %v5891
        %5895 = vmatprep.subr.bf16.mxu0 0
        %5896 = vmatpush1.bf16.msra.mxu0 0
        %5897 = vmatprep.subr.bf16.mxu0 0
        %5898 = vmatpush1.bf16.msra.mxu0 0
        %5899 = vmatprep.subr.bf16.mxu0 0
        %5900 = vmatpush1.bf16.msra.mxu0 0
        %5901 = vmatprep.subr.bf16.mxu0 0
        %5902 = vmatpush1.bf16.msra.mxu0 0
        %5903 = vmatprep.subr.bf16.mxu0 0
        %5904 = vmatpush1.bf16.msra.mxu0 0
        %5905 = vmatprep.subr.bf16.mxu0 0
        %5906 = vmatpush1.bf16.msra.mxu0 0
        %5907 = vmatprep.subr.bf16.mxu0 0
        %5908 = vmatpush1.bf16.msra.mxu0 0
        %5909 = vmatprep.subr.bf16.mxu0 0
        %5910 = vmatpush1.bf16.msra.mxu0 0
        %5911 = vmatprep.subr.bf16.mxu0 0
        %5912 = vmatpush1.bf16.msra.mxu0 0
        %5913 = vmatprep.subr.bf16.mxu0 0
        %5914 = vmatpush1.bf16.msra.mxu0 0
        %5915 = vmatprep.subr.bf16.mxu0 0
        %5916 = vmatpush1.bf16.msra.mxu0 0
        %5917 = vmatprep.subr.bf16.mxu0 0
        %5918 = vmatpush1.bf16.msra.mxu0 0
        %5919 = vmatprep.subr.bf16.mxu0 0
        %5920 = vmatpush1.bf16.msra.mxu0 0
        %5921 = vmatprep.subr.bf16.mxu0 0
        %5922 = vmatpush1.bf16.msra.mxu0 0
        %5923 = vmatprep.subr.bf16.mxu0 0
        %5924 = vmatpush1.bf16.msra.mxu0 0
        %5925 = vmatprep.mubr.bf16.mxu0 0
        %5926 = vmatmul.mubr.bf16.gmra.mrb[0].mxu0 %v5843
        %v5927 = vpop.f32.mrb[0].mxu0
        %v5928 = vadd.f32 0.0, %v5927
        %v5929 = vpop.f32.mrb[0].mxu0
        %v5930 = vpop.f32.mrb[0].mxu0
        %v5931 = vadd.f32 0.0, %v5930
        %v5932 = vpop.f32.mrb[0].mxu0
        %5933 = vmatprep.mubr.bf16.mxu0 0
        %5934 = vmatmul.mubr.bf16.gmra.mrb[0].mxu0 %v5846
        %v5935 = vpop.f32.mrb[0].mxu0
        %v5936 = vadd.f32 0.0, %v5935
        %v5937 = vpop.f32.mrb[0].mxu0
        %v5938 = vpop.f32.mrb[0].mxu0
        %v5939 = vadd.f32 0.0, %v5938
        %v5940 = vpop.f32.mrb[0].mxu0
        %5941 = vmatprep.mubr.bf16.mxu0 0
        %5942 = vmatmul.mubr.bf16.gmra.mrb[0].mxu0 %v5849
        %v5943 = vpop.f32.mrb[0].mxu0
        %v5944 = vadd.f32 0.0, %v5943
        %v5945 = vpop.f32.mrb[0].mxu0
        %v5946 = vpop.f32.mrb[0].mxu0
        %v5947 = vadd.f32 0.0, %v5946
        %v5948 = vpop.f32.mrb[0].mxu0
        %5949 = vmatprep.mubr.bf16.mxu0 0
        %5950 = vmatmul.mubr.bf16.gmra.mrb[0].mxu0 %v5852
        %v5951 = vpop.f32.mrb[0].mxu0
        %v5952 = vadd.f32 0.0, %v5951
        %v5953 = vpop.f32.mrb[0].mxu0
        %v5954 = vpop.f32.mrb[0].mxu0
        %v5955 = vadd.f32 0.0, %v5954
        %v5956 = vpop.f32.mrb[0].mxu0
        %5957 = vmatprep.mubr.bf16.mxu0 0
        %5958 = vmatmul.mubr.bf16.gmra.mrb[0].mxu0 %v5855
        %v5959 = vpop.f32.mrb[0].mxu0
        %v5960 = vadd.f32 0.0, %v5959
        %v5961 = vpop.f32.mrb[0].mxu0
        %v5962 = vpop.f32.mrb[0].mxu0
        %v5963 = vadd.f32 0.0, %v5962
        %v5964 = vpop.f32.mrb[0].mxu0
        %5965 = vmatprep.mubr.bf16.mxu0 0
        %5966 = vmatmul.mubr.bf16.gmra.mrb[0].mxu0 %v5858
        %v5967 = vpop.f32.mrb[0].mxu0
        %v5968 = vadd.f32 0.0, %v5967
        %v5969 = vpop.f32.mrb[0].mxu0
        %v5970 = vpop.f32.mrb[0].mxu0
        %v5971 = vadd.f32 0.0, %v5970
        %v5972 = vpop.f32.mrb[0].mxu0
        %5973 = vmatprep.mubr.bf16.mxu0 0
        %5974 = vmatmul.mubr.bf16.gmra.mrb[0].mxu0 %v5861
        %v5975 = vpop.f32.mrb[0].mxu0
        %v5976 = vadd.f32 0.0, %v5975
        %v5977 = vpop.f32.mrb[0].mxu0
        %v5978 = vpop.f32.mrb[0].mxu0
        %v5979 = vadd.f32 0.0, %v5978
        %v5980 = vpop.f32.mrb[0].mxu0
        %5981 = vmatprep.mubr.bf16.mxu0 0
        %5982 = vmatmul.mubr.bf16.gmra.mrb[0].mxu0 %v5864
        %v5983 = vpop.f32.mrb[0].mxu0
        %v5984 = vadd.f32 0.0, %v5983
        %v5985 = vpop.f32.mrb[0].mxu0
        %v5986 = vpop.f32.mrb[0].mxu0
        %v5987 = vadd.f32 0.0, %v5986
        %v5988 = vpop.f32.mrb[0].mxu0
        %5989 = vmatprep.mubr.bf16.mxu0 0
        %5990 = vmatmul.mubr.bf16.gmra.mrb[0].mxu0 %v5867
        %v5991 = vpop.f32.mrb[0].mxu0
        %v5992 = vadd.f32 0.0, %v5991
        %v5993 = vpop.f32.mrb[0].mxu0
        %v5994 = vpop.f32.mrb[0].mxu0
        %v5995 = vadd.f32 0.0, %v5994
        %v5996 = vpop.f32.mrb[0].mxu0
        %5997 = vmatprep.mubr.bf16.mxu0 0
        %5998 = vmatmul.mubr.bf16.gmra.mrb[0].mxu0 %v5870
        %v5999 = vpop.f32.mrb[0].mxu0
        %v6000 = vadd.f32 0.0, %v5999
        %v6001 = vpop.f32.mrb[0].mxu0
        %v6002 = vpop.f32.mrb[0].mxu0
        %v6003 = vadd.f32 0.0, %v6002
        %v6004 = vpop.f32.mrb[0].mxu0
        %6005 = vmatprep.mubr.bf16.mxu0 0
        %6006 = vmatmul.mubr.bf16.gmra.mrb[0].mxu0 %v5873
        %v6007 = vpop.f32.mrb[0].mxu0
        %v6008 = vadd.f32 0.0, %v6007
        %v6009 = vpop.f32.mrb[0].mxu0
        %v6010 = vpop.f32.mrb[0].mxu0
        %v6011 = vadd.f32 0.0, %v6010
        %v6012 = vpop.f32.mrb[0].mxu0
        %6013 = vmatprep.mubr.bf16.mxu0 0
        %6014 = vmatmul.mubr.bf16.gmra.mrb[0].mxu0 %v5876
        %v6015 = vpop.f32.mrb[0].mxu0
        %v6016 = vadd.f32 0.0, %v6015
        %v6017 = vpop.f32.mrb[0].mxu0
        %v6018 = vpop.f32.mrb[0].mxu0
        %v6019 = vadd.f32 0.0, %v6018
        %v6020 = vpop.f32.mrb[0].mxu0
        %6021 = vmatprep.mubr.bf16.mxu0 0
        %6022 = vmatmul.mubr.bf16.gmra.mrb[0].mxu0 %v5879
        %v6023 = vpop.f32.mrb[0].mxu0
        %v6024 = vadd.f32 0.0, %v6023
        %v6025 = vpop.f32.mrb[0].mxu0
        %v6026 = vpop.f32.mrb[0].mxu0
        %v6027 = vadd.f32 0.0, %v6026
        %v6028 = vpop.f32.mrb[0].mxu0
        %6029 = vmatprep.mubr.bf16.mxu0 0
        %6030 = vmatmul.mubr.bf16.gmra.mrb[0].mxu0 %v5882
        %v6031 = vpop.f32.mrb[0].mxu0
        %v6032 = vadd.f32 0.0, %v6031
        %v6033 = vpop.f32.mrb[0].mxu0
        %v6034 = vpop.f32.mrb[0].mxu0
        %v6035 = vadd.f32 0.0, %v6034
        %v6036 = vpop.f32.mrb[0].mxu0
        %6037 = vmatprep.mubr.bf16.mxu0 0
        %6038 = vmatmul.mubr.bf16.gmra.mrb[0].mxu0 %v5885
        %v6039 = vpop.f32.mrb[0].mxu0
        %v6040 = vadd.f32 0.0, %v6039
        %v6041 = vpop.f32.mrb[0].mxu0
        %v6042 = vpop.f32.mrb[0].mxu0
        %v6043 = vadd.f32 0.0, %v6042
        %v6044 = vpop.f32.mrb[0].mxu0
        %6045 = vmatprep.mubr.bf16.mxu0 0
        %6046 = vmatmul.mubr.bf16.gmra.mrb[0].mxu0 %v5888
        %v6047 = vpop.f32.mrb[0].mxu0
        %v6048 = vadd.f32 0.0, %v6047
        %v6049 = vpop.f32.mrb[0].mxu0
        %v6050 = vpop.f32.mrb[0].mxu0
        %v6051 = vadd.f32 0.0, %v6050
        %v6052 = vpop.f32.mrb[0].mxu0
        %6053 = vdwg.mxu0
        %v6054 = vld [vmem:[%s4] sm:$0x1]
        %v6055 = vld [vmem:[%s6] sm:$0x1]
        %v6056 = vadd.f32 %v6054, %v6055
        %v6057 = vadd.f32 %v5729, %v5928
        %v6058 = vadd.f32 %v5730, %v5931
        %v6059 = vadd.f32 %v5731, %v5936
        %v6060 = vadd.f32 %v5732, %v5939
        %v6061 = vadd.f32 %v5733, %v5944
        %v6062 = vadd.f32 %v5734, %v5947
        %v6063 = vadd.f32 %v5735, %v5952
        %v6064 = vadd.f32 %v5736, %v5955
        %v6065 = vadd.f32 %v5737, %v5960
        %v6066 = vadd.f32 %v5738, %v5963
        %v6067 = vadd.f32 %v5739, %v5968
        %v6068 = vadd.f32 %v5740, %v5971
        %v6069 = vadd.f32 %v5741, %v5976
        %v6070 = vadd.f32 %v5742, %v5979
        %v6071 = vadd.f32 %v5743, %v5984
        %v6072 = vadd.f32 %v5744, %v5987
        %v6073 = vadd.f32 %v5745, %v5992
        %v6074 = vadd.f32 %v5746, %v5995
        %v6075 = vadd.f32 %v5747, %v6000
        %v6076 = vadd.f32 %v5748, %v6003
        %v6077 = vadd.f32 %v5749, %v6008
        %v6078 = vadd.f32 %v5750, %v6011
        %v6079 = vadd.f32 %v5751, %v6016
        %v6080 = vadd.f32 %v5752, %v6019
        %v6081 = vadd.f32 %v5753, %v6024
        %v6082 = vadd.f32 %v5754, %v6027
        %v6083 = vadd.f32 %v5755, %v6032
        %v6084 = vadd.f32 %v5756, %v6035
        %v6085 = vadd.f32 %v5757, %v6040
        %v6086 = vadd.f32 %v5758, %v6043
        %v6087 = vadd.f32 %v5759, %v6048
        %v6088 = vadd.f32 %v5760, %v6051
        %v6090 = vlaneseq
        %v6091 = vshrl.u32 %v6090, 7
        %v6092 = vsub.s32 0, %v6091
        %v6093 = vrot.slane %v6056, %v6092
        %v6095 = vadd.f32 %v6057, %v6093
        %v6096 = vadd.f32 %v6058, %v6093
        %v6097 = vadd.f32 %v6059, %v6093
        %v6098 = vadd.f32 %v6060, %v6093
        %v6099 = vadd.f32 %v6061, %v6093
        %v6100 = vadd.f32 %v6062, %v6093
        %v6101 = vadd.f32 %v6063, %v6093
        %v6102 = vadd.f32 %v6064, %v6093
        %v6103 = vadd.f32 %v6065, %v6093
        %v6104 = vadd.f32 %v6066, %v6093
        %v6105 = vadd.f32 %v6067, %v6093
        %v6106 = vadd.f32 %v6068, %v6093
        %v6107 = vadd.f32 %v6069, %v6093
        %v6108 = vadd.f32 %v6070, %v6093
        %v6109 = vadd.f32 %v6071, %v6093
        %v6110 = vadd.f32 %v6072, %v6093
        %v6111 = vadd.f32 %v6073, %v6093
        %v6112 = vadd.f32 %v6074, %v6093
        %v6113 = vadd.f32 %v6075, %v6093
        %v6114 = vadd.f32 %v6076, %v6093
        %v6115 = vadd.f32 %v6077, %v6093
        %v6116 = vadd.f32 %v6078, %v6093
        %v6117 = vadd.f32 %v6079, %v6093
        %v6118 = vadd.f32 %v6080, %v6093
        %v6119 = vadd.f32 %v6081, %v6093
        %v6120 = vadd.f32 %v6082, %v6093
        %v6121 = vadd.f32 %v6083, %v6093
        %v6122 = vadd.f32 %v6084, %v6093
        %v6123 = vadd.f32 %v6085, %v6093
        %v6124 = vadd.f32 %v6086, %v6093
        %v6125 = vadd.f32 %v6087, %v6093
        %v6126 = vadd.f32 %v6088, %v6093
        %6127 = vst.msk [vmem:[#allocation4] sm:$0xff] %vm3103, %v6095
        %6128 = vst.msk [vmem:[#allocation4 + $0x8] sm:$0xff] %vm3103, %v6096
        %6129 = vst.msk [vmem:[#allocation4 + $0x10] sm:$0xff] %vm3103, %v6097
        %6130 = vst.msk [vmem:[#allocation4 + $0x18] sm:$0xff] %vm3103, %v6098
        %6131 = vst.msk [vmem:[#allocation4 + $0x20] sm:$0xff] %vm3103, %v6099
        %6132 = vst.msk [vmem:[#allocation4 + $0x28] sm:$0xff] %vm3103, %v6100
        %6133 = vst.msk [vmem:[#allocation4 + $0x30] sm:$0xff] %vm3103, %v6101
        %6134 = vst.msk [vmem:[#allocation4 + $0x38] sm:$0xff] %vm3103, %v6102
        %6135 = vst.msk [vmem:[#allocation4 + $0x40] sm:$0xff] %vm3103, %v6103
        %6136 = vst.msk [vmem:[#allocation4 + $0x48] sm:$0xff] %vm3103, %v6104
        %6137 = vst.msk [vmem:[#allocation4 + $0x50] sm:$0xff] %vm3103, %v6105
        %6138 = vst.msk [vmem:[#allocation4 + $0x58] sm:$0xff] %vm3103, %v6106
        %6139 = vst.msk [vmem:[#allocation4 + $0x60] sm:$0xff] %vm3103, %v6107
        %6140 = vst.msk [vmem:[#allocation4 + $0x68] sm:$0xff] %vm3103, %v6108
        %6141 = vst.msk [vmem:[#allocation4 + $0x70] sm:$0xff] %vm3103, %v6109
        %6142 = vst.msk [vmem:[#allocation4 + $0x78] sm:$0xff] %vm3103, %v6110
        %6143 = vst.msk [vmem:[#allocation4 + $0x80] sm:$0xff] %vm3103, %v6111
        %6144 = vst.msk [vmem:[#allocation4 + $0x88] sm:$0xff] %vm3103, %v6112
        %6145 = vst.msk [vmem:[#allocation4 + $0x90] sm:$0xff] %vm3103, %v6113
        %6146 = vst.msk [vmem:[#allocation4 + $0x98] sm:$0xff] %vm3103, %v6114
        %6147 = vst.msk [vmem:[#allocation4 + $0xa0] sm:$0xff] %vm3103, %v6115
        %6148 = vst.msk [vmem:[#allocation4 + $0xa8] sm:$0xff] %vm3103, %v6116
        %6149 = vst.msk [vmem:[#allocation4 + $0xb0] sm:$0xff] %vm3103, %v6117
        %6150 = vst.msk [vmem:[#allocation4 + $0xb8] sm:$0xff] %vm3103, %v6118
        %6151 = vst.msk [vmem:[#allocation4 + $0xc0] sm:$0xff] %vm3103, %v6119
        %6152 = vst.msk [vmem:[#allocation4 + $0xc8] sm:$0xff] %vm3103, %v6120
        %6153 = vst.msk [vmem:[#allocation4 + $0xd0] sm:$0xff] %vm3103, %v6121
        %6154 = vst.msk [vmem:[#allocation4 + $0xd8] sm:$0xff] %vm3103, %v6122
        %6155 = vst.msk [vmem:[#allocation4 + $0xe0] sm:$0xff] %vm3103, %v6123
        %6156 = vst.msk [vmem:[#allocation4 + $0xe8] sm:$0xff] %vm3103, %v6124
        %6157 = vst.msk [vmem:[#allocation4 + $0xf0] sm:$0xff] %vm3103, %v6125
        %6158 = vst.msk [vmem:[#allocation4 + $0xf8] sm:$0xff] %vm3103, %v6126
        %v6159 = vld [vmem:[#allocation4] ss:$2 sm:$0xff]
        %s6160 = scalar_lea.vmem [#allocation4], 16
        %v6161 = vld [vmem:[%s6160] ss:$2 sm:$0xff]
        %s6162 = scalar_lea.vmem [#allocation4], 32
        %v6163 = vld [vmem:[%s6162] ss:$2 sm:$0xff]
        %s6164 = scalar_lea.vmem [#allocation4], 48
        %v6165 = vld [vmem:[%s6164] ss:$2 sm:$0xff]
        %s6166 = scalar_lea.vmem [#allocation4], 64
        %v6167 = vld [vmem:[%s6166] ss:$2 sm:$0xff]
        %s6168 = scalar_lea.vmem [#allocation4], 80
        %v6169 = vld [vmem:[%s6168] ss:$2 sm:$0xff]
        %s6170 = scalar_lea.vmem [#allocation4], 96
        %v6171 = vld [vmem:[%s6170] ss:$2 sm:$0xff]
        %s6172 = scalar_lea.vmem [#allocation4], 112
        %v6173 = vld [vmem:[%s6172] ss:$2 sm:$0xff]
        %s6174 = scalar_lea.vmem [#allocation4], 128
        %v6175 = vld [vmem:[%s6174] ss:$2 sm:$0xff]
        %s6176 = scalar_lea.vmem [#allocation4], 144
        %v6177 = vld [vmem:[%s6176] ss:$2 sm:$0xff]
        %s6178 = scalar_lea.vmem [#allocation4], 160
        %v6179 = vld [vmem:[%s6178] ss:$2 sm:$0xff]
        %s6180 = scalar_lea.vmem [#allocation4], 176
        %v6181 = vld [vmem:[%s6180] ss:$2 sm:$0xff]
        %s6182 = scalar_lea.vmem [#allocation4], 192
        %v6183 = vld [vmem:[%s6182] ss:$2 sm:$0xff]
        %s6184 = scalar_lea.vmem [#allocation4], 208
        %v6185 = vld [vmem:[%s6184] ss:$2 sm:$0xff]
        %s6186 = scalar_lea.vmem [#allocation4], 224
        %v6187 = vld [vmem:[%s6186] ss:$2 sm:$0xff]
        %s6188 = scalar_lea.vmem [#allocation4], 240
        %v6189 = vld [vmem:[%s6188] ss:$2 sm:$0xff]
        %s6190 = scalar_lea.vmem [#allocation4], 1
        %v6191 = vld [vmem:[%s6190] ss:$2 sm:$0xff]
        %s6192 = scalar_lea.vmem [#allocation4], 17
        %v6193 = vld [vmem:[%s6192] ss:$2 sm:$0xff]
        %s6194 = scalar_lea.vmem [#allocation4], 33
        %v6195 = vld [vmem:[%s6194] ss:$2 sm:$0xff]
        %s6196 = scalar_lea.vmem [#allocation4], 49
        %v6197 = vld [vmem:[%s6196] ss:$2 sm:$0xff]
        %s6198 = scalar_lea.vmem [#allocation4], 65
        %v6199 = vld [vmem:[%s6198] ss:$2 sm:$0xff]
        %s6200 = scalar_lea.vmem [#allocation4], 81
        %v6201 = vld [vmem:[%s6200] ss:$2 sm:$0xff]
        %s6202 = scalar_lea.vmem [#allocation4], 97
        %v6203 = vld [vmem:[%s6202] ss:$2 sm:$0xff]
        %s6204 = scalar_lea.vmem [#allocation4], 113
        %v6205 = vld [vmem:[%s6204] ss:$2 sm:$0xff]
        %s6206 = scalar_lea.vmem [#allocation4], 129
        %v6207 = vld [vmem:[%s6206] ss:$2 sm:$0xff]
        %s6208 = scalar_lea.vmem [#allocation4], 145
        %v6209 = vld [vmem:[%s6208] ss:$2 sm:$0xff]
        %s6210 = scalar_lea.vmem [#allocation4], 161
        %v6211 = vld [vmem:[%s6210] ss:$2 sm:$0xff]
        %s6212 = scalar_lea.vmem [#allocation4], 177
        %v6213 = vld [vmem:[%s6212] ss:$2 sm:$0xff]
        %s6214 = scalar_lea.vmem [#allocation4], 193
        %v6215 = vld [vmem:[%s6214] ss:$2 sm:$0xff]
        %s6216 = scalar_lea.vmem [#allocation4], 209
        %v6217 = vld [vmem:[%s6216] ss:$2 sm:$0xff]
        %s6218 = scalar_lea.vmem [#allocation4], 225
        %v6219 = vld [vmem:[%s6218] ss:$2 sm:$0xff]
        %s6220 = scalar_lea.vmem [#allocation4], 241
        %v6221 = vld [vmem:[%s6220] ss:$2 sm:$0xff]
        %v6222 = vadd.f32 %v6159, %v6191
        %v6223 = vadd.f32 %v6161, %v6193
        %v6224 = vadd.f32 %v6163, %v6195
        %v6225 = vadd.f32 %v6165, %v6197
        %v6226 = vadd.f32 %v6167, %v6199
        %v6227 = vadd.f32 %v6169, %v6201
        %v6228 = vadd.f32 %v6171, %v6203
        %v6229 = vadd.f32 %v6173, %v6205
        %v6230 = vadd.f32 %v6175, %v6207
        %v6231 = vadd.f32 %v6177, %v6209
        %v6232 = vadd.f32 %v6179, %v6211
        %v6233 = vadd.f32 %v6181, %v6213
        %v6234 = vadd.f32 %v6183, %v6215
        %v6235 = vadd.f32 %v6185, %v6217
        %v6236 = vadd.f32 %v6187, %v6219
        %v6237 = vadd.f32 %v6189, %v6221
        %v6238 = vadd.f32 %v6222, %v6223
        %v6239 = vadd.f32 %v6224, %v6225
        %v6240 = vadd.f32 %v6226, %v6227
        %v6241 = vadd.f32 %v6228, %v6229
        %v6242 = vadd.f32 %v6230, %v6231
        %v6243 = vadd.f32 %v6232, %v6233
        %v6244 = vadd.f32 %v6234, %v6235
        %v6245 = vadd.f32 %v6236, %v6237
        %v6246 = vmul.f32 %v6238, 0.25
        %v6247 = vmul.f32 %v6239, 0.25
        %v6248 = vmul.f32 %v6240, 0.25
        %v6249 = vmul.f32 %v6241, 0.25
        %v6250 = vmul.f32 %v6242, 0.25
        %v6251 = vmul.f32 %v6243, 0.25
        %v6252 = vmul.f32 %v6244, 0.25
        %v6253 = vmul.f32 %v6245, 0.25
        %6254 = vst.msk [vmem:[%s271] sm:$0xff] %vm3103, %v6246
        %6255 = vst.msk [vmem:[%s271 + $0x8] sm:$0xff] %vm3103, %v6247
        %6256 = vst.msk [vmem:[%s271 + $0x10] sm:$0xff] %vm3103, %v6248
        %6257 = vst.msk [vmem:[%s271 + $0x18] sm:$0xff] %vm3103, %v6249
        %6258 = vst.msk [vmem:[%s271 + $0x20] sm:$0xff] %vm3103, %v6250
        %6259 = vst.msk [vmem:[%s271 + $0x28] sm:$0xff] %vm3103, %v6251
        %6260 = vst.msk [vmem:[%s271 + $0x30] sm:$0xff] %vm3103, %v6252
        %6261 = vst.msk [vmem:[%s271 + $0x38] sm:$0xff] %vm3103, %v6253
        %s6262 = sand.u32 %s181, 1
        %s6263 = scalar_lea.sflag [#allocation6], %s6262
        %s6264 = sand.u32 %s181, 1
        %s6265 = smul.addr %s6264, 64
        %s6266 = scalar_lea.vmem [#allocation5], %s6265
        // Predicated region
        $region49: #{tpu_custom_call.1} parent=47 // pred_check
          %p6267 = pneg %p191
        $region50: #{tpu_custom_call.1} parent=47 // pred_check_branch
          %6269 = sbr.rel (%p6267) target = $region52
        $region51: #{tpu_custom_call.1} parent=47 // pred_region
          %s6271 = ssub.s32 1024, 1024
          %6272 = vsyncadd %s6263, %s6271
          %s6273 = smul.addr %s21, 8
          %s6274 = smul.addr %s6273, 128
          %s6275 = scalar_lea.hbm %s7, %s6274
          %s6276 = sshll.u32 %s6266, 4
          %s6277 = int_to_ptr.vmem [resolvable:$true] %s6276
          %6282 = dma.vmem_to_hbm [thread:$0]  %s6277, 1024, %s6275, %s6263, 128, 128, 8
        $region52: #{tpu_custom_call.1} parent=47 // pred_fallthru
          _
      $region48: #{tpu_custom_call.1} parent=5 // pred_fallthru
        _
      %p6283 = scmp.le.s32.totalorder 2, %s16
      // Predicated region
      $region53: #{tpu_custom_call.1} parent=5 // pred_check
        %p6284 = pneg %p6283
      $region54: #{tpu_custom_call.1} parent=5 // pred_check_branch
        %6286 = sbr.rel (%p6284) target = $region56
      $region55: #{tpu_custom_call.1} parent=5 // pred_region
        %s6287 = ssub.s32 %s16, 2
        // Predicated region
        $region57: #{tpu_custom_call.1} parent=55 // pred_check
          %p6288 = pneg %p197
        $region58: #{tpu_custom_call.1} parent=55 // pred_check_branch
          %6290 = sbr.rel (%p6288) target = $region60
        $region59: #{tpu_custom_call.1} parent=55 // pred_region
          %s6291 = sand.u32 %s182, 1
          %s6292 = scalar_lea.sflag [#allocation6], %s6291
          %s6293 = sand.u32 %s182, 1
          %s6294 = smul.addr %s6293, 64
          %s6295 = scalar_lea.vmem [#allocation5], %s6294
          %6296 = dma.done %s6292, 1024
        $region60: #{tpu_custom_call.1} parent=55 // pred_fallthru
          _
      $region56: #{tpu_custom_call.1} parent=5 // pred_fallthru
        _
    $region6: #{tpu_custom_call.1} parent=1 // loop_footer
      %s20 = sadd.s32 1, %s16
    $region7: #{tpu_custom_call.1} parent=1 // loop_footer_branch
      %15 = sbr.rel target = $region3
    $region8: #{tpu_custom_call.1} parent=1 // loop_exit
      _
    %6297 = vsyncpa [#allocation6], 1
    %s6298 = scalar_lea.sflag [#allocation6], 1
    %6299 = vsyncpa %s6298, 1

</llo_original>
